<compile_context>
chip_gen: v6e
topology: v6e:2x2x1
jax: 0.10.0
libtpu: 0.0.40
codegen_flags: <defaults>
</compile_context>

<pallas_src>
import functools

import numpy as np
import jax
import jax.numpy as jnp
from jax.experimental import pallas as pl
from jax.experimental.pallas import tpu as pltpu

PAD = 0
LN_EPS = 1e-6


# ------------------------------------------------------------------ in-kernel helpers (traced)

def _layernorm(y, g, b, eps):
    mu = jnp.mean(y, axis=-1, keepdims=True)
    var = jnp.mean((y - mu) ** 2, axis=-1, keepdims=True)
    return (y - mu) * jax.lax.rsqrt(var + eps) * g + b


def _softmax_rows(sc):
    sc = sc - jnp.max(sc, axis=-1, keepdims=True)
    p = jnp.exp(sc)
    return p / jnp.sum(p, axis=-1, keepdims=True)


def _mask_add(valid_row, L):
    """Additive attention mask: 0 where (causal AND key != PAD), else -1e9.

    valid_row: (1, L) float (1 = valid key).  Computed once per (layer, batch element) and
    added to the scores of every head — the select is hoisted out of the per-head loop.
    """
    row = jax.lax.broadcasted_iota(jnp.int32, (L, L), 0)
    col = jax.lax.broadcasted_iota(jnp.int32, (L, L), 1)
    ok = (row >= col) & (valid_row > 0.5)
    return jnp.where(ok, 0.0, -1e9)


def _decoder_layer(dec_a, dec_s, enc, mask_add, w_refs, *, n_head, d_k, eps):
    """One DecoderLayer (TypeArea self-attn + enc-dec attn + FFN), packed lane-dense matmuls."""
    (slf_ref, slf_fc_ref, crs_q_ref, crs_kv_ref, crs_fc_ref,
     w1_ref, w2_ref, b_ref, ln_ref) = w_refs
    Hd = n_head * d_k
    scale = 1.0 / float(np.sqrt(d_k))
    ln = ln_ref[...]                       # (6, D): [g_slf, b_slf, g_crs, b_crs, g_ffn, b_ffn]
    bias = b_ref[...]                      # (1, d_inner + D)
    d_inner = w1_ref.shape[1]

    a16 = dec_a.astype(jnp.bfloat16)
    s16 = dec_s.astype(jnp.bfloat16)

    # ---- TypeArea self-attention: scores (Qa+Qs)(Ka+Ks)^T, values Va+Vs.
    # Packed QKV: one (L, D)@(D, 3*H*dk) matmul per stream, static 32-lane slices per head.
    proj = (jnp.dot(a16, slf_ref[0], preferred_element_type=jnp.float32)
            + jnp.dot(s16, slf_ref[1], preferred_element_type=jnp.float32))      # (L, 3*Hd)
    q, k, v = proj[:, :Hd], proj[:, Hd:2 * Hd], proj[:, 2 * Hd:]
    heads = []
    for h in range(n_head):
        sl = slice(h * d_k, (h + 1) * d_k)
        sc = jax.lax.dot_general(q[:, sl], k[:, sl], (((1,), (1,)), ((), ())),
                                 preferred_element_type=jnp.float32) * scale + mask_add
        heads.append(jnp.dot(_softmax_rows(sc), v[:, sl],
                             preferred_element_type=jnp.float32))
    o = jnp.concatenate(heads, axis=-1)                                           # (L, H*dv)
    y1 = dec_a + dec_s + jnp.dot(o.astype(jnp.bfloat16), slf_fc_ref[...],
                                 preferred_element_type=jnp.float32)
    x1 = _layernorm(y1, ln[0:1], ln[1:2], eps)

    # ---- encoder-decoder attention (dec_enc_attn_mask is None in the reference) ----
    x16 = x1.astype(jnp.bfloat16)
    e16 = enc.astype(jnp.bfloat16)
    qc = jnp.dot(x16, crs_q_ref[...], preferred_element_type=jnp.float32)         # (L, Hd)
    kv = jnp.dot(e16, crs_kv_ref[...], preferred_element_type=jnp.float32)        # (Le, 2*Hd)
    kc, vc = kv[:, :Hd], kv[:, Hd:]
    heads = []
    for h in range(n_head):
        sl = slice(h * d_k, (h + 1) * d_k)
        sc = jax.lax.dot_general(qc[:, sl], kc[:, sl], (((1,), (1,)), ((), ())),
                                 preferred_element_type=jnp.float32) * scale
        heads.append(jnp.dot(_softmax_rows(sc), vc[:, sl],
                             preferred_element_type=jnp.float32))
    o = jnp.concatenate(heads, axis=-1)
    y2 = x1 + jnp.dot(o.astype(jnp.bfloat16), crs_fc_ref[...],
                      preferred_element_type=jnp.float32)
    x2 = _layernorm(y2, ln[2:3], ln[3:4], eps)

    # ---- position-wise FFN ----
    hmid = jnp.maximum(
        jnp.dot(x2.astype(jnp.bfloat16), w1_ref[...],
                preferred_element_type=jnp.float32) + bias[:, :d_inner], 0.0)
    y3 = jnp.dot(hmid.astype(jnp.bfloat16), w2_ref[...],
                 preferred_element_type=jnp.float32) + bias[:, d_inner:] + x2
    return _layernorm(y3, ln[4:5], ln[5:6], eps)


# ------------------------------------------------------------------ fully fused forward kernel

def _shotgen_fused_kernel(
        dec_a_A_ref, dec_s_A_ref, dec_a_B_ref, dec_s_B_ref, dec_a_L_ref, dec_s_L_ref,
        enc_A_ref, enc_B_ref, enc_L_ref,
        v_A_ref, v_B_ref, v_L_ref,
        pemb_ref, sel_A_ref, sel_B_ref, beta_ref,
        p_slf_ref, p_slf_fc_ref, p_crs_q_ref, p_crs_kv_ref, p_crs_fc_ref,
        p_w1_ref, p_w2_ref, p_b_ref, p_ln_ref,
        r_slf_ref, r_slf_fc_ref, r_crs_q_ref, r_crs_kv_ref, r_crs_fc_ref,
        r_w1_ref, r_w2_ref, r_b_ref, r_ln_ref,
        w_gf_ref, w_out_ref,
        out_ref,
        *, n_batch, n_head, d_k, has_b, eps):
    S, D = dec_a_L_ref.shape[1], dec_a_L_ref.shape[2]
    LA = dec_a_A_ref.shape[1]
    LB = dec_a_B_ref.shape[1]

    player_w = (p_slf_ref, p_slf_fc_ref, p_crs_q_ref, p_crs_kv_ref, p_crs_fc_ref,
                p_w1_ref, p_w2_ref, p_b_ref, p_ln_ref)
    rally_w = (r_slf_ref, r_slf_fc_ref, r_crs_q_ref, r_crs_kv_ref, r_crs_fc_ref,
               r_w1_ref, r_w2_ref, r_b_ref, r_ln_ref)
    layer = functools.partial(_decoder_layer, n_head=n_head, d_k=d_k, eps=eps)

    v_A = v_A_ref[...]
    v_B = v_B_ref[...]
    v_L = v_L_ref[...]

    # Static (unrolled) batch loop: one kernel launch handles the whole batch; everything
    # between the embeddings and the final logits stays resident in VMEM/vregs.
    for b in range(n_batch):
        d_A = layer(dec_a_A_ref[b], dec_s_A_ref[b], enc_A_ref[b],
                    _mask_add(v_A[b:b + 1, :], LA), player_w)
        d_R = layer(dec_a_L_ref[b], dec_s_L_ref[b], enc_L_ref[b],
                    _mask_add(v_L[b:b + 1, :], S), rally_w)

        # alternatemerge(decode_A, decode_A, S, 'A') / (decode_B, decode_B, S, 'B') expressed
        # as 0/1 selection-matrix matmuls (exact reference scatter; see _merge_matrices).
        m_A = jnp.dot(sel_A_ref[...], d_A, preferred_element_type=jnp.float32)    # (S, D)
        if has_b:
            d_B = layer(dec_a_B_ref[b], dec_s_B_ref[b], enc_B_ref[b],
                        _mask_add(v_B[b:b + 1, :], LB), player_w)
            m_B = jnp.dot(sel_B_ref[...], d_B, preferred_element_type=jnp.float32)
        else:
            m_B = jnp.zeros((S, D), jnp.float32)   # reference: decode_B = zeros when no B shots

        # ---- GatedFusionLayer: one packed (S, 3D)@(3D, 6D) matmul (blockdiag hidden | gates)
        x_cat = jnp.concatenate([m_A, m_B, d_R], axis=-1)                          # (S, 3D)
        g = jnp.dot(x_cat.astype(jnp.bfloat16), w_gf_ref[...],
                    preferred_element_type=jnp.float32)                            # (S, 6D)
        h_g = jnp.tanh(g[:, :3 * D])               # [h_A | h_B | h_L]
        a_g = jax.nn.sigmoid(g[:, 3 * D:])         # [alpha_A | alpha_B | alpha_L]
        prod = beta_ref[...] * a_g * h_g           # beta = [w_A | w_B | w_L][:S]
        z = prod[:, :D] + prod[:, D:2 * D] + prod[:, 2 * D:]
        dec_out = jax.nn.sigmoid(z)                                                # (S, D)

        # ---- PredictorLayer: fused area+shot heads, lane-dense 128-wide output store ----
        x_pred = (dec_out + pemb_ref[b]).astype(jnp.bfloat16)
        out_ref[b] = jnp.dot(x_pred, w_out_ref[...], preferred_element_type=jnp.float32)


def _zero_index_map(ndim):
    return lambda i: (0,) * ndim


def pl_shotgen_fused(dec_a_A, dec_s_A, dec_a_B, dec_s_B, dec_a_L, dec_s_L,
                     enc_A, enc_B, enc_L, v_A, v_B, v_L, pemb, sel_A, sel_B, beta,
                     player_w, rally_w, w_gf, w_out, *, n_head, d_k, has_b):
    B, S, _ = dec_a_L.shape
    n_pad = w_out.shape[1]
    operands = [dec_a_A, dec_s_A, dec_a_B, dec_s_B, dec_a_L, dec_s_L,
                enc_A, enc_B, enc_L, v_A, v_B, v_L, pemb, sel_A, sel_B, beta,
                *player_w, *rally_w, w_gf, w_out]

    def full_spec(x):
        return pl.BlockSpec(x.shape, _zero_index_map(x.ndim))

    kernel = functools.partial(_shotgen_fused_kernel, n_batch=B, n_head=n_head,
                               d_k=d_k, has_b=has_b, eps=LN_EPS)
    return pl.pallas_call(
        kernel,
        out_shape=jax.ShapeDtypeStruct((B, S, n_pad), jnp.float32),
        # One launch for the whole batch (the grid over B was pure per-step overhead).
        # On v7x a leading size-2 "parallel" axis could shard batch over the 2 TensorCores,
        # but on v5e/v6e (1 TC) that is wasted, so we keep a single invocation.
        grid=(1,),
        in_specs=[full_spec(x) for x in operands],
        out_specs=pl.BlockSpec((B, S, n_pad), lambda i: (0, 0, 0)),
        compiler_params=pltpu.CompilerParams(dimension_semantics=("arbitrary",)),
    )(*operands)


# ------------------------------------------------------------------ one-time weight packing

def sinusoid_table(n_position, d_hid):
    pos = np.arange(n_position)[:, None].astype(np.float64)
    i = np.arange(d_hid)[None, :]
    angle = pos / np.power(10000.0, 2 * (i // 2) / d_hid)
    table = np.zeros((n_position, d_hid))
    table[:, 0::2] = np.sin(angle[:, 0::2])
    table[:, 1::2] = np.cos(angle[:, 1::2])
    return jnp.asarray(table, jnp.float32)


def _merge_matrices(S):
    """0/1 selection matrices encoding the reference alternatemerge scatter.

    The reference forward calls alternatemerge(x, x, S, player) with BOTH source args equal;
    in every branch of the PyTorch code that reduces to
        merged_A[i] = decode_A[i // 2]                     (all rows)
        merged_B[0] = 0,  merged_B[i] = decode_B[(i-1)//2] (i >= 1)
    so the merge is an exact (S, L) 0/1 matmul.
    """
    LA, LB = (S + 1) // 2, S // 2
    sel_A = np.zeros((S, LA), np.float32)
    sel_B = np.zeros((S, max(LB, 1)), np.float32)
    for i in range(S):
        sel_A[i, i // 2] = 1.0
        if i >= 1 and LB > 0:
            sel_B[i, (i - 1) // 2] = 1.0
    return jnp.asarray(sel_A), jnp.asarray(sel_B)


def pack_params(params, cfg):
    """One-time (outside jit) packing of weights into lane-dense kernel operands."""
    D = cfg["encode_dim"]
    bf = jnp.bfloat16

    def pack_layer(p):
        sa, ca, ff = p["self_attn"], p["cross_attn"], p["ffn"]
        w_slf = jnp.stack(
            [jnp.concatenate([sa["w_qs_a"], sa["w_ks_a"], sa["w_vs_a"]], axis=1),
             jnp.concatenate([sa["w_qs_s"], sa["w_ks_s"], sa["w_vs_s"]], axis=1)],
            axis=0).astype(bf)                                                # (2, D, 3*H*dk)
        w_crs_q = ca["w_qs"].astype(bf)                                       # (D, H*dk)
        w_crs_kv = jnp.concatenate([ca["w_ks"], ca["w_vs"]], axis=1).astype(bf)  # (D, 2*H*dk)
        bias = jnp.concatenate([ff["b1"], ff["b2"]])[None, :].astype(jnp.float32)
        ln = jnp.stack([sa["ln_g"], sa["ln_b"], ca["ln_g"], ca["ln_b"],
                        ff["ln_g"], ff["ln_b"]], axis=0).astype(jnp.float32)  # (6, D)
        return (w_slf, sa["fc"].astype(bf), w_crs_q, w_crs_kv, ca["fc"].astype(bf),
                ff["w1"].astype(bf), ff["w2"].astype(bf), bias, ln)

    # GatedFusionLayer: block-diagonal hidden weights + concatenated gate weights -> (3D, 6D)
    g = params["gated"]
    wh_bd = jnp.zeros((3 * D, 3 * D), jnp.float32)
    wh_bd = (wh_bd.at[:D, :D].set(g["wh1"])
                  .at[D:2 * D, D:2 * D].set(g["wh2"])
                  .at[2 * D:, 2 * D:].set(g["wh3"]))
    w_gate = jnp.concatenate([g["wg1"], g["wg2"], g["wg3"]], axis=1)          # (3D, 3D)
    w_gf = jnp.concatenate([wh_bd, w_gate], axis=1).astype(bf)                # (3D, 6D)
    beta_full = jnp.concatenate([g["w_A"], g["w_B"], g["w_L"]], axis=1).astype(jnp.float32)

    # PredictorLayer: area + shot heads fused and zero-padded to 128 lanes (lane-dense store)
    pr = params["pred"]
    area_num, shot_num = cfg["area_num"], cfg["shot_num"]
    n_out = area_num + shot_num
    n_pad = ((n_out + 127) // 128) * 128
    w_out = jnp.zeros((D, n_pad), jnp.float32)
    w_out = (w_out.at[:, :area_num].set(pr["area_w"])
                   .at[:, area_num:n_out].set(pr["shot_w"])).astype(bf)

    return dict(
        area_w=params["emb"]["area_w"].astype(jnp.float32),
        area_b=params["emb"]["area_b"].astype(jnp.float32),
        shot_table=params["emb"]["shot_table"],
        player_table=params["emb"]["player_table"],
        pred_player_table=pr["player_table"],
        pos_table=params["pos_table"],
        player_layer=pack_layer(params["player_layer"]),
        rally_layer=pack_layer(params["rally_layer"]),
        w_gf=w_gf, beta_full=beta_full, w_out=w_out,
    )


# ------------------------------------------------------------------ jitted forward (plain-JAX glue)

def shotgen_decoder_forward(packed, cfg, input_shot, input_x, input_y, input_player,
                            encode_local_output, encode_global_A, encode_global_B,
                            target_player):
    B, S = input_shot.shape
    D = cfg["encode_dim"]
    el = cfg["encode_length"]
    n_head, d_k = 2, D
    LA, LB = (S + 1) // 2, S // 2
    has_b = LB > 0

    # EmbeddingLayer (dropout = eval-mode identity; gathers / small embed stay in plain JAX
    # where XLA fuses them — no dedicated area-embedding kernel).
    area = jnp.stack([input_x, input_y], axis=-1).astype(jnp.float32)        # (B, S, 2)
    embedded_area = jax.nn.relu(jnp.dot(area, packed["area_w"]) + packed["area_b"])
    embedded_shot = jnp.take(packed["shot_table"], input_shot, axis=0)
    embedded_player = jnp.take(packed["player_table"], input_player, axis=0)
    h_a = embedded_area + embedded_player
    h_s = embedded_shot + embedded_player

    # Decode-mode positional encoding added outside the kernel (pure elementwise, fuses in XLA).
    pos = packed["pos_table"]
    dec_a_A = h_a[:, ::2] + pos[el:el + LA]
    dec_s_A = h_s[:, ::2] + pos[el:el + LA]
    dec_a_L = h_a + pos[el:el + S]
    dec_s_L = h_s + pos[el:el + S]

    valid = (input_shot != PAD).astype(jnp.float32)
    v_A = valid[:, ::2]
    v_L = valid
    if has_b:
        dec_a_B = h_a[:, 1::2] + pos[el:el + LB]
        dec_s_B = h_s[:, 1::2] + pos[el:el + LB]
        v_B = valid[:, 1::2]
    else:   # S == 1: the B stream is skipped inside the kernel (static flag); dummies only.
        dec_a_B = jnp.zeros((B, 1, D), jnp.float32)
        dec_s_B = jnp.zeros((B, 1, D), jnp.float32)
        v_B = jnp.zeros((B, 1), jnp.float32)

    sel_A, sel_B = _merge_matrices(S)
    beta = packed["beta_full"][:S]
    pemb = jnp.take(packed["pred_player_table"], target_player, axis=0)

    logits = pl_shotgen_fused(
        dec_a_A, dec_s_A, dec_a_B, dec_s_B, dec_a_L, dec_s_L,
        encode_global_A.astype(jnp.float32), encode_global_B.astype(jnp.float32),
        encode_local_output.astype(jnp.float32),
        v_A, v_B, v_L, pemb, sel_A, sel_B, beta,
        packed["player_layer"], packed["rally_layer"], packed["w_gf"], packed["w_out"],
        n_head=n_head, d_k=d_k, has_b=has_b)

    area_num = cfg["area_num"]
    area_logits = logits[..., :area_num]
    shot_logits = logits[..., area_num:area_num + cfg["shot_num"]]
    return area_logits, shot_logits


# ------------------------------------------------------------------ parameter init (reference layout)

def init_params(key, cfg):
    d = cfg["encode_dim"]
    H = 2
    dk = dv = d
    d_inner = d * 2
    keys = iter(jax.random.split(key, 128))

    def w(shape, scale=0.1):
        return jax.random.normal(next(keys), shape, jnp.float32) * scale

    def emb(num, dim):
        return w((num, dim)).at[PAD].set(0.0)          # padding_idx = PAD

    def mha_params():
        return dict(w_qs=w((d, H * dk)), w_ks=w((d, H * dk)), w_vs=w((d, H * dv)),
                    fc=w((H * dv, d)),
                    ln_g=jnp.ones((d,), jnp.float32), ln_b=jnp.zeros((d,), jnp.float32))

    def type_area_mha_params():
        return dict(w_qs_a=w((d, H * dk)), w_ks_a=w((d, H * dk)), w_vs_a=w((d, H * dv)),
                    w_qs_s=w((d, H * dk)), w_ks_s=w((d, H * dk)), w_vs_s=w((d, H * dv)),
                    fc=w((H * dv, d)),
                    ln_g=jnp.ones((d,), jnp.float32), ln_b=jnp.zeros((d,), jnp.float32))

    def ffn_params():
        return dict(w1=w((d, d_inner)), b1=w((d_inner,)), w2=w((d_inner, d)), b2=w((d,)),
                    ln_g=jnp.ones((d,), jnp.float32), ln_b=jnp.zeros((d,), jnp.float32))

    def decoder_layer_params():
        return dict(self_attn=type_area_mha_params(), cross_attn=mha_params(), ffn=ffn_params())

    dl = cfg["max_ball_round"] - cfg["encode_length"]
    return dict(
        emb=dict(area_w=w((2, cfg["area_dim"])), area_b=w((cfg["area_dim"],)),
                 shot_table=emb(cfg["shot_num"], cfg["shot_dim"]),
                 player_table=emb(cfg["player_num"], cfg["player_dim"])),
        player_layer=decoder_layer_params(),
        rally_layer=decoder_layer_params(),
        # NOTE: reference init is zeros for w_A/w_B/w_L; small random values exercise the kernel.
        gated=dict(wh1=w((d, d)), wh2=w((d, d)), wh3=w((d, d)),
                   wg1=w((3 * d, d)), wg2=w((3 * d, d)), wg3=w((3 * d, d)),
                   w_A=w((dl, d)), w_B=w((dl, d)), w_L=w((dl, d))),
        pred=dict(area_w=w((d, cfg["area_num"])), shot_w=w((d, cfg["shot_num"])),
                  player_table=emb(cfg["player_num"], cfg["player_dim"])),
        pos_table=sinusoid_table(cfg["max_ball_round"], cfg["shot_dim"]),
    )


# ------------------------------------------------------------------ main

if __name__ == "__main__":
    cfg = dict(area_dim=32, shot_dim=32, player_dim=32, encode_dim=32,
               shot_num=10, player_num=6, area_num=10,
               encode_length=4, max_ball_round=16)

    B, S = 2, 8
    key = jax.random.PRNGKey(0)
    k0, k1, k2, k3, k4, k5, k6, k7, k8 = jax.random.split(key, 9)

    params = init_params(k0, cfg)
    packed = pack_params(params, cfg)          # one-time weight packing, hoisted out of jit

    input_shot = jax.random.randint(k1, (B, S), 1, cfg["shot_num"], dtype=jnp.int32)
    input_shot = input_shot.at[1, -1].set(PAD)  # exercise the key-pad mask
    input_x = jax.random.normal(k2, (B, S), jnp.float32)
    input_y = jax.random.normal(k3, (B, S), jnp.float32)
    input_player = jax.random.randint(k4, (B, S), 1, cfg["player_num"], dtype=jnp.int32)
    target_player = jax.random.randint(k5, (B, S), 1, cfg["player_num"], dtype=jnp.int32)
    encode_local_output = jax.random.normal(k6, (B, cfg["encode_length"], cfg["encode_dim"]),
                                            jnp.float32)
    encode_global_A = jax.random.normal(k7, (B, cfg["encode_length"] // 2, cfg["encode_dim"]),
                                        jnp.float32)
    encode_global_B = jax.random.normal(k8, (B, cfg["encode_length"] // 2, cfg["encode_dim"]),
                                        jnp.float32)

    fwd = jax.jit(lambda p, *args: shotgen_decoder_forward(p, cfg, *args))
    area_logits, shot_logits = fwd(packed, input_shot, input_x, input_y, input_player,
                                   encode_local_output, encode_global_A, encode_global_B,
                                   target_player)

    jax.block_until_ready((area_logits, shot_logits))
    assert area_logits.shape == (B, S, cfg["area_num"])
    assert shot_logits.shape == (B, S, cfg["shot_num"])
    assert bool(jnp.all(jnp.isfinite(area_logits))) and bool(jnp.all(jnp.isfinite(shot_logits)))
    print("KERNEL_OK")
</pallas_src>

<mosaic_0001>
module attributes {stable_mosaic.version = 11 : i64} {
  func.func @_shotgen_fused_kernel(%arg0: i32, %arg1: memref<2x4x32xf32, #tpu.memory_space<vmem>>, %arg2: memref<2x4x32xf32, #tpu.memory_space<vmem>>, %arg3: memref<2x4x32xf32, #tpu.memory_space<vmem>>, %arg4: memref<2x4x32xf32, #tpu.memory_space<vmem>>, %arg5: memref<2x8x32xf32, #tpu.memory_space<vmem>>, %arg6: memref<2x8x32xf32, #tpu.memory_space<vmem>>, %arg7: memref<2x2x32xf32, #tpu.memory_space<vmem>>, %arg8: memref<2x2x32xf32, #tpu.memory_space<vmem>>, %arg9: memref<2x4x32xf32, #tpu.memory_space<vmem>>, %arg10: memref<2x4xf32, #tpu.memory_space<vmem>>, %arg11: memref<2x4xf32, #tpu.memory_space<vmem>>, %arg12: memref<2x8xf32, #tpu.memory_space<vmem>>, %arg13: memref<2x8x32xf32, #tpu.memory_space<vmem>>, %arg14: memref<8x4xf32, #tpu.memory_space<vmem>>, %arg15: memref<8x4xf32, #tpu.memory_space<vmem>>, %arg16: memref<8x96xf32, #tpu.memory_space<vmem>>, %arg17: memref<2x32x192xbf16, #tpu.memory_space<vmem>>, %arg18: memref<64x32xbf16, #tpu.memory_space<vmem>>, %arg19: memref<32x64xbf16, #tpu.memory_space<vmem>>, %arg20: memref<32x128xbf16, #tpu.memory_space<vmem>>, %arg21: memref<64x32xbf16, #tpu.memory_space<vmem>>, %arg22: memref<32x64xbf16, #tpu.memory_space<vmem>>, %arg23: memref<64x32xbf16, #tpu.memory_space<vmem>>, %arg24: memref<1x96xf32, #tpu.memory_space<vmem>>, %arg25: memref<6x32xf32, #tpu.memory_space<vmem>>, %arg26: memref<2x32x192xbf16, #tpu.memory_space<vmem>>, %arg27: memref<64x32xbf16, #tpu.memory_space<vmem>>, %arg28: memref<32x64xbf16, #tpu.memory_space<vmem>>, %arg29: memref<32x128xbf16, #tpu.memory_space<vmem>>, %arg30: memref<64x32xbf16, #tpu.memory_space<vmem>>, %arg31: memref<32x64xbf16, #tpu.memory_space<vmem>>, %arg32: memref<64x32xbf16, #tpu.memory_space<vmem>>, %arg33: memref<1x96xf32, #tpu.memory_space<vmem>>, %arg34: memref<6x32xf32, #tpu.memory_space<vmem>>, %arg35: memref<96x192xbf16, #tpu.memory_space<vmem>>, %arg36: memref<32x128xbf16, #tpu.memory_space<vmem>>, %arg37: memref<2x8x128xf32, #tpu.memory_space<vmem>>) attributes {dimension_semantics = [#tpu.dimension_semantics<arbitrary>], iteration_bounds = array<i64: 1>, scalar_prefetch = 0 : i64, scratch_operands = 0 : i64, tpu.core_type = #tpu.core_type<tc>, window_params = [{pipeline_mode = #tpu.pipeline_mode<synchronous>, transform_indices = @transform_0, window_bounds = array<i64: 2, 4, 32>}, {pipeline_mode = #tpu.pipeline_mode<synchronous>, transform_indices = @transform_1, window_bounds = array<i64: 2, 4, 32>}, {pipeline_mode = #tpu.pipeline_mode<synchronous>, transform_indices = @transform_2, window_bounds = array<i64: 2, 4, 32>}, {pipeline_mode = #tpu.pipeline_mode<synchronous>, transform_indices = @transform_3, window_bounds = array<i64: 2, 4, 32>}, {pipeline_mode = #tpu.pipeline_mode<synchronous>, transform_indices = @transform_4, window_bounds = array<i64: 2, 8, 32>}, {pipeline_mode = #tpu.pipeline_mode<synchronous>, transform_indices = @transform_5, window_bounds = array<i64: 2, 8, 32>}, {pipeline_mode = #tpu.pipeline_mode<synchronous>, transform_indices = @transform_6, window_bounds = array<i64: 2, 2, 32>}, {pipeline_mode = #tpu.pipeline_mode<synchronous>, transform_indices = @transform_7, window_bounds = array<i64: 2, 2, 32>}, {pipeline_mode = #tpu.pipeline_mode<synchronous>, transform_indices = @transform_8, window_bounds = array<i64: 2, 4, 32>}, {pipeline_mode = #tpu.pipeline_mode<synchronous>, transform_indices = @transform_9, window_bounds = array<i64: 2, 4>}, {pipeline_mode = #tpu.pipeline_mode<synchronous>, transform_indices = @transform_10, window_bounds = array<i64: 2, 4>}, {pipeline_mode = #tpu.pipeline_mode<synchronous>, transform_indices = @transform_11, window_bounds = array<i64: 2, 8>}, {pipeline_mode = #tpu.pipeline_mode<synchronous>, transform_indices = @transform_12, window_bounds = array<i64: 2, 8, 32>}, {pipeline_mode = #tpu.pipeline_mode<synchronous>, transform_indices = @transform_13, window_bounds = array<i64: 8, 4>}, {pipeline_mode = #tpu.pipeline_mode<synchronous>, transform_indices = @transform_14, window_bounds = array<i64: 8, 4>}, {pipeline_mode = #tpu.pipeline_mode<synchronous>, transform_indices = @transform_15, window_bounds = array<i64: 8, 96>}, {pipeline_mode = #tpu.pipeline_mode<synchronous>, transform_indices = @transform_16, window_bounds = array<i64: 2, 32, 192>}, {pipeline_mode = #tpu.pipeline_mode<synchronous>, transform_indices = @transform_17, window_bounds = array<i64: 64, 32>}, {pipeline_mode = #tpu.pipeline_mode<synchronous>, transform_indices = @transform_18, window_bounds = array<i64: 32, 64>}, {pipeline_mode = #tpu.pipeline_mode<synchronous>, transform_indices = @transform_19, window_bounds = array<i64: 32, 128>}, {pipeline_mode = #tpu.pipeline_mode<synchronous>, transform_indices = @transform_20, window_bounds = array<i64: 64, 32>}, {pipeline_mode = #tpu.pipeline_mode<synchronous>, transform_indices = @transform_21, window_bounds = array<i64: 32, 64>}, {pipeline_mode = #tpu.pipeline_mode<synchronous>, transform_indices = @transform_22, window_bounds = array<i64: 64, 32>}, {pipeline_mode = #tpu.pipeline_mode<synchronous>, transform_indices = @transform_23, window_bounds = array<i64: 1, 96>}, {pipeline_mode = #tpu.pipeline_mode<synchronous>, transform_indices = @transform_24, window_bounds = array<i64: 6, 32>}, {pipeline_mode = #tpu.pipeline_mode<synchronous>, transform_indices = @transform_25, window_bounds = array<i64: 2, 32, 192>}, {pipeline_mode = #tpu.pipeline_mode<synchronous>, transform_indices = @transform_26, window_bounds = array<i64: 64, 32>}, {pipeline_mode = #tpu.pipeline_mode<synchronous>, transform_indices = @transform_27, window_bounds = array<i64: 32, 64>}, {pipeline_mode = #tpu.pipeline_mode<synchronous>, transform_indices = @transform_28, window_bounds = array<i64: 32, 128>}, {pipeline_mode = #tpu.pipeline_mode<synchronous>, transform_indices = @transform_29, window_bounds = array<i64: 64, 32>}, {pipeline_mode = #tpu.pipeline_mode<synchronous>, transform_indices = @transform_30, window_bounds = array<i64: 32, 64>}, {pipeline_mode = #tpu.pipeline_mode<synchronous>, transform_indices = @transform_31, window_bounds = array<i64: 64, 32>}, {pipeline_mode = #tpu.pipeline_mode<synchronous>, transform_indices = @transform_32, window_bounds = array<i64: 1, 96>}, {pipeline_mode = #tpu.pipeline_mode<synchronous>, transform_indices = @transform_33, window_bounds = array<i64: 6, 32>}, {pipeline_mode = #tpu.pipeline_mode<synchronous>, transform_indices = @transform_34, window_bounds = array<i64: 96, 192>}, {pipeline_mode = #tpu.pipeline_mode<synchronous>, transform_indices = @transform_35, window_bounds = array<i64: 32, 128>}, {pipeline_mode = #tpu.pipeline_mode<synchronous>, transform_indices = @transform_36, window_bounds = array<i64: 2, 8, 128>}]} {
    %c0 = arith.constant 0 : index
    %c0_0 = arith.constant 0 : index
    %0 = vector.load %arg10[%c0, %c0_0] : memref<2x4xf32, #tpu.memory_space<vmem>>, vector<2x4xf32>
    %c0_1 = arith.constant 0 : index
    %c0_2 = arith.constant 0 : index
    %1 = vector.load %arg11[%c0_1, %c0_2] : memref<2x4xf32, #tpu.memory_space<vmem>>, vector<2x4xf32>
    %c0_3 = arith.constant 0 : index
    %c0_4 = arith.constant 0 : index
    %2 = vector.load %arg12[%c0_3, %c0_4] : memref<2x8xf32, #tpu.memory_space<vmem>>, vector<2x8xf32>
    %c0_5 = arith.constant 0 : index
    %c0_6 = arith.constant 0 : index
    %c0_7 = arith.constant 0 : index
    %3 = vector.load %arg1[%c0_5, %c0_6, %c0_7] : memref<2x4x32xf32, #tpu.memory_space<vmem>>, vector<1x4x32xf32>
    %4 = vector.shape_cast %3 : vector<1x4x32xf32> to vector<4x32xf32>
    %c0_8 = arith.constant 0 : index
    %c0_9 = arith.constant 0 : index
    %c0_10 = arith.constant 0 : index
    %5 = vector.load %arg2[%c0_8, %c0_9, %c0_10] : memref<2x4x32xf32, #tpu.memory_space<vmem>>, vector<1x4x32xf32>
    %6 = vector.shape_cast %5 : vector<1x4x32xf32> to vector<4x32xf32>
    %c0_11 = arith.constant 0 : index
    %c0_12 = arith.constant 0 : index
    %c0_13 = arith.constant 0 : index
    %7 = vector.load %arg7[%c0_11, %c0_12, %c0_13] : memref<2x2x32xf32, #tpu.memory_space<vmem>>, vector<1x2x32xf32>
    %8 = vector.shape_cast %7 : vector<1x2x32xf32> to vector<2x32xf32>
    %9 = vector.extract_strided_slice %0 {offsets = [0, 0], sizes = [1, 4], strides = [1, 1]} : vector<2x4xf32> to vector<1x4xf32>
    %10 = tpu.iota {dimensions = array<i32: 0>} : vector<4x4xi32>
    %11 = tpu.iota {dimensions = array<i32: 1>} : vector<4x4xi32>
    %12 = arith.cmpi sge, %10, %11 : vector<4x4xi32>
    %cst = arith.constant 5.000000e-01 : f32
    %13 = vector.broadcast %cst : f32 to vector<1x4xf32>
    %14 = arith.cmpf ogt, %9, %13 : vector<1x4xf32>
    %15 = vector.broadcast %14 : vector<1x4xi1> to vector<4x4xi1>
    %16 = arith.andi %12, %15 : vector<4x4xi1>
    %cst_14 = arith.constant 0.000000e+00 : f32
    %cst_15 = arith.constant -1.000000e+09 : f32
    %17 = vector.broadcast %cst_14 : f32 to vector<4x4xf32>
    %18 = vector.broadcast %cst_15 : f32 to vector<4x4xf32>
    %19 = arith.select %16, %17, %18 : vector<4x4xi1>, vector<4x4xf32>
    %c0_16 = arith.constant 0 : index
    %c0_17 = arith.constant 0 : index
    %20 = vector.load %arg25[%c0_16, %c0_17] : memref<6x32xf32, #tpu.memory_space<vmem>>, vector<6x32xf32>
    %c0_18 = arith.constant 0 : index
    %c0_19 = arith.constant 0 : index
    %21 = vector.load %arg24[%c0_18, %c0_19] : memref<1x96xf32, #tpu.memory_space<vmem>>, vector<1x96xf32>
    %22 = arith.truncf %4 : vector<4x32xf32> to vector<4x32xbf16>
    %23 = arith.truncf %6 : vector<4x32xf32> to vector<4x32xbf16>
    %c0_20 = arith.constant 0 : index
    %c0_21 = arith.constant 0 : index
    %c0_22 = arith.constant 0 : index
    %24 = vector.load %arg17[%c0_20, %c0_21, %c0_22] : memref<2x32x192xbf16, #tpu.memory_space<vmem>>, vector<1x32x192xbf16>
    %25 = vector.shape_cast %24 : vector<1x32x192xbf16> to vector<32x192xbf16>
    %cst_23 = arith.constant dense<0.000000e+00> : vector<4x192xf32>
    %26 = tpu.matmul %22, %25, %cst_23 {dimension_numbers = #tpu.dot_dimension_numbers<[1], [0], [0], [1], [0, 0, 1, 1], [], []>} : vector<4x32xbf16>, vector<32x192xbf16>, vector<4x192xf32> -> vector<4x192xf32>
    %c1 = arith.constant 1 : index
    %c0_24 = arith.constant 0 : index
    %c0_25 = arith.constant 0 : index
    %27 = vector.load %arg17[%c1, %c0_24, %c0_25] : memref<2x32x192xbf16, #tpu.memory_space<vmem>>, vector<1x32x192xbf16>
    %28 = vector.shape_cast %27 : vector<1x32x192xbf16> to vector<32x192xbf16>
    %cst_26 = arith.constant dense<0.000000e+00> : vector<4x192xf32>
    %29 = tpu.matmul %23, %28, %cst_26 {dimension_numbers = #tpu.dot_dimension_numbers<[1], [0], [0], [1], [0, 0, 1, 1], [], []>} : vector<4x32xbf16>, vector<32x192xbf16>, vector<4x192xf32> -> vector<4x192xf32>
    %30 = arith.addf %26, %29 : vector<4x192xf32>
    %31 = vector.extract_strided_slice %30 {offsets = [0, 0], sizes = [4, 64], strides = [1, 1]} : vector<4x192xf32> to vector<4x64xf32>
    %32 = vector.extract_strided_slice %30 {offsets = [0, 64], sizes = [4, 64], strides = [1, 1]} : vector<4x192xf32> to vector<4x64xf32>
    %33 = vector.extract_strided_slice %30 {offsets = [0, 128], sizes = [4, 64], strides = [1, 1]} : vector<4x192xf32> to vector<4x64xf32>
    %34 = vector.extract_strided_slice %31 {offsets = [0, 0], sizes = [4, 32], strides = [1, 1]} : vector<4x64xf32> to vector<4x32xf32>
    %35 = vector.extract_strided_slice %32 {offsets = [0, 0], sizes = [4, 32], strides = [1, 1]} : vector<4x64xf32> to vector<4x32xf32>
    %cst_27 = arith.constant dense<0.000000e+00> : vector<4x4xf32>
    %36 = tpu.matmul %34, %35, %cst_27 {dimension_numbers = #tpu.dot_dimension_numbers<[1], [1], [0], [0], [0, 0, 1, 0], [], []>} : vector<4x32xf32>, vector<4x32xf32>, vector<4x4xf32> -> vector<4x4xf32>
    %cst_28 = arith.constant 0.176776692 : f32
    %37 = vector.broadcast %cst_28 : f32 to vector<4x4xf32>
    %38 = arith.mulf %36, %37 : vector<4x4xf32>
    %39 = arith.addf %38, %19 : vector<4x4xf32>
    %cst_29 = arith.constant dense<0xFF800000> : vector<4xf32>
    %40 = vector.multi_reduction <maximumf>, %39, %cst_29 [1] : vector<4x4xf32> to vector<4xf32>
    %41 = vector.shape_cast %40 : vector<4xf32> to vector<4x1xf32>
    %42 = vector.broadcast %41 : vector<4x1xf32> to vector<4x4xf32>
    %43 = arith.subf %39, %42 : vector<4x4xf32>
    %44 = math.exp %43 : vector<4x4xf32>
    %cst_30 = arith.constant dense<0.000000e+00> : vector<4xf32>
    %45 = vector.multi_reduction <add>, %44, %cst_30 [1] : vector<4x4xf32> to vector<4xf32>
    %46 = vector.shape_cast %45 : vector<4xf32> to vector<4x1xf32>
    %47 = vector.broadcast %46 : vector<4x1xf32> to vector<4x4xf32>
    %48 = arith.divf %44, %47 : vector<4x4xf32>
    %49 = vector.extract_strided_slice %33 {offsets = [0, 0], sizes = [4, 32], strides = [1, 1]} : vector<4x64xf32> to vector<4x32xf32>
    %cst_31 = arith.constant dense<0.000000e+00> : vector<4x32xf32>
    %50 = tpu.matmul %48, %49, %cst_31 {dimension_numbers = #tpu.dot_dimension_numbers<[1], [0], [0], [1], [0, 0, 1, 1], [], []>} : vector<4x4xf32>, vector<4x32xf32>, vector<4x32xf32> -> vector<4x32xf32>
    %51 = vector.extract_strided_slice %31 {offsets = [0, 32], sizes = [4, 32], strides = [1, 1]} : vector<4x64xf32> to vector<4x32xf32>
    %52 = vector.extract_strided_slice %32 {offsets = [0, 32], sizes = [4, 32], strides = [1, 1]} : vector<4x64xf32> to vector<4x32xf32>
    %cst_32 = arith.constant dense<0.000000e+00> : vector<4x4xf32>
    %53 = tpu.matmul %51, %52, %cst_32 {dimension_numbers = #tpu.dot_dimension_numbers<[1], [1], [0], [0], [0, 0, 1, 0], [], []>} : vector<4x32xf32>, vector<4x32xf32>, vector<4x4xf32> -> vector<4x4xf32>
    %cst_33 = arith.constant 0.176776692 : f32
    %54 = vector.broadcast %cst_33 : f32 to vector<4x4xf32>
    %55 = arith.mulf %53, %54 : vector<4x4xf32>
    %56 = arith.addf %55, %19 : vector<4x4xf32>
    %cst_34 = arith.constant dense<0xFF800000> : vector<4xf32>
    %57 = vector.multi_reduction <maximumf>, %56, %cst_34 [1] : vector<4x4xf32> to vector<4xf32>
    %58 = vector.shape_cast %57 : vector<4xf32> to vector<4x1xf32>
    %59 = vector.broadcast %58 : vector<4x1xf32> to vector<4x4xf32>
    %60 = arith.subf %56, %59 : vector<4x4xf32>
    %61 = math.exp %60 : vector<4x4xf32>
    %cst_35 = arith.constant dense<0.000000e+00> : vector<4xf32>
    %62 = vector.multi_reduction <add>, %61, %cst_35 [1] : vector<4x4xf32> to vector<4xf32>
    %63 = vector.shape_cast %62 : vector<4xf32> to vector<4x1xf32>
    %64 = vector.broadcast %63 : vector<4x1xf32> to vector<4x4xf32>
    %65 = arith.divf %61, %64 : vector<4x4xf32>
    %66 = vector.extract_strided_slice %33 {offsets = [0, 32], sizes = [4, 32], strides = [1, 1]} : vector<4x64xf32> to vector<4x32xf32>
    %cst_36 = arith.constant dense<0.000000e+00> : vector<4x32xf32>
    %67 = tpu.matmul %65, %66, %cst_36 {dimension_numbers = #tpu.dot_dimension_numbers<[1], [0], [0], [1], [0, 0, 1, 1], [], []>} : vector<4x4xf32>, vector<4x32xf32>, vector<4x32xf32> -> vector<4x32xf32>
    %68 = tpu.concatenate %50, %67 in 1 : vector<4x32xf32>, vector<4x32xf32> -> vector<4x64xf32>
    %69 = arith.addf %4, %6 : vector<4x32xf32>
    %70 = arith.truncf %68 : vector<4x64xf32> to vector<4x64xbf16>
    %c0_37 = arith.constant 0 : index
    %c0_38 = arith.constant 0 : index
    %71 = vector.load %arg18[%c0_37, %c0_38] : memref<64x32xbf16, #tpu.memory_space<vmem>>, vector<64x32xbf16>
    %cst_39 = arith.constant dense<0.000000e+00> : vector<4x32xf32>
    %72 = tpu.matmul %70, %71, %cst_39 {dimension_numbers = #tpu.dot_dimension_numbers<[1], [0], [0], [1], [0, 0, 1, 1], [], []>} : vector<4x64xbf16>, vector<64x32xbf16>, vector<4x32xf32> -> vector<4x32xf32>
    %73 = arith.addf %69, %72 : vector<4x32xf32>
    %74 = vector.extract_strided_slice %20 {offsets = [0, 0], sizes = [1, 32], strides = [1, 1]} : vector<6x32xf32> to vector<1x32xf32>
    %75 = vector.extract_strided_slice %20 {offsets = [1, 0], sizes = [1, 32], strides = [1, 1]} : vector<6x32xf32> to vector<1x32xf32>
    %cst_40 = arith.constant dense<0.000000e+00> : vector<4xf32>
    %76 = vector.multi_reduction <add>, %73, %cst_40 [1] : vector<4x32xf32> to vector<4xf32>
    %77 = vector.shape_cast %76 : vector<4xf32> to vector<4x1xf32>
    %cst_41 = arith.constant 3.200000e+01 : f32
    %78 = vector.broadcast %cst_41 : f32 to vector<4x1xf32>
    %79 = arith.divf %77, %78 : vector<4x1xf32>
    %80 = vector.broadcast %79 : vector<4x1xf32> to vector<4x32xf32>
    %81 = arith.subf %73, %80 : vector<4x32xf32>
    %82 = arith.mulf %81, %81 : vector<4x32xf32>
    %cst_42 = arith.constant dense<0.000000e+00> : vector<4xf32>
    %83 = vector.multi_reduction <add>, %82, %cst_42 [1] : vector<4x32xf32> to vector<4xf32>
    %84 = vector.shape_cast %83 : vector<4xf32> to vector<4x1xf32>
    %cst_43 = arith.constant 3.200000e+01 : f32
    %85 = vector.broadcast %cst_43 : f32 to vector<4x1xf32>
    %86 = arith.divf %84, %85 : vector<4x1xf32>
    %87 = vector.broadcast %79 : vector<4x1xf32> to vector<4x32xf32>
    %88 = arith.subf %73, %87 : vector<4x32xf32>
    %cst_44 = arith.constant 9.99999997E-7 : f32
    %89 = vector.broadcast %cst_44 : f32 to vector<4x1xf32>
    %90 = arith.addf %86, %89 : vector<4x1xf32>
    %91 = math.rsqrt %90 : vector<4x1xf32>
    %92 = vector.broadcast %91 : vector<4x1xf32> to vector<4x32xf32>
    %93 = arith.mulf %88, %92 : vector<4x32xf32>
    %94 = vector.broadcast %74 : vector<1x32xf32> to vector<4x32xf32>
    %95 = arith.mulf %93, %94 : vector<4x32xf32>
    %96 = vector.broadcast %75 : vector<1x32xf32> to vector<4x32xf32>
    %97 = arith.addf %95, %96 : vector<4x32xf32>
    %98 = arith.truncf %97 : vector<4x32xf32> to vector<4x32xbf16>
    %99 = arith.truncf %8 : vector<2x32xf32> to vector<2x32xbf16>
    %c0_45 = arith.constant 0 : index
    %c0_46 = arith.constant 0 : index
    %100 = vector.load %arg19[%c0_45, %c0_46] : memref<32x64xbf16, #tpu.memory_space<vmem>>, vector<32x64xbf16>
    %cst_47 = arith.constant dense<0.000000e+00> : vector<4x64xf32>
    %101 = tpu.matmul %98, %100, %cst_47 {dimension_numbers = #tpu.dot_dimension_numbers<[1], [0], [0], [1], [0, 0, 1, 1], [], []>} : vector<4x32xbf16>, vector<32x64xbf16>, vector<4x64xf32> -> vector<4x64xf32>
    %c0_48 = arith.constant 0 : index
    %c0_49 = arith.constant 0 : index
    %102 = vector.load %arg20[%c0_48, %c0_49] : memref<32x128xbf16, #tpu.memory_space<vmem>>, vector<32x128xbf16>
    %cst_50 = arith.constant dense<0.000000e+00> : vector<2x128xf32>
    %103 = tpu.matmul %99, %102, %cst_50 {dimension_numbers = #tpu.dot_dimension_numbers<[1], [0], [0], [1], [0, 0, 1, 1], [], []>} : vector<2x32xbf16>, vector<32x128xbf16>, vector<2x128xf32> -> vector<2x128xf32>
    %104 = vector.extract_strided_slice %103 {offsets = [0, 0], sizes = [2, 64], strides = [1, 1]} : vector<2x128xf32> to vector<2x64xf32>
    %105 = vector.extract_strided_slice %103 {offsets = [0, 64], sizes = [2, 64], strides = [1, 1]} : vector<2x128xf32> to vector<2x64xf32>
    %106 = vector.extract_strided_slice %101 {offsets = [0, 0], sizes = [4, 32], strides = [1, 1]} : vector<4x64xf32> to vector<4x32xf32>
    %107 = vector.extract_strided_slice %104 {offsets = [0, 0], sizes = [2, 32], strides = [1, 1]} : vector<2x64xf32> to vector<2x32xf32>
    %cst_51 = arith.constant dense<0.000000e+00> : vector<4x2xf32>
    %108 = tpu.matmul %106, %107, %cst_51 {dimension_numbers = #tpu.dot_dimension_numbers<[1], [1], [0], [0], [0, 0, 1, 0], [], []>} : vector<4x32xf32>, vector<2x32xf32>, vector<4x2xf32> -> vector<4x2xf32>
    %cst_52 = arith.constant 0.176776692 : f32
    %109 = vector.broadcast %cst_52 : f32 to vector<4x2xf32>
    %110 = arith.mulf %108, %109 : vector<4x2xf32>
    %cst_53 = arith.constant dense<0xFF800000> : vector<4xf32>
    %111 = vector.multi_reduction <maximumf>, %110, %cst_53 [1] : vector<4x2xf32> to vector<4xf32>
    %112 = vector.shape_cast %111 : vector<4xf32> to vector<4x1xf32>
    %113 = vector.broadcast %112 : vector<4x1xf32> to vector<4x2xf32>
    %114 = arith.subf %110, %113 : vector<4x2xf32>
    %115 = math.exp %114 : vector<4x2xf32>
    %cst_54 = arith.constant dense<0.000000e+00> : vector<4xf32>
    %116 = vector.multi_reduction <add>, %115, %cst_54 [1] : vector<4x2xf32> to vector<4xf32>
    %117 = vector.shape_cast %116 : vector<4xf32> to vector<4x1xf32>
    %118 = vector.broadcast %117 : vector<4x1xf32> to vector<4x2xf32>
    %119 = arith.divf %115, %118 : vector<4x2xf32>
    %120 = vector.extract_strided_slice %105 {offsets = [0, 0], sizes = [2, 32], strides = [1, 1]} : vector<2x64xf32> to vector<2x32xf32>
    %cst_55 = arith.constant dense<0.000000e+00> : vector<4x32xf32>
    %121 = tpu.matmul %119, %120, %cst_55 {dimension_numbers = #tpu.dot_dimension_numbers<[1], [0], [0], [1], [0, 0, 1, 1], [], []>} : vector<4x2xf32>, vector<2x32xf32>, vector<4x32xf32> -> vector<4x32xf32>
    %122 = vector.extract_strided_slice %101 {offsets = [0, 32], sizes = [4, 32], strides = [1, 1]} : vector<4x64xf32> to vector<4x32xf32>
    %123 = vector.extract_strided_slice %104 {offsets = [0, 32], sizes = [2, 32], strides = [1, 1]} : vector<2x64xf32> to vector<2x32xf32>
    %cst_56 = arith.constant dense<0.000000e+00> : vector<4x2xf32>
    %124 = tpu.matmul %122, %123, %cst_56 {dimension_numbers = #tpu.dot_dimension_numbers<[1], [1], [0], [0], [0, 0, 1, 0], [], []>} : vector<4x32xf32>, vector<2x32xf32>, vector<4x2xf32> -> vector<4x2xf32>
    %cst_57 = arith.constant 0.176776692 : f32
    %125 = vector.broadcast %cst_57 : f32 to vector<4x2xf32>
    %126 = arith.mulf %124, %125 : vector<4x2xf32>
    %cst_58 = arith.constant dense<0xFF800000> : vector<4xf32>
    %127 = vector.multi_reduction <maximumf>, %126, %cst_58 [1] : vector<4x2xf32> to vector<4xf32>
    %128 = vector.shape_cast %127 : vector<4xf32> to vector<4x1xf32>
    %129 = vector.broadcast %128 : vector<4x1xf32> to vector<4x2xf32>
    %130 = arith.subf %126, %129 : vector<4x2xf32>
    %131 = math.exp %130 : vector<4x2xf32>
    %cst_59 = arith.constant dense<0.000000e+00> : vector<4xf32>
    %132 = vector.multi_reduction <add>, %131, %cst_59 [1] : vector<4x2xf32> to vector<4xf32>
    %133 = vector.shape_cast %132 : vector<4xf32> to vector<4x1xf32>
    %134 = vector.broadcast %133 : vector<4x1xf32> to vector<4x2xf32>
    %135 = arith.divf %131, %134 : vector<4x2xf32>
    %136 = vector.extract_strided_slice %105 {offsets = [0, 32], sizes = [2, 32], strides = [1, 1]} : vector<2x64xf32> to vector<2x32xf32>
    %cst_60 = arith.constant dense<0.000000e+00> : vector<4x32xf32>
    %137 = tpu.matmul %135, %136, %cst_60 {dimension_numbers = #tpu.dot_dimension_numbers<[1], [0], [0], [1], [0, 0, 1, 1], [], []>} : vector<4x2xf32>, vector<2x32xf32>, vector<4x32xf32> -> vector<4x32xf32>
    %138 = tpu.concatenate %121, %137 in 1 : vector<4x32xf32>, vector<4x32xf32> -> vector<4x64xf32>
    %139 = arith.truncf %138 : vector<4x64xf32> to vector<4x64xbf16>
    %c0_61 = arith.constant 0 : index
    %c0_62 = arith.constant 0 : index
    %140 = vector.load %arg21[%c0_61, %c0_62] : memref<64x32xbf16, #tpu.memory_space<vmem>>, vector<64x32xbf16>
    %cst_63 = arith.constant dense<0.000000e+00> : vector<4x32xf32>
    %141 = tpu.matmul %139, %140, %cst_63 {dimension_numbers = #tpu.dot_dimension_numbers<[1], [0], [0], [1], [0, 0, 1, 1], [], []>} : vector<4x64xbf16>, vector<64x32xbf16>, vector<4x32xf32> -> vector<4x32xf32>
    %142 = arith.addf %97, %141 : vector<4x32xf32>
    %143 = vector.extract_strided_slice %20 {offsets = [2, 0], sizes = [1, 32], strides = [1, 1]} : vector<6x32xf32> to vector<1x32xf32>
    %144 = vector.extract_strided_slice %20 {offsets = [3, 0], sizes = [1, 32], strides = [1, 1]} : vector<6x32xf32> to vector<1x32xf32>
    %cst_64 = arith.constant dense<0.000000e+00> : vector<4xf32>
    %145 = vector.multi_reduction <add>, %142, %cst_64 [1] : vector<4x32xf32> to vector<4xf32>
    %146 = vector.shape_cast %145 : vector<4xf32> to vector<4x1xf32>
    %cst_65 = arith.constant 3.200000e+01 : f32
    %147 = vector.broadcast %cst_65 : f32 to vector<4x1xf32>
    %148 = arith.divf %146, %147 : vector<4x1xf32>
    %149 = vector.broadcast %148 : vector<4x1xf32> to vector<4x32xf32>
    %150 = arith.subf %142, %149 : vector<4x32xf32>
    %151 = arith.mulf %150, %150 : vector<4x32xf32>
    %cst_66 = arith.constant dense<0.000000e+00> : vector<4xf32>
    %152 = vector.multi_reduction <add>, %151, %cst_66 [1] : vector<4x32xf32> to vector<4xf32>
    %153 = vector.shape_cast %152 : vector<4xf32> to vector<4x1xf32>
    %cst_67 = arith.constant 3.200000e+01 : f32
    %154 = vector.broadcast %cst_67 : f32 to vector<4x1xf32>
    %155 = arith.divf %153, %154 : vector<4x1xf32>
    %156 = vector.broadcast %148 : vector<4x1xf32> to vector<4x32xf32>
    %157 = arith.subf %142, %156 : vector<4x32xf32>
    %cst_68 = arith.constant 9.99999997E-7 : f32
    %158 = vector.broadcast %cst_68 : f32 to vector<4x1xf32>
    %159 = arith.addf %155, %158 : vector<4x1xf32>
    %160 = math.rsqrt %159 : vector<4x1xf32>
    %161 = vector.broadcast %160 : vector<4x1xf32> to vector<4x32xf32>
    %162 = arith.mulf %157, %161 : vector<4x32xf32>
    %163 = vector.broadcast %143 : vector<1x32xf32> to vector<4x32xf32>
    %164 = arith.mulf %162, %163 : vector<4x32xf32>
    %165 = vector.broadcast %144 : vector<1x32xf32> to vector<4x32xf32>
    %166 = arith.addf %164, %165 : vector<4x32xf32>
    %167 = arith.truncf %166 : vector<4x32xf32> to vector<4x32xbf16>
    %c0_69 = arith.constant 0 : index
    %c0_70 = arith.constant 0 : index
    %168 = vector.load %arg22[%c0_69, %c0_70] : memref<32x64xbf16, #tpu.memory_space<vmem>>, vector<32x64xbf16>
    %cst_71 = arith.constant dense<0.000000e+00> : vector<4x64xf32>
    %169 = tpu.matmul %167, %168, %cst_71 {dimension_numbers = #tpu.dot_dimension_numbers<[1], [0], [0], [1], [0, 0, 1, 1], [], []>} : vector<4x32xbf16>, vector<32x64xbf16>, vector<4x64xf32> -> vector<4x64xf32>
    %170 = vector.extract_strided_slice %21 {offsets = [0, 0], sizes = [1, 64], strides = [1, 1]} : vector<1x96xf32> to vector<1x64xf32>
    %171 = vector.broadcast %170 : vector<1x64xf32> to vector<4x64xf32>
    %172 = arith.addf %169, %171 : vector<4x64xf32>
    %cst_72 = arith.constant 0.000000e+00 : f32
    %173 = vector.broadcast %cst_72 : f32 to vector<4x64xf32>
    %174 = arith.maximumf %172, %173 : vector<4x64xf32>
    %175 = arith.truncf %174 : vector<4x64xf32> to vector<4x64xbf16>
    %c0_73 = arith.constant 0 : index
    %c0_74 = arith.constant 0 : index
    %176 = vector.load %arg23[%c0_73, %c0_74] : memref<64x32xbf16, #tpu.memory_space<vmem>>, vector<64x32xbf16>
    %cst_75 = arith.constant dense<0.000000e+00> : vector<4x32xf32>
    %177 = tpu.matmul %175, %176, %cst_75 {dimension_numbers = #tpu.dot_dimension_numbers<[1], [0], [0], [1], [0, 0, 1, 1], [], []>} : vector<4x64xbf16>, vector<64x32xbf16>, vector<4x32xf32> -> vector<4x32xf32>
    %178 = vector.extract_strided_slice %21 {offsets = [0, 64], sizes = [1, 32], strides = [1, 1]} : vector<1x96xf32> to vector<1x32xf32>
    %179 = vector.broadcast %178 : vector<1x32xf32> to vector<4x32xf32>
    %180 = arith.addf %177, %179 : vector<4x32xf32>
    %181 = arith.addf %180, %166 : vector<4x32xf32>
    %182 = vector.extract_strided_slice %20 {offsets = [4, 0], sizes = [1, 32], strides = [1, 1]} : vector<6x32xf32> to vector<1x32xf32>
    %183 = vector.extract_strided_slice %20 {offsets = [5, 0], sizes = [1, 32], strides = [1, 1]} : vector<6x32xf32> to vector<1x32xf32>
    %cst_76 = arith.constant dense<0.000000e+00> : vector<4xf32>
    %184 = vector.multi_reduction <add>, %181, %cst_76 [1] : vector<4x32xf32> to vector<4xf32>
    %185 = vector.shape_cast %184 : vector<4xf32> to vector<4x1xf32>
    %cst_77 = arith.constant 3.200000e+01 : f32
    %186 = vector.broadcast %cst_77 : f32 to vector<4x1xf32>
    %187 = arith.divf %185, %186 : vector<4x1xf32>
    %188 = vector.broadcast %187 : vector<4x1xf32> to vector<4x32xf32>
    %189 = arith.subf %181, %188 : vector<4x32xf32>
    %190 = arith.mulf %189, %189 : vector<4x32xf32>
    %cst_78 = arith.constant dense<0.000000e+00> : vector<4xf32>
    %191 = vector.multi_reduction <add>, %190, %cst_78 [1] : vector<4x32xf32> to vector<4xf32>
    %192 = vector.shape_cast %191 : vector<4xf32> to vector<4x1xf32>
    %cst_79 = arith.constant 3.200000e+01 : f32
    %193 = vector.broadcast %cst_79 : f32 to vector<4x1xf32>
    %194 = arith.divf %192, %193 : vector<4x1xf32>
    %195 = vector.broadcast %187 : vector<4x1xf32> to vector<4x32xf32>
    %196 = arith.subf %181, %195 : vector<4x32xf32>
    %cst_80 = arith.constant 9.99999997E-7 : f32
    %197 = vector.broadcast %cst_80 : f32 to vector<4x1xf32>
    %198 = arith.addf %194, %197 : vector<4x1xf32>
    %199 = math.rsqrt %198 : vector<4x1xf32>
    %200 = vector.broadcast %199 : vector<4x1xf32> to vector<4x32xf32>
    %201 = arith.mulf %196, %200 : vector<4x32xf32>
    %202 = vector.broadcast %182 : vector<1x32xf32> to vector<4x32xf32>
    %203 = arith.mulf %201, %202 : vector<4x32xf32>
    %204 = vector.broadcast %183 : vector<1x32xf32> to vector<4x32xf32>
    %205 = arith.addf %203, %204 : vector<4x32xf32>
    %c0_81 = arith.constant 0 : index
    %c0_82 = arith.constant 0 : index
    %c0_83 = arith.constant 0 : index
    %206 = vector.load %arg5[%c0_81, %c0_82, %c0_83] : memref<2x8x32xf32, #tpu.memory_space<vmem>>, vector<1x8x32xf32>
    %207 = vector.shape_cast %206 : vector<1x8x32xf32> to vector<8x32xf32>
    %c0_84 = arith.constant 0 : index
    %c0_85 = arith.constant 0 : index
    %c0_86 = arith.constant 0 : index
    %208 = vector.load %arg6[%c0_84, %c0_85, %c0_86] : memref<2x8x32xf32, #tpu.memory_space<vmem>>, vector<1x8x32xf32>
    %209 = vector.shape_cast %208 : vector<1x8x32xf32> to vector<8x32xf32>
    %c0_87 = arith.constant 0 : index
    %c0_88 = arith.constant 0 : index
    %c0_89 = arith.constant 0 : index
    %210 = vector.load %arg9[%c0_87, %c0_88, %c0_89] : memref<2x4x32xf32, #tpu.memory_space<vmem>>, vector<1x4x32xf32>
    %211 = vector.shape_cast %210 : vector<1x4x32xf32> to vector<4x32xf32>
    %212 = vector.extract_strided_slice %2 {offsets = [0, 0], sizes = [1, 8], strides = [1, 1]} : vector<2x8xf32> to vector<1x8xf32>
    %213 = tpu.iota {dimensions = array<i32: 0>} : vector<8x8xi32>
    %214 = tpu.iota {dimensions = array<i32: 1>} : vector<8x8xi32>
    %215 = arith.cmpi sge, %213, %214 : vector<8x8xi32>
    %cst_90 = arith.constant 5.000000e-01 : f32
    %216 = vector.broadcast %cst_90 : f32 to vector<1x8xf32>
    %217 = arith.cmpf ogt, %212, %216 : vector<1x8xf32>
    %218 = vector.broadcast %217 : vector<1x8xi1> to vector<8x8xi1>
    %219 = arith.andi %215, %218 : vector<8x8xi1>
    %cst_91 = arith.constant 0.000000e+00 : f32
    %cst_92 = arith.constant -1.000000e+09 : f32
    %220 = vector.broadcast %cst_91 : f32 to vector<8x8xf32>
    %221 = vector.broadcast %cst_92 : f32 to vector<8x8xf32>
    %222 = arith.select %219, %220, %221 : vector<8x8xi1>, vector<8x8xf32>
    %c0_93 = arith.constant 0 : index
    %c0_94 = arith.constant 0 : index
    %223 = vector.load %arg34[%c0_93, %c0_94] : memref<6x32xf32, #tpu.memory_space<vmem>>, vector<6x32xf32>
    %c0_95 = arith.constant 0 : index
    %c0_96 = arith.constant 0 : index
    %224 = vector.load %arg33[%c0_95, %c0_96] : memref<1x96xf32, #tpu.memory_space<vmem>>, vector<1x96xf32>
    %225 = arith.truncf %207 : vector<8x32xf32> to vector<8x32xbf16>
    %226 = arith.truncf %209 : vector<8x32xf32> to vector<8x32xbf16>
    %c0_97 = arith.constant 0 : index
    %c0_98 = arith.constant 0 : index
    %c0_99 = arith.constant 0 : index
    %227 = vector.load %arg26[%c0_97, %c0_98, %c0_99] : memref<2x32x192xbf16, #tpu.memory_space<vmem>>, vector<1x32x192xbf16>
    %228 = vector.shape_cast %227 : vector<1x32x192xbf16> to vector<32x192xbf16>
    %cst_100 = arith.constant dense<0.000000e+00> : vector<8x192xf32>
    %229 = tpu.matmul %225, %228, %cst_100 {dimension_numbers = #tpu.dot_dimension_numbers<[1], [0], [0], [1], [0, 0, 1, 1], [], []>} : vector<8x32xbf16>, vector<32x192xbf16>, vector<8x192xf32> -> vector<8x192xf32>
    %c1_101 = arith.constant 1 : index
    %c0_102 = arith.constant 0 : index
    %c0_103 = arith.constant 0 : index
    %230 = vector.load %arg26[%c1_101, %c0_102, %c0_103] : memref<2x32x192xbf16, #tpu.memory_space<vmem>>, vector<1x32x192xbf16>
    %231 = vector.shape_cast %230 : vector<1x32x192xbf16> to vector<32x192xbf16>
    %cst_104 = arith.constant dense<0.000000e+00> : vector<8x192xf32>
    %232 = tpu.matmul %226, %231, %cst_104 {dimension_numbers = #tpu.dot_dimension_numbers<[1], [0], [0], [1], [0, 0, 1, 1], [], []>} : vector<8x32xbf16>, vector<32x192xbf16>, vector<8x192xf32> -> vector<8x192xf32>
    %233 = arith.addf %229, %232 : vector<8x192xf32>
    %234 = vector.extract_strided_slice %233 {offsets = [0, 0], sizes = [8, 64], strides = [1, 1]} : vector<8x192xf32> to vector<8x64xf32>
    %235 = vector.extract_strided_slice %233 {offsets = [0, 64], sizes = [8, 64], strides = [1, 1]} : vector<8x192xf32> to vector<8x64xf32>
    %236 = vector.extract_strided_slice %233 {offsets = [0, 128], sizes = [8, 64], strides = [1, 1]} : vector<8x192xf32> to vector<8x64xf32>
    %237 = vector.extract_strided_slice %234 {offsets = [0, 0], sizes = [8, 32], strides = [1, 1]} : vector<8x64xf32> to vector<8x32xf32>
    %238 = vector.extract_strided_slice %235 {offsets = [0, 0], sizes = [8, 32], strides = [1, 1]} : vector<8x64xf32> to vector<8x32xf32>
    %cst_105 = arith.constant dense<0.000000e+00> : vector<8x8xf32>
    %239 = tpu.matmul %237, %238, %cst_105 {dimension_numbers = #tpu.dot_dimension_numbers<[1], [1], [0], [0], [0, 0, 1, 0], [], []>} : vector<8x32xf32>, vector<8x32xf32>, vector<8x8xf32> -> vector<8x8xf32>
    %cst_106 = arith.constant 0.176776692 : f32
    %240 = vector.broadcast %cst_106 : f32 to vector<8x8xf32>
    %241 = arith.mulf %239, %240 : vector<8x8xf32>
    %242 = arith.addf %241, %222 : vector<8x8xf32>
    %cst_107 = arith.constant dense<0xFF800000> : vector<8xf32>
    %243 = vector.multi_reduction <maximumf>, %242, %cst_107 [1] : vector<8x8xf32> to vector<8xf32>
    %244 = vector.shape_cast %243 : vector<8xf32> to vector<8x1xf32>
    %245 = vector.broadcast %244 : vector<8x1xf32> to vector<8x8xf32>
    %246 = arith.subf %242, %245 : vector<8x8xf32>
    %247 = math.exp %246 : vector<8x8xf32>
    %cst_108 = arith.constant dense<0.000000e+00> : vector<8xf32>
    %248 = vector.multi_reduction <add>, %247, %cst_108 [1] : vector<8x8xf32> to vector<8xf32>
    %249 = vector.shape_cast %248 : vector<8xf32> to vector<8x1xf32>
    %250 = vector.broadcast %249 : vector<8x1xf32> to vector<8x8xf32>
    %251 = arith.divf %247, %250 : vector<8x8xf32>
    %252 = vector.extract_strided_slice %236 {offsets = [0, 0], sizes = [8, 32], strides = [1, 1]} : vector<8x64xf32> to vector<8x32xf32>
    %cst_109 = arith.constant dense<0.000000e+00> : vector<8x32xf32>
    %253 = tpu.matmul %251, %252, %cst_109 {dimension_numbers = #tpu.dot_dimension_numbers<[1], [0], [0], [1], [0, 0, 1, 1], [], []>} : vector<8x8xf32>, vector<8x32xf32>, vector<8x32xf32> -> vector<8x32xf32>
    %254 = vector.extract_strided_slice %234 {offsets = [0, 32], sizes = [8, 32], strides = [1, 1]} : vector<8x64xf32> to vector<8x32xf32>
    %255 = vector.extract_strided_slice %235 {offsets = [0, 32], sizes = [8, 32], strides = [1, 1]} : vector<8x64xf32> to vector<8x32xf32>
    %cst_110 = arith.constant dense<0.000000e+00> : vector<8x8xf32>
    %256 = tpu.matmul %254, %255, %cst_110 {dimension_numbers = #tpu.dot_dimension_numbers<[1], [1], [0], [0], [0, 0, 1, 0], [], []>} : vector<8x32xf32>, vector<8x32xf32>, vector<8x8xf32> -> vector<8x8xf32>
    %cst_111 = arith.constant 0.176776692 : f32
    %257 = vector.broadcast %cst_111 : f32 to vector<8x8xf32>
    %258 = arith.mulf %256, %257 : vector<8x8xf32>
    %259 = arith.addf %258, %222 : vector<8x8xf32>
    %cst_112 = arith.constant dense<0xFF800000> : vector<8xf32>
    %260 = vector.multi_reduction <maximumf>, %259, %cst_112 [1] : vector<8x8xf32> to vector<8xf32>
    %261 = vector.shape_cast %260 : vector<8xf32> to vector<8x1xf32>
    %262 = vector.broadcast %261 : vector<8x1xf32> to vector<8x8xf32>
    %263 = arith.subf %259, %262 : vector<8x8xf32>
    %264 = math.exp %263 : vector<8x8xf32>
    %cst_113 = arith.constant dense<0.000000e+00> : vector<8xf32>
    %265 = vector.multi_reduction <add>, %264, %cst_113 [1] : vector<8x8xf32> to vector<8xf32>
    %266 = vector.shape_cast %265 : vector<8xf32> to vector<8x1xf32>
    %267 = vector.broadcast %266 : vector<8x1xf32> to vector<8x8xf32>
    %268 = arith.divf %264, %267 : vector<8x8xf32>
    %269 = vector.extract_strided_slice %236 {offsets = [0, 32], sizes = [8, 32], strides = [1, 1]} : vector<8x64xf32> to vector<8x32xf32>
    %cst_114 = arith.constant dense<0.000000e+00> : vector<8x32xf32>
    %270 = tpu.matmul %268, %269, %cst_114 {dimension_numbers = #tpu.dot_dimension_numbers<[1], [0], [0], [1], [0, 0, 1, 1], [], []>} : vector<8x8xf32>, vector<8x32xf32>, vector<8x32xf32> -> vector<8x32xf32>
    %271 = tpu.concatenate %253, %270 in 1 : vector<8x32xf32>, vector<8x32xf32> -> vector<8x64xf32>
    %272 = arith.addf %207, %209 : vector<8x32xf32>
    %273 = arith.truncf %271 : vector<8x64xf32> to vector<8x64xbf16>
    %c0_115 = arith.constant 0 : index
    %c0_116 = arith.constant 0 : index
    %274 = vector.load %arg27[%c0_115, %c0_116] : memref<64x32xbf16, #tpu.memory_space<vmem>>, vector<64x32xbf16>
    %cst_117 = arith.constant dense<0.000000e+00> : vector<8x32xf32>
    %275 = tpu.matmul %273, %274, %cst_117 {dimension_numbers = #tpu.dot_dimension_numbers<[1], [0], [0], [1], [0, 0, 1, 1], [], []>} : vector<8x64xbf16>, vector<64x32xbf16>, vector<8x32xf32> -> vector<8x32xf32>
    %276 = arith.addf %272, %275 : vector<8x32xf32>
    %277 = vector.extract_strided_slice %223 {offsets = [0, 0], sizes = [1, 32], strides = [1, 1]} : vector<6x32xf32> to vector<1x32xf32>
    %278 = vector.extract_strided_slice %223 {offsets = [1, 0], sizes = [1, 32], strides = [1, 1]} : vector<6x32xf32> to vector<1x32xf32>
    %cst_118 = arith.constant dense<0.000000e+00> : vector<8xf32>
    %279 = vector.multi_reduction <add>, %276, %cst_118 [1] : vector<8x32xf32> to vector<8xf32>
    %280 = vector.shape_cast %279 : vector<8xf32> to vector<8x1xf32>
    %cst_119 = arith.constant 3.200000e+01 : f32
    %281 = vector.broadcast %cst_119 : f32 to vector<8x1xf32>
    %282 = arith.divf %280, %281 : vector<8x1xf32>
    %283 = vector.broadcast %282 : vector<8x1xf32> to vector<8x32xf32>
    %284 = arith.subf %276, %283 : vector<8x32xf32>
    %285 = arith.mulf %284, %284 : vector<8x32xf32>
    %cst_120 = arith.constant dense<0.000000e+00> : vector<8xf32>
    %286 = vector.multi_reduction <add>, %285, %cst_120 [1] : vector<8x32xf32> to vector<8xf32>
    %287 = vector.shape_cast %286 : vector<8xf32> to vector<8x1xf32>
    %cst_121 = arith.constant 3.200000e+01 : f32
    %288 = vector.broadcast %cst_121 : f32 to vector<8x1xf32>
    %289 = arith.divf %287, %288 : vector<8x1xf32>
    %290 = vector.broadcast %282 : vector<8x1xf32> to vector<8x32xf32>
    %291 = arith.subf %276, %290 : vector<8x32xf32>
    %cst_122 = arith.constant 9.99999997E-7 : f32
    %292 = vector.broadcast %cst_122 : f32 to vector<8x1xf32>
    %293 = arith.addf %289, %292 : vector<8x1xf32>
    %294 = math.rsqrt %293 : vector<8x1xf32>
    %295 = vector.broadcast %294 : vector<8x1xf32> to vector<8x32xf32>
    %296 = arith.mulf %291, %295 : vector<8x32xf32>
    %297 = vector.broadcast %277 : vector<1x32xf32> to vector<8x32xf32>
    %298 = arith.mulf %296, %297 : vector<8x32xf32>
    %299 = vector.broadcast %278 : vector<1x32xf32> to vector<8x32xf32>
    %300 = arith.addf %298, %299 : vector<8x32xf32>
    %301 = arith.truncf %300 : vector<8x32xf32> to vector<8x32xbf16>
    %302 = arith.truncf %211 : vector<4x32xf32> to vector<4x32xbf16>
    %c0_123 = arith.constant 0 : index
    %c0_124 = arith.constant 0 : index
    %303 = vector.load %arg28[%c0_123, %c0_124] : memref<32x64xbf16, #tpu.memory_space<vmem>>, vector<32x64xbf16>
    %cst_125 = arith.constant dense<0.000000e+00> : vector<8x64xf32>
    %304 = tpu.matmul %301, %303, %cst_125 {dimension_numbers = #tpu.dot_dimension_numbers<[1], [0], [0], [1], [0, 0, 1, 1], [], []>} : vector<8x32xbf16>, vector<32x64xbf16>, vector<8x64xf32> -> vector<8x64xf32>
    %c0_126 = arith.constant 0 : index
    %c0_127 = arith.constant 0 : index
    %305 = vector.load %arg29[%c0_126, %c0_127] : memref<32x128xbf16, #tpu.memory_space<vmem>>, vector<32x128xbf16>
    %cst_128 = arith.constant dense<0.000000e+00> : vector<4x128xf32>
    %306 = tpu.matmul %302, %305, %cst_128 {dimension_numbers = #tpu.dot_dimension_numbers<[1], [0], [0], [1], [0, 0, 1, 1], [], []>} : vector<4x32xbf16>, vector<32x128xbf16>, vector<4x128xf32> -> vector<4x128xf32>
    %307 = vector.extract_strided_slice %306 {offsets = [0, 0], sizes = [4, 64], strides = [1, 1]} : vector<4x128xf32> to vector<4x64xf32>
    %308 = vector.extract_strided_slice %306 {offsets = [0, 64], sizes = [4, 64], strides = [1, 1]} : vector<4x128xf32> to vector<4x64xf32>
    %309 = vector.extract_strided_slice %304 {offsets = [0, 0], sizes = [8, 32], strides = [1, 1]} : vector<8x64xf32> to vector<8x32xf32>
    %310 = vector.extract_strided_slice %307 {offsets = [0, 0], sizes = [4, 32], strides = [1, 1]} : vector<4x64xf32> to vector<4x32xf32>
    %cst_129 = arith.constant dense<0.000000e+00> : vector<8x4xf32>
    %311 = tpu.matmul %309, %310, %cst_129 {dimension_numbers = #tpu.dot_dimension_numbers<[1], [1], [0], [0], [0, 0, 1, 0], [], []>} : vector<8x32xf32>, vector<4x32xf32>, vector<8x4xf32> -> vector<8x4xf32>
    %cst_130 = arith.constant 0.176776692 : f32
    %312 = vector.broadcast %cst_130 : f32 to vector<8x4xf32>
    %313 = arith.mulf %311, %312 : vector<8x4xf32>
    %cst_131 = arith.constant dense<0xFF800000> : vector<8xf32>
    %314 = vector.multi_reduction <maximumf>, %313, %cst_131 [1] : vector<8x4xf32> to vector<8xf32>
    %315 = vector.shape_cast %314 : vector<8xf32> to vector<8x1xf32>
    %316 = vector.broadcast %315 : vector<8x1xf32> to vector<8x4xf32>
    %317 = arith.subf %313, %316 : vector<8x4xf32>
    %318 = math.exp %317 : vector<8x4xf32>
    %cst_132 = arith.constant dense<0.000000e+00> : vector<8xf32>
    %319 = vector.multi_reduction <add>, %318, %cst_132 [1] : vector<8x4xf32> to vector<8xf32>
    %320 = vector.shape_cast %319 : vector<8xf32> to vector<8x1xf32>
    %321 = vector.broadcast %320 : vector<8x1xf32> to vector<8x4xf32>
    %322 = arith.divf %318, %321 : vector<8x4xf32>
    %323 = vector.extract_strided_slice %308 {offsets = [0, 0], sizes = [4, 32], strides = [1, 1]} : vector<4x64xf32> to vector<4x32xf32>
    %cst_133 = arith.constant dense<0.000000e+00> : vector<8x32xf32>
    %324 = tpu.matmul %322, %323, %cst_133 {dimension_numbers = #tpu.dot_dimension_numbers<[1], [0], [0], [1], [0, 0, 1, 1], [], []>} : vector<8x4xf32>, vector<4x32xf32>, vector<8x32xf32> -> vector<8x32xf32>
    %325 = vector.extract_strided_slice %304 {offsets = [0, 32], sizes = [8, 32], strides = [1, 1]} : vector<8x64xf32> to vector<8x32xf32>
    %326 = vector.extract_strided_slice %307 {offsets = [0, 32], sizes = [4, 32], strides = [1, 1]} : vector<4x64xf32> to vector<4x32xf32>
    %cst_134 = arith.constant dense<0.000000e+00> : vector<8x4xf32>
    %327 = tpu.matmul %325, %326, %cst_134 {dimension_numbers = #tpu.dot_dimension_numbers<[1], [1], [0], [0], [0, 0, 1, 0], [], []>} : vector<8x32xf32>, vector<4x32xf32>, vector<8x4xf32> -> vector<8x4xf32>
    %cst_135 = arith.constant 0.176776692 : f32
    %328 = vector.broadcast %cst_135 : f32 to vector<8x4xf32>
    %329 = arith.mulf %327, %328 : vector<8x4xf32>
    %cst_136 = arith.constant dense<0xFF800000> : vector<8xf32>
    %330 = vector.multi_reduction <maximumf>, %329, %cst_136 [1] : vector<8x4xf32> to vector<8xf32>
    %331 = vector.shape_cast %330 : vector<8xf32> to vector<8x1xf32>
    %332 = vector.broadcast %331 : vector<8x1xf32> to vector<8x4xf32>
    %333 = arith.subf %329, %332 : vector<8x4xf32>
    %334 = math.exp %333 : vector<8x4xf32>
    %cst_137 = arith.constant dense<0.000000e+00> : vector<8xf32>
    %335 = vector.multi_reduction <add>, %334, %cst_137 [1] : vector<8x4xf32> to vector<8xf32>
    %336 = vector.shape_cast %335 : vector<8xf32> to vector<8x1xf32>
    %337 = vector.broadcast %336 : vector<8x1xf32> to vector<8x4xf32>
    %338 = arith.divf %334, %337 : vector<8x4xf32>
    %339 = vector.extract_strided_slice %308 {offsets = [0, 32], sizes = [4, 32], strides = [1, 1]} : vector<4x64xf32> to vector<4x32xf32>
    %cst_138 = arith.constant dense<0.000000e+00> : vector<8x32xf32>
    %340 = tpu.matmul %338, %339, %cst_138 {dimension_numbers = #tpu.dot_dimension_numbers<[1], [0], [0], [1], [0, 0, 1, 1], [], []>} : vector<8x4xf32>, vector<4x32xf32>, vector<8x32xf32> -> vector<8x32xf32>
    %341 = tpu.concatenate %324, %340 in 1 : vector<8x32xf32>, vector<8x32xf32> -> vector<8x64xf32>
    %342 = arith.truncf %341 : vector<8x64xf32> to vector<8x64xbf16>
    %c0_139 = arith.constant 0 : index
    %c0_140 = arith.constant 0 : index
    %343 = vector.load %arg30[%c0_139, %c0_140] : memref<64x32xbf16, #tpu.memory_space<vmem>>, vector<64x32xbf16>
    %cst_141 = arith.constant dense<0.000000e+00> : vector<8x32xf32>
    %344 = tpu.matmul %342, %343, %cst_141 {dimension_numbers = #tpu.dot_dimension_numbers<[1], [0], [0], [1], [0, 0, 1, 1], [], []>} : vector<8x64xbf16>, vector<64x32xbf16>, vector<8x32xf32> -> vector<8x32xf32>
    %345 = arith.addf %300, %344 : vector<8x32xf32>
    %346 = vector.extract_strided_slice %223 {offsets = [2, 0], sizes = [1, 32], strides = [1, 1]} : vector<6x32xf32> to vector<1x32xf32>
    %347 = vector.extract_strided_slice %223 {offsets = [3, 0], sizes = [1, 32], strides = [1, 1]} : vector<6x32xf32> to vector<1x32xf32>
    %cst_142 = arith.constant dense<0.000000e+00> : vector<8xf32>
    %348 = vector.multi_reduction <add>, %345, %cst_142 [1] : vector<8x32xf32> to vector<8xf32>
    %349 = vector.shape_cast %348 : vector<8xf32> to vector<8x1xf32>
    %cst_143 = arith.constant 3.200000e+01 : f32
    %350 = vector.broadcast %cst_143 : f32 to vector<8x1xf32>
    %351 = arith.divf %349, %350 : vector<8x1xf32>
    %352 = vector.broadcast %351 : vector<8x1xf32> to vector<8x32xf32>
    %353 = arith.subf %345, %352 : vector<8x32xf32>
    %354 = arith.mulf %353, %353 : vector<8x32xf32>
    %cst_144 = arith.constant dense<0.000000e+00> : vector<8xf32>
    %355 = vector.multi_reduction <add>, %354, %cst_144 [1] : vector<8x32xf32> to vector<8xf32>
    %356 = vector.shape_cast %355 : vector<8xf32> to vector<8x1xf32>
    %cst_145 = arith.constant 3.200000e+01 : f32
    %357 = vector.broadcast %cst_145 : f32 to vector<8x1xf32>
    %358 = arith.divf %356, %357 : vector<8x1xf32>
    %359 = vector.broadcast %351 : vector<8x1xf32> to vector<8x32xf32>
    %360 = arith.subf %345, %359 : vector<8x32xf32>
    %cst_146 = arith.constant 9.99999997E-7 : f32
    %361 = vector.broadcast %cst_146 : f32 to vector<8x1xf32>
    %362 = arith.addf %358, %361 : vector<8x1xf32>
    %363 = math.rsqrt %362 : vector<8x1xf32>
    %364 = vector.broadcast %363 : vector<8x1xf32> to vector<8x32xf32>
    %365 = arith.mulf %360, %364 : vector<8x32xf32>
    %366 = vector.broadcast %346 : vector<1x32xf32> to vector<8x32xf32>
    %367 = arith.mulf %365, %366 : vector<8x32xf32>
    %368 = vector.broadcast %347 : vector<1x32xf32> to vector<8x32xf32>
    %369 = arith.addf %367, %368 : vector<8x32xf32>
    %370 = arith.truncf %369 : vector<8x32xf32> to vector<8x32xbf16>
    %c0_147 = arith.constant 0 : index
    %c0_148 = arith.constant 0 : index
    %371 = vector.load %arg31[%c0_147, %c0_148] : memref<32x64xbf16, #tpu.memory_space<vmem>>, vector<32x64xbf16>
    %cst_149 = arith.constant dense<0.000000e+00> : vector<8x64xf32>
    %372 = tpu.matmul %370, %371, %cst_149 {dimension_numbers = #tpu.dot_dimension_numbers<[1], [0], [0], [1], [0, 0, 1, 1], [], []>} : vector<8x32xbf16>, vector<32x64xbf16>, vector<8x64xf32> -> vector<8x64xf32>
    %373 = vector.extract_strided_slice %224 {offsets = [0, 0], sizes = [1, 64], strides = [1, 1]} : vector<1x96xf32> to vector<1x64xf32>
    %374 = vector.broadcast %373 : vector<1x64xf32> to vector<8x64xf32>
    %375 = arith.addf %372, %374 : vector<8x64xf32>
    %cst_150 = arith.constant 0.000000e+00 : f32
    %376 = vector.broadcast %cst_150 : f32 to vector<8x64xf32>
    %377 = arith.maximumf %375, %376 : vector<8x64xf32>
    %378 = arith.truncf %377 : vector<8x64xf32> to vector<8x64xbf16>
    %c0_151 = arith.constant 0 : index
    %c0_152 = arith.constant 0 : index
    %379 = vector.load %arg32[%c0_151, %c0_152] : memref<64x32xbf16, #tpu.memory_space<vmem>>, vector<64x32xbf16>
    %cst_153 = arith.constant dense<0.000000e+00> : vector<8x32xf32>
    %380 = tpu.matmul %378, %379, %cst_153 {dimension_numbers = #tpu.dot_dimension_numbers<[1], [0], [0], [1], [0, 0, 1, 1], [], []>} : vector<8x64xbf16>, vector<64x32xbf16>, vector<8x32xf32> -> vector<8x32xf32>
    %381 = vector.extract_strided_slice %224 {offsets = [0, 64], sizes = [1, 32], strides = [1, 1]} : vector<1x96xf32> to vector<1x32xf32>
    %382 = vector.broadcast %381 : vector<1x32xf32> to vector<8x32xf32>
    %383 = arith.addf %380, %382 : vector<8x32xf32>
    %384 = arith.addf %383, %369 : vector<8x32xf32>
    %385 = vector.extract_strided_slice %223 {offsets = [4, 0], sizes = [1, 32], strides = [1, 1]} : vector<6x32xf32> to vector<1x32xf32>
    %386 = vector.extract_strided_slice %223 {offsets = [5, 0], sizes = [1, 32], strides = [1, 1]} : vector<6x32xf32> to vector<1x32xf32>
    %cst_154 = arith.constant dense<0.000000e+00> : vector<8xf32>
    %387 = vector.multi_reduction <add>, %384, %cst_154 [1] : vector<8x32xf32> to vector<8xf32>
    %388 = vector.shape_cast %387 : vector<8xf32> to vector<8x1xf32>
    %cst_155 = arith.constant 3.200000e+01 : f32
    %389 = vector.broadcast %cst_155 : f32 to vector<8x1xf32>
    %390 = arith.divf %388, %389 : vector<8x1xf32>
    %391 = vector.broadcast %390 : vector<8x1xf32> to vector<8x32xf32>
    %392 = arith.subf %384, %391 : vector<8x32xf32>
    %393 = arith.mulf %392, %392 : vector<8x32xf32>
    %cst_156 = arith.constant dense<0.000000e+00> : vector<8xf32>
    %394 = vector.multi_reduction <add>, %393, %cst_156 [1] : vector<8x32xf32> to vector<8xf32>
    %395 = vector.shape_cast %394 : vector<8xf32> to vector<8x1xf32>
    %cst_157 = arith.constant 3.200000e+01 : f32
    %396 = vector.broadcast %cst_157 : f32 to vector<8x1xf32>
    %397 = arith.divf %395, %396 : vector<8x1xf32>
    %398 = vector.broadcast %390 : vector<8x1xf32> to vector<8x32xf32>
    %399 = arith.subf %384, %398 : vector<8x32xf32>
    %cst_158 = arith.constant 9.99999997E-7 : f32
    %400 = vector.broadcast %cst_158 : f32 to vector<8x1xf32>
    %401 = arith.addf %397, %400 : vector<8x1xf32>
    %402 = math.rsqrt %401 : vector<8x1xf32>
    %403 = vector.broadcast %402 : vector<8x1xf32> to vector<8x32xf32>
    %404 = arith.mulf %399, %403 : vector<8x32xf32>
    %405 = vector.broadcast %385 : vector<1x32xf32> to vector<8x32xf32>
    %406 = arith.mulf %404, %405 : vector<8x32xf32>
    %407 = vector.broadcast %386 : vector<1x32xf32> to vector<8x32xf32>
    %408 = arith.addf %406, %407 : vector<8x32xf32>
    %c0_159 = arith.constant 0 : index
    %c0_160 = arith.constant 0 : index
    %409 = vector.load %arg14[%c0_159, %c0_160] : memref<8x4xf32, #tpu.memory_space<vmem>>, vector<8x4xf32>
    %cst_161 = arith.constant dense<0.000000e+00> : vector<8x32xf32>
    %410 = tpu.matmul %409, %205, %cst_161 {dimension_numbers = #tpu.dot_dimension_numbers<[1], [0], [0], [1], [0, 0, 1, 1], [], []>} : vector<8x4xf32>, vector<4x32xf32>, vector<8x32xf32> -> vector<8x32xf32>
    %c0_162 = arith.constant 0 : index
    %c0_163 = arith.constant 0 : index
    %c0_164 = arith.constant 0 : index
    %411 = vector.load %arg3[%c0_162, %c0_163, %c0_164] : memref<2x4x32xf32, #tpu.memory_space<vmem>>, vector<1x4x32xf32>
    %412 = vector.shape_cast %411 : vector<1x4x32xf32> to vector<4x32xf32>
    %c0_165 = arith.constant 0 : index
    %c0_166 = arith.constant 0 : index
    %c0_167 = arith.constant 0 : index
    %413 = vector.load %arg4[%c0_165, %c0_166, %c0_167] : memref<2x4x32xf32, #tpu.memory_space<vmem>>, vector<1x4x32xf32>
    %414 = vector.shape_cast %413 : vector<1x4x32xf32> to vector<4x32xf32>
    %c0_168 = arith.constant 0 : index
    %c0_169 = arith.constant 0 : index
    %c0_170 = arith.constant 0 : index
    %415 = vector.load %arg8[%c0_168, %c0_169, %c0_170] : memref<2x2x32xf32, #tpu.memory_space<vmem>>, vector<1x2x32xf32>
    %416 = vector.shape_cast %415 : vector<1x2x32xf32> to vector<2x32xf32>
    %417 = vector.extract_strided_slice %1 {offsets = [0, 0], sizes = [1, 4], strides = [1, 1]} : vector<2x4xf32> to vector<1x4xf32>
    %418 = tpu.iota {dimensions = array<i32: 0>} : vector<4x4xi32>
    %419 = tpu.iota {dimensions = array<i32: 1>} : vector<4x4xi32>
    %420 = arith.cmpi sge, %418, %419 : vector<4x4xi32>
    %cst_171 = arith.constant 5.000000e-01 : f32
    %421 = vector.broadcast %cst_171 : f32 to vector<1x4xf32>
    %422 = arith.cmpf ogt, %417, %421 : vector<1x4xf32>
    %423 = vector.broadcast %422 : vector<1x4xi1> to vector<4x4xi1>
    %424 = arith.andi %420, %423 : vector<4x4xi1>
    %cst_172 = arith.constant 0.000000e+00 : f32
    %cst_173 = arith.constant -1.000000e+09 : f32
    %425 = vector.broadcast %cst_172 : f32 to vector<4x4xf32>
    %426 = vector.broadcast %cst_173 : f32 to vector<4x4xf32>
    %427 = arith.select %424, %425, %426 : vector<4x4xi1>, vector<4x4xf32>
    %c0_174 = arith.constant 0 : index
    %c0_175 = arith.constant 0 : index
    %428 = vector.load %arg25[%c0_174, %c0_175] : memref<6x32xf32, #tpu.memory_space<vmem>>, vector<6x32xf32>
    %c0_176 = arith.constant 0 : index
    %c0_177 = arith.constant 0 : index
    %429 = vector.load %arg24[%c0_176, %c0_177] : memref<1x96xf32, #tpu.memory_space<vmem>>, vector<1x96xf32>
    %430 = arith.truncf %412 : vector<4x32xf32> to vector<4x32xbf16>
    %431 = arith.truncf %414 : vector<4x32xf32> to vector<4x32xbf16>
    %c0_178 = arith.constant 0 : index
    %c0_179 = arith.constant 0 : index
    %c0_180 = arith.constant 0 : index
    %432 = vector.load %arg17[%c0_178, %c0_179, %c0_180] : memref<2x32x192xbf16, #tpu.memory_space<vmem>>, vector<1x32x192xbf16>
    %433 = vector.shape_cast %432 : vector<1x32x192xbf16> to vector<32x192xbf16>
    %cst_181 = arith.constant dense<0.000000e+00> : vector<4x192xf32>
    %434 = tpu.matmul %430, %433, %cst_181 {dimension_numbers = #tpu.dot_dimension_numbers<[1], [0], [0], [1], [0, 0, 1, 1], [], []>} : vector<4x32xbf16>, vector<32x192xbf16>, vector<4x192xf32> -> vector<4x192xf32>
    %c1_182 = arith.constant 1 : index
    %c0_183 = arith.constant 0 : index
    %c0_184 = arith.constant 0 : index
    %435 = vector.load %arg17[%c1_182, %c0_183, %c0_184] : memref<2x32x192xbf16, #tpu.memory_space<vmem>>, vector<1x32x192xbf16>
    %436 = vector.shape_cast %435 : vector<1x32x192xbf16> to vector<32x192xbf16>
    %cst_185 = arith.constant dense<0.000000e+00> : vector<4x192xf32>
    %437 = tpu.matmul %431, %436, %cst_185 {dimension_numbers = #tpu.dot_dimension_numbers<[1], [0], [0], [1], [0, 0, 1, 1], [], []>} : vector<4x32xbf16>, vector<32x192xbf16>, vector<4x192xf32> -> vector<4x192xf32>
    %438 = arith.addf %434, %437 : vector<4x192xf32>
    %439 = vector.extract_strided_slice %438 {offsets = [0, 0], sizes = [4, 64], strides = [1, 1]} : vector<4x192xf32> to vector<4x64xf32>
    %440 = vector.extract_strided_slice %438 {offsets = [0, 64], sizes = [4, 64], strides = [1, 1]} : vector<4x192xf32> to vector<4x64xf32>
    %441 = vector.extract_strided_slice %438 {offsets = [0, 128], sizes = [4, 64], strides = [1, 1]} : vector<4x192xf32> to vector<4x64xf32>
    %442 = vector.extract_strided_slice %439 {offsets = [0, 0], sizes = [4, 32], strides = [1, 1]} : vector<4x64xf32> to vector<4x32xf32>
    %443 = vector.extract_strided_slice %440 {offsets = [0, 0], sizes = [4, 32], strides = [1, 1]} : vector<4x64xf32> to vector<4x32xf32>
    %cst_186 = arith.constant dense<0.000000e+00> : vector<4x4xf32>
    %444 = tpu.matmul %442, %443, %cst_186 {dimension_numbers = #tpu.dot_dimension_numbers<[1], [1], [0], [0], [0, 0, 1, 0], [], []>} : vector<4x32xf32>, vector<4x32xf32>, vector<4x4xf32> -> vector<4x4xf32>
    %cst_187 = arith.constant 0.176776692 : f32
    %445 = vector.broadcast %cst_187 : f32 to vector<4x4xf32>
    %446 = arith.mulf %444, %445 : vector<4x4xf32>
    %447 = arith.addf %446, %427 : vector<4x4xf32>
    %cst_188 = arith.constant dense<0xFF800000> : vector<4xf32>
    %448 = vector.multi_reduction <maximumf>, %447, %cst_188 [1] : vector<4x4xf32> to vector<4xf32>
    %449 = vector.shape_cast %448 : vector<4xf32> to vector<4x1xf32>
    %450 = vector.broadcast %449 : vector<4x1xf32> to vector<4x4xf32>
    %451 = arith.subf %447, %450 : vector<4x4xf32>
    %452 = math.exp %451 : vector<4x4xf32>
    %cst_189 = arith.constant dense<0.000000e+00> : vector<4xf32>
    %453 = vector.multi_reduction <add>, %452, %cst_189 [1] : vector<4x4xf32> to vector<4xf32>
    %454 = vector.shape_cast %453 : vector<4xf32> to vector<4x1xf32>
    %455 = vector.broadcast %454 : vector<4x1xf32> to vector<4x4xf32>
    %456 = arith.divf %452, %455 : vector<4x4xf32>
    %457 = vector.extract_strided_slice %441 {offsets = [0, 0], sizes = [4, 32], strides = [1, 1]} : vector<4x64xf32> to vector<4x32xf32>
    %cst_190 = arith.constant dense<0.000000e+00> : vector<4x32xf32>
    %458 = tpu.matmul %456, %457, %cst_190 {dimension_numbers = #tpu.dot_dimension_numbers<[1], [0], [0], [1], [0, 0, 1, 1], [], []>} : vector<4x4xf32>, vector<4x32xf32>, vector<4x32xf32> -> vector<4x32xf32>
    %459 = vector.extract_strided_slice %439 {offsets = [0, 32], sizes = [4, 32], strides = [1, 1]} : vector<4x64xf32> to vector<4x32xf32>
    %460 = vector.extract_strided_slice %440 {offsets = [0, 32], sizes = [4, 32], strides = [1, 1]} : vector<4x64xf32> to vector<4x32xf32>
    %cst_191 = arith.constant dense<0.000000e+00> : vector<4x4xf32>
    %461 = tpu.matmul %459, %460, %cst_191 {dimension_numbers = #tpu.dot_dimension_numbers<[1], [1], [0], [0], [0, 0, 1, 0], [], []>} : vector<4x32xf32>, vector<4x32xf32>, vector<4x4xf32> -> vector<4x4xf32>
    %cst_192 = arith.constant 0.176776692 : f32
    %462 = vector.broadcast %cst_192 : f32 to vector<4x4xf32>
    %463 = arith.mulf %461, %462 : vector<4x4xf32>
    %464 = arith.addf %463, %427 : vector<4x4xf32>
    %cst_193 = arith.constant dense<0xFF800000> : vector<4xf32>
    %465 = vector.multi_reduction <maximumf>, %464, %cst_193 [1] : vector<4x4xf32> to vector<4xf32>
    %466 = vector.shape_cast %465 : vector<4xf32> to vector<4x1xf32>
    %467 = vector.broadcast %466 : vector<4x1xf32> to vector<4x4xf32>
    %468 = arith.subf %464, %467 : vector<4x4xf32>
    %469 = math.exp %468 : vector<4x4xf32>
    %cst_194 = arith.constant dense<0.000000e+00> : vector<4xf32>
    %470 = vector.multi_reduction <add>, %469, %cst_194 [1] : vector<4x4xf32> to vector<4xf32>
    %471 = vector.shape_cast %470 : vector<4xf32> to vector<4x1xf32>
    %472 = vector.broadcast %471 : vector<4x1xf32> to vector<4x4xf32>
    %473 = arith.divf %469, %472 : vector<4x4xf32>
    %474 = vector.extract_strided_slice %441 {offsets = [0, 32], sizes = [4, 32], strides = [1, 1]} : vector<4x64xf32> to vector<4x32xf32>
    %cst_195 = arith.constant dense<0.000000e+00> : vector<4x32xf32>
    %475 = tpu.matmul %473, %474, %cst_195 {dimension_numbers = #tpu.dot_dimension_numbers<[1], [0], [0], [1], [0, 0, 1, 1], [], []>} : vector<4x4xf32>, vector<4x32xf32>, vector<4x32xf32> -> vector<4x32xf32>
    %476 = tpu.concatenate %458, %475 in 1 : vector<4x32xf32>, vector<4x32xf32> -> vector<4x64xf32>
    %477 = arith.addf %412, %414 : vector<4x32xf32>
    %478 = arith.truncf %476 : vector<4x64xf32> to vector<4x64xbf16>
    %c0_196 = arith.constant 0 : index
    %c0_197 = arith.constant 0 : index
    %479 = vector.load %arg18[%c0_196, %c0_197] : memref<64x32xbf16, #tpu.memory_space<vmem>>, vector<64x32xbf16>
    %cst_198 = arith.constant dense<0.000000e+00> : vector<4x32xf32>
    %480 = tpu.matmul %478, %479, %cst_198 {dimension_numbers = #tpu.dot_dimension_numbers<[1], [0], [0], [1], [0, 0, 1, 1], [], []>} : vector<4x64xbf16>, vector<64x32xbf16>, vector<4x32xf32> -> vector<4x32xf32>
    %481 = arith.addf %477, %480 : vector<4x32xf32>
    %482 = vector.extract_strided_slice %428 {offsets = [0, 0], sizes = [1, 32], strides = [1, 1]} : vector<6x32xf32> to vector<1x32xf32>
    %483 = vector.extract_strided_slice %428 {offsets = [1, 0], sizes = [1, 32], strides = [1, 1]} : vector<6x32xf32> to vector<1x32xf32>
    %cst_199 = arith.constant dense<0.000000e+00> : vector<4xf32>
    %484 = vector.multi_reduction <add>, %481, %cst_199 [1] : vector<4x32xf32> to vector<4xf32>
    %485 = vector.shape_cast %484 : vector<4xf32> to vector<4x1xf32>
    %cst_200 = arith.constant 3.200000e+01 : f32
    %486 = vector.broadcast %cst_200 : f32 to vector<4x1xf32>
    %487 = arith.divf %485, %486 : vector<4x1xf32>
    %488 = vector.broadcast %487 : vector<4x1xf32> to vector<4x32xf32>
    %489 = arith.subf %481, %488 : vector<4x32xf32>
    %490 = arith.mulf %489, %489 : vector<4x32xf32>
    %cst_201 = arith.constant dense<0.000000e+00> : vector<4xf32>
    %491 = vector.multi_reduction <add>, %490, %cst_201 [1] : vector<4x32xf32> to vector<4xf32>
    %492 = vector.shape_cast %491 : vector<4xf32> to vector<4x1xf32>
    %cst_202 = arith.constant 3.200000e+01 : f32
    %493 = vector.broadcast %cst_202 : f32 to vector<4x1xf32>
    %494 = arith.divf %492, %493 : vector<4x1xf32>
    %495 = vector.broadcast %487 : vector<4x1xf32> to vector<4x32xf32>
    %496 = arith.subf %481, %495 : vector<4x32xf32>
    %cst_203 = arith.constant 9.99999997E-7 : f32
    %497 = vector.broadcast %cst_203 : f32 to vector<4x1xf32>
    %498 = arith.addf %494, %497 : vector<4x1xf32>
    %499 = math.rsqrt %498 : vector<4x1xf32>
    %500 = vector.broadcast %499 : vector<4x1xf32> to vector<4x32xf32>
    %501 = arith.mulf %496, %500 : vector<4x32xf32>
    %502 = vector.broadcast %482 : vector<1x32xf32> to vector<4x32xf32>
    %503 = arith.mulf %501, %502 : vector<4x32xf32>
    %504 = vector.broadcast %483 : vector<1x32xf32> to vector<4x32xf32>
    %505 = arith.addf %503, %504 : vector<4x32xf32>
    %506 = arith.truncf %505 : vector<4x32xf32> to vector<4x32xbf16>
    %507 = arith.truncf %416 : vector<2x32xf32> to vector<2x32xbf16>
    %c0_204 = arith.constant 0 : index
    %c0_205 = arith.constant 0 : index
    %508 = vector.load %arg19[%c0_204, %c0_205] : memref<32x64xbf16, #tpu.memory_space<vmem>>, vector<32x64xbf16>
    %cst_206 = arith.constant dense<0.000000e+00> : vector<4x64xf32>
    %509 = tpu.matmul %506, %508, %cst_206 {dimension_numbers = #tpu.dot_dimension_numbers<[1], [0], [0], [1], [0, 0, 1, 1], [], []>} : vector<4x32xbf16>, vector<32x64xbf16>, vector<4x64xf32> -> vector<4x64xf32>
    %c0_207 = arith.constant 0 : index
    %c0_208 = arith.constant 0 : index
    %510 = vector.load %arg20[%c0_207, %c0_208] : memref<32x128xbf16, #tpu.memory_space<vmem>>, vector<32x128xbf16>
    %cst_209 = arith.constant dense<0.000000e+00> : vector<2x128xf32>
    %511 = tpu.matmul %507, %510, %cst_209 {dimension_numbers = #tpu.dot_dimension_numbers<[1], [0], [0], [1], [0, 0, 1, 1], [], []>} : vector<2x32xbf16>, vector<32x128xbf16>, vector<2x128xf32> -> vector<2x128xf32>
    %512 = vector.extract_strided_slice %511 {offsets = [0, 0], sizes = [2, 64], strides = [1, 1]} : vector<2x128xf32> to vector<2x64xf32>
    %513 = vector.extract_strided_slice %511 {offsets = [0, 64], sizes = [2, 64], strides = [1, 1]} : vector<2x128xf32> to vector<2x64xf32>
    %514 = vector.extract_strided_slice %509 {offsets = [0, 0], sizes = [4, 32], strides = [1, 1]} : vector<4x64xf32> to vector<4x32xf32>
    %515 = vector.extract_strided_slice %512 {offsets = [0, 0], sizes = [2, 32], strides = [1, 1]} : vector<2x64xf32> to vector<2x32xf32>
    %cst_210 = arith.constant dense<0.000000e+00> : vector<4x2xf32>
    %516 = tpu.matmul %514, %515, %cst_210 {dimension_numbers = #tpu.dot_dimension_numbers<[1], [1], [0], [0], [0, 0, 1, 0], [], []>} : vector<4x32xf32>, vector<2x32xf32>, vector<4x2xf32> -> vector<4x2xf32>
    %cst_211 = arith.constant 0.176776692 : f32
    %517 = vector.broadcast %cst_211 : f32 to vector<4x2xf32>
    %518 = arith.mulf %516, %517 : vector<4x2xf32>
    %cst_212 = arith.constant dense<0xFF800000> : vector<4xf32>
    %519 = vector.multi_reduction <maximumf>, %518, %cst_212 [1] : vector<4x2xf32> to vector<4xf32>
    %520 = vector.shape_cast %519 : vector<4xf32> to vector<4x1xf32>
    %521 = vector.broadcast %520 : vector<4x1xf32> to vector<4x2xf32>
    %522 = arith.subf %518, %521 : vector<4x2xf32>
    %523 = math.exp %522 : vector<4x2xf32>
    %cst_213 = arith.constant dense<0.000000e+00> : vector<4xf32>
    %524 = vector.multi_reduction <add>, %523, %cst_213 [1] : vector<4x2xf32> to vector<4xf32>
    %525 = vector.shape_cast %524 : vector<4xf32> to vector<4x1xf32>
    %526 = vector.broadcast %525 : vector<4x1xf32> to vector<4x2xf32>
    %527 = arith.divf %523, %526 : vector<4x2xf32>
    %528 = vector.extract_strided_slice %513 {offsets = [0, 0], sizes = [2, 32], strides = [1, 1]} : vector<2x64xf32> to vector<2x32xf32>
    %cst_214 = arith.constant dense<0.000000e+00> : vector<4x32xf32>
    %529 = tpu.matmul %527, %528, %cst_214 {dimension_numbers = #tpu.dot_dimension_numbers<[1], [0], [0], [1], [0, 0, 1, 1], [], []>} : vector<4x2xf32>, vector<2x32xf32>, vector<4x32xf32> -> vector<4x32xf32>
    %530 = vector.extract_strided_slice %509 {offsets = [0, 32], sizes = [4, 32], strides = [1, 1]} : vector<4x64xf32> to vector<4x32xf32>
    %531 = vector.extract_strided_slice %512 {offsets = [0, 32], sizes = [2, 32], strides = [1, 1]} : vector<2x64xf32> to vector<2x32xf32>
    %cst_215 = arith.constant dense<0.000000e+00> : vector<4x2xf32>
    %532 = tpu.matmul %530, %531, %cst_215 {dimension_numbers = #tpu.dot_dimension_numbers<[1], [1], [0], [0], [0, 0, 1, 0], [], []>} : vector<4x32xf32>, vector<2x32xf32>, vector<4x2xf32> -> vector<4x2xf32>
    %cst_216 = arith.constant 0.176776692 : f32
    %533 = vector.broadcast %cst_216 : f32 to vector<4x2xf32>
    %534 = arith.mulf %532, %533 : vector<4x2xf32>
    %cst_217 = arith.constant dense<0xFF800000> : vector<4xf32>
    %535 = vector.multi_reduction <maximumf>, %534, %cst_217 [1] : vector<4x2xf32> to vector<4xf32>
    %536 = vector.shape_cast %535 : vector<4xf32> to vector<4x1xf32>
    %537 = vector.broadcast %536 : vector<4x1xf32> to vector<4x2xf32>
    %538 = arith.subf %534, %537 : vector<4x2xf32>
    %539 = math.exp %538 : vector<4x2xf32>
    %cst_218 = arith.constant dense<0.000000e+00> : vector<4xf32>
    %540 = vector.multi_reduction <add>, %539, %cst_218 [1] : vector<4x2xf32> to vector<4xf32>
    %541 = vector.shape_cast %540 : vector<4xf32> to vector<4x1xf32>
    %542 = vector.broadcast %541 : vector<4x1xf32> to vector<4x2xf32>
    %543 = arith.divf %539, %542 : vector<4x2xf32>
    %544 = vector.extract_strided_slice %513 {offsets = [0, 32], sizes = [2, 32], strides = [1, 1]} : vector<2x64xf32> to vector<2x32xf32>
    %cst_219 = arith.constant dense<0.000000e+00> : vector<4x32xf32>
    %545 = tpu.matmul %543, %544, %cst_219 {dimension_numbers = #tpu.dot_dimension_numbers<[1], [0], [0], [1], [0, 0, 1, 1], [], []>} : vector<4x2xf32>, vector<2x32xf32>, vector<4x32xf32> -> vector<4x32xf32>
    %546 = tpu.concatenate %529, %545 in 1 : vector<4x32xf32>, vector<4x32xf32> -> vector<4x64xf32>
    %547 = arith.truncf %546 : vector<4x64xf32> to vector<4x64xbf16>
    %c0_220 = arith.constant 0 : index
    %c0_221 = arith.constant 0 : index
    %548 = vector.load %arg21[%c0_220, %c0_221] : memref<64x32xbf16, #tpu.memory_space<vmem>>, vector<64x32xbf16>
    %cst_222 = arith.constant dense<0.000000e+00> : vector<4x32xf32>
    %549 = tpu.matmul %547, %548, %cst_222 {dimension_numbers = #tpu.dot_dimension_numbers<[1], [0], [0], [1], [0, 0, 1, 1], [], []>} : vector<4x64xbf16>, vector<64x32xbf16>, vector<4x32xf32> -> vector<4x32xf32>
    %550 = arith.addf %505, %549 : vector<4x32xf32>
    %551 = vector.extract_strided_slice %428 {offsets = [2, 0], sizes = [1, 32], strides = [1, 1]} : vector<6x32xf32> to vector<1x32xf32>
    %552 = vector.extract_strided_slice %428 {offsets = [3, 0], sizes = [1, 32], strides = [1, 1]} : vector<6x32xf32> to vector<1x32xf32>
    %cst_223 = arith.constant dense<0.000000e+00> : vector<4xf32>
    %553 = vector.multi_reduction <add>, %550, %cst_223 [1] : vector<4x32xf32> to vector<4xf32>
    %554 = vector.shape_cast %553 : vector<4xf32> to vector<4x1xf32>
    %cst_224 = arith.constant 3.200000e+01 : f32
    %555 = vector.broadcast %cst_224 : f32 to vector<4x1xf32>
    %556 = arith.divf %554, %555 : vector<4x1xf32>
    %557 = vector.broadcast %556 : vector<4x1xf32> to vector<4x32xf32>
    %558 = arith.subf %550, %557 : vector<4x32xf32>
    %559 = arith.mulf %558, %558 : vector<4x32xf32>
    %cst_225 = arith.constant dense<0.000000e+00> : vector<4xf32>
    %560 = vector.multi_reduction <add>, %559, %cst_225 [1] : vector<4x32xf32> to vector<4xf32>
    %561 = vector.shape_cast %560 : vector<4xf32> to vector<4x1xf32>
    %cst_226 = arith.constant 3.200000e+01 : f32
    %562 = vector.broadcast %cst_226 : f32 to vector<4x1xf32>
    %563 = arith.divf %561, %562 : vector<4x1xf32>
    %564 = vector.broadcast %556 : vector<4x1xf32> to vector<4x32xf32>
    %565 = arith.subf %550, %564 : vector<4x32xf32>
    %cst_227 = arith.constant 9.99999997E-7 : f32
    %566 = vector.broadcast %cst_227 : f32 to vector<4x1xf32>
    %567 = arith.addf %563, %566 : vector<4x1xf32>
    %568 = math.rsqrt %567 : vector<4x1xf32>
    %569 = vector.broadcast %568 : vector<4x1xf32> to vector<4x32xf32>
    %570 = arith.mulf %565, %569 : vector<4x32xf32>
    %571 = vector.broadcast %551 : vector<1x32xf32> to vector<4x32xf32>
    %572 = arith.mulf %570, %571 : vector<4x32xf32>
    %573 = vector.broadcast %552 : vector<1x32xf32> to vector<4x32xf32>
    %574 = arith.addf %572, %573 : vector<4x32xf32>
    %575 = arith.truncf %574 : vector<4x32xf32> to vector<4x32xbf16>
    %c0_228 = arith.constant 0 : index
    %c0_229 = arith.constant 0 : index
    %576 = vector.load %arg22[%c0_228, %c0_229] : memref<32x64xbf16, #tpu.memory_space<vmem>>, vector<32x64xbf16>
    %cst_230 = arith.constant dense<0.000000e+00> : vector<4x64xf32>
    %577 = tpu.matmul %575, %576, %cst_230 {dimension_numbers = #tpu.dot_dimension_numbers<[1], [0], [0], [1], [0, 0, 1, 1], [], []>} : vector<4x32xbf16>, vector<32x64xbf16>, vector<4x64xf32> -> vector<4x64xf32>
    %578 = vector.extract_strided_slice %429 {offsets = [0, 0], sizes = [1, 64], strides = [1, 1]} : vector<1x96xf32> to vector<1x64xf32>
    %579 = vector.broadcast %578 : vector<1x64xf32> to vector<4x64xf32>
    %580 = arith.addf %577, %579 : vector<4x64xf32>
    %cst_231 = arith.constant 0.000000e+00 : f32
    %581 = vector.broadcast %cst_231 : f32 to vector<4x64xf32>
    %582 = arith.maximumf %580, %581 : vector<4x64xf32>
    %583 = arith.truncf %582 : vector<4x64xf32> to vector<4x64xbf16>
    %c0_232 = arith.constant 0 : index
    %c0_233 = arith.constant 0 : index
    %584 = vector.load %arg23[%c0_232, %c0_233] : memref<64x32xbf16, #tpu.memory_space<vmem>>, vector<64x32xbf16>
    %cst_234 = arith.constant dense<0.000000e+00> : vector<4x32xf32>
    %585 = tpu.matmul %583, %584, %cst_234 {dimension_numbers = #tpu.dot_dimension_numbers<[1], [0], [0], [1], [0, 0, 1, 1], [], []>} : vector<4x64xbf16>, vector<64x32xbf16>, vector<4x32xf32> -> vector<4x32xf32>
    %586 = vector.extract_strided_slice %429 {offsets = [0, 64], sizes = [1, 32], strides = [1, 1]} : vector<1x96xf32> to vector<1x32xf32>
    %587 = vector.broadcast %586 : vector<1x32xf32> to vector<4x32xf32>
    %588 = arith.addf %585, %587 : vector<4x32xf32>
    %589 = arith.addf %588, %574 : vector<4x32xf32>
    %590 = vector.extract_strided_slice %428 {offsets = [4, 0], sizes = [1, 32], strides = [1, 1]} : vector<6x32xf32> to vector<1x32xf32>
    %591 = vector.extract_strided_slice %428 {offsets = [5, 0], sizes = [1, 32], strides = [1, 1]} : vector<6x32xf32> to vector<1x32xf32>
    %cst_235 = arith.constant dense<0.000000e+00> : vector<4xf32>
    %592 = vector.multi_reduction <add>, %589, %cst_235 [1] : vector<4x32xf32> to vector<4xf32>
    %593 = vector.shape_cast %592 : vector<4xf32> to vector<4x1xf32>
    %cst_236 = arith.constant 3.200000e+01 : f32
    %594 = vector.broadcast %cst_236 : f32 to vector<4x1xf32>
    %595 = arith.divf %593, %594 : vector<4x1xf32>
    %596 = vector.broadcast %595 : vector<4x1xf32> to vector<4x32xf32>
    %597 = arith.subf %589, %596 : vector<4x32xf32>
    %598 = arith.mulf %597, %597 : vector<4x32xf32>
    %cst_237 = arith.constant dense<0.000000e+00> : vector<4xf32>
    %599 = vector.multi_reduction <add>, %598, %cst_237 [1] : vector<4x32xf32> to vector<4xf32>
    %600 = vector.shape_cast %599 : vector<4xf32> to vector<4x1xf32>
    %cst_238 = arith.constant 3.200000e+01 : f32
    %601 = vector.broadcast %cst_238 : f32 to vector<4x1xf32>
    %602 = arith.divf %600, %601 : vector<4x1xf32>
    %603 = vector.broadcast %595 : vector<4x1xf32> to vector<4x32xf32>
    %604 = arith.subf %589, %603 : vector<4x32xf32>
    %cst_239 = arith.constant 9.99999997E-7 : f32
    %605 = vector.broadcast %cst_239 : f32 to vector<4x1xf32>
    %606 = arith.addf %602, %605 : vector<4x1xf32>
    %607 = math.rsqrt %606 : vector<4x1xf32>
    %608 = vector.broadcast %607 : vector<4x1xf32> to vector<4x32xf32>
    %609 = arith.mulf %604, %608 : vector<4x32xf32>
    %610 = vector.broadcast %590 : vector<1x32xf32> to vector<4x32xf32>
    %611 = arith.mulf %609, %610 : vector<4x32xf32>
    %612 = vector.broadcast %591 : vector<1x32xf32> to vector<4x32xf32>
    %613 = arith.addf %611, %612 : vector<4x32xf32>
    %c0_240 = arith.constant 0 : index
    %c0_241 = arith.constant 0 : index
    %614 = vector.load %arg15[%c0_240, %c0_241] : memref<8x4xf32, #tpu.memory_space<vmem>>, vector<8x4xf32>
    %cst_242 = arith.constant dense<0.000000e+00> : vector<8x32xf32>
    %615 = tpu.matmul %614, %613, %cst_242 {dimension_numbers = #tpu.dot_dimension_numbers<[1], [0], [0], [1], [0, 0, 1, 1], [], []>} : vector<8x4xf32>, vector<4x32xf32>, vector<8x32xf32> -> vector<8x32xf32>
    %616 = tpu.concatenate %410, %615, %408 in 1 : vector<8x32xf32>, vector<8x32xf32>, vector<8x32xf32> -> vector<8x96xf32>
    %617 = arith.truncf %616 : vector<8x96xf32> to vector<8x96xbf16>
    %c0_243 = arith.constant 0 : index
    %c0_244 = arith.constant 0 : index
    %618 = vector.load %arg35[%c0_243, %c0_244] : memref<96x192xbf16, #tpu.memory_space<vmem>>, vector<96x192xbf16>
    %cst_245 = arith.constant dense<0.000000e+00> : vector<8x192xf32>
    %619 = tpu.matmul %617, %618, %cst_245 {dimension_numbers = #tpu.dot_dimension_numbers<[1], [0], [0], [1], [0, 0, 1, 1], [], []>} : vector<8x96xbf16>, vector<96x192xbf16>, vector<8x192xf32> -> vector<8x192xf32>
    %620 = vector.extract_strided_slice %619 {offsets = [0, 0], sizes = [8, 96], strides = [1, 1]} : vector<8x192xf32> to vector<8x96xf32>
    %621 = math.tanh %620 : vector<8x96xf32>
    %622 = vector.extract_strided_slice %619 {offsets = [0, 96], sizes = [8, 96], strides = [1, 1]} : vector<8x192xf32> to vector<8x96xf32>
    %623 = arith.negf %622 : vector<8x96xf32>
    %624 = math.exp %623 : vector<8x96xf32>
    %cst_246 = arith.constant 1.000000e+00 : f32
    %625 = vector.broadcast %cst_246 : f32 to vector<8x96xf32>
    %626 = arith.addf %625, %624 : vector<8x96xf32>
    %627 = arith.divf %625, %626 : vector<8x96xf32>
    %c0_247 = arith.constant 0 : index
    %c0_248 = arith.constant 0 : index
    %628 = vector.load %arg16[%c0_247, %c0_248] : memref<8x96xf32, #tpu.memory_space<vmem>>, vector<8x96xf32>
    %629 = arith.mulf %628, %627 : vector<8x96xf32>
    %630 = arith.mulf %629, %621 : vector<8x96xf32>
    %631 = vector.extract_strided_slice %630 {offsets = [0, 0], sizes = [8, 32], strides = [1, 1]} : vector<8x96xf32> to vector<8x32xf32>
    %632 = vector.extract_strided_slice %630 {offsets = [0, 32], sizes = [8, 32], strides = [1, 1]} : vector<8x96xf32> to vector<8x32xf32>
    %633 = arith.addf %631, %632 : vector<8x32xf32>
    %634 = vector.extract_strided_slice %630 {offsets = [0, 64], sizes = [8, 32], strides = [1, 1]} : vector<8x96xf32> to vector<8x32xf32>
    %635 = arith.addf %633, %634 : vector<8x32xf32>
    %636 = arith.negf %635 : vector<8x32xf32>
    %637 = math.exp %636 : vector<8x32xf32>
    %cst_249 = arith.constant 1.000000e+00 : f32
    %638 = vector.broadcast %cst_249 : f32 to vector<8x32xf32>
    %639 = arith.addf %638, %637 : vector<8x32xf32>
    %640 = arith.divf %638, %639 : vector<8x32xf32>
    %c0_250 = arith.constant 0 : index
    %c0_251 = arith.constant 0 : index
    %c0_252 = arith.constant 0 : index
    %641 = vector.load %arg13[%c0_250, %c0_251, %c0_252] : memref<2x8x32xf32, #tpu.memory_space<vmem>>, vector<1x8x32xf32>
    %642 = vector.shape_cast %641 : vector<1x8x32xf32> to vector<8x32xf32>
    %643 = arith.addf %640, %642 : vector<8x32xf32>
    %644 = arith.truncf %643 : vector<8x32xf32> to vector<8x32xbf16>
    %c0_253 = arith.constant 0 : index
    %c0_254 = arith.constant 0 : index
    %645 = vector.load %arg36[%c0_253, %c0_254] : memref<32x128xbf16, #tpu.memory_space<vmem>>, vector<32x128xbf16>
    %cst_255 = arith.constant dense<0.000000e+00> : vector<8x128xf32>
    %646 = tpu.matmul %644, %645, %cst_255 {dimension_numbers = #tpu.dot_dimension_numbers<[1], [0], [0], [1], [0, 0, 1, 1], [], []>} : vector<8x32xbf16>, vector<32x128xbf16>, vector<8x128xf32> -> vector<8x128xf32>
    %c0_256 = arith.constant 0 : index
    %c0_257 = arith.constant 0 : index
    %c0_258 = arith.constant 0 : index
    %647 = vector.load %arg37[%c0_256, %c0_257, %c0_258] : memref<2x8x128xf32, #tpu.memory_space<vmem>>, vector<1x8x128xf32>
    %648 = vector.shape_cast %647 : vector<1x8x128xf32> to vector<8x128xf32>
    %649 = vector.shape_cast %646 : vector<8x128xf32> to vector<1x8x128xf32>
    tpu.vector_store %arg37[%c0_256, %c0_257, %c0_258], %649 {strides = array<i32>} : memref<2x8x128xf32, #tpu.memory_space<vmem>>, vector<1x8x128xf32>,
    %c1_259 = arith.constant 1 : index
    %c0_260 = arith.constant 0 : index
    %c0_261 = arith.constant 0 : index
    %650 = vector.load %arg1[%c1_259, %c0_260, %c0_261] : memref<2x4x32xf32, #tpu.memory_space<vmem>>, vector<1x4x32xf32>
    %651 = vector.shape_cast %650 : vector<1x4x32xf32> to vector<4x32xf32>
    %c1_262 = arith.constant 1 : index
    %c0_263 = arith.constant 0 : index
    %c0_264 = arith.constant 0 : index
    %652 = vector.load %arg2[%c1_262, %c0_263, %c0_264] : memref<2x4x32xf32, #tpu.memory_space<vmem>>, vector<1x4x32xf32>
    %653 = vector.shape_cast %652 : vector<1x4x32xf32> to vector<4x32xf32>
    %c1_265 = arith.constant 1 : index
    %c0_266 = arith.constant 0 : index
    %c0_267 = arith.constant 0 : index
    %654 = vector.load %arg7[%c1_265, %c0_266, %c0_267] : memref<2x2x32xf32, #tpu.memory_space<vmem>>, vector<1x2x32xf32>
    %655 = vector.shape_cast %654 : vector<1x2x32xf32> to vector<2x32xf32>
    %656 = vector.extract_strided_slice %0 {offsets = [1, 0], sizes = [1, 4], strides = [1, 1]} : vector<2x4xf32> to vector<1x4xf32>
    %657 = tpu.iota {dimensions = array<i32: 0>} : vector<4x4xi32>
    %658 = tpu.iota {dimensions = array<i32: 1>} : vector<4x4xi32>
    %659 = arith.cmpi sge, %657, %658 : vector<4x4xi32>
    %cst_268 = arith.constant 5.000000e-01 : f32
    %660 = vector.broadcast %cst_268 : f32 to vector<1x4xf32>
    %661 = arith.cmpf ogt, %656, %660 : vector<1x4xf32>
    %662 = vector.broadcast %661 : vector<1x4xi1> to vector<4x4xi1>
    %663 = arith.andi %659, %662 : vector<4x4xi1>
    %cst_269 = arith.constant 0.000000e+00 : f32
    %cst_270 = arith.constant -1.000000e+09 : f32
    %664 = vector.broadcast %cst_269 : f32 to vector<4x4xf32>
    %665 = vector.broadcast %cst_270 : f32 to vector<4x4xf32>
    %666 = arith.select %663, %664, %665 : vector<4x4xi1>, vector<4x4xf32>
    %c0_271 = arith.constant 0 : index
    %c0_272 = arith.constant 0 : index
    %667 = vector.load %arg25[%c0_271, %c0_272] : memref<6x32xf32, #tpu.memory_space<vmem>>, vector<6x32xf32>
    %c0_273 = arith.constant 0 : index
    %c0_274 = arith.constant 0 : index
    %668 = vector.load %arg24[%c0_273, %c0_274] : memref<1x96xf32, #tpu.memory_space<vmem>>, vector<1x96xf32>
    %669 = arith.truncf %651 : vector<4x32xf32> to vector<4x32xbf16>
    %670 = arith.truncf %653 : vector<4x32xf32> to vector<4x32xbf16>
    %c0_275 = arith.constant 0 : index
    %c0_276 = arith.constant 0 : index
    %c0_277 = arith.constant 0 : index
    %671 = vector.load %arg17[%c0_275, %c0_276, %c0_277] : memref<2x32x192xbf16, #tpu.memory_space<vmem>>, vector<1x32x192xbf16>
    %672 = vector.shape_cast %671 : vector<1x32x192xbf16> to vector<32x192xbf16>
    %cst_278 = arith.constant dense<0.000000e+00> : vector<4x192xf32>
    %673 = tpu.matmul %669, %672, %cst_278 {dimension_numbers = #tpu.dot_dimension_numbers<[1], [0], [0], [1], [0, 0, 1, 1], [], []>} : vector<4x32xbf16>, vector<32x192xbf16>, vector<4x192xf32> -> vector<4x192xf32>
    %c1_279 = arith.constant 1 : index
    %c0_280 = arith.constant 0 : index
    %c0_281 = arith.constant 0 : index
    %674 = vector.load %arg17[%c1_279, %c0_280, %c0_281] : memref<2x32x192xbf16, #tpu.memory_space<vmem>>, vector<1x32x192xbf16>
    %675 = vector.shape_cast %674 : vector<1x32x192xbf16> to vector<32x192xbf16>
    %cst_282 = arith.constant dense<0.000000e+00> : vector<4x192xf32>
    %676 = tpu.matmul %670, %675, %cst_282 {dimension_numbers = #tpu.dot_dimension_numbers<[1], [0], [0], [1], [0, 0, 1, 1], [], []>} : vector<4x32xbf16>, vector<32x192xbf16>, vector<4x192xf32> -> vector<4x192xf32>
    %677 = arith.addf %673, %676 : vector<4x192xf32>
    %678 = vector.extract_strided_slice %677 {offsets = [0, 0], sizes = [4, 64], strides = [1, 1]} : vector<4x192xf32> to vector<4x64xf32>
    %679 = vector.extract_strided_slice %677 {offsets = [0, 64], sizes = [4, 64], strides = [1, 1]} : vector<4x192xf32> to vector<4x64xf32>
    %680 = vector.extract_strided_slice %677 {offsets = [0, 128], sizes = [4, 64], strides = [1, 1]} : vector<4x192xf32> to vector<4x64xf32>
    %681 = vector.extract_strided_slice %678 {offsets = [0, 0], sizes = [4, 32], strides = [1, 1]} : vector<4x64xf32> to vector<4x32xf32>
    %682 = vector.extract_strided_slice %679 {offsets = [0, 0], sizes = [4, 32], strides = [1, 1]} : vector<4x64xf32> to vector<4x32xf32>
    %cst_283 = arith.constant dense<0.000000e+00> : vector<4x4xf32>
    %683 = tpu.matmul %681, %682, %cst_283 {dimension_numbers = #tpu.dot_dimension_numbers<[1], [1], [0], [0], [0, 0, 1, 0], [], []>} : vector<4x32xf32>, vector<4x32xf32>, vector<4x4xf32> -> vector<4x4xf32>
    %cst_284 = arith.constant 0.176776692 : f32
    %684 = vector.broadcast %cst_284 : f32 to vector<4x4xf32>
    %685 = arith.mulf %683, %684 : vector<4x4xf32>
    %686 = arith.addf %685, %666 : vector<4x4xf32>
    %cst_285 = arith.constant dense<0xFF800000> : vector<4xf32>
    %687 = vector.multi_reduction <maximumf>, %686, %cst_285 [1] : vector<4x4xf32> to vector<4xf32>
    %688 = vector.shape_cast %687 : vector<4xf32> to vector<4x1xf32>
    %689 = vector.broadcast %688 : vector<4x1xf32> to vector<4x4xf32>
    %690 = arith.subf %686, %689 : vector<4x4xf32>
    %691 = math.exp %690 : vector<4x4xf32>
    %cst_286 = arith.constant dense<0.000000e+00> : vector<4xf32>
    %692 = vector.multi_reduction <add>, %691, %cst_286 [1] : vector<4x4xf32> to vector<4xf32>
    %693 = vector.shape_cast %692 : vector<4xf32> to vector<4x1xf32>
    %694 = vector.broadcast %693 : vector<4x1xf32> to vector<4x4xf32>
    %695 = arith.divf %691, %694 : vector<4x4xf32>
    %696 = vector.extract_strided_slice %680 {offsets = [0, 0], sizes = [4, 32], strides = [1, 1]} : vector<4x64xf32> to vector<4x32xf32>
    %cst_287 = arith.constant dense<0.000000e+00> : vector<4x32xf32>
    %697 = tpu.matmul %695, %696, %cst_287 {dimension_numbers = #tpu.dot_dimension_numbers<[1], [0], [0], [1], [0, 0, 1, 1], [], []>} : vector<4x4xf32>, vector<4x32xf32>, vector<4x32xf32> -> vector<4x32xf32>
    %698 = vector.extract_strided_slice %678 {offsets = [0, 32], sizes = [4, 32], strides = [1, 1]} : vector<4x64xf32> to vector<4x32xf32>
    %699 = vector.extract_strided_slice %679 {offsets = [0, 32], sizes = [4, 32], strides = [1, 1]} : vector<4x64xf32> to vector<4x32xf32>
    %cst_288 = arith.constant dense<0.000000e+00> : vector<4x4xf32>
    %700 = tpu.matmul %698, %699, %cst_288 {dimension_numbers = #tpu.dot_dimension_numbers<[1], [1], [0], [0], [0, 0, 1, 0], [], []>} : vector<4x32xf32>, vector<4x32xf32>, vector<4x4xf32> -> vector<4x4xf32>
    %cst_289 = arith.constant 0.176776692 : f32
    %701 = vector.broadcast %cst_289 : f32 to vector<4x4xf32>
    %702 = arith.mulf %700, %701 : vector<4x4xf32>
    %703 = arith.addf %702, %666 : vector<4x4xf32>
    %cst_290 = arith.constant dense<0xFF800000> : vector<4xf32>
    %704 = vector.multi_reduction <maximumf>, %703, %cst_290 [1] : vector<4x4xf32> to vector<4xf32>
    %705 = vector.shape_cast %704 : vector<4xf32> to vector<4x1xf32>
    %706 = vector.broadcast %705 : vector<4x1xf32> to vector<4x4xf32>
    %707 = arith.subf %703, %706 : vector<4x4xf32>
    %708 = math.exp %707 : vector<4x4xf32>
    %cst_291 = arith.constant dense<0.000000e+00> : vector<4xf32>
    %709 = vector.multi_reduction <add>, %708, %cst_291 [1] : vector<4x4xf32> to vector<4xf32>
    %710 = vector.shape_cast %709 : vector<4xf32> to vector<4x1xf32>
    %711 = vector.broadcast %710 : vector<4x1xf32> to vector<4x4xf32>
    %712 = arith.divf %708, %711 : vector<4x4xf32>
    %713 = vector.extract_strided_slice %680 {offsets = [0, 32], sizes = [4, 32], strides = [1, 1]} : vector<4x64xf32> to vector<4x32xf32>
    %cst_292 = arith.constant dense<0.000000e+00> : vector<4x32xf32>
    %714 = tpu.matmul %712, %713, %cst_292 {dimension_numbers = #tpu.dot_dimension_numbers<[1], [0], [0], [1], [0, 0, 1, 1], [], []>} : vector<4x4xf32>, vector<4x32xf32>, vector<4x32xf32> -> vector<4x32xf32>
    %715 = tpu.concatenate %697, %714 in 1 : vector<4x32xf32>, vector<4x32xf32> -> vector<4x64xf32>
    %716 = arith.addf %651, %653 : vector<4x32xf32>
    %717 = arith.truncf %715 : vector<4x64xf32> to vector<4x64xbf16>
    %c0_293 = arith.constant 0 : index
    %c0_294 = arith.constant 0 : index
    %718 = vector.load %arg18[%c0_293, %c0_294] : memref<64x32xbf16, #tpu.memory_space<vmem>>, vector<64x32xbf16>
    %cst_295 = arith.constant dense<0.000000e+00> : vector<4x32xf32>
    %719 = tpu.matmul %717, %718, %cst_295 {dimension_numbers = #tpu.dot_dimension_numbers<[1], [0], [0], [1], [0, 0, 1, 1], [], []>} : vector<4x64xbf16>, vector<64x32xbf16>, vector<4x32xf32> -> vector<4x32xf32>
    %720 = arith.addf %716, %719 : vector<4x32xf32>
    %721 = vector.extract_strided_slice %667 {offsets = [0, 0], sizes = [1, 32], strides = [1, 1]} : vector<6x32xf32> to vector<1x32xf32>
    %722 = vector.extract_strided_slice %667 {offsets = [1, 0], sizes = [1, 32], strides = [1, 1]} : vector<6x32xf32> to vector<1x32xf32>
    %cst_296 = arith.constant dense<0.000000e+00> : vector<4xf32>
    %723 = vector.multi_reduction <add>, %720, %cst_296 [1] : vector<4x32xf32> to vector<4xf32>
    %724 = vector.shape_cast %723 : vector<4xf32> to vector<4x1xf32>
    %cst_297 = arith.constant 3.200000e+01 : f32
    %725 = vector.broadcast %cst_297 : f32 to vector<4x1xf32>
    %726 = arith.divf %724, %725 : vector<4x1xf32>
    %727 = vector.broadcast %726 : vector<4x1xf32> to vector<4x32xf32>
    %728 = arith.subf %720, %727 : vector<4x32xf32>
    %729 = arith.mulf %728, %728 : vector<4x32xf32>
    %cst_298 = arith.constant dense<0.000000e+00> : vector<4xf32>
    %730 = vector.multi_reduction <add>, %729, %cst_298 [1] : vector<4x32xf32> to vector<4xf32>
    %731 = vector.shape_cast %730 : vector<4xf32> to vector<4x1xf32>
    %cst_299 = arith.constant 3.200000e+01 : f32
    %732 = vector.broadcast %cst_299 : f32 to vector<4x1xf32>
    %733 = arith.divf %731, %732 : vector<4x1xf32>
    %734 = vector.broadcast %726 : vector<4x1xf32> to vector<4x32xf32>
    %735 = arith.subf %720, %734 : vector<4x32xf32>
    %cst_300 = arith.constant 9.99999997E-7 : f32
    %736 = vector.broadcast %cst_300 : f32 to vector<4x1xf32>
    %737 = arith.addf %733, %736 : vector<4x1xf32>
    %738 = math.rsqrt %737 : vector<4x1xf32>
    %739 = vector.broadcast %738 : vector<4x1xf32> to vector<4x32xf32>
    %740 = arith.mulf %735, %739 : vector<4x32xf32>
    %741 = vector.broadcast %721 : vector<1x32xf32> to vector<4x32xf32>
    %742 = arith.mulf %740, %741 : vector<4x32xf32>
    %743 = vector.broadcast %722 : vector<1x32xf32> to vector<4x32xf32>
    %744 = arith.addf %742, %743 : vector<4x32xf32>
    %745 = arith.truncf %744 : vector<4x32xf32> to vector<4x32xbf16>
    %746 = arith.truncf %655 : vector<2x32xf32> to vector<2x32xbf16>
    %c0_301 = arith.constant 0 : index
    %c0_302 = arith.constant 0 : index
    %747 = vector.load %arg19[%c0_301, %c0_302] : memref<32x64xbf16, #tpu.memory_space<vmem>>, vector<32x64xbf16>
    %cst_303 = arith.constant dense<0.000000e+00> : vector<4x64xf32>
    %748 = tpu.matmul %745, %747, %cst_303 {dimension_numbers = #tpu.dot_dimension_numbers<[1], [0], [0], [1], [0, 0, 1, 1], [], []>} : vector<4x32xbf16>, vector<32x64xbf16>, vector<4x64xf32> -> vector<4x64xf32>
    %c0_304 = arith.constant 0 : index
    %c0_305 = arith.constant 0 : index
    %749 = vector.load %arg20[%c0_304, %c0_305] : memref<32x128xbf16, #tpu.memory_space<vmem>>, vector<32x128xbf16>
    %cst_306 = arith.constant dense<0.000000e+00> : vector<2x128xf32>
    %750 = tpu.matmul %746, %749, %cst_306 {dimension_numbers = #tpu.dot_dimension_numbers<[1], [0], [0], [1], [0, 0, 1, 1], [], []>} : vector<2x32xbf16>, vector<32x128xbf16>, vector<2x128xf32> -> vector<2x128xf32>
    %751 = vector.extract_strided_slice %750 {offsets = [0, 0], sizes = [2, 64], strides = [1, 1]} : vector<2x128xf32> to vector<2x64xf32>
    %752 = vector.extract_strided_slice %750 {offsets = [0, 64], sizes = [2, 64], strides = [1, 1]} : vector<2x128xf32> to vector<2x64xf32>
    %753 = vector.extract_strided_slice %748 {offsets = [0, 0], sizes = [4, 32], strides = [1, 1]} : vector<4x64xf32> to vector<4x32xf32>
    %754 = vector.extract_strided_slice %751 {offsets = [0, 0], sizes = [2, 32], strides = [1, 1]} : vector<2x64xf32> to vector<2x32xf32>
    %cst_307 = arith.constant dense<0.000000e+00> : vector<4x2xf32>
    %755 = tpu.matmul %753, %754, %cst_307 {dimension_numbers = #tpu.dot_dimension_numbers<[1], [1], [0], [0], [0, 0, 1, 0], [], []>} : vector<4x32xf32>, vector<2x32xf32>, vector<4x2xf32> -> vector<4x2xf32>
    %cst_308 = arith.constant 0.176776692 : f32
    %756 = vector.broadcast %cst_308 : f32 to vector<4x2xf32>
    %757 = arith.mulf %755, %756 : vector<4x2xf32>
    %cst_309 = arith.constant dense<0xFF800000> : vector<4xf32>
    %758 = vector.multi_reduction <maximumf>, %757, %cst_309 [1] : vector<4x2xf32> to vector<4xf32>
    %759 = vector.shape_cast %758 : vector<4xf32> to vector<4x1xf32>
    %760 = vector.broadcast %759 : vector<4x1xf32> to vector<4x2xf32>
    %761 = arith.subf %757, %760 : vector<4x2xf32>
    %762 = math.exp %761 : vector<4x2xf32>
    %cst_310 = arith.constant dense<0.000000e+00> : vector<4xf32>
    %763 = vector.multi_reduction <add>, %762, %cst_310 [1] : vector<4x2xf32> to vector<4xf32>
    %764 = vector.shape_cast %763 : vector<4xf32> to vector<4x1xf32>
    %765 = vector.broadcast %764 : vector<4x1xf32> to vector<4x2xf32>
    %766 = arith.divf %762, %765 : vector<4x2xf32>
    %767 = vector.extract_strided_slice %752 {offsets = [0, 0], sizes = [2, 32], strides = [1, 1]} : vector<2x64xf32> to vector<2x32xf32>
    %cst_311 = arith.constant dense<0.000000e+00> : vector<4x32xf32>
    %768 = tpu.matmul %766, %767, %cst_311 {dimension_numbers = #tpu.dot_dimension_numbers<[1], [0], [0], [1], [0, 0, 1, 1], [], []>} : vector<4x2xf32>, vector<2x32xf32>, vector<4x32xf32> -> vector<4x32xf32>
    %769 = vector.extract_strided_slice %748 {offsets = [0, 32], sizes = [4, 32], strides = [1, 1]} : vector<4x64xf32> to vector<4x32xf32>
    %770 = vector.extract_strided_slice %751 {offsets = [0, 32], sizes = [2, 32], strides = [1, 1]} : vector<2x64xf32> to vector<2x32xf32>
    %cst_312 = arith.constant dense<0.000000e+00> : vector<4x2xf32>
    %771 = tpu.matmul %769, %770, %cst_312 {dimension_numbers = #tpu.dot_dimension_numbers<[1], [1], [0], [0], [0, 0, 1, 0], [], []>} : vector<4x32xf32>, vector<2x32xf32>, vector<4x2xf32> -> vector<4x2xf32>
    %cst_313 = arith.constant 0.176776692 : f32
    %772 = vector.broadcast %cst_313 : f32 to vector<4x2xf32>
    %773 = arith.mulf %771, %772 : vector<4x2xf32>
    %cst_314 = arith.constant dense<0xFF800000> : vector<4xf32>
    %774 = vector.multi_reduction <maximumf>, %773, %cst_314 [1] : vector<4x2xf32> to vector<4xf32>
    %775 = vector.shape_cast %774 : vector<4xf32> to vector<4x1xf32>
    %776 = vector.broadcast %775 : vector<4x1xf32> to vector<4x2xf32>
    %777 = arith.subf %773, %776 : vector<4x2xf32>
    %778 = math.exp %777 : vector<4x2xf32>
    %cst_315 = arith.constant dense<0.000000e+00> : vector<4xf32>
    %779 = vector.multi_reduction <add>, %778, %cst_315 [1] : vector<4x2xf32> to vector<4xf32>
    %780 = vector.shape_cast %779 : vector<4xf32> to vector<4x1xf32>
    %781 = vector.broadcast %780 : vector<4x1xf32> to vector<4x2xf32>
    %782 = arith.divf %778, %781 : vector<4x2xf32>
    %783 = vector.extract_strided_slice %752 {offsets = [0, 32], sizes = [2, 32], strides = [1, 1]} : vector<2x64xf32> to vector<2x32xf32>
    %cst_316 = arith.constant dense<0.000000e+00> : vector<4x32xf32>
    %784 = tpu.matmul %782, %783, %cst_316 {dimension_numbers = #tpu.dot_dimension_numbers<[1], [0], [0], [1], [0, 0, 1, 1], [], []>} : vector<4x2xf32>, vector<2x32xf32>, vector<4x32xf32> -> vector<4x32xf32>
    %785 = tpu.concatenate %768, %784 in 1 : vector<4x32xf32>, vector<4x32xf32> -> vector<4x64xf32>
    %786 = arith.truncf %785 : vector<4x64xf32> to vector<4x64xbf16>
    %c0_317 = arith.constant 0 : index
    %c0_318 = arith.constant 0 : index
    %787 = vector.load %arg21[%c0_317, %c0_318] : memref<64x32xbf16, #tpu.memory_space<vmem>>, vector<64x32xbf16>
    %cst_319 = arith.constant dense<0.000000e+00> : vector<4x32xf32>
    %788 = tpu.matmul %786, %787, %cst_319 {dimension_numbers = #tpu.dot_dimension_numbers<[1], [0], [0], [1], [0, 0, 1, 1], [], []>} : vector<4x64xbf16>, vector<64x32xbf16>, vector<4x32xf32> -> vector<4x32xf32>
    %789 = arith.addf %744, %788 : vector<4x32xf32>
    %790 = vector.extract_strided_slice %667 {offsets = [2, 0], sizes = [1, 32], strides = [1, 1]} : vector<6x32xf32> to vector<1x32xf32>
    %791 = vector.extract_strided_slice %667 {offsets = [3, 0], sizes = [1, 32], strides = [1, 1]} : vector<6x32xf32> to vector<1x32xf32>
    %cst_320 = arith.constant dense<0.000000e+00> : vector<4xf32>
    %792 = vector.multi_reduction <add>, %789, %cst_320 [1] : vector<4x32xf32> to vector<4xf32>
    %793 = vector.shape_cast %792 : vector<4xf32> to vector<4x1xf32>
    %cst_321 = arith.constant 3.200000e+01 : f32
    %794 = vector.broadcast %cst_321 : f32 to vector<4x1xf32>
    %795 = arith.divf %793, %794 : vector<4x1xf32>
    %796 = vector.broadcast %795 : vector<4x1xf32> to vector<4x32xf32>
    %797 = arith.subf %789, %796 : vector<4x32xf32>
    %798 = arith.mulf %797, %797 : vector<4x32xf32>
    %cst_322 = arith.constant dense<0.000000e+00> : vector<4xf32>
    %799 = vector.multi_reduction <add>, %798, %cst_322 [1] : vector<4x32xf32> to vector<4xf32>
    %800 = vector.shape_cast %799 : vector<4xf32> to vector<4x1xf32>
    %cst_323 = arith.constant 3.200000e+01 : f32
    %801 = vector.broadcast %cst_323 : f32 to vector<4x1xf32>
    %802 = arith.divf %800, %801 : vector<4x1xf32>
    %803 = vector.broadcast %795 : vector<4x1xf32> to vector<4x32xf32>
    %804 = arith.subf %789, %803 : vector<4x32xf32>
    %cst_324 = arith.constant 9.99999997E-7 : f32
    %805 = vector.broadcast %cst_324 : f32 to vector<4x1xf32>
    %806 = arith.addf %802, %805 : vector<4x1xf32>
    %807 = math.rsqrt %806 : vector<4x1xf32>
    %808 = vector.broadcast %807 : vector<4x1xf32> to vector<4x32xf32>
    %809 = arith.mulf %804, %808 : vector<4x32xf32>
    %810 = vector.broadcast %790 : vector<1x32xf32> to vector<4x32xf32>
    %811 = arith.mulf %809, %810 : vector<4x32xf32>
    %812 = vector.broadcast %791 : vector<1x32xf32> to vector<4x32xf32>
    %813 = arith.addf %811, %812 : vector<4x32xf32>
    %814 = arith.truncf %813 : vector<4x32xf32> to vector<4x32xbf16>
    %c0_325 = arith.constant 0 : index
    %c0_326 = arith.constant 0 : index
    %815 = vector.load %arg22[%c0_325, %c0_326] : memref<32x64xbf16, #tpu.memory_space<vmem>>, vector<32x64xbf16>
    %cst_327 = arith.constant dense<0.000000e+00> : vector<4x64xf32>
    %816 = tpu.matmul %814, %815, %cst_327 {dimension_numbers = #tpu.dot_dimension_numbers<[1], [0], [0], [1], [0, 0, 1, 1], [], []>} : vector<4x32xbf16>, vector<32x64xbf16>, vector<4x64xf32> -> vector<4x64xf32>
    %817 = vector.extract_strided_slice %668 {offsets = [0, 0], sizes = [1, 64], strides = [1, 1]} : vector<1x96xf32> to vector<1x64xf32>
    %818 = vector.broadcast %817 : vector<1x64xf32> to vector<4x64xf32>
    %819 = arith.addf %816, %818 : vector<4x64xf32>
    %cst_328 = arith.constant 0.000000e+00 : f32
    %820 = vector.broadcast %cst_328 : f32 to vector<4x64xf32>
    %821 = arith.maximumf %819, %820 : vector<4x64xf32>
    %822 = arith.truncf %821 : vector<4x64xf32> to vector<4x64xbf16>
    %c0_329 = arith.constant 0 : index
    %c0_330 = arith.constant 0 : index
    %823 = vector.load %arg23[%c0_329, %c0_330] : memref<64x32xbf16, #tpu.memory_space<vmem>>, vector<64x32xbf16>
    %cst_331 = arith.constant dense<0.000000e+00> : vector<4x32xf32>
    %824 = tpu.matmul %822, %823, %cst_331 {dimension_numbers = #tpu.dot_dimension_numbers<[1], [0], [0], [1], [0, 0, 1, 1], [], []>} : vector<4x64xbf16>, vector<64x32xbf16>, vector<4x32xf32> -> vector<4x32xf32>
    %825 = vector.extract_strided_slice %668 {offsets = [0, 64], sizes = [1, 32], strides = [1, 1]} : vector<1x96xf32> to vector<1x32xf32>
    %826 = vector.broadcast %825 : vector<1x32xf32> to vector<4x32xf32>
    %827 = arith.addf %824, %826 : vector<4x32xf32>
    %828 = arith.addf %827, %813 : vector<4x32xf32>
    %829 = vector.extract_strided_slice %667 {offsets = [4, 0], sizes = [1, 32], strides = [1, 1]} : vector<6x32xf32> to vector<1x32xf32>
    %830 = vector.extract_strided_slice %667 {offsets = [5, 0], sizes = [1, 32], strides = [1, 1]} : vector<6x32xf32> to vector<1x32xf32>
    %cst_332 = arith.constant dense<0.000000e+00> : vector<4xf32>
    %831 = vector.multi_reduction <add>, %828, %cst_332 [1] : vector<4x32xf32> to vector<4xf32>
    %832 = vector.shape_cast %831 : vector<4xf32> to vector<4x1xf32>
    %cst_333 = arith.constant 3.200000e+01 : f32
    %833 = vector.broadcast %cst_333 : f32 to vector<4x1xf32>
    %834 = arith.divf %832, %833 : vector<4x1xf32>
    %835 = vector.broadcast %834 : vector<4x1xf32> to vector<4x32xf32>
    %836 = arith.subf %828, %835 : vector<4x32xf32>
    %837 = arith.mulf %836, %836 : vector<4x32xf32>
    %cst_334 = arith.constant dense<0.000000e+00> : vector<4xf32>
    %838 = vector.multi_reduction <add>, %837, %cst_334 [1] : vector<4x32xf32> to vector<4xf32>
    %839 = vector.shape_cast %838 : vector<4xf32> to vector<4x1xf32>
    %cst_335 = arith.constant 3.200000e+01 : f32
    %840 = vector.broadcast %cst_335 : f32 to vector<4x1xf32>
    %841 = arith.divf %839, %840 : vector<4x1xf32>
    %842 = vector.broadcast %834 : vector<4x1xf32> to vector<4x32xf32>
    %843 = arith.subf %828, %842 : vector<4x32xf32>
    %cst_336 = arith.constant 9.99999997E-7 : f32
    %844 = vector.broadcast %cst_336 : f32 to vector<4x1xf32>
    %845 = arith.addf %841, %844 : vector<4x1xf32>
    %846 = math.rsqrt %845 : vector<4x1xf32>
    %847 = vector.broadcast %846 : vector<4x1xf32> to vector<4x32xf32>
    %848 = arith.mulf %843, %847 : vector<4x32xf32>
    %849 = vector.broadcast %829 : vector<1x32xf32> to vector<4x32xf32>
    %850 = arith.mulf %848, %849 : vector<4x32xf32>
    %851 = vector.broadcast %830 : vector<1x32xf32> to vector<4x32xf32>
    %852 = arith.addf %850, %851 : vector<4x32xf32>
    %c1_337 = arith.constant 1 : index
    %c0_338 = arith.constant 0 : index
    %c0_339 = arith.constant 0 : index
    %853 = vector.load %arg5[%c1_337, %c0_338, %c0_339] : memref<2x8x32xf32, #tpu.memory_space<vmem>>, vector<1x8x32xf32>
    %854 = vector.shape_cast %853 : vector<1x8x32xf32> to vector<8x32xf32>
    %c1_340 = arith.constant 1 : index
    %c0_341 = arith.constant 0 : index
    %c0_342 = arith.constant 0 : index
    %855 = vector.load %arg6[%c1_340, %c0_341, %c0_342] : memref<2x8x32xf32, #tpu.memory_space<vmem>>, vector<1x8x32xf32>
    %856 = vector.shape_cast %855 : vector<1x8x32xf32> to vector<8x32xf32>
    %c1_343 = arith.constant 1 : index
    %c0_344 = arith.constant 0 : index
    %c0_345 = arith.constant 0 : index
    %857 = vector.load %arg9[%c1_343, %c0_344, %c0_345] : memref<2x4x32xf32, #tpu.memory_space<vmem>>, vector<1x4x32xf32>
    %858 = vector.shape_cast %857 : vector<1x4x32xf32> to vector<4x32xf32>
    %859 = vector.extract_strided_slice %2 {offsets = [1, 0], sizes = [1, 8], strides = [1, 1]} : vector<2x8xf32> to vector<1x8xf32>
    %860 = tpu.iota {dimensions = array<i32: 0>} : vector<8x8xi32>
    %861 = tpu.iota {dimensions = array<i32: 1>} : vector<8x8xi32>
    %862 = arith.cmpi sge, %860, %861 : vector<8x8xi32>
    %cst_346 = arith.constant 5.000000e-01 : f32
    %863 = vector.broadcast %cst_346 : f32 to vector<1x8xf32>
    %864 = arith.cmpf ogt, %859, %863 : vector<1x8xf32>
    %865 = vector.broadcast %864 : vector<1x8xi1> to vector<8x8xi1>
    %866 = arith.andi %862, %865 : vector<8x8xi1>
    %cst_347 = arith.constant 0.000000e+00 : f32
    %cst_348 = arith.constant -1.000000e+09 : f32
    %867 = vector.broadcast %cst_347 : f32 to vector<8x8xf32>
    %868 = vector.broadcast %cst_348 : f32 to vector<8x8xf32>
    %869 = arith.select %866, %867, %868 : vector<8x8xi1>, vector<8x8xf32>
    %c0_349 = arith.constant 0 : index
    %c0_350 = arith.constant 0 : index
    %870 = vector.load %arg34[%c0_349, %c0_350] : memref<6x32xf32, #tpu.memory_space<vmem>>, vector<6x32xf32>
    %c0_351 = arith.constant 0 : index
    %c0_352 = arith.constant 0 : index
    %871 = vector.load %arg33[%c0_351, %c0_352] : memref<1x96xf32, #tpu.memory_space<vmem>>, vector<1x96xf32>
    %872 = arith.truncf %854 : vector<8x32xf32> to vector<8x32xbf16>
    %873 = arith.truncf %856 : vector<8x32xf32> to vector<8x32xbf16>
    %c0_353 = arith.constant 0 : index
    %c0_354 = arith.constant 0 : index
    %c0_355 = arith.constant 0 : index
    %874 = vector.load %arg26[%c0_353, %c0_354, %c0_355] : memref<2x32x192xbf16, #tpu.memory_space<vmem>>, vector<1x32x192xbf16>
    %875 = vector.shape_cast %874 : vector<1x32x192xbf16> to vector<32x192xbf16>
    %cst_356 = arith.constant dense<0.000000e+00> : vector<8x192xf32>
    %876 = tpu.matmul %872, %875, %cst_356 {dimension_numbers = #tpu.dot_dimension_numbers<[1], [0], [0], [1], [0, 0, 1, 1], [], []>} : vector<8x32xbf16>, vector<32x192xbf16>, vector<8x192xf32> -> vector<8x192xf32>
    %c1_357 = arith.constant 1 : index
    %c0_358 = arith.constant 0 : index
    %c0_359 = arith.constant 0 : index
    %877 = vector.load %arg26[%c1_357, %c0_358, %c0_359] : memref<2x32x192xbf16, #tpu.memory_space<vmem>>, vector<1x32x192xbf16>
    %878 = vector.shape_cast %877 : vector<1x32x192xbf16> to vector<32x192xbf16>
    %cst_360 = arith.constant dense<0.000000e+00> : vector<8x192xf32>
    %879 = tpu.matmul %873, %878, %cst_360 {dimension_numbers = #tpu.dot_dimension_numbers<[1], [0], [0], [1], [0, 0, 1, 1], [], []>} : vector<8x32xbf16>, vector<32x192xbf16>, vector<8x192xf32> -> vector<8x192xf32>
    %880 = arith.addf %876, %879 : vector<8x192xf32>
    %881 = vector.extract_strided_slice %880 {offsets = [0, 0], sizes = [8, 64], strides = [1, 1]} : vector<8x192xf32> to vector<8x64xf32>
    %882 = vector.extract_strided_slice %880 {offsets = [0, 64], sizes = [8, 64], strides = [1, 1]} : vector<8x192xf32> to vector<8x64xf32>
    %883 = vector.extract_strided_slice %880 {offsets = [0, 128], sizes = [8, 64], strides = [1, 1]} : vector<8x192xf32> to vector<8x64xf32>
    %884 = vector.extract_strided_slice %881 {offsets = [0, 0], sizes = [8, 32], strides = [1, 1]} : vector<8x64xf32> to vector<8x32xf32>
    %885 = vector.extract_strided_slice %882 {offsets = [0, 0], sizes = [8, 32], strides = [1, 1]} : vector<8x64xf32> to vector<8x32xf32>
    %cst_361 = arith.constant dense<0.000000e+00> : vector<8x8xf32>
    %886 = tpu.matmul %884, %885, %cst_361 {dimension_numbers = #tpu.dot_dimension_numbers<[1], [1], [0], [0], [0, 0, 1, 0], [], []>} : vector<8x32xf32>, vector<8x32xf32>, vector<8x8xf32> -> vector<8x8xf32>
    %cst_362 = arith.constant 0.176776692 : f32
    %887 = vector.broadcast %cst_362 : f32 to vector<8x8xf32>
    %888 = arith.mulf %886, %887 : vector<8x8xf32>
    %889 = arith.addf %888, %869 : vector<8x8xf32>
    %cst_363 = arith.constant dense<0xFF800000> : vector<8xf32>
    %890 = vector.multi_reduction <maximumf>, %889, %cst_363 [1] : vector<8x8xf32> to vector<8xf32>
    %891 = vector.shape_cast %890 : vector<8xf32> to vector<8x1xf32>
    %892 = vector.broadcast %891 : vector<8x1xf32> to vector<8x8xf32>
    %893 = arith.subf %889, %892 : vector<8x8xf32>
    %894 = math.exp %893 : vector<8x8xf32>
    %cst_364 = arith.constant dense<0.000000e+00> : vector<8xf32>
    %895 = vector.multi_reduction <add>, %894, %cst_364 [1] : vector<8x8xf32> to vector<8xf32>
    %896 = vector.shape_cast %895 : vector<8xf32> to vector<8x1xf32>
    %897 = vector.broadcast %896 : vector<8x1xf32> to vector<8x8xf32>
    %898 = arith.divf %894, %897 : vector<8x8xf32>
    %899 = vector.extract_strided_slice %883 {offsets = [0, 0], sizes = [8, 32], strides = [1, 1]} : vector<8x64xf32> to vector<8x32xf32>
    %cst_365 = arith.constant dense<0.000000e+00> : vector<8x32xf32>
    %900 = tpu.matmul %898, %899, %cst_365 {dimension_numbers = #tpu.dot_dimension_numbers<[1], [0], [0], [1], [0, 0, 1, 1], [], []>} : vector<8x8xf32>, vector<8x32xf32>, vector<8x32xf32> -> vector<8x32xf32>
    %901 = vector.extract_strided_slice %881 {offsets = [0, 32], sizes = [8, 32], strides = [1, 1]} : vector<8x64xf32> to vector<8x32xf32>
    %902 = vector.extract_strided_slice %882 {offsets = [0, 32], sizes = [8, 32], strides = [1, 1]} : vector<8x64xf32> to vector<8x32xf32>
    %cst_366 = arith.constant dense<0.000000e+00> : vector<8x8xf32>
    %903 = tpu.matmul %901, %902, %cst_366 {dimension_numbers = #tpu.dot_dimension_numbers<[1], [1], [0], [0], [0, 0, 1, 0], [], []>} : vector<8x32xf32>, vector<8x32xf32>, vector<8x8xf32> -> vector<8x8xf32>
    %cst_367 = arith.constant 0.176776692 : f32
    %904 = vector.broadcast %cst_367 : f32 to vector<8x8xf32>
    %905 = arith.mulf %903, %904 : vector<8x8xf32>
    %906 = arith.addf %905, %869 : vector<8x8xf32>
    %cst_368 = arith.constant dense<0xFF800000> : vector<8xf32>
    %907 = vector.multi_reduction <maximumf>, %906, %cst_368 [1] : vector<8x8xf32> to vector<8xf32>
    %908 = vector.shape_cast %907 : vector<8xf32> to vector<8x1xf32>
    %909 = vector.broadcast %908 : vector<8x1xf32> to vector<8x8xf32>
    %910 = arith.subf %906, %909 : vector<8x8xf32>
    %911 = math.exp %910 : vector<8x8xf32>
    %cst_369 = arith.constant dense<0.000000e+00> : vector<8xf32>
    %912 = vector.multi_reduction <add>, %911, %cst_369 [1] : vector<8x8xf32> to vector<8xf32>
    %913 = vector.shape_cast %912 : vector<8xf32> to vector<8x1xf32>
    %914 = vector.broadcast %913 : vector<8x1xf32> to vector<8x8xf32>
    %915 = arith.divf %911, %914 : vector<8x8xf32>
    %916 = vector.extract_strided_slice %883 {offsets = [0, 32], sizes = [8, 32], strides = [1, 1]} : vector<8x64xf32> to vector<8x32xf32>
    %cst_370 = arith.constant dense<0.000000e+00> : vector<8x32xf32>
    %917 = tpu.matmul %915, %916, %cst_370 {dimension_numbers = #tpu.dot_dimension_numbers<[1], [0], [0], [1], [0, 0, 1, 1], [], []>} : vector<8x8xf32>, vector<8x32xf32>, vector<8x32xf32> -> vector<8x32xf32>
    %918 = tpu.concatenate %900, %917 in 1 : vector<8x32xf32>, vector<8x32xf32> -> vector<8x64xf32>
    %919 = arith.addf %854, %856 : vector<8x32xf32>
    %920 = arith.truncf %918 : vector<8x64xf32> to vector<8x64xbf16>
    %c0_371 = arith.constant 0 : index
    %c0_372 = arith.constant 0 : index
    %921 = vector.load %arg27[%c0_371, %c0_372] : memref<64x32xbf16, #tpu.memory_space<vmem>>, vector<64x32xbf16>
    %cst_373 = arith.constant dense<0.000000e+00> : vector<8x32xf32>
    %922 = tpu.matmul %920, %921, %cst_373 {dimension_numbers = #tpu.dot_dimension_numbers<[1], [0], [0], [1], [0, 0, 1, 1], [], []>} : vector<8x64xbf16>, vector<64x32xbf16>, vector<8x32xf32> -> vector<8x32xf32>
    %923 = arith.addf %919, %922 : vector<8x32xf32>
    %924 = vector.extract_strided_slice %870 {offsets = [0, 0], sizes = [1, 32], strides = [1, 1]} : vector<6x32xf32> to vector<1x32xf32>
    %925 = vector.extract_strided_slice %870 {offsets = [1, 0], sizes = [1, 32], strides = [1, 1]} : vector<6x32xf32> to vector<1x32xf32>
    %cst_374 = arith.constant dense<0.000000e+00> : vector<8xf32>
    %926 = vector.multi_reduction <add>, %923, %cst_374 [1] : vector<8x32xf32> to vector<8xf32>
    %927 = vector.shape_cast %926 : vector<8xf32> to vector<8x1xf32>
    %cst_375 = arith.constant 3.200000e+01 : f32
    %928 = vector.broadcast %cst_375 : f32 to vector<8x1xf32>
    %929 = arith.divf %927, %928 : vector<8x1xf32>
    %930 = vector.broadcast %929 : vector<8x1xf32> to vector<8x32xf32>
    %931 = arith.subf %923, %930 : vector<8x32xf32>
    %932 = arith.mulf %931, %931 : vector<8x32xf32>
    %cst_376 = arith.constant dense<0.000000e+00> : vector<8xf32>
    %933 = vector.multi_reduction <add>, %932, %cst_376 [1] : vector<8x32xf32> to vector<8xf32>
    %934 = vector.shape_cast %933 : vector<8xf32> to vector<8x1xf32>
    %cst_377 = arith.constant 3.200000e+01 : f32
    %935 = vector.broadcast %cst_377 : f32 to vector<8x1xf32>
    %936 = arith.divf %934, %935 : vector<8x1xf32>
    %937 = vector.broadcast %929 : vector<8x1xf32> to vector<8x32xf32>
    %938 = arith.subf %923, %937 : vector<8x32xf32>
    %cst_378 = arith.constant 9.99999997E-7 : f32
    %939 = vector.broadcast %cst_378 : f32 to vector<8x1xf32>
    %940 = arith.addf %936, %939 : vector<8x1xf32>
    %941 = math.rsqrt %940 : vector<8x1xf32>
    %942 = vector.broadcast %941 : vector<8x1xf32> to vector<8x32xf32>
    %943 = arith.mulf %938, %942 : vector<8x32xf32>
    %944 = vector.broadcast %924 : vector<1x32xf32> to vector<8x32xf32>
    %945 = arith.mulf %943, %944 : vector<8x32xf32>
    %946 = vector.broadcast %925 : vector<1x32xf32> to vector<8x32xf32>
    %947 = arith.addf %945, %946 : vector<8x32xf32>
    %948 = arith.truncf %947 : vector<8x32xf32> to vector<8x32xbf16>
    %949 = arith.truncf %858 : vector<4x32xf32> to vector<4x32xbf16>
    %c0_379 = arith.constant 0 : index
    %c0_380 = arith.constant 0 : index
    %950 = vector.load %arg28[%c0_379, %c0_380] : memref<32x64xbf16, #tpu.memory_space<vmem>>, vector<32x64xbf16>
    %cst_381 = arith.constant dense<0.000000e+00> : vector<8x64xf32>
    %951 = tpu.matmul %948, %950, %cst_381 {dimension_numbers = #tpu.dot_dimension_numbers<[1], [0], [0], [1], [0, 0, 1, 1], [], []>} : vector<8x32xbf16>, vector<32x64xbf16>, vector<8x64xf32> -> vector<8x64xf32>
    %c0_382 = arith.constant 0 : index
    %c0_383 = arith.constant 0 : index
    %952 = vector.load %arg29[%c0_382, %c0_383] : memref<32x128xbf16, #tpu.memory_space<vmem>>, vector<32x128xbf16>
    %cst_384 = arith.constant dense<0.000000e+00> : vector<4x128xf32>
    %953 = tpu.matmul %949, %952, %cst_384 {dimension_numbers = #tpu.dot_dimension_numbers<[1], [0], [0], [1], [0, 0, 1, 1], [], []>} : vector<4x32xbf16>, vector<32x128xbf16>, vector<4x128xf32> -> vector<4x128xf32>
    %954 = vector.extract_strided_slice %953 {offsets = [0, 0], sizes = [4, 64], strides = [1, 1]} : vector<4x128xf32> to vector<4x64xf32>
    %955 = vector.extract_strided_slice %953 {offsets = [0, 64], sizes = [4, 64], strides = [1, 1]} : vector<4x128xf32> to vector<4x64xf32>
    %956 = vector.extract_strided_slice %951 {offsets = [0, 0], sizes = [8, 32], strides = [1, 1]} : vector<8x64xf32> to vector<8x32xf32>
    %957 = vector.extract_strided_slice %954 {offsets = [0, 0], sizes = [4, 32], strides = [1, 1]} : vector<4x64xf32> to vector<4x32xf32>
    %cst_385 = arith.constant dense<0.000000e+00> : vector<8x4xf32>
    %958 = tpu.matmul %956, %957, %cst_385 {dimension_numbers = #tpu.dot_dimension_numbers<[1], [1], [0], [0], [0, 0, 1, 0], [], []>} : vector<8x32xf32>, vector<4x32xf32>, vector<8x4xf32> -> vector<8x4xf32>
    %cst_386 = arith.constant 0.176776692 : f32
    %959 = vector.broadcast %cst_386 : f32 to vector<8x4xf32>
    %960 = arith.mulf %958, %959 : vector<8x4xf32>
    %cst_387 = arith.constant dense<0xFF800000> : vector<8xf32>
    %961 = vector.multi_reduction <maximumf>, %960, %cst_387 [1] : vector<8x4xf32> to vector<8xf32>
    %962 = vector.shape_cast %961 : vector<8xf32> to vector<8x1xf32>
    %963 = vector.broadcast %962 : vector<8x1xf32> to vector<8x4xf32>
    %964 = arith.subf %960, %963 : vector<8x4xf32>
    %965 = math.exp %964 : vector<8x4xf32>
    %cst_388 = arith.constant dense<0.000000e+00> : vector<8xf32>
    %966 = vector.multi_reduction <add>, %965, %cst_388 [1] : vector<8x4xf32> to vector<8xf32>
    %967 = vector.shape_cast %966 : vector<8xf32> to vector<8x1xf32>
    %968 = vector.broadcast %967 : vector<8x1xf32> to vector<8x4xf32>
    %969 = arith.divf %965, %968 : vector<8x4xf32>
    %970 = vector.extract_strided_slice %955 {offsets = [0, 0], sizes = [4, 32], strides = [1, 1]} : vector<4x64xf32> to vector<4x32xf32>
    %cst_389 = arith.constant dense<0.000000e+00> : vector<8x32xf32>
    %971 = tpu.matmul %969, %970, %cst_389 {dimension_numbers = #tpu.dot_dimension_numbers<[1], [0], [0], [1], [0, 0, 1, 1], [], []>} : vector<8x4xf32>, vector<4x32xf32>, vector<8x32xf32> -> vector<8x32xf32>
    %972 = vector.extract_strided_slice %951 {offsets = [0, 32], sizes = [8, 32], strides = [1, 1]} : vector<8x64xf32> to vector<8x32xf32>
    %973 = vector.extract_strided_slice %954 {offsets = [0, 32], sizes = [4, 32], strides = [1, 1]} : vector<4x64xf32> to vector<4x32xf32>
    %cst_390 = arith.constant dense<0.000000e+00> : vector<8x4xf32>
    %974 = tpu.matmul %972, %973, %cst_390 {dimension_numbers = #tpu.dot_dimension_numbers<[1], [1], [0], [0], [0, 0, 1, 0], [], []>} : vector<8x32xf32>, vector<4x32xf32>, vector<8x4xf32> -> vector<8x4xf32>
    %cst_391 = arith.constant 0.176776692 : f32
    %975 = vector.broadcast %cst_391 : f32 to vector<8x4xf32>
    %976 = arith.mulf %974, %975 : vector<8x4xf32>
    %cst_392 = arith.constant dense<0xFF800000> : vector<8xf32>
    %977 = vector.multi_reduction <maximumf>, %976, %cst_392 [1] : vector<8x4xf32> to vector<8xf32>
    %978 = vector.shape_cast %977 : vector<8xf32> to vector<8x1xf32>
    %979 = vector.broadcast %978 : vector<8x1xf32> to vector<8x4xf32>
    %980 = arith.subf %976, %979 : vector<8x4xf32>
    %981 = math.exp %980 : vector<8x4xf32>
    %cst_393 = arith.constant dense<0.000000e+00> : vector<8xf32>
    %982 = vector.multi_reduction <add>, %981, %cst_393 [1] : vector<8x4xf32> to vector<8xf32>
    %983 = vector.shape_cast %982 : vector<8xf32> to vector<8x1xf32>
    %984 = vector.broadcast %983 : vector<8x1xf32> to vector<8x4xf32>
    %985 = arith.divf %981, %984 : vector<8x4xf32>
    %986 = vector.extract_strided_slice %955 {offsets = [0, 32], sizes = [4, 32], strides = [1, 1]} : vector<4x64xf32> to vector<4x32xf32>
    %cst_394 = arith.constant dense<0.000000e+00> : vector<8x32xf32>
    %987 = tpu.matmul %985, %986, %cst_394 {dimension_numbers = #tpu.dot_dimension_numbers<[1], [0], [0], [1], [0, 0, 1, 1], [], []>} : vector<8x4xf32>, vector<4x32xf32>, vector<8x32xf32> -> vector<8x32xf32>
    %988 = tpu.concatenate %971, %987 in 1 : vector<8x32xf32>, vector<8x32xf32> -> vector<8x64xf32>
    %989 = arith.truncf %988 : vector<8x64xf32> to vector<8x64xbf16>
    %c0_395 = arith.constant 0 : index
    %c0_396 = arith.constant 0 : index
    %990 = vector.load %arg30[%c0_395, %c0_396] : memref<64x32xbf16, #tpu.memory_space<vmem>>, vector<64x32xbf16>
    %cst_397 = arith.constant dense<0.000000e+00> : vector<8x32xf32>
    %991 = tpu.matmul %989, %990, %cst_397 {dimension_numbers = #tpu.dot_dimension_numbers<[1], [0], [0], [1], [0, 0, 1, 1], [], []>} : vector<8x64xbf16>, vector<64x32xbf16>, vector<8x32xf32> -> vector<8x32xf32>
    %992 = arith.addf %947, %991 : vector<8x32xf32>
    %993 = vector.extract_strided_slice %870 {offsets = [2, 0], sizes = [1, 32], strides = [1, 1]} : vector<6x32xf32> to vector<1x32xf32>
    %994 = vector.extract_strided_slice %870 {offsets = [3, 0], sizes = [1, 32], strides = [1, 1]} : vector<6x32xf32> to vector<1x32xf32>
    %cst_398 = arith.constant dense<0.000000e+00> : vector<8xf32>
    %995 = vector.multi_reduction <add>, %992, %cst_398 [1] : vector<8x32xf32> to vector<8xf32>
    %996 = vector.shape_cast %995 : vector<8xf32> to vector<8x1xf32>
    %cst_399 = arith.constant 3.200000e+01 : f32
    %997 = vector.broadcast %cst_399 : f32 to vector<8x1xf32>
    %998 = arith.divf %996, %997 : vector<8x1xf32>
    %999 = vector.broadcast %998 : vector<8x1xf32> to vector<8x32xf32>
    %1000 = arith.subf %992, %999 : vector<8x32xf32>
    %1001 = arith.mulf %1000, %1000 : vector<8x32xf32>
    %cst_400 = arith.constant dense<0.000000e+00> : vector<8xf32>
    %1002 = vector.multi_reduction <add>, %1001, %cst_400 [1] : vector<8x32xf32> to vector<8xf32>
    %1003 = vector.shape_cast %1002 : vector<8xf32> to vector<8x1xf32>
    %cst_401 = arith.constant 3.200000e+01 : f32
    %1004 = vector.broadcast %cst_401 : f32 to vector<8x1xf32>
    %1005 = arith.divf %1003, %1004 : vector<8x1xf32>
    %1006 = vector.broadcast %998 : vector<8x1xf32> to vector<8x32xf32>
    %1007 = arith.subf %992, %1006 : vector<8x32xf32>
    %cst_402 = arith.constant 9.99999997E-7 : f32
    %1008 = vector.broadcast %cst_402 : f32 to vector<8x1xf32>
    %1009 = arith.addf %1005, %1008 : vector<8x1xf32>
    %1010 = math.rsqrt %1009 : vector<8x1xf32>
    %1011 = vector.broadcast %1010 : vector<8x1xf32> to vector<8x32xf32>
    %1012 = arith.mulf %1007, %1011 : vector<8x32xf32>
    %1013 = vector.broadcast %993 : vector<1x32xf32> to vector<8x32xf32>
    %1014 = arith.mulf %1012, %1013 : vector<8x32xf32>
    %1015 = vector.broadcast %994 : vector<1x32xf32> to vector<8x32xf32>
    %1016 = arith.addf %1014, %1015 : vector<8x32xf32>
    %1017 = arith.truncf %1016 : vector<8x32xf32> to vector<8x32xbf16>
    %c0_403 = arith.constant 0 : index
    %c0_404 = arith.constant 0 : index
    %1018 = vector.load %arg31[%c0_403, %c0_404] : memref<32x64xbf16, #tpu.memory_space<vmem>>, vector<32x64xbf16>
    %cst_405 = arith.constant dense<0.000000e+00> : vector<8x64xf32>
    %1019 = tpu.matmul %1017, %1018, %cst_405 {dimension_numbers = #tpu.dot_dimension_numbers<[1], [0], [0], [1], [0, 0, 1, 1], [], []>} : vector<8x32xbf16>, vector<32x64xbf16>, vector<8x64xf32> -> vector<8x64xf32>
    %1020 = vector.extract_strided_slice %871 {offsets = [0, 0], sizes = [1, 64], strides = [1, 1]} : vector<1x96xf32> to vector<1x64xf32>
    %1021 = vector.broadcast %1020 : vector<1x64xf32> to vector<8x64xf32>
    %1022 = arith.addf %1019, %1021 : vector<8x64xf32>
    %cst_406 = arith.constant 0.000000e+00 : f32
    %1023 = vector.broadcast %cst_406 : f32 to vector<8x64xf32>
    %1024 = arith.maximumf %1022, %1023 : vector<8x64xf32>
    %1025 = arith.truncf %1024 : vector<8x64xf32> to vector<8x64xbf16>
    %c0_407 = arith.constant 0 : index
    %c0_408 = arith.constant 0 : index
    %1026 = vector.load %arg32[%c0_407, %c0_408] : memref<64x32xbf16, #tpu.memory_space<vmem>>, vector<64x32xbf16>
    %cst_409 = arith.constant dense<0.000000e+00> : vector<8x32xf32>
    %1027 = tpu.matmul %1025, %1026, %cst_409 {dimension_numbers = #tpu.dot_dimension_numbers<[1], [0], [0], [1], [0, 0, 1, 1], [], []>} : vector<8x64xbf16>, vector<64x32xbf16>, vector<8x32xf32> -> vector<8x32xf32>
    %1028 = vector.extract_strided_slice %871 {offsets = [0, 64], sizes = [1, 32], strides = [1, 1]} : vector<1x96xf32> to vector<1x32xf32>
    %1029 = vector.broadcast %1028 : vector<1x32xf32> to vector<8x32xf32>
    %1030 = arith.addf %1027, %1029 : vector<8x32xf32>
    %1031 = arith.addf %1030, %1016 : vector<8x32xf32>
    %1032 = vector.extract_strided_slice %870 {offsets = [4, 0], sizes = [1, 32], strides = [1, 1]} : vector<6x32xf32> to vector<1x32xf32>
    %1033 = vector.extract_strided_slice %870 {offsets = [5, 0], sizes = [1, 32], strides = [1, 1]} : vector<6x32xf32> to vector<1x32xf32>
    %cst_410 = arith.constant dense<0.000000e+00> : vector<8xf32>
    %1034 = vector.multi_reduction <add>, %1031, %cst_410 [1] : vector<8x32xf32> to vector<8xf32>
    %1035 = vector.shape_cast %1034 : vector<8xf32> to vector<8x1xf32>
    %cst_411 = arith.constant 3.200000e+01 : f32
    %1036 = vector.broadcast %cst_411 : f32 to vector<8x1xf32>
    %1037 = arith.divf %1035, %1036 : vector<8x1xf32>
    %1038 = vector.broadcast %1037 : vector<8x1xf32> to vector<8x32xf32>
    %1039 = arith.subf %1031, %1038 : vector<8x32xf32>
    %1040 = arith.mulf %1039, %1039 : vector<8x32xf32>
    %cst_412 = arith.constant dense<0.000000e+00> : vector<8xf32>
    %1041 = vector.multi_reduction <add>, %1040, %cst_412 [1] : vector<8x32xf32> to vector<8xf32>
    %1042 = vector.shape_cast %1041 : vector<8xf32> to vector<8x1xf32>
    %cst_413 = arith.constant 3.200000e+01 : f32
    %1043 = vector.broadcast %cst_413 : f32 to vector<8x1xf32>
    %1044 = arith.divf %1042, %1043 : vector<8x1xf32>
    %1045 = vector.broadcast %1037 : vector<8x1xf32> to vector<8x32xf32>
    %1046 = arith.subf %1031, %1045 : vector<8x32xf32>
    %cst_414 = arith.constant 9.99999997E-7 : f32
    %1047 = vector.broadcast %cst_414 : f32 to vector<8x1xf32>
    %1048 = arith.addf %1044, %1047 : vector<8x1xf32>
    %1049 = math.rsqrt %1048 : vector<8x1xf32>
    %1050 = vector.broadcast %1049 : vector<8x1xf32> to vector<8x32xf32>
    %1051 = arith.mulf %1046, %1050 : vector<8x32xf32>
    %1052 = vector.broadcast %1032 : vector<1x32xf32> to vector<8x32xf32>
    %1053 = arith.mulf %1051, %1052 : vector<8x32xf32>
    %1054 = vector.broadcast %1033 : vector<1x32xf32> to vector<8x32xf32>
    %1055 = arith.addf %1053, %1054 : vector<8x32xf32>
    %c0_415 = arith.constant 0 : index
    %c0_416 = arith.constant 0 : index
    %1056 = vector.load %arg14[%c0_415, %c0_416] : memref<8x4xf32, #tpu.memory_space<vmem>>, vector<8x4xf32>
    %cst_417 = arith.constant dense<0.000000e+00> : vector<8x32xf32>
    %1057 = tpu.matmul %1056, %852, %cst_417 {dimension_numbers = #tpu.dot_dimension_numbers<[1], [0], [0], [1], [0, 0, 1, 1], [], []>} : vector<8x4xf32>, vector<4x32xf32>, vector<8x32xf32> -> vector<8x32xf32>
    %c1_418 = arith.constant 1 : index
    %c0_419 = arith.constant 0 : index
    %c0_420 = arith.constant 0 : index
    %1058 = vector.load %arg3[%c1_418, %c0_419, %c0_420] : memref<2x4x32xf32, #tpu.memory_space<vmem>>, vector<1x4x32xf32>
    %1059 = vector.shape_cast %1058 : vector<1x4x32xf32> to vector<4x32xf32>
    %c1_421 = arith.constant 1 : index
    %c0_422 = arith.constant 0 : index
    %c0_423 = arith.constant 0 : index
    %1060 = vector.load %arg4[%c1_421, %c0_422, %c0_423] : memref<2x4x32xf32, #tpu.memory_space<vmem>>, vector<1x4x32xf32>
    %1061 = vector.shape_cast %1060 : vector<1x4x32xf32> to vector<4x32xf32>
    %c1_424 = arith.constant 1 : index
    %c0_425 = arith.constant 0 : index
    %c0_426 = arith.constant 0 : index
    %1062 = vector.load %arg8[%c1_424, %c0_425, %c0_426] : memref<2x2x32xf32, #tpu.memory_space<vmem>>, vector<1x2x32xf32>
    %1063 = vector.shape_cast %1062 : vector<1x2x32xf32> to vector<2x32xf32>
    %1064 = vector.extract_strided_slice %1 {offsets = [1, 0], sizes = [1, 4], strides = [1, 1]} : vector<2x4xf32> to vector<1x4xf32>
    %1065 = tpu.iota {dimensions = array<i32: 0>} : vector<4x4xi32>
    %1066 = tpu.iota {dimensions = array<i32: 1>} : vector<4x4xi32>
    %1067 = arith.cmpi sge, %1065, %1066 : vector<4x4xi32>
    %cst_427 = arith.constant 5.000000e-01 : f32
    %1068 = vector.broadcast %cst_427 : f32 to vector<1x4xf32>
    %1069 = arith.cmpf ogt, %1064, %1068 : vector<1x4xf32>
    %1070 = vector.broadcast %1069 : vector<1x4xi1> to vector<4x4xi1>
    %1071 = arith.andi %1067, %1070 : vector<4x4xi1>
    %cst_428 = arith.constant 0.000000e+00 : f32
    %cst_429 = arith.constant -1.000000e+09 : f32
    %1072 = vector.broadcast %cst_428 : f32 to vector<4x4xf32>
    %1073 = vector.broadcast %cst_429 : f32 to vector<4x4xf32>
    %1074 = arith.select %1071, %1072, %1073 : vector<4x4xi1>, vector<4x4xf32>
    %c0_430 = arith.constant 0 : index
    %c0_431 = arith.constant 0 : index
    %1075 = vector.load %arg25[%c0_430, %c0_431] : memref<6x32xf32, #tpu.memory_space<vmem>>, vector<6x32xf32>
    %c0_432 = arith.constant 0 : index
    %c0_433 = arith.constant 0 : index
    %1076 = vector.load %arg24[%c0_432, %c0_433] : memref<1x96xf32, #tpu.memory_space<vmem>>, vector<1x96xf32>
    %1077 = arith.truncf %1059 : vector<4x32xf32> to vector<4x32xbf16>
    %1078 = arith.truncf %1061 : vector<4x32xf32> to vector<4x32xbf16>
    %c0_434 = arith.constant 0 : index
    %c0_435 = arith.constant 0 : index
    %c0_436 = arith.constant 0 : index
    %1079 = vector.load %arg17[%c0_434, %c0_435, %c0_436] : memref<2x32x192xbf16, #tpu.memory_space<vmem>>, vector<1x32x192xbf16>
    %1080 = vector.shape_cast %1079 : vector<1x32x192xbf16> to vector<32x192xbf16>
    %cst_437 = arith.constant dense<0.000000e+00> : vector<4x192xf32>
    %1081 = tpu.matmul %1077, %1080, %cst_437 {dimension_numbers = #tpu.dot_dimension_numbers<[1], [0], [0], [1], [0, 0, 1, 1], [], []>} : vector<4x32xbf16>, vector<32x192xbf16>, vector<4x192xf32> -> vector<4x192xf32>
    %c1_438 = arith.constant 1 : index
    %c0_439 = arith.constant 0 : index
    %c0_440 = arith.constant 0 : index
    %1082 = vector.load %arg17[%c1_438, %c0_439, %c0_440] : memref<2x32x192xbf16, #tpu.memory_space<vmem>>, vector<1x32x192xbf16>
    %1083 = vector.shape_cast %1082 : vector<1x32x192xbf16> to vector<32x192xbf16>
    %cst_441 = arith.constant dense<0.000000e+00> : vector<4x192xf32>
    %1084 = tpu.matmul %1078, %1083, %cst_441 {dimension_numbers = #tpu.dot_dimension_numbers<[1], [0], [0], [1], [0, 0, 1, 1], [], []>} : vector<4x32xbf16>, vector<32x192xbf16>, vector<4x192xf32> -> vector<4x192xf32>
    %1085 = arith.addf %1081, %1084 : vector<4x192xf32>
    %1086 = vector.extract_strided_slice %1085 {offsets = [0, 0], sizes = [4, 64], strides = [1, 1]} : vector<4x192xf32> to vector<4x64xf32>
    %1087 = vector.extract_strided_slice %1085 {offsets = [0, 64], sizes = [4, 64], strides = [1, 1]} : vector<4x192xf32> to vector<4x64xf32>
    %1088 = vector.extract_strided_slice %1085 {offsets = [0, 128], sizes = [4, 64], strides = [1, 1]} : vector<4x192xf32> to vector<4x64xf32>
    %1089 = vector.extract_strided_slice %1086 {offsets = [0, 0], sizes = [4, 32], strides = [1, 1]} : vector<4x64xf32> to vector<4x32xf32>
    %1090 = vector.extract_strided_slice %1087 {offsets = [0, 0], sizes = [4, 32], strides = [1, 1]} : vector<4x64xf32> to vector<4x32xf32>
    %cst_442 = arith.constant dense<0.000000e+00> : vector<4x4xf32>
    %1091 = tpu.matmul %1089, %1090, %cst_442 {dimension_numbers = #tpu.dot_dimension_numbers<[1], [1], [0], [0], [0, 0, 1, 0], [], []>} : vector<4x32xf32>, vector<4x32xf32>, vector<4x4xf32> -> vector<4x4xf32>
    %cst_443 = arith.constant 0.176776692 : f32
    %1092 = vector.broadcast %cst_443 : f32 to vector<4x4xf32>
    %1093 = arith.mulf %1091, %1092 : vector<4x4xf32>
    %1094 = arith.addf %1093, %1074 : vector<4x4xf32>
    %cst_444 = arith.constant dense<0xFF800000> : vector<4xf32>
    %1095 = vector.multi_reduction <maximumf>, %1094, %cst_444 [1] : vector<4x4xf32> to vector<4xf32>
    %1096 = vector.shape_cast %1095 : vector<4xf32> to vector<4x1xf32>
    %1097 = vector.broadcast %1096 : vector<4x1xf32> to vector<4x4xf32>
    %1098 = arith.subf %1094, %1097 : vector<4x4xf32>
    %1099 = math.exp %1098 : vector<4x4xf32>
    %cst_445 = arith.constant dense<0.000000e+00> : vector<4xf32>
    %1100 = vector.multi_reduction <add>, %1099, %cst_445 [1] : vector<4x4xf32> to vector<4xf32>
    %1101 = vector.shape_cast %1100 : vector<4xf32> to vector<4x1xf32>
    %1102 = vector.broadcast %1101 : vector<4x1xf32> to vector<4x4xf32>
    %1103 = arith.divf %1099, %1102 : vector<4x4xf32>
    %1104 = vector.extract_strided_slice %1088 {offsets = [0, 0], sizes = [4, 32], strides = [1, 1]} : vector<4x64xf32> to vector<4x32xf32>
    %cst_446 = arith.constant dense<0.000000e+00> : vector<4x32xf32>
    %1105 = tpu.matmul %1103, %1104, %cst_446 {dimension_numbers = #tpu.dot_dimension_numbers<[1], [0], [0], [1], [0, 0, 1, 1], [], []>} : vector<4x4xf32>, vector<4x32xf32>, vector<4x32xf32> -> vector<4x32xf32>
    %1106 = vector.extract_strided_slice %1086 {offsets = [0, 32], sizes = [4, 32], strides = [1, 1]} : vector<4x64xf32> to vector<4x32xf32>
    %1107 = vector.extract_strided_slice %1087 {offsets = [0, 32], sizes = [4, 32], strides = [1, 1]} : vector<4x64xf32> to vector<4x32xf32>
    %cst_447 = arith.constant dense<0.000000e+00> : vector<4x4xf32>
    %1108 = tpu.matmul %1106, %1107, %cst_447 {dimension_numbers = #tpu.dot_dimension_numbers<[1], [1], [0], [0], [0, 0, 1, 0], [], []>} : vector<4x32xf32>, vector<4x32xf32>, vector<4x4xf32> -> vector<4x4xf32>
    %cst_448 = arith.constant 0.176776692 : f32
    %1109 = vector.broadcast %cst_448 : f32 to vector<4x4xf32>
    %1110 = arith.mulf %1108, %1109 : vector<4x4xf32>
    %1111 = arith.addf %1110, %1074 : vector<4x4xf32>
    %cst_449 = arith.constant dense<0xFF800000> : vector<4xf32>
    %1112 = vector.multi_reduction <maximumf>, %1111, %cst_449 [1] : vector<4x4xf32> to vector<4xf32>
    %1113 = vector.shape_cast %1112 : vector<4xf32> to vector<4x1xf32>
    %1114 = vector.broadcast %1113 : vector<4x1xf32> to vector<4x4xf32>
    %1115 = arith.subf %1111, %1114 : vector<4x4xf32>
    %1116 = math.exp %1115 : vector<4x4xf32>
    %cst_450 = arith.constant dense<0.000000e+00> : vector<4xf32>
    %1117 = vector.multi_reduction <add>, %1116, %cst_450 [1] : vector<4x4xf32> to vector<4xf32>
    %1118 = vector.shape_cast %1117 : vector<4xf32> to vector<4x1xf32>
    %1119 = vector.broadcast %1118 : vector<4x1xf32> to vector<4x4xf32>
    %1120 = arith.divf %1116, %1119 : vector<4x4xf32>
    %1121 = vector.extract_strided_slice %1088 {offsets = [0, 32], sizes = [4, 32], strides = [1, 1]} : vector<4x64xf32> to vector<4x32xf32>
    %cst_451 = arith.constant dense<0.000000e+00> : vector<4x32xf32>
    %1122 = tpu.matmul %1120, %1121, %cst_451 {dimension_numbers = #tpu.dot_dimension_numbers<[1], [0], [0], [1], [0, 0, 1, 1], [], []>} : vector<4x4xf32>, vector<4x32xf32>, vector<4x32xf32> -> vector<4x32xf32>
    %1123 = tpu.concatenate %1105, %1122 in 1 : vector<4x32xf32>, vector<4x32xf32> -> vector<4x64xf32>
    %1124 = arith.addf %1059, %1061 : vector<4x32xf32>
    %1125 = arith.truncf %1123 : vector<4x64xf32> to vector<4x64xbf16>
    %c0_452 = arith.constant 0 : index
    %c0_453 = arith.constant 0 : index
    %1126 = vector.load %arg18[%c0_452, %c0_453] : memref<64x32xbf16, #tpu.memory_space<vmem>>, vector<64x32xbf16>
    %cst_454 = arith.constant dense<0.000000e+00> : vector<4x32xf32>
    %1127 = tpu.matmul %1125, %1126, %cst_454 {dimension_numbers = #tpu.dot_dimension_numbers<[1], [0], [0], [1], [0, 0, 1, 1], [], []>} : vector<4x64xbf16>, vector<64x32xbf16>, vector<4x32xf32> -> vector<4x32xf32>
    %1128 = arith.addf %1124, %1127 : vector<4x32xf32>
    %1129 = vector.extract_strided_slice %1075 {offsets = [0, 0], sizes = [1, 32], strides = [1, 1]} : vector<6x32xf32> to vector<1x32xf32>
    %1130 = vector.extract_strided_slice %1075 {offsets = [1, 0], sizes = [1, 32], strides = [1, 1]} : vector<6x32xf32> to vector<1x32xf32>
    %cst_455 = arith.constant dense<0.000000e+00> : vector<4xf32>
    %1131 = vector.multi_reduction <add>, %1128, %cst_455 [1] : vector<4x32xf32> to vector<4xf32>
    %1132 = vector.shape_cast %1131 : vector<4xf32> to vector<4x1xf32>
    %cst_456 = arith.constant 3.200000e+01 : f32
    %1133 = vector.broadcast %cst_456 : f32 to vector<4x1xf32>
    %1134 = arith.divf %1132, %1133 : vector<4x1xf32>
    %1135 = vector.broadcast %1134 : vector<4x1xf32> to vector<4x32xf32>
    %1136 = arith.subf %1128, %1135 : vector<4x32xf32>
    %1137 = arith.mulf %1136, %1136 : vector<4x32xf32>
    %cst_457 = arith.constant dense<0.000000e+00> : vector<4xf32>
    %1138 = vector.multi_reduction <add>, %1137, %cst_457 [1] : vector<4x32xf32> to vector<4xf32>
    %1139 = vector.shape_cast %1138 : vector<4xf32> to vector<4x1xf32>
    %cst_458 = arith.constant 3.200000e+01 : f32
    %1140 = vector.broadcast %cst_458 : f32 to vector<4x1xf32>
    %1141 = arith.divf %1139, %1140 : vector<4x1xf32>
    %1142 = vector.broadcast %1134 : vector<4x1xf32> to vector<4x32xf32>
    %1143 = arith.subf %1128, %1142 : vector<4x32xf32>
    %cst_459 = arith.constant 9.99999997E-7 : f32
    %1144 = vector.broadcast %cst_459 : f32 to vector<4x1xf32>
    %1145 = arith.addf %1141, %1144 : vector<4x1xf32>
    %1146 = math.rsqrt %1145 : vector<4x1xf32>
    %1147 = vector.broadcast %1146 : vector<4x1xf32> to vector<4x32xf32>
    %1148 = arith.mulf %1143, %1147 : vector<4x32xf32>
    %1149 = vector.broadcast %1129 : vector<1x32xf32> to vector<4x32xf32>
    %1150 = arith.mulf %1148, %1149 : vector<4x32xf32>
    %1151 = vector.broadcast %1130 : vector<1x32xf32> to vector<4x32xf32>
    %1152 = arith.addf %1150, %1151 : vector<4x32xf32>
    %1153 = arith.truncf %1152 : vector<4x32xf32> to vector<4x32xbf16>
    %1154 = arith.truncf %1063 : vector<2x32xf32> to vector<2x32xbf16>
    %c0_460 = arith.constant 0 : index
    %c0_461 = arith.constant 0 : index
    %1155 = vector.load %arg19[%c0_460, %c0_461] : memref<32x64xbf16, #tpu.memory_space<vmem>>, vector<32x64xbf16>
    %cst_462 = arith.constant dense<0.000000e+00> : vector<4x64xf32>
    %1156 = tpu.matmul %1153, %1155, %cst_462 {dimension_numbers = #tpu.dot_dimension_numbers<[1], [0], [0], [1], [0, 0, 1, 1], [], []>} : vector<4x32xbf16>, vector<32x64xbf16>, vector<4x64xf32> -> vector<4x64xf32>
    %c0_463 = arith.constant 0 : index
    %c0_464 = arith.constant 0 : index
    %1157 = vector.load %arg20[%c0_463, %c0_464] : memref<32x128xbf16, #tpu.memory_space<vmem>>, vector<32x128xbf16>
    %cst_465 = arith.constant dense<0.000000e+00> : vector<2x128xf32>
    %1158 = tpu.matmul %1154, %1157, %cst_465 {dimension_numbers = #tpu.dot_dimension_numbers<[1], [0], [0], [1], [0, 0, 1, 1], [], []>} : vector<2x32xbf16>, vector<32x128xbf16>, vector<2x128xf32> -> vector<2x128xf32>
    %1159 = vector.extract_strided_slice %1158 {offsets = [0, 0], sizes = [2, 64], strides = [1, 1]} : vector<2x128xf32> to vector<2x64xf32>
    %1160 = vector.extract_strided_slice %1158 {offsets = [0, 64], sizes = [2, 64], strides = [1, 1]} : vector<2x128xf32> to vector<2x64xf32>
    %1161 = vector.extract_strided_slice %1156 {offsets = [0, 0], sizes = [4, 32], strides = [1, 1]} : vector<4x64xf32> to vector<4x32xf32>
    %1162 = vector.extract_strided_slice %1159 {offsets = [0, 0], sizes = [2, 32], strides = [1, 1]} : vector<2x64xf32> to vector<2x32xf32>
    %cst_466 = arith.constant dense<0.000000e+00> : vector<4x2xf32>
    %1163 = tpu.matmul %1161, %1162, %cst_466 {dimension_numbers = #tpu.dot_dimension_numbers<[1], [1], [0], [0], [0, 0, 1, 0], [], []>} : vector<4x32xf32>, vector<2x32xf32>, vector<4x2xf32> -> vector<4x2xf32>
    %cst_467 = arith.constant 0.176776692 : f32
    %1164 = vector.broadcast %cst_467 : f32 to vector<4x2xf32>
    %1165 = arith.mulf %1163, %1164 : vector<4x2xf32>
    %cst_468 = arith.constant dense<0xFF800000> : vector<4xf32>
    %1166 = vector.multi_reduction <maximumf>, %1165, %cst_468 [1] : vector<4x2xf32> to vector<4xf32>
    %1167 = vector.shape_cast %1166 : vector<4xf32> to vector<4x1xf32>
    %1168 = vector.broadcast %1167 : vector<4x1xf32> to vector<4x2xf32>
    %1169 = arith.subf %1165, %1168 : vector<4x2xf32>
    %1170 = math.exp %1169 : vector<4x2xf32>
    %cst_469 = arith.constant dense<0.000000e+00> : vector<4xf32>
    %1171 = vector.multi_reduction <add>, %1170, %cst_469 [1] : vector<4x2xf32> to vector<4xf32>
    %1172 = vector.shape_cast %1171 : vector<4xf32> to vector<4x1xf32>
    %1173 = vector.broadcast %1172 : vector<4x1xf32> to vector<4x2xf32>
    %1174 = arith.divf %1170, %1173 : vector<4x2xf32>
    %1175 = vector.extract_strided_slice %1160 {offsets = [0, 0], sizes = [2, 32], strides = [1, 1]} : vector<2x64xf32> to vector<2x32xf32>
    %cst_470 = arith.constant dense<0.000000e+00> : vector<4x32xf32>
    %1176 = tpu.matmul %1174, %1175, %cst_470 {dimension_numbers = #tpu.dot_dimension_numbers<[1], [0], [0], [1], [0, 0, 1, 1], [], []>} : vector<4x2xf32>, vector<2x32xf32>, vector<4x32xf32> -> vector<4x32xf32>
    %1177 = vector.extract_strided_slice %1156 {offsets = [0, 32], sizes = [4, 32], strides = [1, 1]} : vector<4x64xf32> to vector<4x32xf32>
    %1178 = vector.extract_strided_slice %1159 {offsets = [0, 32], sizes = [2, 32], strides = [1, 1]} : vector<2x64xf32> to vector<2x32xf32>
    %cst_471 = arith.constant dense<0.000000e+00> : vector<4x2xf32>
    %1179 = tpu.matmul %1177, %1178, %cst_471 {dimension_numbers = #tpu.dot_dimension_numbers<[1], [1], [0], [0], [0, 0, 1, 0], [], []>} : vector<4x32xf32>, vector<2x32xf32>, vector<4x2xf32> -> vector<4x2xf32>
    %cst_472 = arith.constant 0.176776692 : f32
    %1180 = vector.broadcast %cst_472 : f32 to vector<4x2xf32>
    %1181 = arith.mulf %1179, %1180 : vector<4x2xf32>
    %cst_473 = arith.constant dense<0xFF800000> : vector<4xf32>
    %1182 = vector.multi_reduction <maximumf>, %1181, %cst_473 [1] : vector<4x2xf32> to vector<4xf32>
    %1183 = vector.shape_cast %1182 : vector<4xf32> to vector<4x1xf32>
    %1184 = vector.broadcast %1183 : vector<4x1xf32> to vector<4x2xf32>
    %1185 = arith.subf %1181, %1184 : vector<4x2xf32>
    %1186 = math.exp %1185 : vector<4x2xf32>
    %cst_474 = arith.constant dense<0.000000e+00> : vector<4xf32>
    %1187 = vector.multi_reduction <add>, %1186, %cst_474 [1] : vector<4x2xf32> to vector<4xf32>
    %1188 = vector.shape_cast %1187 : vector<4xf32> to vector<4x1xf32>
    %1189 = vector.broadcast %1188 : vector<4x1xf32> to vector<4x2xf32>
    %1190 = arith.divf %1186, %1189 : vector<4x2xf32>
    %1191 = vector.extract_strided_slice %1160 {offsets = [0, 32], sizes = [2, 32], strides = [1, 1]} : vector<2x64xf32> to vector<2x32xf32>
    %cst_475 = arith.constant dense<0.000000e+00> : vector<4x32xf32>
    %1192 = tpu.matmul %1190, %1191, %cst_475 {dimension_numbers = #tpu.dot_dimension_numbers<[1], [0], [0], [1], [0, 0, 1, 1], [], []>} : vector<4x2xf32>, vector<2x32xf32>, vector<4x32xf32> -> vector<4x32xf32>
    %1193 = tpu.concatenate %1176, %1192 in 1 : vector<4x32xf32>, vector<4x32xf32> -> vector<4x64xf32>
    %1194 = arith.truncf %1193 : vector<4x64xf32> to vector<4x64xbf16>
    %c0_476 = arith.constant 0 : index
    %c0_477 = arith.constant 0 : index
    %1195 = vector.load %arg21[%c0_476, %c0_477] : memref<64x32xbf16, #tpu.memory_space<vmem>>, vector<64x32xbf16>
    %cst_478 = arith.constant dense<0.000000e+00> : vector<4x32xf32>
    %1196 = tpu.matmul %1194, %1195, %cst_478 {dimension_numbers = #tpu.dot_dimension_numbers<[1], [0], [0], [1], [0, 0, 1, 1], [], []>} : vector<4x64xbf16>, vector<64x32xbf16>, vector<4x32xf32> -> vector<4x32xf32>
    %1197 = arith.addf %1152, %1196 : vector<4x32xf32>
    %1198 = vector.extract_strided_slice %1075 {offsets = [2, 0], sizes = [1, 32], strides = [1, 1]} : vector<6x32xf32> to vector<1x32xf32>
    %1199 = vector.extract_strided_slice %1075 {offsets = [3, 0], sizes = [1, 32], strides = [1, 1]} : vector<6x32xf32> to vector<1x32xf32>
    %cst_479 = arith.constant dense<0.000000e+00> : vector<4xf32>
    %1200 = vector.multi_reduction <add>, %1197, %cst_479 [1] : vector<4x32xf32> to vector<4xf32>
    %1201 = vector.shape_cast %1200 : vector<4xf32> to vector<4x1xf32>
    %cst_480 = arith.constant 3.200000e+01 : f32
    %1202 = vector.broadcast %cst_480 : f32 to vector<4x1xf32>
    %1203 = arith.divf %1201, %1202 : vector<4x1xf32>
    %1204 = vector.broadcast %1203 : vector<4x1xf32> to vector<4x32xf32>
    %1205 = arith.subf %1197, %1204 : vector<4x32xf32>
    %1206 = arith.mulf %1205, %1205 : vector<4x32xf32>
    %cst_481 = arith.constant dense<0.000000e+00> : vector<4xf32>
    %1207 = vector.multi_reduction <add>, %1206, %cst_481 [1] : vector<4x32xf32> to vector<4xf32>
    %1208 = vector.shape_cast %1207 : vector<4xf32> to vector<4x1xf32>
    %cst_482 = arith.constant 3.200000e+01 : f32
    %1209 = vector.broadcast %cst_482 : f32 to vector<4x1xf32>
    %1210 = arith.divf %1208, %1209 : vector<4x1xf32>
    %1211 = vector.broadcast %1203 : vector<4x1xf32> to vector<4x32xf32>
    %1212 = arith.subf %1197, %1211 : vector<4x32xf32>
    %cst_483 = arith.constant 9.99999997E-7 : f32
    %1213 = vector.broadcast %cst_483 : f32 to vector<4x1xf32>
    %1214 = arith.addf %1210, %1213 : vector<4x1xf32>
    %1215 = math.rsqrt %1214 : vector<4x1xf32>
    %1216 = vector.broadcast %1215 : vector<4x1xf32> to vector<4x32xf32>
    %1217 = arith.mulf %1212, %1216 : vector<4x32xf32>
    %1218 = vector.broadcast %1198 : vector<1x32xf32> to vector<4x32xf32>
    %1219 = arith.mulf %1217, %1218 : vector<4x32xf32>
    %1220 = vector.broadcast %1199 : vector<1x32xf32> to vector<4x32xf32>
    %1221 = arith.addf %1219, %1220 : vector<4x32xf32>
    %1222 = arith.truncf %1221 : vector<4x32xf32> to vector<4x32xbf16>
    %c0_484 = arith.constant 0 : index
    %c0_485 = arith.constant 0 : index
    %1223 = vector.load %arg22[%c0_484, %c0_485] : memref<32x64xbf16, #tpu.memory_space<vmem>>, vector<32x64xbf16>
    %cst_486 = arith.constant dense<0.000000e+00> : vector<4x64xf32>
    %1224 = tpu.matmul %1222, %1223, %cst_486 {dimension_numbers = #tpu.dot_dimension_numbers<[1], [0], [0], [1], [0, 0, 1, 1], [], []>} : vector<4x32xbf16>, vector<32x64xbf16>, vector<4x64xf32> -> vector<4x64xf32>
    %1225 = vector.extract_strided_slice %1076 {offsets = [0, 0], sizes = [1, 64], strides = [1, 1]} : vector<1x96xf32> to vector<1x64xf32>
    %1226 = vector.broadcast %1225 : vector<1x64xf32> to vector<4x64xf32>
    %1227 = arith.addf %1224, %1226 : vector<4x64xf32>
    %cst_487 = arith.constant 0.000000e+00 : f32
    %1228 = vector.broadcast %cst_487 : f32 to vector<4x64xf32>
    %1229 = arith.maximumf %1227, %1228 : vector<4x64xf32>
    %1230 = arith.truncf %1229 : vector<4x64xf32> to vector<4x64xbf16>
    %c0_488 = arith.constant 0 : index
    %c0_489 = arith.constant 0 : index
    %1231 = vector.load %arg23[%c0_488, %c0_489] : memref<64x32xbf16, #tpu.memory_space<vmem>>, vector<64x32xbf16>
    %cst_490 = arith.constant dense<0.000000e+00> : vector<4x32xf32>
    %1232 = tpu.matmul %1230, %1231, %cst_490 {dimension_numbers = #tpu.dot_dimension_numbers<[1], [0], [0], [1], [0, 0, 1, 1], [], []>} : vector<4x64xbf16>, vector<64x32xbf16>, vector<4x32xf32> -> vector<4x32xf32>
    %1233 = vector.extract_strided_slice %1076 {offsets = [0, 64], sizes = [1, 32], strides = [1, 1]} : vector<1x96xf32> to vector<1x32xf32>
    %1234 = vector.broadcast %1233 : vector<1x32xf32> to vector<4x32xf32>
    %1235 = arith.addf %1232, %1234 : vector<4x32xf32>
    %1236 = arith.addf %1235, %1221 : vector<4x32xf32>
    %1237 = vector.extract_strided_slice %1075 {offsets = [4, 0], sizes = [1, 32], strides = [1, 1]} : vector<6x32xf32> to vector<1x32xf32>
    %1238 = vector.extract_strided_slice %1075 {offsets = [5, 0], sizes = [1, 32], strides = [1, 1]} : vector<6x32xf32> to vector<1x32xf32>
    %cst_491 = arith.constant dense<0.000000e+00> : vector<4xf32>
    %1239 = vector.multi_reduction <add>, %1236, %cst_491 [1] : vector<4x32xf32> to vector<4xf32>
    %1240 = vector.shape_cast %1239 : vector<4xf32> to vector<4x1xf32>
    %cst_492 = arith.constant 3.200000e+01 : f32
    %1241 = vector.broadcast %cst_492 : f32 to vector<4x1xf32>
    %1242 = arith.divf %1240, %1241 : vector<4x1xf32>
    %1243 = vector.broadcast %1242 : vector<4x1xf32> to vector<4x32xf32>
    %1244 = arith.subf %1236, %1243 : vector<4x32xf32>
    %1245 = arith.mulf %1244, %1244 : vector<4x32xf32>
    %cst_493 = arith.constant dense<0.000000e+00> : vector<4xf32>
    %1246 = vector.multi_reduction <add>, %1245, %cst_493 [1] : vector<4x32xf32> to vector<4xf32>
    %1247 = vector.shape_cast %1246 : vector<4xf32> to vector<4x1xf32>
    %cst_494 = arith.constant 3.200000e+01 : f32
    %1248 = vector.broadcast %cst_494 : f32 to vector<4x1xf32>
    %1249 = arith.divf %1247, %1248 : vector<4x1xf32>
    %1250 = vector.broadcast %1242 : vector<4x1xf32> to vector<4x32xf32>
    %1251 = arith.subf %1236, %1250 : vector<4x32xf32>
    %cst_495 = arith.constant 9.99999997E-7 : f32
    %1252 = vector.broadcast %cst_495 : f32 to vector<4x1xf32>
    %1253 = arith.addf %1249, %1252 : vector<4x1xf32>
    %1254 = math.rsqrt %1253 : vector<4x1xf32>
    %1255 = vector.broadcast %1254 : vector<4x1xf32> to vector<4x32xf32>
    %1256 = arith.mulf %1251, %1255 : vector<4x32xf32>
    %1257 = vector.broadcast %1237 : vector<1x32xf32> to vector<4x32xf32>
    %1258 = arith.mulf %1256, %1257 : vector<4x32xf32>
    %1259 = vector.broadcast %1238 : vector<1x32xf32> to vector<4x32xf32>
    %1260 = arith.addf %1258, %1259 : vector<4x32xf32>
    %c0_496 = arith.constant 0 : index
    %c0_497 = arith.constant 0 : index
    %1261 = vector.load %arg15[%c0_496, %c0_497] : memref<8x4xf32, #tpu.memory_space<vmem>>, vector<8x4xf32>
    %cst_498 = arith.constant dense<0.000000e+00> : vector<8x32xf32>
    %1262 = tpu.matmul %1261, %1260, %cst_498 {dimension_numbers = #tpu.dot_dimension_numbers<[1], [0], [0], [1], [0, 0, 1, 1], [], []>} : vector<8x4xf32>, vector<4x32xf32>, vector<8x32xf32> -> vector<8x32xf32>
    %1263 = tpu.concatenate %1057, %1262, %1055 in 1 : vector<8x32xf32>, vector<8x32xf32>, vector<8x32xf32> -> vector<8x96xf32>
    %1264 = arith.truncf %1263 : vector<8x96xf32> to vector<8x96xbf16>
    %c0_499 = arith.constant 0 : index
    %c0_500 = arith.constant 0 : index
    %1265 = vector.load %arg35[%c0_499, %c0_500] : memref<96x192xbf16, #tpu.memory_space<vmem>>, vector<96x192xbf16>
    %cst_501 = arith.constant dense<0.000000e+00> : vector<8x192xf32>
    %1266 = tpu.matmul %1264, %1265, %cst_501 {dimension_numbers = #tpu.dot_dimension_numbers<[1], [0], [0], [1], [0, 0, 1, 1], [], []>} : vector<8x96xbf16>, vector<96x192xbf16>, vector<8x192xf32> -> vector<8x192xf32>
    %1267 = vector.extract_strided_slice %1266 {offsets = [0, 0], sizes = [8, 96], strides = [1, 1]} : vector<8x192xf32> to vector<8x96xf32>
    %1268 = math.tanh %1267 : vector<8x96xf32>
    %1269 = vector.extract_strided_slice %1266 {offsets = [0, 96], sizes = [8, 96], strides = [1, 1]} : vector<8x192xf32> to vector<8x96xf32>
    %1270 = arith.negf %1269 : vector<8x96xf32>
    %1271 = math.exp %1270 : vector<8x96xf32>
    %cst_502 = arith.constant 1.000000e+00 : f32
    %1272 = vector.broadcast %cst_502 : f32 to vector<8x96xf32>
    %1273 = arith.addf %1272, %1271 : vector<8x96xf32>
    %1274 = arith.divf %1272, %1273 : vector<8x96xf32>
    %c0_503 = arith.constant 0 : index
    %c0_504 = arith.constant 0 : index
    %1275 = vector.load %arg16[%c0_503, %c0_504] : memref<8x96xf32, #tpu.memory_space<vmem>>, vector<8x96xf32>
    %1276 = arith.mulf %1275, %1274 : vector<8x96xf32>
    %1277 = arith.mulf %1276, %1268 : vector<8x96xf32>
    %1278 = vector.extract_strided_slice %1277 {offsets = [0, 0], sizes = [8, 32], strides = [1, 1]} : vector<8x96xf32> to vector<8x32xf32>
    %1279 = vector.extract_strided_slice %1277 {offsets = [0, 32], sizes = [8, 32], strides = [1, 1]} : vector<8x96xf32> to vector<8x32xf32>
    %1280 = arith.addf %1278, %1279 : vector<8x32xf32>
    %1281 = vector.extract_strided_slice %1277 {offsets = [0, 64], sizes = [8, 32], strides = [1, 1]} : vector<8x96xf32> to vector<8x32xf32>
    %1282 = arith.addf %1280, %1281 : vector<8x32xf32>
    %1283 = arith.negf %1282 : vector<8x32xf32>
    %1284 = math.exp %1283 : vector<8x32xf32>
    %cst_505 = arith.constant 1.000000e+00 : f32
    %1285 = vector.broadcast %cst_505 : f32 to vector<8x32xf32>
    %1286 = arith.addf %1285, %1284 : vector<8x32xf32>
    %1287 = arith.divf %1285, %1286 : vector<8x32xf32>
    %c1_506 = arith.constant 1 : index
    %c0_507 = arith.constant 0 : index
    %c0_508 = arith.constant 0 : index
    %1288 = vector.load %arg13[%c1_506, %c0_507, %c0_508] : memref<2x8x32xf32, #tpu.memory_space<vmem>>, vector<1x8x32xf32>
    %1289 = vector.shape_cast %1288 : vector<1x8x32xf32> to vector<8x32xf32>
    %1290 = arith.addf %1287, %1289 : vector<8x32xf32>
    %1291 = arith.truncf %1290 : vector<8x32xf32> to vector<8x32xbf16>
    %c0_509 = arith.constant 0 : index
    %c0_510 = arith.constant 0 : index
    %1292 = vector.load %arg36[%c0_509, %c0_510] : memref<32x128xbf16, #tpu.memory_space<vmem>>, vector<32x128xbf16>
    %cst_511 = arith.constant dense<0.000000e+00> : vector<8x128xf32>
    %1293 = tpu.matmul %1291, %1292, %cst_511 {dimension_numbers = #tpu.dot_dimension_numbers<[1], [0], [0], [1], [0, 0, 1, 1], [], []>} : vector<8x32xbf16>, vector<32x128xbf16>, vector<8x128xf32> -> vector<8x128xf32>
    %c1_512 = arith.constant 1 : index
    %c0_513 = arith.constant 0 : index
    %c0_514 = arith.constant 0 : index
    %1294 = vector.load %arg37[%c1_512, %c0_513, %c0_514] : memref<2x8x128xf32, #tpu.memory_space<vmem>>, vector<1x8x128xf32>
    %1295 = vector.shape_cast %1294 : vector<1x8x128xf32> to vector<8x128xf32>
    %1296 = vector.shape_cast %1293 : vector<8x128xf32> to vector<1x8x128xf32>
    tpu.vector_store %arg37[%c1_512, %c0_513, %c0_514], %1296 {strides = array<i32>} : memref<2x8x128xf32, #tpu.memory_space<vmem>>, vector<1x8x128xf32>,
    return
  }
  func.func @transform_0(%arg0: i32) -> (i32, i32, i32) {
    %c0_i32 = arith.constant 0 : i32
    %c0_i32_0 = arith.constant 0 : i32
    %c0_i32_1 = arith.constant 0 : i32
    %c0_i32_2 = arith.constant 0 : i32
    return %c0_i32, %c0_i32_0, %c0_i32_1 : i32, i32, i32
  }
  func.func @transform_1(%arg0: i32) -> (i32, i32, i32) {
    %c0_i32 = arith.constant 0 : i32
    %c0_i32_0 = arith.constant 0 : i32
    %c0_i32_1 = arith.constant 0 : i32
    %c0_i32_2 = arith.constant 0 : i32
    return %c0_i32, %c0_i32_0, %c0_i32_1 : i32, i32, i32
  }
  func.func @transform_2(%arg0: i32) -> (i32, i32, i32) {
    %c0_i32 = arith.constant 0 : i32
    %c0_i32_0 = arith.constant 0 : i32
    %c0_i32_1 = arith.constant 0 : i32
    %c0_i32_2 = arith.constant 0 : i32
    return %c0_i32, %c0_i32_0, %c0_i32_1 : i32, i32, i32
  }
  func.func @transform_3(%arg0: i32) -> (i32, i32, i32) {
    %c0_i32 = arith.constant 0 : i32
    %c0_i32_0 = arith.constant 0 : i32
    %c0_i32_1 = arith.constant 0 : i32
    %c0_i32_2 = arith.constant 0 : i32
    return %c0_i32, %c0_i32_0, %c0_i32_1 : i32, i32, i32
  }
  func.func @transform_4(%arg0: i32) -> (i32, i32, i32) {
    %c0_i32 = arith.constant 0 : i32
    %c0_i32_0 = arith.constant 0 : i32
    %c0_i32_1 = arith.constant 0 : i32
    %c0_i32_2 = arith.constant 0 : i32
    return %c0_i32, %c0_i32_0, %c0_i32_1 : i32, i32, i32
  }
  func.func @transform_5(%arg0: i32) -> (i32, i32, i32) {
    %c0_i32 = arith.constant 0 : i32
    %c0_i32_0 = arith.constant 0 : i32
    %c0_i32_1 = arith.constant 0 : i32
    %c0_i32_2 = arith.constant 0 : i32
    return %c0_i32, %c0_i32_0, %c0_i32_1 : i32, i32, i32
  }
  func.func @transform_6(%arg0: i32) -> (i32, i32, i32) {
    %c0_i32 = arith.constant 0 : i32
    %c0_i32_0 = arith.constant 0 : i32
    %c0_i32_1 = arith.constant 0 : i32
    %c0_i32_2 = arith.constant 0 : i32
    return %c0_i32, %c0_i32_0, %c0_i32_1 : i32, i32, i32
  }
  func.func @transform_7(%arg0: i32) -> (i32, i32, i32) {
    %c0_i32 = arith.constant 0 : i32
    %c0_i32_0 = arith.constant 0 : i32
    %c0_i32_1 = arith.constant 0 : i32
    %c0_i32_2 = arith.constant 0 : i32
    return %c0_i32, %c0_i32_0, %c0_i32_1 : i32, i32, i32
  }
  func.func @transform_8(%arg0: i32) -> (i32, i32, i32) {
    %c0_i32 = arith.constant 0 : i32
    %c0_i32_0 = arith.constant 0 : i32
    %c0_i32_1 = arith.constant 0 : i32
    %c0_i32_2 = arith.constant 0 : i32
    return %c0_i32, %c0_i32_0, %c0_i32_1 : i32, i32, i32
  }
  func.func @transform_9(%arg0: i32) -> (i32, i32) {
    %c0_i32 = arith.constant 0 : i32
    %c0_i32_0 = arith.constant 0 : i32
    %c0_i32_1 = arith.constant 0 : i32
    return %c0_i32, %c0_i32_0 : i32, i32
  }
  func.func @transform_10(%arg0: i32) -> (i32, i32) {
    %c0_i32 = arith.constant 0 : i32
    %c0_i32_0 = arith.constant 0 : i32
    %c0_i32_1 = arith.constant 0 : i32
    return %c0_i32, %c0_i32_0 : i32, i32
  }
  func.func @transform_11(%arg0: i32) -> (i32, i32) {
    %c0_i32 = arith.constant 0 : i32
    %c0_i32_0 = arith.constant 0 : i32
    %c0_i32_1 = arith.constant 0 : i32
    return %c0_i32, %c0_i32_0 : i32, i32
  }
  func.func @transform_12(%arg0: i32) -> (i32, i32, i32) {
    %c0_i32 = arith.constant 0 : i32
    %c0_i32_0 = arith.constant 0 : i32
    %c0_i32_1 = arith.constant 0 : i32
    %c0_i32_2 = arith.constant 0 : i32
    return %c0_i32, %c0_i32_0, %c0_i32_1 : i32, i32, i32
  }
  func.func @transform_13(%arg0: i32) -> (i32, i32) {
    %c0_i32 = arith.constant 0 : i32
    %c0_i32_0 = arith.constant 0 : i32
    %c0_i32_1 = arith.constant 0 : i32
    return %c0_i32, %c0_i32_0 : i32, i32
  }
  func.func @transform_14(%arg0: i32) -> (i32, i32) {
    %c0_i32 = arith.constant 0 : i32
    %c0_i32_0 = arith.constant 0 : i32
    %c0_i32_1 = arith.constant 0 : i32
    return %c0_i32, %c0_i32_0 : i32, i32
  }
  func.func @transform_15(%arg0: i32) -> (i32, i32) {
    %c0_i32 = arith.constant 0 : i32
    %c0_i32_0 = arith.constant 0 : i32
    %c0_i32_1 = arith.constant 0 : i32
    return %c0_i32, %c0_i32_0 : i32, i32
  }
  func.func @transform_16(%arg0: i32) -> (i32, i32, i32) {
    %c0_i32 = arith.constant 0 : i32
    %c0_i32_0 = arith.constant 0 : i32
    %c0_i32_1 = arith.constant 0 : i32
    %c0_i32_2 = arith.constant 0 : i32
    return %c0_i32, %c0_i32_0, %c0_i32_1 : i32, i32, i32
  }
  func.func @transform_17(%arg0: i32) -> (i32, i32) {
    %c0_i32 = arith.constant 0 : i32
    %c0_i32_0 = arith.constant 0 : i32
    %c0_i32_1 = arith.constant 0 : i32
    return %c0_i32, %c0_i32_0 : i32, i32
  }
  func.func @transform_18(%arg0: i32) -> (i32, i32) {
    %c0_i32 = arith.constant 0 : i32
    %c0_i32_0 = arith.constant 0 : i32
    %c0_i32_1 = arith.constant 0 : i32
    return %c0_i32, %c0_i32_0 : i32, i32
  }
  func.func @transform_19(%arg0: i32) -> (i32, i32) {
    %c0_i32 = arith.constant 0 : i32
    %c0_i32_0 = arith.constant 0 : i32
    %c0_i32_1 = arith.constant 0 : i32
    return %c0_i32, %c0_i32_0 : i32, i32
  }
  func.func @transform_20(%arg0: i32) -> (i32, i32) {
    %c0_i32 = arith.constant 0 : i32
    %c0_i32_0 = arith.constant 0 : i32
    %c0_i32_1 = arith.constant 0 : i32
    return %c0_i32, %c0_i32_0 : i32, i32
  }
  func.func @transform_21(%arg0: i32) -> (i32, i32) {
    %c0_i32 = arith.constant 0 : i32
    %c0_i32_0 = arith.constant 0 : i32
    %c0_i32_1 = arith.constant 0 : i32
    return %c0_i32, %c0_i32_0 : i32, i32
  }
  func.func @transform_22(%arg0: i32) -> (i32, i32) {
    %c0_i32 = arith.constant 0 : i32
    %c0_i32_0 = arith.constant 0 : i32
    %c0_i32_1 = arith.constant 0 : i32
    return %c0_i32, %c0_i32_0 : i32, i32
  }
  func.func @transform_23(%arg0: i32) -> (i32, i32) {
    %c0_i32 = arith.constant 0 : i32
    %c0_i32_0 = arith.constant 0 : i32
    %c0_i32_1 = arith.constant 0 : i32
    return %c0_i32, %c0_i32_0 : i32, i32
  }
  func.func @transform_24(%arg0: i32) -> (i32, i32) {
    %c0_i32 = arith.constant 0 : i32
    %c0_i32_0 = arith.constant 0 : i32
    %c0_i32_1 = arith.constant 0 : i32
    return %c0_i32, %c0_i32_0 : i32, i32
  }
  func.func @transform_25(%arg0: i32) -> (i32, i32, i32) {
    %c0_i32 = arith.constant 0 : i32
    %c0_i32_0 = arith.constant 0 : i32
    %c0_i32_1 = arith.constant 0 : i32
    %c0_i32_2 = arith.constant 0 : i32
    return %c0_i32, %c0_i32_0, %c0_i32_1 : i32, i32, i32
  }
  func.func @transform_26(%arg0: i32) -> (i32, i32) {
    %c0_i32 = arith.constant 0 : i32
    %c0_i32_0 = arith.constant 0 : i32
    %c0_i32_1 = arith.constant 0 : i32
    return %c0_i32, %c0_i32_0 : i32, i32
  }
  func.func @transform_27(%arg0: i32) -> (i32, i32) {
    %c0_i32 = arith.constant 0 : i32
    %c0_i32_0 = arith.constant 0 : i32
    %c0_i32_1 = arith.constant 0 : i32
    return %c0_i32, %c0_i32_0 : i32, i32
  }
  func.func @transform_28(%arg0: i32) -> (i32, i32) {
    %c0_i32 = arith.constant 0 : i32
    %c0_i32_0 = arith.constant 0 : i32
    %c0_i32_1 = arith.constant 0 : i32
    return %c0_i32, %c0_i32_0 : i32, i32
  }
  func.func @transform_29(%arg0: i32) -> (i32, i32) {
    %c0_i32 = arith.constant 0 : i32
    %c0_i32_0 = arith.constant 0 : i32
    %c0_i32_1 = arith.constant 0 : i32
    return %c0_i32, %c0_i32_0 : i32, i32
  }
  func.func @transform_30(%arg0: i32) -> (i32, i32) {
    %c0_i32 = arith.constant 0 : i32
    %c0_i32_0 = arith.constant 0 : i32
    %c0_i32_1 = arith.constant 0 : i32
    return %c0_i32, %c0_i32_0 : i32, i32
  }
  func.func @transform_31(%arg0: i32) -> (i32, i32) {
    %c0_i32 = arith.constant 0 : i32
    %c0_i32_0 = arith.constant 0 : i32
    %c0_i32_1 = arith.constant 0 : i32
    return %c0_i32, %c0_i32_0 : i32, i32
  }
  func.func @transform_32(%arg0: i32) -> (i32, i32) {
    %c0_i32 = arith.constant 0 : i32
    %c0_i32_0 = arith.constant 0 : i32
    %c0_i32_1 = arith.constant 0 : i32
    return %c0_i32, %c0_i32_0 : i32, i32
  }
  func.func @transform_33(%arg0: i32) -> (i32, i32) {
    %c0_i32 = arith.constant 0 : i32
    %c0_i32_0 = arith.constant 0 : i32
    %c0_i32_1 = arith.constant 0 : i32
    return %c0_i32, %c0_i32_0 : i32, i32
  }
  func.func @transform_34(%arg0: i32) -> (i32, i32) {
    %c0_i32 = arith.constant 0 : i32
    %c0_i32_0 = arith.constant 0 : i32
    %c0_i32_1 = arith.constant 0 : i32
    return %c0_i32, %c0_i32_0 : i32, i32
  }
  func.func @transform_35(%arg0: i32) -> (i32, i32) {
    %c0_i32 = arith.constant 0 : i32
    %c0_i32_0 = arith.constant 0 : i32
    %c0_i32_1 = arith.constant 0 : i32
    return %c0_i32, %c0_i32_0 : i32, i32
  }
  func.func @transform_36(%arg0: i32) -> (i32, i32, i32) {
    %c0_i32 = arith.constant 0 : i32
    %c0_i32_0 = arith.constant 0 : i32
    %c0_i32_1 = arith.constant 0 : i32
    %c0_i32_2 = arith.constant 0 : i32
    return %c0_i32, %c0_i32_0, %c0_i32_1 : i32, i32, i32
  }
}

</mosaic_0001>

<llo_original>
// kernel: _lambda_.1
$region0: #{_lambda_.1}
  #allocation0 [shape = 'u32[]', space=smem, size = 0x4, offset = 0x4, fixed_abs, tag = 'smem constant byte address 0x4 - core index']
  #allocation1 [shape = 'u32[144,128]{1,0:T(1,128)}', space=vmem, size = 0x12000, scoped, tag = 'internal scratch']
  %s0 = inlined_call_operand.smem [shape: u32[37], index: -1, kind: input, shape index: {}]
  %s1 = sld [smem:[%s0]]
  %s2 = scalar_lea.smem %s0, 1
  %s3 = sld [smem:[%s2]]
  %s4 = scalar_lea.smem %s0, 2
  %s5 = sld [smem:[%s4]]
  %s6 = scalar_lea.smem %s0, 3
  %s7 = sld [smem:[%s6]]
  %s8 = scalar_lea.smem %s0, 4
  %s9 = sld [smem:[%s8]]
  %s10 = scalar_lea.smem %s0, 5
  %s11 = sld [smem:[%s10]]
  %s12 = scalar_lea.smem %s0, 6
  %s13 = sld [smem:[%s12]]
  %s14 = scalar_lea.smem %s0, 7
  %s15 = sld [smem:[%s14]]
  %s16 = scalar_lea.smem %s0, 8
  %s17 = sld [smem:[%s16]]
  %s18 = scalar_lea.smem %s0, 9
  %s19 = sld [smem:[%s18]]
  %s20 = scalar_lea.smem %s0, 10
  %s21 = sld [smem:[%s20]]
  %s22 = scalar_lea.smem %s0, 11
  %s23 = sld [smem:[%s22]]
  %s24 = scalar_lea.smem %s0, 12
  %s25 = sld [smem:[%s24]]
  %s26 = scalar_lea.smem %s0, 13
  %s27 = sld [smem:[%s26]]
  %s28 = scalar_lea.smem %s0, 14
  %s29 = sld [smem:[%s28]]
  %s30 = scalar_lea.smem %s0, 15
  %s31 = sld [smem:[%s30]]
  %s32 = scalar_lea.smem %s0, 16
  %s33 = sld [smem:[%s32]]
  %s34 = scalar_lea.smem %s0, 17
  %s35 = sld [smem:[%s34]]
  %s36 = scalar_lea.smem %s0, 18
  %s37 = sld [smem:[%s36]]
  %s38 = scalar_lea.smem %s0, 19
  %s39 = sld [smem:[%s38]]
  %s40 = scalar_lea.smem %s0, 20
  %s41 = sld [smem:[%s40]]
  %s42 = scalar_lea.smem %s0, 21
  %s43 = sld [smem:[%s42]]
  %s44 = scalar_lea.smem %s0, 22
  %s45 = sld [smem:[%s44]]
  %s46 = scalar_lea.smem %s0, 23
  %s47 = sld [smem:[%s46]]
  %s48 = scalar_lea.smem %s0, 24
  %s49 = sld [smem:[%s48]]
  %s50 = scalar_lea.smem %s0, 25
  %s51 = sld [smem:[%s50]]
  %s52 = scalar_lea.smem %s0, 26
  %s53 = sld [smem:[%s52]]
  %s54 = scalar_lea.smem %s0, 27
  %s55 = sld [smem:[%s54]]
  %s56 = scalar_lea.smem %s0, 28
  %s57 = sld [smem:[%s56]]
  %s58 = scalar_lea.smem %s0, 29
  %s59 = sld [smem:[%s58]]
  %s60 = scalar_lea.smem %s0, 30
  %s61 = sld [smem:[%s60]]
  %s62 = scalar_lea.smem %s0, 31
  %s63 = sld [smem:[%s62]]
  %s64 = scalar_lea.smem %s0, 32
  %s65 = sld [smem:[%s64]]
  %s66 = scalar_lea.smem %s0, 33
  %s67 = sld [smem:[%s66]]
  %s68 = scalar_lea.smem %s0, 34
  %s69 = sld [smem:[%s68]]
  %s70 = scalar_lea.smem %s0, 35
  %s71 = sld [smem:[%s70]]
  %s72 = scalar_lea.smem %s0, 36
  %s73 = sld [smem:[%s72]]
  %s74 = sld [smem:[#allocation0]]
  $region154: #{_lambda_.1} parent=0
    _
  %s76 = ssub.s32 1, %s74
  %s77 = scalar_select 0, %s76, %s74
  // Predicated region
  $region2: #{_lambda_.1} parent=0 // pred_check
    _
  $region3: #{_lambda_.1} parent=0 // pred_check_branch
    %79 = sbr.rel (0) target = $region5
  $region4: #{_lambda_.1} parent=0 // pred_region
    _
  $region5: #{_lambda_.1} parent=0 // pred_fallthru
    _
  // Predicated region
  $region6: #{_lambda_.1} parent=0 // pred_check
    _
  $region7: #{_lambda_.1} parent=0 // pred_check_branch
    %81 = sbr.rel (0) target = $region9
  $region8: #{_lambda_.1} parent=0 // pred_region
    _
  $region9: #{_lambda_.1} parent=0 // pred_fallthru
    _
  // Predicated region
  $region10: #{_lambda_.1} parent=0 // pred_check
    _
  $region11: #{_lambda_.1} parent=0 // pred_check_branch
    %83 = sbr.rel (0) target = $region13
  $region12: #{_lambda_.1} parent=0 // pred_region
    _
  $region13: #{_lambda_.1} parent=0 // pred_fallthru
    _
  // Predicated region
  $region14: #{_lambda_.1} parent=0 // pred_check
    _
  $region15: #{_lambda_.1} parent=0 // pred_check_branch
    %85 = sbr.rel (0) target = $region17
  $region16: #{_lambda_.1} parent=0 // pred_region
    _
  $region17: #{_lambda_.1} parent=0 // pred_fallthru
    _
  // Predicated region
  $region18: #{_lambda_.1} parent=0 // pred_check
    _
  $region19: #{_lambda_.1} parent=0 // pred_check_branch
    %87 = sbr.rel (0) target = $region21
  $region20: #{_lambda_.1} parent=0 // pred_region
    _
  $region21: #{_lambda_.1} parent=0 // pred_fallthru
    _
  // Predicated region
  $region22: #{_lambda_.1} parent=0 // pred_check
    _
  $region23: #{_lambda_.1} parent=0 // pred_check_branch
    %89 = sbr.rel (0) target = $region25
  $region24: #{_lambda_.1} parent=0 // pred_region
    _
  $region25: #{_lambda_.1} parent=0 // pred_fallthru
    _
  // Predicated region
  $region26: #{_lambda_.1} parent=0 // pred_check
    _
  $region27: #{_lambda_.1} parent=0 // pred_check_branch
    %91 = sbr.rel (0) target = $region29
  $region28: #{_lambda_.1} parent=0 // pred_region
    _
  $region29: #{_lambda_.1} parent=0 // pred_fallthru
    _
  // Predicated region
  $region30: #{_lambda_.1} parent=0 // pred_check
    _
  $region31: #{_lambda_.1} parent=0 // pred_check_branch
    %93 = sbr.rel (0) target = $region33
  $region32: #{_lambda_.1} parent=0 // pred_region
    _
  $region33: #{_lambda_.1} parent=0 // pred_fallthru
    _
  // Predicated region
  $region34: #{_lambda_.1} parent=0 // pred_check
    _
  $region35: #{_lambda_.1} parent=0 // pred_check_branch
    %95 = sbr.rel (0) target = $region37
  $region36: #{_lambda_.1} parent=0 // pred_region
    _
  $region37: #{_lambda_.1} parent=0 // pred_fallthru
    _
  // Predicated region
  $region38: #{_lambda_.1} parent=0 // pred_check
    _
  $region39: #{_lambda_.1} parent=0 // pred_check_branch
    %97 = sbr.rel (0) target = $region41
  $region40: #{_lambda_.1} parent=0 // pred_region
    _
  $region41: #{_lambda_.1} parent=0 // pred_fallthru
    _
  // Predicated region
  $region42: #{_lambda_.1} parent=0 // pred_check
    _
  $region43: #{_lambda_.1} parent=0 // pred_check_branch
    %99 = sbr.rel (0) target = $region45
  $region44: #{_lambda_.1} parent=0 // pred_region
    _
  $region45: #{_lambda_.1} parent=0 // pred_fallthru
    _
  // Predicated region
  $region46: #{_lambda_.1} parent=0 // pred_check
    _
  $region47: #{_lambda_.1} parent=0 // pred_check_branch
    %101 = sbr.rel (0) target = $region49
  $region48: #{_lambda_.1} parent=0 // pred_region
    _
  $region49: #{_lambda_.1} parent=0 // pred_fallthru
    _
  // Predicated region
  $region50: #{_lambda_.1} parent=0 // pred_check
    _
  $region51: #{_lambda_.1} parent=0 // pred_check_branch
    %103 = sbr.rel (0) target = $region53
  $region52: #{_lambda_.1} parent=0 // pred_region
    _
  $region53: #{_lambda_.1} parent=0 // pred_fallthru
    _
  // Predicated region
  $region54: #{_lambda_.1} parent=0 // pred_check
    _
  $region55: #{_lambda_.1} parent=0 // pred_check_branch
    %105 = sbr.rel (0) target = $region57
  $region56: #{_lambda_.1} parent=0 // pred_region
    _
  $region57: #{_lambda_.1} parent=0 // pred_fallthru
    _
  // Predicated region
  $region58: #{_lambda_.1} parent=0 // pred_check
    _
  $region59: #{_lambda_.1} parent=0 // pred_check_branch
    %107 = sbr.rel (0) target = $region61
  $region60: #{_lambda_.1} parent=0 // pred_region
    _
  $region61: #{_lambda_.1} parent=0 // pred_fallthru
    _
  // Predicated region
  $region62: #{_lambda_.1} parent=0 // pred_check
    _
  $region63: #{_lambda_.1} parent=0 // pred_check_branch
    %109 = sbr.rel (0) target = $region65
  $region64: #{_lambda_.1} parent=0 // pred_region
    _
  $region65: #{_lambda_.1} parent=0 // pred_fallthru
    _
  // Predicated region
  $region66: #{_lambda_.1} parent=0 // pred_check
    _
  $region67: #{_lambda_.1} parent=0 // pred_check_branch
    %111 = sbr.rel (0) target = $region69
  $region68: #{_lambda_.1} parent=0 // pred_region
    _
  $region69: #{_lambda_.1} parent=0 // pred_fallthru
    _
  // Predicated region
  $region70: #{_lambda_.1} parent=0 // pred_check
    _
  $region71: #{_lambda_.1} parent=0 // pred_check_branch
    %113 = sbr.rel (0) target = $region73
  $region72: #{_lambda_.1} parent=0 // pred_region
    _
  $region73: #{_lambda_.1} parent=0 // pred_fallthru
    _
  // Predicated region
  $region74: #{_lambda_.1} parent=0 // pred_check
    _
  $region75: #{_lambda_.1} parent=0 // pred_check_branch
    %115 = sbr.rel (0) target = $region77
  $region76: #{_lambda_.1} parent=0 // pred_region
    _
  $region77: #{_lambda_.1} parent=0 // pred_fallthru
    _
  // Predicated region
  $region78: #{_lambda_.1} parent=0 // pred_check
    _
  $region79: #{_lambda_.1} parent=0 // pred_check_branch
    %117 = sbr.rel (0) target = $region81
  $region80: #{_lambda_.1} parent=0 // pred_region
    _
  $region81: #{_lambda_.1} parent=0 // pred_fallthru
    _
  // Predicated region
  $region82: #{_lambda_.1} parent=0 // pred_check
    _
  $region83: #{_lambda_.1} parent=0 // pred_check_branch
    %119 = sbr.rel (0) target = $region85
  $region84: #{_lambda_.1} parent=0 // pred_region
    _
  $region85: #{_lambda_.1} parent=0 // pred_fallthru
    _
  // Predicated region
  $region86: #{_lambda_.1} parent=0 // pred_check
    _
  $region87: #{_lambda_.1} parent=0 // pred_check_branch
    %121 = sbr.rel (0) target = $region89
  $region88: #{_lambda_.1} parent=0 // pred_region
    _
  $region89: #{_lambda_.1} parent=0 // pred_fallthru
    _
  // Predicated region
  $region90: #{_lambda_.1} parent=0 // pred_check
    _
  $region91: #{_lambda_.1} parent=0 // pred_check_branch
    %123 = sbr.rel (0) target = $region93
  $region92: #{_lambda_.1} parent=0 // pred_region
    _
  $region93: #{_lambda_.1} parent=0 // pred_fallthru
    _
  // Predicated region
  $region94: #{_lambda_.1} parent=0 // pred_check
    _
  $region95: #{_lambda_.1} parent=0 // pred_check_branch
    %125 = sbr.rel (0) target = $region97
  $region96: #{_lambda_.1} parent=0 // pred_region
    _
  $region97: #{_lambda_.1} parent=0 // pred_fallthru
    _
  // Predicated region
  $region98: #{_lambda_.1} parent=0 // pred_check
    _
  $region99: #{_lambda_.1} parent=0 // pred_check_branch
    %127 = sbr.rel (0) target = $region101
  $region100: #{_lambda_.1} parent=0 // pred_region
    _
  $region101: #{_lambda_.1} parent=0 // pred_fallthru
    _
  // Predicated region
  $region102: #{_lambda_.1} parent=0 // pred_check
    _
  $region103: #{_lambda_.1} parent=0 // pred_check_branch
    %129 = sbr.rel (0) target = $region105
  $region104: #{_lambda_.1} parent=0 // pred_region
    _
  $region105: #{_lambda_.1} parent=0 // pred_fallthru
    _
  // Predicated region
  $region106: #{_lambda_.1} parent=0 // pred_check
    _
  $region107: #{_lambda_.1} parent=0 // pred_check_branch
    %131 = sbr.rel (0) target = $region109
  $region108: #{_lambda_.1} parent=0 // pred_region
    _
  $region109: #{_lambda_.1} parent=0 // pred_fallthru
    _
  // Predicated region
  $region110: #{_lambda_.1} parent=0 // pred_check
    _
  $region111: #{_lambda_.1} parent=0 // pred_check_branch
    %133 = sbr.rel (0) target = $region113
  $region112: #{_lambda_.1} parent=0 // pred_region
    _
  $region113: #{_lambda_.1} parent=0 // pred_fallthru
    _
  // Predicated region
  $region114: #{_lambda_.1} parent=0 // pred_check
    _
  $region115: #{_lambda_.1} parent=0 // pred_check_branch
    %135 = sbr.rel (0) target = $region117
  $region116: #{_lambda_.1} parent=0 // pred_region
    _
  $region117: #{_lambda_.1} parent=0 // pred_fallthru
    _
  // Predicated region
  $region118: #{_lambda_.1} parent=0 // pred_check
    _
  $region119: #{_lambda_.1} parent=0 // pred_check_branch
    %137 = sbr.rel (0) target = $region121
  $region120: #{_lambda_.1} parent=0 // pred_region
    _
  $region121: #{_lambda_.1} parent=0 // pred_fallthru
    _
  // Predicated region
  $region122: #{_lambda_.1} parent=0 // pred_check
    _
  $region123: #{_lambda_.1} parent=0 // pred_check_branch
    %139 = sbr.rel (0) target = $region125
  $region124: #{_lambda_.1} parent=0 // pred_region
    _
  $region125: #{_lambda_.1} parent=0 // pred_fallthru
    _
  // Predicated region
  $region126: #{_lambda_.1} parent=0 // pred_check
    _
  $region127: #{_lambda_.1} parent=0 // pred_check_branch
    %141 = sbr.rel (0) target = $region129
  $region128: #{_lambda_.1} parent=0 // pred_region
    _
  $region129: #{_lambda_.1} parent=0 // pred_fallthru
    _
  // Predicated region
  $region130: #{_lambda_.1} parent=0 // pred_check
    _
  $region131: #{_lambda_.1} parent=0 // pred_check_branch
    %143 = sbr.rel (0) target = $region133
  $region132: #{_lambda_.1} parent=0 // pred_region
    _
  $region133: #{_lambda_.1} parent=0 // pred_fallthru
    _
  // Predicated region
  $region134: #{_lambda_.1} parent=0 // pred_check
    _
  $region135: #{_lambda_.1} parent=0 // pred_check_branch
    %145 = sbr.rel (0) target = $region137
  $region136: #{_lambda_.1} parent=0 // pred_region
    _
  $region137: #{_lambda_.1} parent=0 // pred_fallthru
    _
  // Predicated region
  $region138: #{_lambda_.1} parent=0 // pred_check
    _
  $region139: #{_lambda_.1} parent=0 // pred_check_branch
    %147 = sbr.rel (0) target = $region141
  $region140: #{_lambda_.1} parent=0 // pred_region
    _
  $region141: #{_lambda_.1} parent=0 // pred_fallthru
    _
  // Predicated region
  $region142: #{_lambda_.1} parent=0 // pred_check
    _
  $region143: #{_lambda_.1} parent=0 // pred_check_branch
    %149 = sbr.rel (0) target = $region145
  $region144: #{_lambda_.1} parent=0 // pred_region
    _
  $region145: #{_lambda_.1} parent=0 // pred_fallthru
    _
  %v151 = vld [vmem:[%s19] sm:$0x3]
  %v152 = vld [vmem:[%s21] sm:$0x3]
  %v153 = vld [vmem:[%s23] sm:$0x3]
  %v154 = vld [vmem:[%s1] sm:$0xf]
  %v155 = vld [vmem:[%s3] sm:$0xf]
  %v156 = vld [vmem:[%s13] sm:$0x3]
  %v157 = vlaneseq
  %v158 = vshrl.u32 %v157, 7
  %v159 = vlaneseq
  %v160 = vand.u32 %v159, 127
  %vm161 = vcmp.ge.s32.totalorder %v158, %v160
  %vm162 = vcmp.gt.f32.partialorder %v151, 0.5
  %v163 = vsel %vm162, 1, 0
  %v164 = vlaneseq
  %v165 = vshrl.u32 %v164, 7
  %v166 = vsub.s32 0, %v165
  %v167 = vrot.slane %v163, %v166
  %vm168 = vcmp.eq.s32.totalorder %v167, 1
  %vm169 = vmand %vm161, %vm168
  %v170 = vsel %vm169, 0.0, -1e+09
  %v171 = vld [vmem:[%s49] sm:$0x3f]
  %v172 = vld [vmem:[%s47] sm:$0x1]
  %v173 = vpack.c.bf16 %v154, %v154
  %v174 = vpack.c.bf16 %v155, %v155
  %v175 = vld [vmem:[%s33] sm:$0xff]
  %v176 = vld [vmem:[%s33 + $0x8] sm:$0xff]
  %v177 = vld [vmem:[%s33 + $0x10] sm:$0xff]
  %v178 = vld [vmem:[%s33 + $0x18] sm:$0xff]
  %s179 = scalar_lea.vmem %s33, 32
  %v180 = vld [vmem:[%s179] sm:$0xff]
  %v181 = vld [vmem:[%s179 + $0x8] sm:$0xff]
  %v182 = vld [vmem:[%s179 + $0x10] sm:$0xff]
  %v183 = vld [vmem:[%s179 + $0x18] sm:$0xff]
  %v188 = vunpack.c.l.b16 %v180
  %v189 = vunpack.c.h.b16 %v180
  %v190 = vunpack.c.l.b16 %v181
  %v191 = vunpack.c.h.b16 %v181
  %v192 = vunpack.c.l.b16 %v182
  %v193 = vunpack.c.h.b16 %v182
  %v194 = vunpack.c.l.b16 %v183
  %v195 = vunpack.c.h.b16 %v183
  %v196 = vpack.c.b16 %v190, %v188
  %v197 = vpack.c.b16 %v191, %v189
  %v198 = vpack.c.b16 %v194, %v192
  %v199 = vpack.c.b16 %v195, %v193
  %vm204 = vcmask 261120
  %v206 = vsel %vm204, %v174, 0
  %208 = vmatprep.subr.bf16.mxu0 0
  %209 = vmatpush1.bf16.msra.mxu0 0
  %210 = vmatprep.subr.bf16.mxu0 0
  %211 = vmatpush1.bf16.msra.mxu0 0
  %212 = vmatprep.subr.bf16.mxu0 0
  %213 = vmatpush1.bf16.msra.mxu0 0
  %214 = vmatprep.subr.bf16.mxu0 0
  %215 = vmatpush1.bf16.msra.mxu0 0
  %216 = vmatprep.subr.bf16.mxu0 0
  %217 = vmatpush1.bf16.msra.mxu0 0
  %218 = vmatprep.subr.bf16.mxu0 0
  %219 = vmatpush1.bf16.msra.mxu0 0
  %220 = vmatprep.subr.bf16.mxu0 %v199
  %221 = vmatpush1.bf16.msra.mxu0 %v198
  %222 = vmatprep.subr.bf16.mxu0 %v197
  %223 = vmatpush1.bf16.msra.mxu0 %v196
  %224 = vmatprep.subr.bf16.mxu0 0
  %225 = vmatpush2.bf16.msra.mxu0 0
  %226 = vmatprep.subr.bf16.mxu0 0
  %227 = vmatpush2.bf16.msra.mxu0 0
  %228 = vmatprep.subr.bf16.mxu0 0
  %229 = vmatpush2.bf16.msra.mxu0 0
  %230 = vmatprep.subr.bf16.mxu0 0
  %231 = vmatpush2.bf16.msra.mxu0 0
  %232 = vmatprep.subr.bf16.mxu0 0
  %233 = vmatpush2.bf16.msra.mxu0 0
  %234 = vmatprep.subr.bf16.mxu0 0
  %235 = vmatpush2.bf16.msra.mxu0 0
  %236 = vmatprep.subr.bf16.mxu0 0
  %237 = vmatpush2.bf16.msra.mxu0 0
  %238 = vmatprep.subr.bf16.mxu0 0
  %239 = vmatpush2.bf16.msra.mxu0 0
  %240 = vmatprep.mubr.bf16.mxu0 0
  %241 = vmatmul.mubr.bf16.gmra.mxu0 %v206
  %v242 = vpop.f32.mrf.mxu0
  %v243 = vadd.f32 0.0, %v242
  %v244 = vpop.f32.mrf.mxu0
  %v245 = vadd.f32 0.0, %v244
  %v246 = vpop.f32.mrf.mxu0
  %v247 = vpop.f32.mrf.mxu0
  %248 = vdwg.mxu0
  %v253 = vunpack.c.l.b16 %v175
  %v254 = vunpack.c.h.b16 %v175
  %v255 = vunpack.c.l.b16 %v176
  %v256 = vunpack.c.h.b16 %v176
  %v257 = vunpack.c.l.b16 %v177
  %v258 = vunpack.c.h.b16 %v177
  %v259 = vunpack.c.l.b16 %v178
  %v260 = vunpack.c.h.b16 %v178
  %v261 = vpack.c.b16 %v255, %v253
  %v262 = vpack.c.b16 %v256, %v254
  %v263 = vpack.c.b16 %v259, %v257
  %v264 = vpack.c.b16 %v260, %v258
  %v270 = vsel %vm204, %v173, 0
  %272 = vmatprep.subr.bf16.mxu0 0
  %273 = vmatpush1.bf16.msra.mxu0 0
  %274 = vmatprep.subr.bf16.mxu0 0
  %275 = vmatpush1.bf16.msra.mxu0 0
  %276 = vmatprep.subr.bf16.mxu0 0
  %277 = vmatpush1.bf16.msra.mxu0 0
  %278 = vmatprep.subr.bf16.mxu0 0
  %279 = vmatpush1.bf16.msra.mxu0 0
  %280 = vmatprep.subr.bf16.mxu0 0
  %281 = vmatpush1.bf16.msra.mxu0 0
  %282 = vmatprep.subr.bf16.mxu0 0
  %283 = vmatpush1.bf16.msra.mxu0 0
  %284 = vmatprep.subr.bf16.mxu0 %v264
  %285 = vmatpush1.bf16.msra.mxu0 %v263
  %286 = vmatprep.subr.bf16.mxu0 %v262
  %287 = vmatpush1.bf16.msra.mxu0 %v261
  %288 = vmatprep.subr.bf16.mxu0 0
  %289 = vmatpush2.bf16.msra.mxu0 0
  %290 = vmatprep.subr.bf16.mxu0 0
  %291 = vmatpush2.bf16.msra.mxu0 0
  %292 = vmatprep.subr.bf16.mxu0 0
  %293 = vmatpush2.bf16.msra.mxu0 0
  %294 = vmatprep.subr.bf16.mxu0 0
  %295 = vmatpush2.bf16.msra.mxu0 0
  %296 = vmatprep.subr.bf16.mxu0 0
  %297 = vmatpush2.bf16.msra.mxu0 0
  %298 = vmatprep.subr.bf16.mxu0 0
  %299 = vmatpush2.bf16.msra.mxu0 0
  %300 = vmatprep.subr.bf16.mxu0 0
  %301 = vmatpush2.bf16.msra.mxu0 0
  %302 = vmatprep.subr.bf16.mxu0 0
  %303 = vmatpush2.bf16.msra.mxu0 0
  %304 = vmatprep.mubr.bf16.mxu0 0
  %305 = vmatmul.mubr.bf16.gmra.mxu0 %v270
  %v306 = vpop.f32.mrf.mxu0
  %v307 = vadd.f32 %v243, %v306
  %v308 = vpop.f32.mrf.mxu0
  %v309 = vadd.f32 %v245, %v308
  %v310 = vpop.f32.mrf.mxu0
  %v311 = vpop.f32.mrf.mxu0
  %312 = vdwg.mxu0
  %314 = vrot.lane.b32.xlu0 %v307, 64
  %v315 = vpop.permute.xlu0 %314
  %v316 = vsel %vm204, %v307, 0
  %v318 = vsel %vm204, %v315, 0
  %320 = vmatprep.subr.mxu0 0.0
  %321 = vmatpush1.xpose.msra.mxu0 0.0
  %322 = vmatprep.subr.mxu0 0.0
  %323 = vmatpush1.xpose.msra.mxu0 0.0
  %324 = vmatprep.subr.mxu0 0.0
  %325 = vmatpush1.xpose.msra.mxu0 0.0
  %326 = vmatprep.subr.mxu0 0.0
  %327 = vmatpush1.xpose.msra.mxu0 0.0
  %328 = vmatprep.subr.mxu0 0.0
  %329 = vmatpush1.xpose.msra.mxu0 0.0
  %330 = vmatprep.subr.mxu0 0.0
  %331 = vmatpush1.xpose.msra.mxu0 0.0
  %332 = vmatprep.subr.mxu0 0.0
  %333 = vmatpush1.xpose.msra.mxu0 0.0
  %334 = vmatprep.subr.mxu0 0.0
  %335 = vmatpush1.xpose.msra.mxu0 0.0
  %336 = vmatprep.subr.mxu0 0.0
  %337 = vmatpush1.xpose.msra.mxu0 0.0
  %338 = vmatprep.subr.mxu0 0.0
  %339 = vmatpush1.xpose.msra.mxu0 0.0
  %340 = vmatprep.subr.mxu0 0.0
  %341 = vmatpush1.xpose.msra.mxu0 0.0
  %342 = vmatprep.subr.mxu0 0.0
  %343 = vmatpush1.xpose.msra.mxu0 0.0
  %344 = vmatprep.subr.mxu0 0.0
  %345 = vmatpush1.xpose.msra.mxu0 0.0
  %346 = vmatprep.subr.mxu0 0.0
  %347 = vmatpush1.xpose.msra.mxu0 0.0
  %348 = vmatprep.subr.mxu0 0.0
  %349 = vmatpush1.xpose.msra.mxu0 0.0
  %350 = vmatprep.subr.mxu0 0.0
  %351 = vmatpush1.xpose.msra.mxu0 %v318
  %352 = vmatprep.subr.mxu0 0.0
  %353 = vmatpush2.xpose.msra.mxu0 0.0
  %354 = vmatprep.subr.mxu0 0.0
  %355 = vmatpush2.xpose.msra.mxu0 0.0
  %356 = vmatprep.subr.mxu0 0.0
  %357 = vmatpush2.xpose.msra.mxu0 0.0
  %358 = vmatprep.subr.mxu0 0.0
  %359 = vmatpush2.xpose.msra.mxu0 0.0
  %360 = vmatprep.subr.mxu0 0.0
  %361 = vmatpush2.xpose.msra.mxu0 0.0
  %362 = vmatprep.subr.mxu0 0.0
  %363 = vmatpush2.xpose.msra.mxu0 0.0
  %364 = vmatprep.subr.mxu0 0.0
  %365 = vmatpush2.xpose.msra.mxu0 0.0
  %366 = vmatprep.subr.mxu0 0.0
  %367 = vmatpush2.xpose.msra.mxu0 0.0
  %368 = vmatprep.subr.mxu0 0.0
  %369 = vmatpush2.xpose.msra.mxu0 0.0
  %370 = vmatprep.subr.mxu0 0.0
  %371 = vmatpush2.xpose.msra.mxu0 0.0
  %372 = vmatprep.subr.mxu0 0.0
  %373 = vmatpush2.xpose.msra.mxu0 0.0
  %374 = vmatprep.subr.mxu0 0.0
  %375 = vmatpush2.xpose.msra.mxu0 0.0
  %376 = vmatprep.subr.mxu0 0.0
  %377 = vmatpush2.xpose.msra.mxu0 0.0
  %378 = vmatprep.subr.mxu0 0.0
  %379 = vmatpush2.xpose.msra.mxu0 0.0
  %380 = vmatprep.subr.mxu0 0.0
  %381 = vmatpush2.xpose.msra.mxu0 0.0
  %382 = vmatprep.subr.mxu0 0.0
  %383 = vmatpush2.xpose.msra.mxu0 0.0
  %384 = vmatprep.mubr.f32.mxu0 0.0
  %385 = vmatmul.mubr.f32.gmra.mxu0 %v316
  %v386 = vpop.f32.mrf.mxu0
  %v387 = vadd.f32 0.0, %v386
  %v388 = vpop.f32.mrf.mxu0
  %389 = vdwg.mxu0
  %v390 = vmul.f32 %v387, 0.17677669
  %v391 = vadd.f32 %v390, %v170
  %vm392 = vcmask 27648
  %v393 = vsel %vm392, %v391, -inf
  %394 = vmax.xlane.f32.xlu0 %v393
  %v395 = vpop.xlane.xlu0 %394
  %v396 = vsub.f32 %v391, %v395
  %v397 = vmul.f32 %v396, 1.442695
  %v398 = vpow.pop %v397
  %v399 = vsel %vm392, %v398, 0.0
  %400 = vadd.xlane.f32.xlu0 %v399
  %v401 = vpop.xlane.xlu0 %400
  %v402 = vrcp.pop %v401
  %v403 = vmul.f32 %v398, %v402
  %vm404 = vcmask 31744
  %v406 = vsel %vm404, %v403, 0
  %vm408 = vcmask 1043456
  %v410 = vsel %vm408, %v309, 0
  %412 = vmatprep.subr.mxu0 0.0
  %413 = vmatpush1.msra.mxu0 0.0
  %414 = vmatprep.subr.mxu0 0.0
  %415 = vmatpush1.msra.mxu0 0.0
  %416 = vmatprep.subr.mxu0 0.0
  %417 = vmatpush1.msra.mxu0 0.0
  %418 = vmatprep.subr.mxu0 0.0
  %419 = vmatpush1.msra.mxu0 0.0
  %420 = vmatprep.subr.mxu0 0.0
  %421 = vmatpush1.msra.mxu0 0.0
  %422 = vmatprep.subr.mxu0 0.0
  %423 = vmatpush1.msra.mxu0 0.0
  %424 = vmatprep.subr.mxu0 0.0
  %425 = vmatpush1.msra.mxu0 0.0
  %426 = vmatprep.subr.mxu0 0.0
  %427 = vmatpush1.msra.mxu0 0.0
  %428 = vmatprep.subr.mxu0 0.0
  %429 = vmatpush1.msra.mxu0 0.0
  %430 = vmatprep.subr.mxu0 0.0
  %431 = vmatpush1.msra.mxu0 0.0
  %432 = vmatprep.subr.mxu0 0.0
  %433 = vmatpush1.msra.mxu0 0.0
  %434 = vmatprep.subr.mxu0 0.0
  %435 = vmatpush1.msra.mxu0 0.0
  %436 = vmatprep.subr.mxu0 0.0
  %437 = vmatpush1.msra.mxu0 0.0
  %438 = vmatprep.subr.mxu0 0.0
  %439 = vmatpush1.msra.mxu0 0.0
  %440 = vmatprep.subr.mxu0 0.0
  %441 = vmatpush1.msra.mxu0 0.0
  %442 = vmatprep.subr.mxu0 0.0
  %443 = vmatpush1.msra.mxu0 %v410
  %444 = vmatprep.subr.mxu0 0.0
  %445 = vmatpush2.msra.mxu0 0.0
  %446 = vmatprep.subr.mxu0 0.0
  %447 = vmatpush2.msra.mxu0 0.0
  %448 = vmatprep.subr.mxu0 0.0
  %449 = vmatpush2.msra.mxu0 0.0
  %450 = vmatprep.subr.mxu0 0.0
  %451 = vmatpush2.msra.mxu0 0.0
  %452 = vmatprep.subr.mxu0 0.0
  %453 = vmatpush2.msra.mxu0 0.0
  %454 = vmatprep.subr.mxu0 0.0
  %455 = vmatpush2.msra.mxu0 0.0
  %456 = vmatprep.subr.mxu0 0.0
  %457 = vmatpush2.msra.mxu0 0.0
  %458 = vmatprep.subr.mxu0 0.0
  %459 = vmatpush2.msra.mxu0 0.0
  %460 = vmatprep.subr.mxu0 0.0
  %461 = vmatpush2.msra.mxu0 0.0
  %462 = vmatprep.subr.mxu0 0.0
  %463 = vmatpush2.msra.mxu0 0.0
  %464 = vmatprep.subr.mxu0 0.0
  %465 = vmatpush2.msra.mxu0 0.0
  %466 = vmatprep.subr.mxu0 0.0
  %467 = vmatpush2.msra.mxu0 0.0
  %468 = vmatprep.subr.mxu0 0.0
  %469 = vmatpush2.msra.mxu0 0.0
  %470 = vmatprep.subr.mxu0 0.0
  %471 = vmatpush2.msra.mxu0 0.0
  %472 = vmatprep.subr.mxu0 0.0
  %473 = vmatpush2.msra.mxu0 0.0
  %474 = vmatprep.subr.mxu0 0.0
  %475 = vmatpush2.msra.mxu0 0.0
  %476 = vmatprep.mubr.f32.mxu0 0.0
  %477 = vmatmul.mubr.f32.gmra.mxu0 %v406
  %v478 = vpop.f32.mrf.mxu0
  %v479 = vadd.f32 0.0, %v478
  %v480 = vpop.f32.mrf.mxu0
  %481 = vdwg.mxu0
  %482 = vrot.lane.b32.xlu0 %v307, 96
  %v483 = vpop.permute.xlu0 %482
  %484 = vrot.lane.b32.xlu0 %v307, 32
  %v485 = vpop.permute.xlu0 %484
  %v486 = vsel %vm204, %v483, 0
  %v488 = vsel %vm204, %v485, 0
  %490 = vmatprep.subr.mxu0 0.0
  %491 = vmatpush1.xpose.msra.mxu0 0.0
  %492 = vmatprep.subr.mxu0 0.0
  %493 = vmatpush1.xpose.msra.mxu0 0.0
  %494 = vmatprep.subr.mxu0 0.0
  %495 = vmatpush1.xpose.msra.mxu0 0.0
  %496 = vmatprep.subr.mxu0 0.0
  %497 = vmatpush1.xpose.msra.mxu0 0.0
  %498 = vmatprep.subr.mxu0 0.0
  %499 = vmatpush1.xpose.msra.mxu0 0.0
  %500 = vmatprep.subr.mxu0 0.0
  %501 = vmatpush1.xpose.msra.mxu0 0.0
  %502 = vmatprep.subr.mxu0 0.0
  %503 = vmatpush1.xpose.msra.mxu0 0.0
  %504 = vmatprep.subr.mxu0 0.0
  %505 = vmatpush1.xpose.msra.mxu0 0.0
  %506 = vmatprep.subr.mxu0 0.0
  %507 = vmatpush1.xpose.msra.mxu0 0.0
  %508 = vmatprep.subr.mxu0 0.0
  %509 = vmatpush1.xpose.msra.mxu0 0.0
  %510 = vmatprep.subr.mxu0 0.0
  %511 = vmatpush1.xpose.msra.mxu0 0.0
  %512 = vmatprep.subr.mxu0 0.0
  %513 = vmatpush1.xpose.msra.mxu0 0.0
  %514 = vmatprep.subr.mxu0 0.0
  %515 = vmatpush1.xpose.msra.mxu0 0.0
  %516 = vmatprep.subr.mxu0 0.0
  %517 = vmatpush1.xpose.msra.mxu0 0.0
  %518 = vmatprep.subr.mxu0 0.0
  %519 = vmatpush1.xpose.msra.mxu0 0.0
  %520 = vmatprep.subr.mxu0 0.0
  %521 = vmatpush1.xpose.msra.mxu0 %v488
  %522 = vmatprep.subr.mxu0 0.0
  %523 = vmatpush2.xpose.msra.mxu0 0.0
  %524 = vmatprep.subr.mxu0 0.0
  %525 = vmatpush2.xpose.msra.mxu0 0.0
  %526 = vmatprep.subr.mxu0 0.0
  %527 = vmatpush2.xpose.msra.mxu0 0.0
  %528 = vmatprep.subr.mxu0 0.0
  %529 = vmatpush2.xpose.msra.mxu0 0.0
  %530 = vmatprep.subr.mxu0 0.0
  %531 = vmatpush2.xpose.msra.mxu0 0.0
  %532 = vmatprep.subr.mxu0 0.0
  %533 = vmatpush2.xpose.msra.mxu0 0.0
  %534 = vmatprep.subr.mxu0 0.0
  %535 = vmatpush2.xpose.msra.mxu0 0.0
  %536 = vmatprep.subr.mxu0 0.0
  %537 = vmatpush2.xpose.msra.mxu0 0.0
  %538 = vmatprep.subr.mxu0 0.0
  %539 = vmatpush2.xpose.msra.mxu0 0.0
  %540 = vmatprep.subr.mxu0 0.0
  %541 = vmatpush2.xpose.msra.mxu0 0.0
  %542 = vmatprep.subr.mxu0 0.0
  %543 = vmatpush2.xpose.msra.mxu0 0.0
  %544 = vmatprep.subr.mxu0 0.0
  %545 = vmatpush2.xpose.msra.mxu0 0.0
  %546 = vmatprep.subr.mxu0 0.0
  %547 = vmatpush2.xpose.msra.mxu0 0.0
  %548 = vmatprep.subr.mxu0 0.0
  %549 = vmatpush2.xpose.msra.mxu0 0.0
  %550 = vmatprep.subr.mxu0 0.0
  %551 = vmatpush2.xpose.msra.mxu0 0.0
  %552 = vmatprep.subr.mxu0 0.0
  %553 = vmatpush2.xpose.msra.mxu0 0.0
  %554 = vmatprep.mubr.f32.mxu0 0.0
  %555 = vmatmul.mubr.f32.gmra.mxu0 %v486
  %v556 = vpop.f32.mrf.mxu0
  %v557 = vadd.f32 0.0, %v556
  %v558 = vpop.f32.mrf.mxu0
  %559 = vdwg.mxu0
  %v560 = vmul.f32 %v557, 0.17677669
  %v561 = vadd.f32 %v560, %v170
  %v562 = vsel %vm392, %v561, -inf
  %563 = vmax.xlane.f32.xlu0 %v562
  %v564 = vpop.xlane.xlu0 %563
  %v565 = vsub.f32 %v561, %v564
  %v566 = vmul.f32 %v565, 1.442695
  %v567 = vpow.pop %v566
  %v568 = vsel %vm392, %v567, 0.0
  %569 = vadd.xlane.f32.xlu0 %v568
  %v570 = vpop.xlane.xlu0 %569
  %v571 = vrcp.pop %v570
  %v572 = vmul.f32 %v567, %v571
  %573 = vrot.lane.b32.xlu0 %v309, 96
  %v574 = vpop.permute.xlu0 %573
  %v576 = vsel %vm404, %v572, 0
  %v578 = vsel %vm408, %v574, 0
  %580 = vmatprep.subr.mxu0 0.0
  %581 = vmatpush1.msra.mxu0 0.0
  %582 = vmatprep.subr.mxu0 0.0
  %583 = vmatpush1.msra.mxu0 0.0
  %584 = vmatprep.subr.mxu0 0.0
  %585 = vmatpush1.msra.mxu0 0.0
  %586 = vmatprep.subr.mxu0 0.0
  %587 = vmatpush1.msra.mxu0 0.0
  %588 = vmatprep.subr.mxu0 0.0
  %589 = vmatpush1.msra.mxu0 0.0
  %590 = vmatprep.subr.mxu0 0.0
  %591 = vmatpush1.msra.mxu0 0.0
  %592 = vmatprep.subr.mxu0 0.0
  %593 = vmatpush1.msra.mxu0 0.0
  %594 = vmatprep.subr.mxu0 0.0
  %595 = vmatpush1.msra.mxu0 0.0
  %596 = vmatprep.subr.mxu0 0.0
  %597 = vmatpush1.msra.mxu0 0.0
  %598 = vmatprep.subr.mxu0 0.0
  %599 = vmatpush1.msra.mxu0 0.0
  %600 = vmatprep.subr.mxu0 0.0
  %601 = vmatpush1.msra.mxu0 0.0
  %602 = vmatprep.subr.mxu0 0.0
  %603 = vmatpush1.msra.mxu0 0.0
  %604 = vmatprep.subr.mxu0 0.0
  %605 = vmatpush1.msra.mxu0 0.0
  %606 = vmatprep.subr.mxu0 0.0
  %607 = vmatpush1.msra.mxu0 0.0
  %608 = vmatprep.subr.mxu0 0.0
  %609 = vmatpush1.msra.mxu0 0.0
  %610 = vmatprep.subr.mxu0 0.0
  %611 = vmatpush1.msra.mxu0 %v578
  %612 = vmatprep.subr.mxu0 0.0
  %613 = vmatpush2.msra.mxu0 0.0
  %614 = vmatprep.subr.mxu0 0.0
  %615 = vmatpush2.msra.mxu0 0.0
  %616 = vmatprep.subr.mxu0 0.0
  %617 = vmatpush2.msra.mxu0 0.0
  %618 = vmatprep.subr.mxu0 0.0
  %619 = vmatpush2.msra.mxu0 0.0
  %620 = vmatprep.subr.mxu0 0.0
  %621 = vmatpush2.msra.mxu0 0.0
  %622 = vmatprep.subr.mxu0 0.0
  %623 = vmatpush2.msra.mxu0 0.0
  %624 = vmatprep.subr.mxu0 0.0
  %625 = vmatpush2.msra.mxu0 0.0
  %626 = vmatprep.subr.mxu0 0.0
  %627 = vmatpush2.msra.mxu0 0.0
  %628 = vmatprep.subr.mxu0 0.0
  %629 = vmatpush2.msra.mxu0 0.0
  %630 = vmatprep.subr.mxu0 0.0
  %631 = vmatpush2.msra.mxu0 0.0
  %632 = vmatprep.subr.mxu0 0.0
  %633 = vmatpush2.msra.mxu0 0.0
  %634 = vmatprep.subr.mxu0 0.0
  %635 = vmatpush2.msra.mxu0 0.0
  %636 = vmatprep.subr.mxu0 0.0
  %637 = vmatpush2.msra.mxu0 0.0
  %638 = vmatprep.subr.mxu0 0.0
  %639 = vmatpush2.msra.mxu0 0.0
  %640 = vmatprep.subr.mxu0 0.0
  %641 = vmatpush2.msra.mxu0 0.0
  %642 = vmatprep.subr.mxu0 0.0
  %643 = vmatpush2.msra.mxu0 0.0
  %644 = vmatprep.mubr.f32.mxu0 0.0
  %645 = vmatmul.mubr.f32.gmra.mxu0 %v576
  %v646 = vpop.f32.mrf.mxu0
  %v647 = vadd.f32 0.0, %v646
  %v648 = vpop.f32.mrf.mxu0
  %649 = vdwg.mxu0
  %651 = vrot.lane.b32.xlu0 %v647, 32
  %v652 = vpop.permute.xlu0 %651
  %v654 = vsel %vm204, %v479, %v652
  %v655 = vadd.f32 %v154, %v155
  %v656 = vpack.c.bf16 %v654, %v654
  %v657 = vld [vmem:[%s35] sm:$0xf]
  %v658 = vld [vmem:[%s35 + $0x4] sm:$0xf]
  %v659 = vld [vmem:[%s35 + $0x8] sm:$0xf]
  %v660 = vld [vmem:[%s35 + $0xc] sm:$0xf]
  %v661 = vld [vmem:[%s35 + $0x10] sm:$0xf]
  %v662 = vld [vmem:[%s35 + $0x14] sm:$0xf]
  %v663 = vld [vmem:[%s35 + $0x18] sm:$0xf]
  %v664 = vld [vmem:[%s35 + $0x1c] sm:$0xf]
  %v673 = vunpack.c.l.b16 %v657
  %v674 = vunpack.c.l.b16 %v658
  %v675 = vunpack.c.l.b16 %v659
  %v676 = vunpack.c.l.b16 %v660
  %v677 = vunpack.c.l.b16 %v661
  %v678 = vunpack.c.l.b16 %v662
  %v679 = vunpack.c.l.b16 %v663
  %v680 = vunpack.c.l.b16 %v664
  %v681 = vpack.c.b16 %v674, %v673
  %v682 = vpack.c.b16 %v676, %v675
  %v683 = vpack.c.b16 %v678, %v677
  %v684 = vpack.c.b16 %v680, %v679
  %vm689 = vcmask 523264
  %v691 = vsel %vm689, %v656, 0
  %693 = vmatprep.subr.bf16.mxu0 0
  %694 = vmatpush1.bf16.msra.mxu0 0
  %695 = vmatprep.subr.bf16.mxu0 0
  %696 = vmatpush1.bf16.msra.mxu0 0
  %697 = vmatprep.subr.bf16.mxu0 0
  %698 = vmatpush1.bf16.msra.mxu0 0
  %699 = vmatprep.subr.bf16.mxu0 0
  %700 = vmatpush1.bf16.msra.mxu0 0
  %701 = vmatprep.subr.bf16.mxu0 0
  %702 = vmatpush1.bf16.msra.mxu0 %v684
  %703 = vmatprep.subr.bf16.mxu0 0
  %704 = vmatpush1.bf16.msra.mxu0 %v683
  %705 = vmatprep.subr.bf16.mxu0 0
  %706 = vmatpush1.bf16.msra.mxu0 %v682
  %707 = vmatprep.subr.bf16.mxu0 0
  %708 = vmatpush1.bf16.msra.mxu0 %v681
  %709 = vmatprep.subr.bf16.mxu0 0
  %710 = vmatpush2.bf16.msra.mxu0 0
  %711 = vmatprep.subr.bf16.mxu0 0
  %712 = vmatpush2.bf16.msra.mxu0 0
  %713 = vmatprep.subr.bf16.mxu0 0
  %714 = vmatpush2.bf16.msra.mxu0 0
  %715 = vmatprep.subr.bf16.mxu0 0
  %716 = vmatpush2.bf16.msra.mxu0 0
  %717 = vmatprep.subr.bf16.mxu0 0
  %718 = vmatpush2.bf16.msra.mxu0 0
  %719 = vmatprep.subr.bf16.mxu0 0
  %720 = vmatpush2.bf16.msra.mxu0 0
  %721 = vmatprep.subr.bf16.mxu0 0
  %722 = vmatpush2.bf16.msra.mxu0 0
  %723 = vmatprep.subr.bf16.mxu0 0
  %724 = vmatpush2.bf16.msra.mxu0 0
  %725 = vmatprep.mubr.bf16.mxu0 0
  %726 = vmatmul.mubr.bf16.gmra.mxu0 %v691
  %v727 = vpop.f32.mrf.mxu0
  %v728 = vadd.f32 0.0, %v727
  %v729 = vpop.f32.mrf.mxu0
  %v730 = vpop.f32.mrf.mxu0
  %v731 = vpop.f32.mrf.mxu0
  %732 = vdwg.mxu0
  %v733 = vadd.f32 %v655, %v728
  %vm734 = vcmask 257024
  %v735 = vsel %vm734, %v733, 0.0
  %736 = vadd.xlane.f32.xlu0 %v735
  %v737 = vpop.xlane.xlu0 %736
  %v738 = vrcp.pop 32.0
  %v739 = vmul.f32 %v737, %v738
  %v740 = vsub.f32 %v733, %v739
  %v741 = vmul.f32 %v740, %v740
  %v742 = vsel %vm734, %v741, 0.0
  %743 = vadd.xlane.f32.xlu0 %v742
  %v744 = vpop.xlane.xlu0 %743
  %v745 = vmul.f32 %v744, %v738
  %v746 = vadd.f32 %v745, 1e-06
  %v747 = vrsqrt.pop %v746
  %v748 = vmul.f32 %v740, %v747
  %v749 = vlaneseq
  %v750 = vshrl.u32 %v749, 7
  %v751 = vsub.s32 0, %v750
  %v752 = vrot.slane %v171, %v751
  %v753 = vmul.f32 %v748, %v752
  %v754 = vlaneseq
  %v755 = vshrl.u32 %v754, 7
  %v756 = vsub.s32 1, %v755
  %v757 = vrot.slane %v171, %v756
  %v758 = vadd.f32 %v753, %v757
  %v759 = vpack.c.bf16 %v758, %v758
  %v760 = vpack.c.bf16 %v156, %v156
  %v761 = vld [vmem:[%s37] sm:$0xf]
  %v762 = vld [vmem:[%s37 + $0x4] sm:$0xf]
  %v763 = vld [vmem:[%s37 + $0x8] sm:$0xf]
  %v764 = vld [vmem:[%s37 + $0xc] sm:$0xf]
  %v769 = vunpack.c.l.b16 %v761
  %v770 = vunpack.c.l.b16 %v762
  %v771 = vunpack.c.l.b16 %v763
  %v772 = vunpack.c.l.b16 %v764
  %v773 = vpack.c.b16 %v770, %v769
  %v774 = vpack.c.b16 %v772, %v771
  %v778 = vsel %vm204, %v759, 0
  %780 = vmatprep.subr.bf16.mxu0 0
  %781 = vmatpush1.bf16.msra.mxu0 0
  %782 = vmatprep.subr.bf16.mxu0 0
  %783 = vmatpush1.bf16.msra.mxu0 0
  %784 = vmatprep.subr.bf16.mxu0 0
  %785 = vmatpush1.bf16.msra.mxu0 0
  %786 = vmatprep.subr.bf16.mxu0 0
  %787 = vmatpush1.bf16.msra.mxu0 0
  %788 = vmatprep.subr.bf16.mxu0 0
  %789 = vmatpush1.bf16.msra.mxu0 0
  %790 = vmatprep.subr.bf16.mxu0 0
  %791 = vmatpush1.bf16.msra.mxu0 0
  %792 = vmatprep.subr.bf16.mxu0 0
  %793 = vmatpush1.bf16.msra.mxu0 %v774
  %794 = vmatprep.subr.bf16.mxu0 0
  %795 = vmatpush1.bf16.msra.mxu0 %v773
  %796 = vmatprep.subr.bf16.mxu0 0
  %797 = vmatpush2.bf16.msra.mxu0 0
  %798 = vmatprep.subr.bf16.mxu0 0
  %799 = vmatpush2.bf16.msra.mxu0 0
  %800 = vmatprep.subr.bf16.mxu0 0
  %801 = vmatpush2.bf16.msra.mxu0 0
  %802 = vmatprep.subr.bf16.mxu0 0
  %803 = vmatpush2.bf16.msra.mxu0 0
  %804 = vmatprep.subr.bf16.mxu0 0
  %805 = vmatpush2.bf16.msra.mxu0 0
  %806 = vmatprep.subr.bf16.mxu0 0
  %807 = vmatpush2.bf16.msra.mxu0 0
  %808 = vmatprep.subr.bf16.mxu0 0
  %809 = vmatpush2.bf16.msra.mxu0 0
  %810 = vmatprep.subr.bf16.mxu0 0
  %811 = vmatpush2.bf16.msra.mxu0 0
  %812 = vmatprep.mubr.bf16.mxu0 0
  %813 = vmatmul.mubr.bf16.gmra.mxu0 %v778
  %v814 = vpop.f32.mrf.mxu0
  %v815 = vadd.f32 0.0, %v814
  %v816 = vpop.f32.mrf.mxu0
  %v817 = vpop.f32.mrf.mxu0
  %v818 = vpop.f32.mrf.mxu0
  %819 = vdwg.mxu0
  %v820 = vld [vmem:[%s39] sm:$0xf]
  %v821 = vld [vmem:[%s39 + $0x4] sm:$0xf]
  %v822 = vld [vmem:[%s39 + $0x8] sm:$0xf]
  %v823 = vld [vmem:[%s39 + $0xc] sm:$0xf]
  %v828 = vunpack.c.l.b16 %v820
  %v829 = vunpack.c.l.b16 %v821
  %v830 = vunpack.c.l.b16 %v822
  %v831 = vunpack.c.l.b16 %v823
  %v832 = vpack.c.b16 %v829, %v828
  %v833 = vpack.c.b16 %v831, %v830
  %v837 = vsel %vm204, %v760, 0
  %839 = vmatprep.subr.bf16.mxu0 0
  %840 = vmatpush1.bf16.msra.mxu0 0
  %841 = vmatprep.subr.bf16.mxu0 0
  %842 = vmatpush1.bf16.msra.mxu0 0
  %843 = vmatprep.subr.bf16.mxu0 0
  %844 = vmatpush1.bf16.msra.mxu0 0
  %845 = vmatprep.subr.bf16.mxu0 0
  %846 = vmatpush1.bf16.msra.mxu0 0
  %847 = vmatprep.subr.bf16.mxu0 0
  %848 = vmatpush1.bf16.msra.mxu0 0
  %849 = vmatprep.subr.bf16.mxu0 0
  %850 = vmatpush1.bf16.msra.mxu0 0
  %851 = vmatprep.subr.bf16.mxu0 0
  %852 = vmatpush1.bf16.msra.mxu0 %v833
  %853 = vmatprep.subr.bf16.mxu0 0
  %854 = vmatpush1.bf16.msra.mxu0 %v832
  %855 = vmatprep.subr.bf16.mxu0 0
  %856 = vmatpush2.bf16.msra.mxu0 0
  %857 = vmatprep.subr.bf16.mxu0 0
  %858 = vmatpush2.bf16.msra.mxu0 0
  %859 = vmatprep.subr.bf16.mxu0 0
  %860 = vmatpush2.bf16.msra.mxu0 0
  %861 = vmatprep.subr.bf16.mxu0 0
  %862 = vmatpush2.bf16.msra.mxu0 0
  %863 = vmatprep.subr.bf16.mxu0 0
  %864 = vmatpush2.bf16.msra.mxu0 0
  %865 = vmatprep.subr.bf16.mxu0 0
  %866 = vmatpush2.bf16.msra.mxu0 0
  %867 = vmatprep.subr.bf16.mxu0 0
  %868 = vmatpush2.bf16.msra.mxu0 0
  %869 = vmatprep.subr.bf16.mxu0 0
  %870 = vmatpush2.bf16.msra.mxu0 0
  %871 = vmatprep.mubr.bf16.mxu0 0
  %872 = vmatmul.mubr.bf16.gmra.mxu0 %v837
  %v873 = vpop.f32.mrf.mxu0
  %v874 = vadd.f32 0.0, %v873
  %v875 = vpop.f32.mrf.mxu0
  %v876 = vpop.f32.mrf.mxu0
  %v877 = vpop.f32.mrf.mxu0
  %878 = vdwg.mxu0
  %v880 = vsel %vm204, %v815, 0
  %v883 = vsel %vm204, %v874, 0
  %885 = vmatprep.subr.mxu0 0.0
  %886 = vmatpush1.xpose.msra.mxu0 0.0
  %887 = vmatprep.subr.mxu0 0.0
  %888 = vmatpush1.xpose.msra.mxu0 0.0
  %889 = vmatprep.subr.mxu0 0.0
  %890 = vmatpush1.xpose.msra.mxu0 0.0
  %891 = vmatprep.subr.mxu0 0.0
  %892 = vmatpush1.xpose.msra.mxu0 0.0
  %893 = vmatprep.subr.mxu0 0.0
  %894 = vmatpush1.xpose.msra.mxu0 0.0
  %895 = vmatprep.subr.mxu0 0.0
  %896 = vmatpush1.xpose.msra.mxu0 0.0
  %897 = vmatprep.subr.mxu0 0.0
  %898 = vmatpush1.xpose.msra.mxu0 0.0
  %899 = vmatprep.subr.mxu0 0.0
  %900 = vmatpush1.xpose.msra.mxu0 0.0
  %901 = vmatprep.subr.mxu0 0.0
  %902 = vmatpush1.xpose.msra.mxu0 0.0
  %903 = vmatprep.subr.mxu0 0.0
  %904 = vmatpush1.xpose.msra.mxu0 0.0
  %905 = vmatprep.subr.mxu0 0.0
  %906 = vmatpush1.xpose.msra.mxu0 0.0
  %907 = vmatprep.subr.mxu0 0.0
  %908 = vmatpush1.xpose.msra.mxu0 0.0
  %909 = vmatprep.subr.mxu0 0.0
  %910 = vmatpush1.xpose.msra.mxu0 0.0
  %911 = vmatprep.subr.mxu0 0.0
  %912 = vmatpush1.xpose.msra.mxu0 0.0
  %913 = vmatprep.subr.mxu0 0.0
  %914 = vmatpush1.xpose.msra.mxu0 0.0
  %915 = vmatprep.subr.mxu0 0.0
  %916 = vmatpush1.xpose.msra.mxu0 %v883
  %917 = vmatprep.subr.mxu0 0.0
  %918 = vmatpush2.xpose.msra.mxu0 0.0
  %919 = vmatprep.subr.mxu0 0.0
  %920 = vmatpush2.xpose.msra.mxu0 0.0
  %921 = vmatprep.subr.mxu0 0.0
  %922 = vmatpush2.xpose.msra.mxu0 0.0
  %923 = vmatprep.subr.mxu0 0.0
  %924 = vmatpush2.xpose.msra.mxu0 0.0
  %925 = vmatprep.subr.mxu0 0.0
  %926 = vmatpush2.xpose.msra.mxu0 0.0
  %927 = vmatprep.subr.mxu0 0.0
  %928 = vmatpush2.xpose.msra.mxu0 0.0
  %929 = vmatprep.subr.mxu0 0.0
  %930 = vmatpush2.xpose.msra.mxu0 0.0
  %931 = vmatprep.subr.mxu0 0.0
  %932 = vmatpush2.xpose.msra.mxu0 0.0
  %933 = vmatprep.subr.mxu0 0.0
  %934 = vmatpush2.xpose.msra.mxu0 0.0
  %935 = vmatprep.subr.mxu0 0.0
  %936 = vmatpush2.xpose.msra.mxu0 0.0
  %937 = vmatprep.subr.mxu0 0.0
  %938 = vmatpush2.xpose.msra.mxu0 0.0
  %939 = vmatprep.subr.mxu0 0.0
  %940 = vmatpush2.xpose.msra.mxu0 0.0
  %941 = vmatprep.subr.mxu0 0.0
  %942 = vmatpush2.xpose.msra.mxu0 0.0
  %943 = vmatprep.subr.mxu0 0.0
  %944 = vmatpush2.xpose.msra.mxu0 0.0
  %945 = vmatprep.subr.mxu0 0.0
  %946 = vmatpush2.xpose.msra.mxu0 0.0
  %947 = vmatprep.subr.mxu0 0.0
  %948 = vmatpush2.xpose.msra.mxu0 0.0
  %949 = vmatprep.mubr.f32.mxu0 0.0
  %950 = vmatmul.mubr.f32.gmra.mxu0 %v880
  %v951 = vpop.f32.mrf.mxu0
  %v952 = vadd.f32 0.0, %v951
  %v953 = vpop.f32.mrf.mxu0
  %954 = vdwg.mxu0
  %v955 = vmul.f32 %v952, 0.17677669
  %vm956 = vcmask 11264
  %v957 = vsel %vm956, %v955, -inf
  %958 = vmax.xlane.f32.xlu0 %v957
  %v959 = vpop.xlane.xlu0 %958
  %v960 = vsub.f32 %v955, %v959
  %v961 = vmul.f32 %v960, 1.442695
  %v962 = vpow.pop %v961
  %v963 = vsel %vm956, %v962, 0.0
  %964 = vadd.xlane.f32.xlu0 %v963
  %v965 = vpop.xlane.xlu0 %964
  %v966 = vrcp.pop %v965
  %v967 = vmul.f32 %v962, %v966
  %968 = vrot.lane.b32.xlu0 %v874, 64
  %v969 = vpop.permute.xlu0 %968
  %vm970 = vcmask 15360
  %v972 = vsel %vm970, %v967, 0
  %vm974 = vcmask 1041408
  %v975 = vsel %vm974, %v969, 0
  %977 = vmatprep.subr.mxu0 0.0
  %978 = vmatpush1.msra.mxu0 0.0
  %979 = vmatprep.subr.mxu0 0.0
  %980 = vmatpush1.msra.mxu0 0.0
  %981 = vmatprep.subr.mxu0 0.0
  %982 = vmatpush1.msra.mxu0 0.0
  %983 = vmatprep.subr.mxu0 0.0
  %984 = vmatpush1.msra.mxu0 0.0
  %985 = vmatprep.subr.mxu0 0.0
  %986 = vmatpush1.msra.mxu0 0.0
  %987 = vmatprep.subr.mxu0 0.0
  %988 = vmatpush1.msra.mxu0 0.0
  %989 = vmatprep.subr.mxu0 0.0
  %990 = vmatpush1.msra.mxu0 0.0
  %991 = vmatprep.subr.mxu0 0.0
  %992 = vmatpush1.msra.mxu0 0.0
  %993 = vmatprep.subr.mxu0 0.0
  %994 = vmatpush1.msra.mxu0 0.0
  %995 = vmatprep.subr.mxu0 0.0
  %996 = vmatpush1.msra.mxu0 0.0
  %997 = vmatprep.subr.mxu0 0.0
  %998 = vmatpush1.msra.mxu0 0.0
  %999 = vmatprep.subr.mxu0 0.0
  %1000 = vmatpush1.msra.mxu0 0.0
  %1001 = vmatprep.subr.mxu0 0.0
  %1002 = vmatpush1.msra.mxu0 0.0
  %1003 = vmatprep.subr.mxu0 0.0
  %1004 = vmatpush1.msra.mxu0 0.0
  %1005 = vmatprep.subr.mxu0 0.0
  %1006 = vmatpush1.msra.mxu0 0.0
  %1007 = vmatprep.subr.mxu0 0.0
  %1008 = vmatpush1.msra.mxu0 %v975
  %1009 = vmatprep.subr.mxu0 0.0
  %1010 = vmatpush2.msra.mxu0 0.0
  %1011 = vmatprep.subr.mxu0 0.0
  %1012 = vmatpush2.msra.mxu0 0.0
  %1013 = vmatprep.subr.mxu0 0.0
  %1014 = vmatpush2.msra.mxu0 0.0
  %1015 = vmatprep.subr.mxu0 0.0
  %1016 = vmatpush2.msra.mxu0 0.0
  %1017 = vmatprep.subr.mxu0 0.0
  %1018 = vmatpush2.msra.mxu0 0.0
  %1019 = vmatprep.subr.mxu0 0.0
  %1020 = vmatpush2.msra.mxu0 0.0
  %1021 = vmatprep.subr.mxu0 0.0
  %1022 = vmatpush2.msra.mxu0 0.0
  %1023 = vmatprep.subr.mxu0 0.0
  %1024 = vmatpush2.msra.mxu0 0.0
  %1025 = vmatprep.subr.mxu0 0.0
  %1026 = vmatpush2.msra.mxu0 0.0
  %1027 = vmatprep.subr.mxu0 0.0
  %1028 = vmatpush2.msra.mxu0 0.0
  %1029 = vmatprep.subr.mxu0 0.0
  %1030 = vmatpush2.msra.mxu0 0.0
  %1031 = vmatprep.subr.mxu0 0.0
  %1032 = vmatpush2.msra.mxu0 0.0
  %1033 = vmatprep.subr.mxu0 0.0
  %1034 = vmatpush2.msra.mxu0 0.0
  %1035 = vmatprep.subr.mxu0 0.0
  %1036 = vmatpush2.msra.mxu0 0.0
  %1037 = vmatprep.subr.mxu0 0.0
  %1038 = vmatpush2.msra.mxu0 0.0
  %1039 = vmatprep.subr.mxu0 0.0
  %1040 = vmatpush2.msra.mxu0 0.0
  %1041 = vmatprep.mubr.f32.mxu0 0.0
  %1042 = vmatmul.mubr.f32.gmra.mxu0 %v972
  %v1043 = vpop.f32.mrf.mxu0
  %v1044 = vadd.f32 0.0, %v1043
  %v1045 = vpop.f32.mrf.mxu0
  %1046 = vdwg.mxu0
  %1047 = vrot.lane.b32.xlu0 %v815, 96
  %v1048 = vpop.permute.xlu0 %1047
  %1049 = vrot.lane.b32.xlu0 %v874, 96
  %v1050 = vpop.permute.xlu0 %1049
  %v1051 = vsel %vm204, %v1048, 0
  %v1053 = vsel %vm204, %v1050, 0
  %1055 = vmatprep.subr.mxu0 0.0
  %1056 = vmatpush1.xpose.msra.mxu0 0.0
  %1057 = vmatprep.subr.mxu0 0.0
  %1058 = vmatpush1.xpose.msra.mxu0 0.0
  %1059 = vmatprep.subr.mxu0 0.0
  %1060 = vmatpush1.xpose.msra.mxu0 0.0
  %1061 = vmatprep.subr.mxu0 0.0
  %1062 = vmatpush1.xpose.msra.mxu0 0.0
  %1063 = vmatprep.subr.mxu0 0.0
  %1064 = vmatpush1.xpose.msra.mxu0 0.0
  %1065 = vmatprep.subr.mxu0 0.0
  %1066 = vmatpush1.xpose.msra.mxu0 0.0
  %1067 = vmatprep.subr.mxu0 0.0
  %1068 = vmatpush1.xpose.msra.mxu0 0.0
  %1069 = vmatprep.subr.mxu0 0.0
  %1070 = vmatpush1.xpose.msra.mxu0 0.0
  %1071 = vmatprep.subr.mxu0 0.0
  %1072 = vmatpush1.xpose.msra.mxu0 0.0
  %1073 = vmatprep.subr.mxu0 0.0
  %1074 = vmatpush1.xpose.msra.mxu0 0.0
  %1075 = vmatprep.subr.mxu0 0.0
  %1076 = vmatpush1.xpose.msra.mxu0 0.0
  %1077 = vmatprep.subr.mxu0 0.0
  %1078 = vmatpush1.xpose.msra.mxu0 0.0
  %1079 = vmatprep.subr.mxu0 0.0
  %1080 = vmatpush1.xpose.msra.mxu0 0.0
  %1081 = vmatprep.subr.mxu0 0.0
  %1082 = vmatpush1.xpose.msra.mxu0 0.0
  %1083 = vmatprep.subr.mxu0 0.0
  %1084 = vmatpush1.xpose.msra.mxu0 0.0
  %1085 = vmatprep.subr.mxu0 0.0
  %1086 = vmatpush1.xpose.msra.mxu0 %v1053
  %1087 = vmatprep.subr.mxu0 0.0
  %1088 = vmatpush2.xpose.msra.mxu0 0.0
  %1089 = vmatprep.subr.mxu0 0.0
  %1090 = vmatpush2.xpose.msra.mxu0 0.0
  %1091 = vmatprep.subr.mxu0 0.0
  %1092 = vmatpush2.xpose.msra.mxu0 0.0
  %1093 = vmatprep.subr.mxu0 0.0
  %1094 = vmatpush2.xpose.msra.mxu0 0.0
  %1095 = vmatprep.subr.mxu0 0.0
  %1096 = vmatpush2.xpose.msra.mxu0 0.0
  %1097 = vmatprep.subr.mxu0 0.0
  %1098 = vmatpush2.xpose.msra.mxu0 0.0
  %1099 = vmatprep.subr.mxu0 0.0
  %1100 = vmatpush2.xpose.msra.mxu0 0.0
  %1101 = vmatprep.subr.mxu0 0.0
  %1102 = vmatpush2.xpose.msra.mxu0 0.0
  %1103 = vmatprep.subr.mxu0 0.0
  %1104 = vmatpush2.xpose.msra.mxu0 0.0
  %1105 = vmatprep.subr.mxu0 0.0
  %1106 = vmatpush2.xpose.msra.mxu0 0.0
  %1107 = vmatprep.subr.mxu0 0.0
  %1108 = vmatpush2.xpose.msra.mxu0 0.0
  %1109 = vmatprep.subr.mxu0 0.0
  %1110 = vmatpush2.xpose.msra.mxu0 0.0
  %1111 = vmatprep.subr.mxu0 0.0
  %1112 = vmatpush2.xpose.msra.mxu0 0.0
  %1113 = vmatprep.subr.mxu0 0.0
  %1114 = vmatpush2.xpose.msra.mxu0 0.0
  %1115 = vmatprep.subr.mxu0 0.0
  %1116 = vmatpush2.xpose.msra.mxu0 0.0
  %1117 = vmatprep.subr.mxu0 0.0
  %1118 = vmatpush2.xpose.msra.mxu0 0.0
  %1119 = vmatprep.mubr.f32.mxu0 0.0
  %1120 = vmatmul.mubr.f32.gmra.mxu0 %v1051
  %v1121 = vpop.f32.mrf.mxu0
  %v1122 = vadd.f32 0.0, %v1121
  %v1123 = vpop.f32.mrf.mxu0
  %1124 = vdwg.mxu0
  %v1125 = vmul.f32 %v1122, 0.17677669
  %v1126 = vsel %vm956, %v1125, -inf
  %1127 = vmax.xlane.f32.xlu0 %v1126
  %v1128 = vpop.xlane.xlu0 %1127
  %v1129 = vsub.f32 %v1125, %v1128
  %v1130 = vmul.f32 %v1129, 1.442695
  %v1131 = vpow.pop %v1130
  %v1132 = vsel %vm956, %v1131, 0.0
  %1133 = vadd.xlane.f32.xlu0 %v1132
  %v1134 = vpop.xlane.xlu0 %1133
  %v1135 = vrcp.pop %v1134
  %v1136 = vmul.f32 %v1131, %v1135
  %1137 = vrot.lane.b32.xlu0 %v874, 32
  %v1138 = vpop.permute.xlu0 %1137
  %v1140 = vsel %vm970, %v1136, 0
  %v1142 = vsel %vm974, %v1138, 0
  %1144 = vmatprep.subr.mxu0 0.0
  %1145 = vmatpush1.msra.mxu0 0.0
  %1146 = vmatprep.subr.mxu0 0.0
  %1147 = vmatpush1.msra.mxu0 0.0
  %1148 = vmatprep.subr.mxu0 0.0
  %1149 = vmatpush1.msra.mxu0 0.0
  %1150 = vmatprep.subr.mxu0 0.0
  %1151 = vmatpush1.msra.mxu0 0.0
  %1152 = vmatprep.subr.mxu0 0.0
  %1153 = vmatpush1.msra.mxu0 0.0
  %1154 = vmatprep.subr.mxu0 0.0
  %1155 = vmatpush1.msra.mxu0 0.0
  %1156 = vmatprep.subr.mxu0 0.0
  %1157 = vmatpush1.msra.mxu0 0.0
  %1158 = vmatprep.subr.mxu0 0.0
  %1159 = vmatpush1.msra.mxu0 0.0
  %1160 = vmatprep.subr.mxu0 0.0
  %1161 = vmatpush1.msra.mxu0 0.0
  %1162 = vmatprep.subr.mxu0 0.0
  %1163 = vmatpush1.msra.mxu0 0.0
  %1164 = vmatprep.subr.mxu0 0.0
  %1165 = vmatpush1.msra.mxu0 0.0
  %1166 = vmatprep.subr.mxu0 0.0
  %1167 = vmatpush1.msra.mxu0 0.0
  %1168 = vmatprep.subr.mxu0 0.0
  %1169 = vmatpush1.msra.mxu0 0.0
  %1170 = vmatprep.subr.mxu0 0.0
  %1171 = vmatpush1.msra.mxu0 0.0
  %1172 = vmatprep.subr.mxu0 0.0
  %1173 = vmatpush1.msra.mxu0 0.0
  %1174 = vmatprep.subr.mxu0 0.0
  %1175 = vmatpush1.msra.mxu0 %v1142
  %1176 = vmatprep.subr.mxu0 0.0
  %1177 = vmatpush2.msra.mxu0 0.0
  %1178 = vmatprep.subr.mxu0 0.0
  %1179 = vmatpush2.msra.mxu0 0.0
  %1180 = vmatprep.subr.mxu0 0.0
  %1181 = vmatpush2.msra.mxu0 0.0
  %1182 = vmatprep.subr.mxu0 0.0
  %1183 = vmatpush2.msra.mxu0 0.0
  %1184 = vmatprep.subr.mxu0 0.0
  %1185 = vmatpush2.msra.mxu0 0.0
  %1186 = vmatprep.subr.mxu0 0.0
  %1187 = vmatpush2.msra.mxu0 0.0
  %1188 = vmatprep.subr.mxu0 0.0
  %1189 = vmatpush2.msra.mxu0 0.0
  %1190 = vmatprep.subr.mxu0 0.0
  %1191 = vmatpush2.msra.mxu0 0.0
  %1192 = vmatprep.subr.mxu0 0.0
  %1193 = vmatpush2.msra.mxu0 0.0
  %1194 = vmatprep.subr.mxu0 0.0
  %1195 = vmatpush2.msra.mxu0 0.0
  %1196 = vmatprep.subr.mxu0 0.0
  %1197 = vmatpush2.msra.mxu0 0.0
  %1198 = vmatprep.subr.mxu0 0.0
  %1199 = vmatpush2.msra.mxu0 0.0
  %1200 = vmatprep.subr.mxu0 0.0
  %1201 = vmatpush2.msra.mxu0 0.0
  %1202 = vmatprep.subr.mxu0 0.0
  %1203 = vmatpush2.msra.mxu0 0.0
  %1204 = vmatprep.subr.mxu0 0.0
  %1205 = vmatpush2.msra.mxu0 0.0
  %1206 = vmatprep.subr.mxu0 0.0
  %1207 = vmatpush2.msra.mxu0 0.0
  %1208 = vmatprep.mubr.f32.mxu0 0.0
  %1209 = vmatmul.mubr.f32.gmra.mxu0 %v1140
  %v1210 = vpop.f32.mrf.mxu0
  %v1211 = vadd.f32 0.0, %v1210
  %v1212 = vpop.f32.mrf.mxu0
  %1213 = vdwg.mxu0
  %1215 = vrot.lane.b32.xlu0 %v1211, 32
  %v1216 = vpop.permute.xlu0 %1215
  %v1218 = vsel %vm204, %v1044, %v1216
  %v1219 = vpack.c.bf16 %v1218, %v1218
  %v1220 = vld [vmem:[%s41] sm:$0xf]
  %v1221 = vld [vmem:[%s41 + $0x4] sm:$0xf]
  %v1222 = vld [vmem:[%s41 + $0x8] sm:$0xf]
  %v1223 = vld [vmem:[%s41 + $0xc] sm:$0xf]
  %v1224 = vld [vmem:[%s41 + $0x10] sm:$0xf]
  %v1225 = vld [vmem:[%s41 + $0x14] sm:$0xf]
  %v1226 = vld [vmem:[%s41 + $0x18] sm:$0xf]
  %v1227 = vld [vmem:[%s41 + $0x1c] sm:$0xf]
  %v1236 = vunpack.c.l.b16 %v1220
  %v1237 = vunpack.c.l.b16 %v1221
  %v1238 = vunpack.c.l.b16 %v1222
  %v1239 = vunpack.c.l.b16 %v1223
  %v1240 = vunpack.c.l.b16 %v1224
  %v1241 = vunpack.c.l.b16 %v1225
  %v1242 = vunpack.c.l.b16 %v1226
  %v1243 = vunpack.c.l.b16 %v1227
  %v1244 = vpack.c.b16 %v1237, %v1236
  %v1245 = vpack.c.b16 %v1239, %v1238
  %v1246 = vpack.c.b16 %v1241, %v1240
  %v1247 = vpack.c.b16 %v1243, %v1242
  %v1253 = vsel %vm689, %v1219, 0
  %1255 = vmatprep.subr.bf16.mxu0 0
  %1256 = vmatpush1.bf16.msra.mxu0 0
  %1257 = vmatprep.subr.bf16.mxu0 0
  %1258 = vmatpush1.bf16.msra.mxu0 0
  %1259 = vmatprep.subr.bf16.mxu0 0
  %1260 = vmatpush1.bf16.msra.mxu0 0
  %1261 = vmatprep.subr.bf16.mxu0 0
  %1262 = vmatpush1.bf16.msra.mxu0 0
  %1263 = vmatprep.subr.bf16.mxu0 0
  %1264 = vmatpush1.bf16.msra.mxu0 %v1247
  %1265 = vmatprep.subr.bf16.mxu0 0
  %1266 = vmatpush1.bf16.msra.mxu0 %v1246
  %1267 = vmatprep.subr.bf16.mxu0 0
  %1268 = vmatpush1.bf16.msra.mxu0 %v1245
  %1269 = vmatprep.subr.bf16.mxu0 0
  %1270 = vmatpush1.bf16.msra.mxu0 %v1244
  %1271 = vmatprep.subr.bf16.mxu0 0
  %1272 = vmatpush2.bf16.msra.mxu0 0
  %1273 = vmatprep.subr.bf16.mxu0 0
  %1274 = vmatpush2.bf16.msra.mxu0 0
  %1275 = vmatprep.subr.bf16.mxu0 0
  %1276 = vmatpush2.bf16.msra.mxu0 0
  %1277 = vmatprep.subr.bf16.mxu0 0
  %1278 = vmatpush2.bf16.msra.mxu0 0
  %1279 = vmatprep.subr.bf16.mxu0 0
  %1280 = vmatpush2.bf16.msra.mxu0 0
  %1281 = vmatprep.subr.bf16.mxu0 0
  %1282 = vmatpush2.bf16.msra.mxu0 0
  %1283 = vmatprep.subr.bf16.mxu0 0
  %1284 = vmatpush2.bf16.msra.mxu0 0
  %1285 = vmatprep.subr.bf16.mxu0 0
  %1286 = vmatpush2.bf16.msra.mxu0 0
  %1287 = vmatprep.mubr.bf16.mxu0 0
  %1288 = vmatmul.mubr.bf16.gmra.mxu0 %v1253
  %v1289 = vpop.f32.mrf.mxu0
  %v1290 = vadd.f32 0.0, %v1289
  %v1291 = vpop.f32.mrf.mxu0
  %v1292 = vpop.f32.mrf.mxu0
  %v1293 = vpop.f32.mrf.mxu0
  %1294 = vdwg.mxu0
  %v1295 = vadd.f32 %v758, %v1290
  %v1296 = vsel %vm734, %v1295, 0.0
  %1297 = vadd.xlane.f32.xlu0 %v1296
  %v1298 = vpop.xlane.xlu0 %1297
  %v1299 = vmul.f32 %v1298, %v738
  %v1300 = vsub.f32 %v1295, %v1299
  %v1301 = vmul.f32 %v1300, %v1300
  %v1302 = vsel %vm734, %v1301, 0.0
  %1303 = vadd.xlane.f32.xlu0 %v1302
  %v1304 = vpop.xlane.xlu0 %1303
  %v1305 = vmul.f32 %v1304, %v738
  %v1306 = vadd.f32 %v1305, 1e-06
  %v1307 = vrsqrt.pop %v1306
  %v1308 = vmul.f32 %v1300, %v1307
  %v1309 = vlaneseq
  %v1310 = vshrl.u32 %v1309, 7
  %v1311 = vsub.s32 2, %v1310
  %v1312 = vrot.slane %v171, %v1311
  %v1313 = vmul.f32 %v1308, %v1312
  %v1314 = vlaneseq
  %v1315 = vshrl.u32 %v1314, 7
  %v1316 = vsub.s32 3, %v1315
  %v1317 = vrot.slane %v171, %v1316
  %v1318 = vadd.f32 %v1313, %v1317
  %v1319 = vpack.c.bf16 %v1318, %v1318
  %v1320 = vld [vmem:[%s43] sm:$0xf]
  %v1321 = vld [vmem:[%s43 + $0x4] sm:$0xf]
  %v1322 = vld [vmem:[%s43 + $0x8] sm:$0xf]
  %v1323 = vld [vmem:[%s43 + $0xc] sm:$0xf]
  %v1325 = vlaneseq
  %v1326 = vshrl.u32 %v1325, 7
  %v1327 = vsub.s32 0, %v1326
  %v1328 = vrot.slane %v172, %v1327
  %v1334 = vunpack.c.l.b16 %v1320
  %v1335 = vunpack.c.l.b16 %v1321
  %v1336 = vunpack.c.l.b16 %v1322
  %v1337 = vunpack.c.l.b16 %v1323
  %v1338 = vpack.c.b16 %v1335, %v1334
  %v1339 = vpack.c.b16 %v1337, %v1336
  %v1343 = vsel %vm204, %v1319, 0
  %1345 = vmatprep.subr.bf16.mxu0 0
  %1346 = vmatpush1.bf16.msra.mxu0 0
  %1347 = vmatprep.subr.bf16.mxu0 0
  %1348 = vmatpush1.bf16.msra.mxu0 0
  %1349 = vmatprep.subr.bf16.mxu0 0
  %1350 = vmatpush1.bf16.msra.mxu0 0
  %1351 = vmatprep.subr.bf16.mxu0 0
  %1352 = vmatpush1.bf16.msra.mxu0 0
  %1353 = vmatprep.subr.bf16.mxu0 0
  %1354 = vmatpush1.bf16.msra.mxu0 0
  %1355 = vmatprep.subr.bf16.mxu0 0
  %1356 = vmatpush1.bf16.msra.mxu0 0
  %1357 = vmatprep.subr.bf16.mxu0 0
  %1358 = vmatpush1.bf16.msra.mxu0 %v1339
  %1359 = vmatprep.subr.bf16.mxu0 0
  %1360 = vmatpush1.bf16.msra.mxu0 %v1338
  %1361 = vmatprep.subr.bf16.mxu0 0
  %1362 = vmatpush2.bf16.msra.mxu0 0
  %1363 = vmatprep.subr.bf16.mxu0 0
  %1364 = vmatpush2.bf16.msra.mxu0 0
  %1365 = vmatprep.subr.bf16.mxu0 0
  %1366 = vmatpush2.bf16.msra.mxu0 0
  %1367 = vmatprep.subr.bf16.mxu0 0
  %1368 = vmatpush2.bf16.msra.mxu0 0
  %1369 = vmatprep.subr.bf16.mxu0 0
  %1370 = vmatpush2.bf16.msra.mxu0 0
  %1371 = vmatprep.subr.bf16.mxu0 0
  %1372 = vmatpush2.bf16.msra.mxu0 0
  %1373 = vmatprep.subr.bf16.mxu0 0
  %1374 = vmatpush2.bf16.msra.mxu0 0
  %1375 = vmatprep.subr.bf16.mxu0 0
  %1376 = vmatpush2.bf16.msra.mxu0 0
  %1377 = vmatprep.mubr.bf16.mxu0 0
  %1378 = vmatmul.mubr.bf16.gmra.mxu0 %v1343
  %v1379 = vpop.f32.mrf.mxu0
  %v1380 = vadd.f32 %v1328, %v1379
  %v1381 = vpop.f32.mrf.mxu0
  %v1382 = vpop.f32.mrf.mxu0
  %v1383 = vpop.f32.mrf.mxu0
  %1384 = vdwg.mxu0
  %v1385 = vmax.f32 %v1380, 0.0
  %v1386 = vpack.c.bf16 %v1385, %v1385
  %v1387 = vld [vmem:[%s45] sm:$0xf]
  %v1388 = vld [vmem:[%s45 + $0x4] sm:$0xf]
  %v1389 = vld [vmem:[%s45 + $0x8] sm:$0xf]
  %v1390 = vld [vmem:[%s45 + $0xc] sm:$0xf]
  %v1391 = vld [vmem:[%s45 + $0x10] sm:$0xf]
  %v1392 = vld [vmem:[%s45 + $0x14] sm:$0xf]
  %v1393 = vld [vmem:[%s45 + $0x18] sm:$0xf]
  %v1394 = vld [vmem:[%s45 + $0x1c] sm:$0xf]
  %v1403 = vunpack.c.l.b16 %v1387
  %v1404 = vunpack.c.l.b16 %v1388
  %v1405 = vunpack.c.l.b16 %v1389
  %v1406 = vunpack.c.l.b16 %v1390
  %v1407 = vunpack.c.l.b16 %v1391
  %v1408 = vunpack.c.l.b16 %v1392
  %v1409 = vunpack.c.l.b16 %v1393
  %v1410 = vunpack.c.l.b16 %v1394
  %v1411 = vpack.c.b16 %v1404, %v1403
  %v1412 = vpack.c.b16 %v1406, %v1405
  %v1413 = vpack.c.b16 %v1408, %v1407
  %v1414 = vpack.c.b16 %v1410, %v1409
  %1419 = vrot.lane.b32.xlu0 %v1328, 64
  %v1420 = vpop.permute.xlu0 %1419
  %v1423 = vsel %vm689, %v1386, 0
  %1425 = vmatprep.subr.bf16.mxu0 0
  %1426 = vmatpush1.bf16.msra.mxu0 0
  %1427 = vmatprep.subr.bf16.mxu0 0
  %1428 = vmatpush1.bf16.msra.mxu0 0
  %1429 = vmatprep.subr.bf16.mxu0 0
  %1430 = vmatpush1.bf16.msra.mxu0 0
  %1431 = vmatprep.subr.bf16.mxu0 0
  %1432 = vmatpush1.bf16.msra.mxu0 0
  %1433 = vmatprep.subr.bf16.mxu0 0
  %1434 = vmatpush1.bf16.msra.mxu0 %v1414
  %1435 = vmatprep.subr.bf16.mxu0 0
  %1436 = vmatpush1.bf16.msra.mxu0 %v1413
  %1437 = vmatprep.subr.bf16.mxu0 0
  %1438 = vmatpush1.bf16.msra.mxu0 %v1412
  %1439 = vmatprep.subr.bf16.mxu0 0
  %1440 = vmatpush1.bf16.msra.mxu0 %v1411
  %1441 = vmatprep.subr.bf16.mxu0 0
  %1442 = vmatpush2.bf16.msra.mxu0 0
  %1443 = vmatprep.subr.bf16.mxu0 0
  %1444 = vmatpush2.bf16.msra.mxu0 0
  %1445 = vmatprep.subr.bf16.mxu0 0
  %1446 = vmatpush2.bf16.msra.mxu0 0
  %1447 = vmatprep.subr.bf16.mxu0 0
  %1448 = vmatpush2.bf16.msra.mxu0 0
  %1449 = vmatprep.subr.bf16.mxu0 0
  %1450 = vmatpush2.bf16.msra.mxu0 0
  %1451 = vmatprep.subr.bf16.mxu0 0
  %1452 = vmatpush2.bf16.msra.mxu0 0
  %1453 = vmatprep.subr.bf16.mxu0 0
  %1454 = vmatpush2.bf16.msra.mxu0 0
  %1455 = vmatprep.subr.bf16.mxu0 0
  %1456 = vmatpush2.bf16.msra.mxu0 0
  %1457 = vmatprep.mubr.bf16.mxu0 0
  %1458 = vmatmul.mubr.bf16.gmra.mxu0 %v1423
  %v1459 = vpop.f32.mrf.mxu0
  %v1460 = vadd.f32 %v1420, %v1459
  %v1461 = vpop.f32.mrf.mxu0
  %v1462 = vpop.f32.mrf.mxu0
  %v1463 = vpop.f32.mrf.mxu0
  %1464 = vdwg.mxu0
  %v1465 = vadd.f32 %v1460, %v1318
  %v1466 = vsel %vm734, %v1465, 0.0
  %1467 = vadd.xlane.f32.xlu0 %v1466
  %v1468 = vpop.xlane.xlu0 %1467
  %v1469 = vmul.f32 %v1468, %v738
  %v1470 = vsub.f32 %v1465, %v1469
  %v1471 = vmul.f32 %v1470, %v1470
  %v1472 = vsel %vm734, %v1471, 0.0
  %1473 = vadd.xlane.f32.xlu0 %v1472
  %v1474 = vpop.xlane.xlu0 %1473
  %v1475 = vmul.f32 %v1474, %v738
  %v1476 = vadd.f32 %v1475, 1e-06
  %v1477 = vrsqrt.pop %v1476
  %v1478 = vmul.f32 %v1470, %v1477
  %v1479 = vlaneseq
  %v1480 = vshrl.u32 %v1479, 7
  %v1481 = vsub.s32 4, %v1480
  %v1482 = vrot.slane %v171, %v1481
  %v1483 = vmul.f32 %v1478, %v1482
  %v1484 = vlaneseq
  %v1485 = vshrl.u32 %v1484, 7
  %v1486 = vsub.s32 5, %v1485
  %v1487 = vrot.slane %v171, %v1486
  %v1488 = vadd.f32 %v1483, %v1487
  %v1489 = vld [vmem:[%s9] sm:$0xff]
  %v1490 = vld [vmem:[%s11] sm:$0xff]
  %v1491 = vld [vmem:[%s17] sm:$0xf]
  %vm1492 = vcmp.gt.f32.partialorder %v153, 0.5
  %v1493 = vsel %vm1492, 1, 0
  %v1494 = vlaneseq
  %v1495 = vshrl.u32 %v1494, 7
  %v1496 = vsub.s32 0, %v1495
  %v1497 = vrot.slane %v1493, %v1496
  %vm1498 = vcmp.eq.s32.totalorder %v1497, 1
  %vm1499 = vmand %vm161, %vm1498
  %v1500 = vsel %vm1499, 0.0, -1e+09
  %v1501 = vld [vmem:[%s67] sm:$0x3f]
  %v1502 = vld [vmem:[%s65] sm:$0x1]
  %v1503 = vpack.c.bf16 %v1489, %v1489
  %v1504 = vpack.c.bf16 %v1490, %v1490
  %v1505 = vld [vmem:[%s51] sm:$0xff]
  %v1506 = vld [vmem:[%s51 + $0x8] sm:$0xff]
  %v1507 = vld [vmem:[%s51 + $0x10] sm:$0xff]
  %v1508 = vld [vmem:[%s51 + $0x18] sm:$0xff]
  %s1509 = scalar_lea.vmem %s51, 32
  %v1510 = vld [vmem:[%s1509] sm:$0xff]
  %v1511 = vld [vmem:[%s1509 + $0x8] sm:$0xff]
  %v1512 = vld [vmem:[%s1509 + $0x10] sm:$0xff]
  %v1513 = vld [vmem:[%s1509 + $0x18] sm:$0xff]
  %v1518 = vunpack.c.l.b16 %v1510
  %v1519 = vunpack.c.h.b16 %v1510
  %v1520 = vunpack.c.l.b16 %v1511
  %v1521 = vunpack.c.h.b16 %v1511
  %v1522 = vunpack.c.l.b16 %v1512
  %v1523 = vunpack.c.h.b16 %v1512
  %v1524 = vunpack.c.l.b16 %v1513
  %v1525 = vunpack.c.h.b16 %v1513
  %v1526 = vpack.c.b16 %v1520, %v1518
  %v1527 = vpack.c.b16 %v1521, %v1519
  %v1528 = vpack.c.b16 %v1524, %v1522
  %v1529 = vpack.c.b16 %v1525, %v1523
  %v1535 = vsel %vm204, %v1504, 0
  %1537 = vmatprep.subr.bf16.mxu0 0
  %1538 = vmatpush1.bf16.msra.mxu0 0
  %1539 = vmatprep.subr.bf16.mxu0 0
  %1540 = vmatpush1.bf16.msra.mxu0 0
  %1541 = vmatprep.subr.bf16.mxu0 0
  %1542 = vmatpush1.bf16.msra.mxu0 0
  %1543 = vmatprep.subr.bf16.mxu0 0
  %1544 = vmatpush1.bf16.msra.mxu0 0
  %1545 = vmatprep.subr.bf16.mxu0 0
  %1546 = vmatpush1.bf16.msra.mxu0 0
  %1547 = vmatprep.subr.bf16.mxu0 0
  %1548 = vmatpush1.bf16.msra.mxu0 0
  %1549 = vmatprep.subr.bf16.mxu0 %v1529
  %1550 = vmatpush1.bf16.msra.mxu0 %v1528
  %1551 = vmatprep.subr.bf16.mxu0 %v1527
  %1552 = vmatpush1.bf16.msra.mxu0 %v1526
  %1553 = vmatprep.subr.bf16.mxu0 0
  %1554 = vmatpush2.bf16.msra.mxu0 0
  %1555 = vmatprep.subr.bf16.mxu0 0
  %1556 = vmatpush2.bf16.msra.mxu0 0
  %1557 = vmatprep.subr.bf16.mxu0 0
  %1558 = vmatpush2.bf16.msra.mxu0 0
  %1559 = vmatprep.subr.bf16.mxu0 0
  %1560 = vmatpush2.bf16.msra.mxu0 0
  %1561 = vmatprep.subr.bf16.mxu0 0
  %1562 = vmatpush2.bf16.msra.mxu0 0
  %1563 = vmatprep.subr.bf16.mxu0 0
  %1564 = vmatpush2.bf16.msra.mxu0 0
  %1565 = vmatprep.subr.bf16.mxu0 0
  %1566 = vmatpush2.bf16.msra.mxu0 0
  %1567 = vmatprep.subr.bf16.mxu0 0
  %1568 = vmatpush2.bf16.msra.mxu0 0
  %1569 = vmatprep.mubr.bf16.mxu0 0
  %1570 = vmatmul.mubr.bf16.gmra.mxu0 %v1535
  %v1571 = vpop.f32.mrf.mxu0
  %v1572 = vadd.f32 0.0, %v1571
  %v1573 = vpop.f32.mrf.mxu0
  %v1574 = vadd.f32 0.0, %v1573
  %v1575 = vpop.f32.mrf.mxu0
  %v1576 = vpop.f32.mrf.mxu0
  %1577 = vdwg.mxu0
  %v1582 = vunpack.c.l.b16 %v1505
  %v1583 = vunpack.c.h.b16 %v1505
  %v1584 = vunpack.c.l.b16 %v1506
  %v1585 = vunpack.c.h.b16 %v1506
  %v1586 = vunpack.c.l.b16 %v1507
  %v1587 = vunpack.c.h.b16 %v1507
  %v1588 = vunpack.c.l.b16 %v1508
  %v1589 = vunpack.c.h.b16 %v1508
  %v1590 = vpack.c.b16 %v1584, %v1582
  %v1591 = vpack.c.b16 %v1585, %v1583
  %v1592 = vpack.c.b16 %v1588, %v1586
  %v1593 = vpack.c.b16 %v1589, %v1587
  %v1599 = vsel %vm204, %v1503, 0
  %1601 = vmatprep.subr.bf16.mxu0 0
  %1602 = vmatpush1.bf16.msra.mxu0 0
  %1603 = vmatprep.subr.bf16.mxu0 0
  %1604 = vmatpush1.bf16.msra.mxu0 0
  %1605 = vmatprep.subr.bf16.mxu0 0
  %1606 = vmatpush1.bf16.msra.mxu0 0
  %1607 = vmatprep.subr.bf16.mxu0 0
  %1608 = vmatpush1.bf16.msra.mxu0 0
  %1609 = vmatprep.subr.bf16.mxu0 0
  %1610 = vmatpush1.bf16.msra.mxu0 0
  %1611 = vmatprep.subr.bf16.mxu0 0
  %1612 = vmatpush1.bf16.msra.mxu0 0
  %1613 = vmatprep.subr.bf16.mxu0 %v1593
  %1614 = vmatpush1.bf16.msra.mxu0 %v1592
  %1615 = vmatprep.subr.bf16.mxu0 %v1591
  %1616 = vmatpush1.bf16.msra.mxu0 %v1590
  %1617 = vmatprep.subr.bf16.mxu0 0
  %1618 = vmatpush2.bf16.msra.mxu0 0
  %1619 = vmatprep.subr.bf16.mxu0 0
  %1620 = vmatpush2.bf16.msra.mxu0 0
  %1621 = vmatprep.subr.bf16.mxu0 0
  %1622 = vmatpush2.bf16.msra.mxu0 0
  %1623 = vmatprep.subr.bf16.mxu0 0
  %1624 = vmatpush2.bf16.msra.mxu0 0
  %1625 = vmatprep.subr.bf16.mxu0 0
  %1626 = vmatpush2.bf16.msra.mxu0 0
  %1627 = vmatprep.subr.bf16.mxu0 0
  %1628 = vmatpush2.bf16.msra.mxu0 0
  %1629 = vmatprep.subr.bf16.mxu0 0
  %1630 = vmatpush2.bf16.msra.mxu0 0
  %1631 = vmatprep.subr.bf16.mxu0 0
  %1632 = vmatpush2.bf16.msra.mxu0 0
  %1633 = vmatprep.mubr.bf16.mxu0 0
  %1634 = vmatmul.mubr.bf16.gmra.mxu0 %v1599
  %v1635 = vpop.f32.mrf.mxu0
  %v1636 = vadd.f32 %v1572, %v1635
  %v1637 = vpop.f32.mrf.mxu0
  %v1638 = vadd.f32 %v1574, %v1637
  %v1639 = vpop.f32.mrf.mxu0
  %v1640 = vpop.f32.mrf.mxu0
  %1641 = vdwg.mxu0
  %1643 = vrot.lane.b32.xlu0 %v1636, 64
  %v1644 = vpop.permute.xlu0 %1643
  %v1645 = vsel %vm204, %v1636, 0
  %v1647 = vsel %vm204, %v1644, 0
  %1649 = vmatprep.subr.mxu0 0.0
  %1650 = vmatpush1.xpose.msra.mxu0 0.0
  %1651 = vmatprep.subr.mxu0 0.0
  %1652 = vmatpush1.xpose.msra.mxu0 0.0
  %1653 = vmatprep.subr.mxu0 0.0
  %1654 = vmatpush1.xpose.msra.mxu0 0.0
  %1655 = vmatprep.subr.mxu0 0.0
  %1656 = vmatpush1.xpose.msra.mxu0 0.0
  %1657 = vmatprep.subr.mxu0 0.0
  %1658 = vmatpush1.xpose.msra.mxu0 0.0
  %1659 = vmatprep.subr.mxu0 0.0
  %1660 = vmatpush1.xpose.msra.mxu0 0.0
  %1661 = vmatprep.subr.mxu0 0.0
  %1662 = vmatpush1.xpose.msra.mxu0 0.0
  %1663 = vmatprep.subr.mxu0 0.0
  %1664 = vmatpush1.xpose.msra.mxu0 0.0
  %1665 = vmatprep.subr.mxu0 0.0
  %1666 = vmatpush1.xpose.msra.mxu0 0.0
  %1667 = vmatprep.subr.mxu0 0.0
  %1668 = vmatpush1.xpose.msra.mxu0 0.0
  %1669 = vmatprep.subr.mxu0 0.0
  %1670 = vmatpush1.xpose.msra.mxu0 0.0
  %1671 = vmatprep.subr.mxu0 0.0
  %1672 = vmatpush1.xpose.msra.mxu0 0.0
  %1673 = vmatprep.subr.mxu0 0.0
  %1674 = vmatpush1.xpose.msra.mxu0 0.0
  %1675 = vmatprep.subr.mxu0 0.0
  %1676 = vmatpush1.xpose.msra.mxu0 0.0
  %1677 = vmatprep.subr.mxu0 0.0
  %1678 = vmatpush1.xpose.msra.mxu0 0.0
  %1679 = vmatprep.subr.mxu0 0.0
  %1680 = vmatpush1.xpose.msra.mxu0 %v1647
  %1681 = vmatprep.subr.mxu0 0.0
  %1682 = vmatpush2.xpose.msra.mxu0 0.0
  %1683 = vmatprep.subr.mxu0 0.0
  %1684 = vmatpush2.xpose.msra.mxu0 0.0
  %1685 = vmatprep.subr.mxu0 0.0
  %1686 = vmatpush2.xpose.msra.mxu0 0.0
  %1687 = vmatprep.subr.mxu0 0.0
  %1688 = vmatpush2.xpose.msra.mxu0 0.0
  %1689 = vmatprep.subr.mxu0 0.0
  %1690 = vmatpush2.xpose.msra.mxu0 0.0
  %1691 = vmatprep.subr.mxu0 0.0
  %1692 = vmatpush2.xpose.msra.mxu0 0.0
  %1693 = vmatprep.subr.mxu0 0.0
  %1694 = vmatpush2.xpose.msra.mxu0 0.0
  %1695 = vmatprep.subr.mxu0 0.0
  %1696 = vmatpush2.xpose.msra.mxu0 0.0
  %1697 = vmatprep.subr.mxu0 0.0
  %1698 = vmatpush2.xpose.msra.mxu0 0.0
  %1699 = vmatprep.subr.mxu0 0.0
  %1700 = vmatpush2.xpose.msra.mxu0 0.0
  %1701 = vmatprep.subr.mxu0 0.0
  %1702 = vmatpush2.xpose.msra.mxu0 0.0
  %1703 = vmatprep.subr.mxu0 0.0
  %1704 = vmatpush2.xpose.msra.mxu0 0.0
  %1705 = vmatprep.subr.mxu0 0.0
  %1706 = vmatpush2.xpose.msra.mxu0 0.0
  %1707 = vmatprep.subr.mxu0 0.0
  %1708 = vmatpush2.xpose.msra.mxu0 0.0
  %1709 = vmatprep.subr.mxu0 0.0
  %1710 = vmatpush2.xpose.msra.mxu0 0.0
  %1711 = vmatprep.subr.mxu0 0.0
  %1712 = vmatpush2.xpose.msra.mxu0 0.0
  %1713 = vmatprep.mubr.f32.mxu0 0.0
  %1714 = vmatmul.mubr.f32.gmra.mxu0 %v1645
  %v1715 = vpop.f32.mrf.mxu0
  %v1716 = vadd.f32 0.0, %v1715
  %v1717 = vpop.f32.mrf.mxu0
  %1718 = vdwg.mxu0
  %v1719 = vmul.f32 %v1716, 0.17677669
  %v1720 = vadd.f32 %v1719, %v1500
  %vm1721 = vcmask 64512
  %v1722 = vsel %vm1721, %v1720, -inf
  %1723 = vmax.xlane.f32.xlu0 %v1722
  %v1724 = vpop.xlane.xlu0 %1723
  %v1725 = vsub.f32 %v1720, %v1724
  %v1726 = vmul.f32 %v1725, 1.442695
  %v1727 = vpow.pop %v1726
  %v1728 = vsel %vm1721, %v1727, 0.0
  %1729 = vadd.xlane.f32.xlu0 %v1728
  %v1730 = vpop.xlane.xlu0 %1729
  %v1731 = vrcp.pop %v1730
  %v1732 = vmul.f32 %v1727, %v1731
  %v1734 = vsel %vm1721, %v1732, 0
  %1736 = vmatprep.subr.mxu0 0.0
  %1737 = vmatpush1.msra.mxu0 0.0
  %1738 = vmatprep.subr.mxu0 0.0
  %1739 = vmatpush1.msra.mxu0 0.0
  %1740 = vmatprep.subr.mxu0 0.0
  %1741 = vmatpush1.msra.mxu0 0.0
  %1742 = vmatprep.subr.mxu0 0.0
  %1743 = vmatpush1.msra.mxu0 0.0
  %1744 = vmatprep.subr.mxu0 0.0
  %1745 = vmatpush1.msra.mxu0 0.0
  %1746 = vmatprep.subr.mxu0 0.0
  %1747 = vmatpush1.msra.mxu0 0.0
  %1748 = vmatprep.subr.mxu0 0.0
  %1749 = vmatpush1.msra.mxu0 0.0
  %1750 = vmatprep.subr.mxu0 0.0
  %1751 = vmatpush1.msra.mxu0 0.0
  %1752 = vmatprep.subr.mxu0 0.0
  %1753 = vmatpush1.msra.mxu0 0.0
  %1754 = vmatprep.subr.mxu0 0.0
  %1755 = vmatpush1.msra.mxu0 0.0
  %1756 = vmatprep.subr.mxu0 0.0
  %1757 = vmatpush1.msra.mxu0 0.0
  %1758 = vmatprep.subr.mxu0 0.0
  %1759 = vmatpush1.msra.mxu0 0.0
  %1760 = vmatprep.subr.mxu0 0.0
  %1761 = vmatpush1.msra.mxu0 0.0
  %1762 = vmatprep.subr.mxu0 0.0
  %1763 = vmatpush1.msra.mxu0 0.0
  %1764 = vmatprep.subr.mxu0 0.0
  %1765 = vmatpush1.msra.mxu0 0.0
  %1766 = vmatprep.subr.mxu0 0.0
  %1767 = vmatpush1.msra.mxu0 %v1638
  %1768 = vmatprep.subr.mxu0 0.0
  %1769 = vmatpush2.msra.mxu0 0.0
  %1770 = vmatprep.subr.mxu0 0.0
  %1771 = vmatpush2.msra.mxu0 0.0
  %1772 = vmatprep.subr.mxu0 0.0
  %1773 = vmatpush2.msra.mxu0 0.0
  %1774 = vmatprep.subr.mxu0 0.0
  %1775 = vmatpush2.msra.mxu0 0.0
  %1776 = vmatprep.subr.mxu0 0.0
  %1777 = vmatpush2.msra.mxu0 0.0
  %1778 = vmatprep.subr.mxu0 0.0
  %1779 = vmatpush2.msra.mxu0 0.0
  %1780 = vmatprep.subr.mxu0 0.0
  %1781 = vmatpush2.msra.mxu0 0.0
  %1782 = vmatprep.subr.mxu0 0.0
  %1783 = vmatpush2.msra.mxu0 0.0
  %1784 = vmatprep.subr.mxu0 0.0
  %1785 = vmatpush2.msra.mxu0 0.0
  %1786 = vmatprep.subr.mxu0 0.0
  %1787 = vmatpush2.msra.mxu0 0.0
  %1788 = vmatprep.subr.mxu0 0.0
  %1789 = vmatpush2.msra.mxu0 0.0
  %1790 = vmatprep.subr.mxu0 0.0
  %1791 = vmatpush2.msra.mxu0 0.0
  %1792 = vmatprep.subr.mxu0 0.0
  %1793 = vmatpush2.msra.mxu0 0.0
  %1794 = vmatprep.subr.mxu0 0.0
  %1795 = vmatpush2.msra.mxu0 0.0
  %1796 = vmatprep.subr.mxu0 0.0
  %1797 = vmatpush2.msra.mxu0 0.0
  %1798 = vmatprep.subr.mxu0 0.0
  %1799 = vmatpush2.msra.mxu0 0.0
  %1800 = vmatprep.mubr.f32.mxu0 0.0
  %1801 = vmatmul.mubr.f32.gmra.mxu0 %v1734
  %v1802 = vpop.f32.mrf.mxu0
  %v1803 = vadd.f32 0.0, %v1802
  %v1804 = vpop.f32.mrf.mxu0
  %1805 = vdwg.mxu0
  %1806 = vrot.lane.b32.xlu0 %v1636, 96
  %v1807 = vpop.permute.xlu0 %1806
  %1808 = vrot.lane.b32.xlu0 %v1636, 32
  %v1809 = vpop.permute.xlu0 %1808
  %v1810 = vsel %vm204, %v1807, 0
  %v1812 = vsel %vm204, %v1809, 0
  %1814 = vmatprep.subr.mxu0 0.0
  %1815 = vmatpush1.xpose.msra.mxu0 0.0
  %1816 = vmatprep.subr.mxu0 0.0
  %1817 = vmatpush1.xpose.msra.mxu0 0.0
  %1818 = vmatprep.subr.mxu0 0.0
  %1819 = vmatpush1.xpose.msra.mxu0 0.0
  %1820 = vmatprep.subr.mxu0 0.0
  %1821 = vmatpush1.xpose.msra.mxu0 0.0
  %1822 = vmatprep.subr.mxu0 0.0
  %1823 = vmatpush1.xpose.msra.mxu0 0.0
  %1824 = vmatprep.subr.mxu0 0.0
  %1825 = vmatpush1.xpose.msra.mxu0 0.0
  %1826 = vmatprep.subr.mxu0 0.0
  %1827 = vmatpush1.xpose.msra.mxu0 0.0
  %1828 = vmatprep.subr.mxu0 0.0
  %1829 = vmatpush1.xpose.msra.mxu0 0.0
  %1830 = vmatprep.subr.mxu0 0.0
  %1831 = vmatpush1.xpose.msra.mxu0 0.0
  %1832 = vmatprep.subr.mxu0 0.0
  %1833 = vmatpush1.xpose.msra.mxu0 0.0
  %1834 = vmatprep.subr.mxu0 0.0
  %1835 = vmatpush1.xpose.msra.mxu0 0.0
  %1836 = vmatprep.subr.mxu0 0.0
  %1837 = vmatpush1.xpose.msra.mxu0 0.0
  %1838 = vmatprep.subr.mxu0 0.0
  %1839 = vmatpush1.xpose.msra.mxu0 0.0
  %1840 = vmatprep.subr.mxu0 0.0
  %1841 = vmatpush1.xpose.msra.mxu0 0.0
  %1842 = vmatprep.subr.mxu0 0.0
  %1843 = vmatpush1.xpose.msra.mxu0 0.0
  %1844 = vmatprep.subr.mxu0 0.0
  %1845 = vmatpush1.xpose.msra.mxu0 %v1812
  %1846 = vmatprep.subr.mxu0 0.0
  %1847 = vmatpush2.xpose.msra.mxu0 0.0
  %1848 = vmatprep.subr.mxu0 0.0
  %1849 = vmatpush2.xpose.msra.mxu0 0.0
  %1850 = vmatprep.subr.mxu0 0.0
  %1851 = vmatpush2.xpose.msra.mxu0 0.0
  %1852 = vmatprep.subr.mxu0 0.0
  %1853 = vmatpush2.xpose.msra.mxu0 0.0
  %1854 = vmatprep.subr.mxu0 0.0
  %1855 = vmatpush2.xpose.msra.mxu0 0.0
  %1856 = vmatprep.subr.mxu0 0.0
  %1857 = vmatpush2.xpose.msra.mxu0 0.0
  %1858 = vmatprep.subr.mxu0 0.0
  %1859 = vmatpush2.xpose.msra.mxu0 0.0
  %1860 = vmatprep.subr.mxu0 0.0
  %1861 = vmatpush2.xpose.msra.mxu0 0.0
  %1862 = vmatprep.subr.mxu0 0.0
  %1863 = vmatpush2.xpose.msra.mxu0 0.0
  %1864 = vmatprep.subr.mxu0 0.0
  %1865 = vmatpush2.xpose.msra.mxu0 0.0
  %1866 = vmatprep.subr.mxu0 0.0
  %1867 = vmatpush2.xpose.msra.mxu0 0.0
  %1868 = vmatprep.subr.mxu0 0.0
  %1869 = vmatpush2.xpose.msra.mxu0 0.0
  %1870 = vmatprep.subr.mxu0 0.0
  %1871 = vmatpush2.xpose.msra.mxu0 0.0
  %1872 = vmatprep.subr.mxu0 0.0
  %1873 = vmatpush2.xpose.msra.mxu0 0.0
  %1874 = vmatprep.subr.mxu0 0.0
  %1875 = vmatpush2.xpose.msra.mxu0 0.0
  %1876 = vmatprep.subr.mxu0 0.0
  %1877 = vmatpush2.xpose.msra.mxu0 0.0
  %1878 = vmatprep.mubr.f32.mxu0 0.0
  %1879 = vmatmul.mubr.f32.gmra.mxu0 %v1810
  %v1880 = vpop.f32.mrf.mxu0
  %v1881 = vadd.f32 0.0, %v1880
  %v1882 = vpop.f32.mrf.mxu0
  %1883 = vdwg.mxu0
  %v1884 = vmul.f32 %v1881, 0.17677669
  %v1885 = vadd.f32 %v1884, %v1500
  %v1886 = vsel %vm1721, %v1885, -inf
  %1887 = vmax.xlane.f32.xlu0 %v1886
  %v1888 = vpop.xlane.xlu0 %1887
  %v1889 = vsub.f32 %v1885, %v1888
  %v1890 = vmul.f32 %v1889, 1.442695
  %v1891 = vpow.pop %v1890
  %v1892 = vsel %vm1721, %v1891, 0.0
  %1893 = vadd.xlane.f32.xlu0 %v1892
  %v1894 = vpop.xlane.xlu0 %1893
  %v1895 = vrcp.pop %v1894
  %v1896 = vmul.f32 %v1891, %v1895
  %1898 = vrot.lane.b32.xlu0 %v1638, 96
  %v1899 = vpop.permute.xlu0 %1898
  %v1902 = vsel %vm1721, %v1896, 0
  %1904 = vmatprep.subr.mxu0 0.0
  %1905 = vmatpush1.msra.mxu0 0.0
  %1906 = vmatprep.subr.mxu0 0.0
  %1907 = vmatpush1.msra.mxu0 0.0
  %1908 = vmatprep.subr.mxu0 0.0
  %1909 = vmatpush1.msra.mxu0 0.0
  %1910 = vmatprep.subr.mxu0 0.0
  %1911 = vmatpush1.msra.mxu0 0.0
  %1912 = vmatprep.subr.mxu0 0.0
  %1913 = vmatpush1.msra.mxu0 0.0
  %1914 = vmatprep.subr.mxu0 0.0
  %1915 = vmatpush1.msra.mxu0 0.0
  %1916 = vmatprep.subr.mxu0 0.0
  %1917 = vmatpush1.msra.mxu0 0.0
  %1918 = vmatprep.subr.mxu0 0.0
  %1919 = vmatpush1.msra.mxu0 0.0
  %1920 = vmatprep.subr.mxu0 0.0
  %1921 = vmatpush1.msra.mxu0 0.0
  %1922 = vmatprep.subr.mxu0 0.0
  %1923 = vmatpush1.msra.mxu0 0.0
  %1924 = vmatprep.subr.mxu0 0.0
  %1925 = vmatpush1.msra.mxu0 0.0
  %1926 = vmatprep.subr.mxu0 0.0
  %1927 = vmatpush1.msra.mxu0 0.0
  %1928 = vmatprep.subr.mxu0 0.0
  %1929 = vmatpush1.msra.mxu0 0.0
  %1930 = vmatprep.subr.mxu0 0.0
  %1931 = vmatpush1.msra.mxu0 0.0
  %1932 = vmatprep.subr.mxu0 0.0
  %1933 = vmatpush1.msra.mxu0 0.0
  %1934 = vmatprep.subr.mxu0 0.0
  %1935 = vmatpush1.msra.mxu0 %v1899
  %1936 = vmatprep.subr.mxu0 0.0
  %1937 = vmatpush2.msra.mxu0 0.0
  %1938 = vmatprep.subr.mxu0 0.0
  %1939 = vmatpush2.msra.mxu0 0.0
  %1940 = vmatprep.subr.mxu0 0.0
  %1941 = vmatpush2.msra.mxu0 0.0
  %1942 = vmatprep.subr.mxu0 0.0
  %1943 = vmatpush2.msra.mxu0 0.0
  %1944 = vmatprep.subr.mxu0 0.0
  %1945 = vmatpush2.msra.mxu0 0.0
  %1946 = vmatprep.subr.mxu0 0.0
  %1947 = vmatpush2.msra.mxu0 0.0
  %1948 = vmatprep.subr.mxu0 0.0
  %1949 = vmatpush2.msra.mxu0 0.0
  %1950 = vmatprep.subr.mxu0 0.0
  %1951 = vmatpush2.msra.mxu0 0.0
  %1952 = vmatprep.subr.mxu0 0.0
  %1953 = vmatpush2.msra.mxu0 0.0
  %1954 = vmatprep.subr.mxu0 0.0
  %1955 = vmatpush2.msra.mxu0 0.0
  %1956 = vmatprep.subr.mxu0 0.0
  %1957 = vmatpush2.msra.mxu0 0.0
  %1958 = vmatprep.subr.mxu0 0.0
  %1959 = vmatpush2.msra.mxu0 0.0
  %1960 = vmatprep.subr.mxu0 0.0
  %1961 = vmatpush2.msra.mxu0 0.0
  %1962 = vmatprep.subr.mxu0 0.0
  %1963 = vmatpush2.msra.mxu0 0.0
  %1964 = vmatprep.subr.mxu0 0.0
  %1965 = vmatpush2.msra.mxu0 0.0
  %1966 = vmatprep.subr.mxu0 0.0
  %1967 = vmatpush2.msra.mxu0 0.0
  %1968 = vmatprep.mubr.f32.mxu0 0.0
  %1969 = vmatmul.mubr.f32.gmra.mxu0 %v1902
  %v1970 = vpop.f32.mrf.mxu0
  %v1971 = vadd.f32 0.0, %v1970
  %v1972 = vpop.f32.mrf.mxu0
  %1973 = vdwg.mxu0
  %1975 = vrot.lane.b32.xlu0 %v1971, 32
  %v1976 = vpop.permute.xlu0 %1975
  %v1978 = vsel %vm204, %v1803, %v1976
  %v1979 = vadd.f32 %v1489, %v1490
  %v1980 = vpack.c.bf16 %v1978, %v1978
  %v1981 = vld [vmem:[%s53] sm:$0xf]
  %v1982 = vld [vmem:[%s53 + $0x4] sm:$0xf]
  %v1983 = vld [vmem:[%s53 + $0x8] sm:$0xf]
  %v1984 = vld [vmem:[%s53 + $0xc] sm:$0xf]
  %v1985 = vld [vmem:[%s53 + $0x10] sm:$0xf]
  %v1986 = vld [vmem:[%s53 + $0x14] sm:$0xf]
  %v1987 = vld [vmem:[%s53 + $0x18] sm:$0xf]
  %v1988 = vld [vmem:[%s53 + $0x1c] sm:$0xf]
  %v1997 = vunpack.c.l.b16 %v1981
  %v1998 = vunpack.c.l.b16 %v1982
  %v1999 = vunpack.c.l.b16 %v1983
  %v2000 = vunpack.c.l.b16 %v1984
  %v2001 = vunpack.c.l.b16 %v1985
  %v2002 = vunpack.c.l.b16 %v1986
  %v2003 = vunpack.c.l.b16 %v1987
  %v2004 = vunpack.c.l.b16 %v1988
  %v2005 = vpack.c.b16 %v1998, %v1997
  %v2006 = vpack.c.b16 %v2000, %v1999
  %v2007 = vpack.c.b16 %v2002, %v2001
  %v2008 = vpack.c.b16 %v2004, %v2003
  %v2014 = vsel %vm689, %v1980, 0
  %2016 = vmatprep.subr.bf16.mxu0 0
  %2017 = vmatpush1.bf16.msra.mxu0 0
  %2018 = vmatprep.subr.bf16.mxu0 0
  %2019 = vmatpush1.bf16.msra.mxu0 0
  %2020 = vmatprep.subr.bf16.mxu0 0
  %2021 = vmatpush1.bf16.msra.mxu0 0
  %2022 = vmatprep.subr.bf16.mxu0 0
  %2023 = vmatpush1.bf16.msra.mxu0 0
  %2024 = vmatprep.subr.bf16.mxu0 0
  %2025 = vmatpush1.bf16.msra.mxu0 %v2008
  %2026 = vmatprep.subr.bf16.mxu0 0
  %2027 = vmatpush1.bf16.msra.mxu0 %v2007
  %2028 = vmatprep.subr.bf16.mxu0 0
  %2029 = vmatpush1.bf16.msra.mxu0 %v2006
  %2030 = vmatprep.subr.bf16.mxu0 0
  %2031 = vmatpush1.bf16.msra.mxu0 %v2005
  %2032 = vmatprep.subr.bf16.mxu0 0
  %2033 = vmatpush2.bf16.msra.mxu0 0
  %2034 = vmatprep.subr.bf16.mxu0 0
  %2035 = vmatpush2.bf16.msra.mxu0 0
  %2036 = vmatprep.subr.bf16.mxu0 0
  %2037 = vmatpush2.bf16.msra.mxu0 0
  %2038 = vmatprep.subr.bf16.mxu0 0
  %2039 = vmatpush2.bf16.msra.mxu0 0
  %2040 = vmatprep.subr.bf16.mxu0 0
  %2041 = vmatpush2.bf16.msra.mxu0 0
  %2042 = vmatprep.subr.bf16.mxu0 0
  %2043 = vmatpush2.bf16.msra.mxu0 0
  %2044 = vmatprep.subr.bf16.mxu0 0
  %2045 = vmatpush2.bf16.msra.mxu0 0
  %2046 = vmatprep.subr.bf16.mxu0 0
  %2047 = vmatpush2.bf16.msra.mxu0 0
  %2048 = vmatprep.mubr.bf16.mxu0 0
  %2049 = vmatmul.mubr.bf16.gmra.mxu0 %v2014
  %v2050 = vpop.f32.mrf.mxu0
  %v2051 = vadd.f32 0.0, %v2050
  %v2052 = vpop.f32.mrf.mxu0
  %v2053 = vpop.f32.mrf.mxu0
  %v2054 = vpop.f32.mrf.mxu0
  %2055 = vdwg.mxu0
  %v2056 = vadd.f32 %v1979, %v2051
  %v2057 = vsel %vm204, %v2056, 0.0
  %2058 = vadd.xlane.f32.xlu0 %v2057
  %v2059 = vpop.xlane.xlu0 %2058
  %v2060 = vmul.f32 %v2059, %v738
  %v2061 = vsub.f32 %v2056, %v2060
  %v2062 = vmul.f32 %v2061, %v2061
  %v2063 = vsel %vm204, %v2062, 0.0
  %2064 = vadd.xlane.f32.xlu0 %v2063
  %v2065 = vpop.xlane.xlu0 %2064
  %v2066 = vmul.f32 %v2065, %v738
  %v2067 = vadd.f32 %v2066, 1e-06
  %v2068 = vrsqrt.pop %v2067
  %v2069 = vmul.f32 %v2061, %v2068
  %v2070 = vlaneseq
  %v2071 = vshrl.u32 %v2070, 7
  %v2072 = vsub.s32 0, %v2071
  %v2073 = vrot.slane %v1501, %v2072
  %v2074 = vmul.f32 %v2069, %v2073
  %v2075 = vlaneseq
  %v2076 = vshrl.u32 %v2075, 7
  %v2077 = vsub.s32 1, %v2076
  %v2078 = vrot.slane %v1501, %v2077
  %v2079 = vadd.f32 %v2074, %v2078
  %v2080 = vpack.c.bf16 %v2079, %v2079
  %v2081 = vpack.c.bf16 %v1491, %v1491
  %v2082 = vld [vmem:[%s55] sm:$0xf]
  %v2083 = vld [vmem:[%s55 + $0x4] sm:$0xf]
  %v2084 = vld [vmem:[%s55 + $0x8] sm:$0xf]
  %v2085 = vld [vmem:[%s55 + $0xc] sm:$0xf]
  %v2090 = vunpack.c.l.b16 %v2082
  %v2091 = vunpack.c.l.b16 %v2083
  %v2092 = vunpack.c.l.b16 %v2084
  %v2093 = vunpack.c.l.b16 %v2085
  %v2094 = vpack.c.b16 %v2091, %v2090
  %v2095 = vpack.c.b16 %v2093, %v2092
  %v2099 = vsel %vm204, %v2080, 0
  %2101 = vmatprep.subr.bf16.mxu0 0
  %2102 = vmatpush1.bf16.msra.mxu0 0
  %2103 = vmatprep.subr.bf16.mxu0 0
  %2104 = vmatpush1.bf16.msra.mxu0 0
  %2105 = vmatprep.subr.bf16.mxu0 0
  %2106 = vmatpush1.bf16.msra.mxu0 0
  %2107 = vmatprep.subr.bf16.mxu0 0
  %2108 = vmatpush1.bf16.msra.mxu0 0
  %2109 = vmatprep.subr.bf16.mxu0 0
  %2110 = vmatpush1.bf16.msra.mxu0 0
  %2111 = vmatprep.subr.bf16.mxu0 0
  %2112 = vmatpush1.bf16.msra.mxu0 0
  %2113 = vmatprep.subr.bf16.mxu0 0
  %2114 = vmatpush1.bf16.msra.mxu0 %v2095
  %2115 = vmatprep.subr.bf16.mxu0 0
  %2116 = vmatpush1.bf16.msra.mxu0 %v2094
  %2117 = vmatprep.subr.bf16.mxu0 0
  %2118 = vmatpush2.bf16.msra.mxu0 0
  %2119 = vmatprep.subr.bf16.mxu0 0
  %2120 = vmatpush2.bf16.msra.mxu0 0
  %2121 = vmatprep.subr.bf16.mxu0 0
  %2122 = vmatpush2.bf16.msra.mxu0 0
  %2123 = vmatprep.subr.bf16.mxu0 0
  %2124 = vmatpush2.bf16.msra.mxu0 0
  %2125 = vmatprep.subr.bf16.mxu0 0
  %2126 = vmatpush2.bf16.msra.mxu0 0
  %2127 = vmatprep.subr.bf16.mxu0 0
  %2128 = vmatpush2.bf16.msra.mxu0 0
  %2129 = vmatprep.subr.bf16.mxu0 0
  %2130 = vmatpush2.bf16.msra.mxu0 0
  %2131 = vmatprep.subr.bf16.mxu0 0
  %2132 = vmatpush2.bf16.msra.mxu0 0
  %2133 = vmatprep.mubr.bf16.mxu0 0
  %2134 = vmatmul.mubr.bf16.gmra.mxu0 %v2099
  %v2135 = vpop.f32.mrf.mxu0
  %v2136 = vadd.f32 0.0, %v2135
  %v2137 = vpop.f32.mrf.mxu0
  %v2138 = vpop.f32.mrf.mxu0
  %v2139 = vpop.f32.mrf.mxu0
  %2140 = vdwg.mxu0
  %v2141 = vld [vmem:[%s57] sm:$0xf]
  %v2142 = vld [vmem:[%s57 + $0x4] sm:$0xf]
  %v2143 = vld [vmem:[%s57 + $0x8] sm:$0xf]
  %v2144 = vld [vmem:[%s57 + $0xc] sm:$0xf]
  %v2149 = vunpack.c.l.b16 %v2141
  %v2150 = vunpack.c.l.b16 %v2142
  %v2151 = vunpack.c.l.b16 %v2143
  %v2152 = vunpack.c.l.b16 %v2144
  %v2153 = vpack.c.b16 %v2150, %v2149
  %v2154 = vpack.c.b16 %v2152, %v2151
  %v2158 = vsel %vm204, %v2081, 0
  %2160 = vmatprep.subr.bf16.mxu0 0
  %2161 = vmatpush1.bf16.msra.mxu0 0
  %2162 = vmatprep.subr.bf16.mxu0 0
  %2163 = vmatpush1.bf16.msra.mxu0 0
  %2164 = vmatprep.subr.bf16.mxu0 0
  %2165 = vmatpush1.bf16.msra.mxu0 0
  %2166 = vmatprep.subr.bf16.mxu0 0
  %2167 = vmatpush1.bf16.msra.mxu0 0
  %2168 = vmatprep.subr.bf16.mxu0 0
  %2169 = vmatpush1.bf16.msra.mxu0 0
  %2170 = vmatprep.subr.bf16.mxu0 0
  %2171 = vmatpush1.bf16.msra.mxu0 0
  %2172 = vmatprep.subr.bf16.mxu0 0
  %2173 = vmatpush1.bf16.msra.mxu0 %v2154
  %2174 = vmatprep.subr.bf16.mxu0 0
  %2175 = vmatpush1.bf16.msra.mxu0 %v2153
  %2176 = vmatprep.subr.bf16.mxu0 0
  %2177 = vmatpush2.bf16.msra.mxu0 0
  %2178 = vmatprep.subr.bf16.mxu0 0
  %2179 = vmatpush2.bf16.msra.mxu0 0
  %2180 = vmatprep.subr.bf16.mxu0 0
  %2181 = vmatpush2.bf16.msra.mxu0 0
  %2182 = vmatprep.subr.bf16.mxu0 0
  %2183 = vmatpush2.bf16.msra.mxu0 0
  %2184 = vmatprep.subr.bf16.mxu0 0
  %2185 = vmatpush2.bf16.msra.mxu0 0
  %2186 = vmatprep.subr.bf16.mxu0 0
  %2187 = vmatpush2.bf16.msra.mxu0 0
  %2188 = vmatprep.subr.bf16.mxu0 0
  %2189 = vmatpush2.bf16.msra.mxu0 0
  %2190 = vmatprep.subr.bf16.mxu0 0
  %2191 = vmatpush2.bf16.msra.mxu0 0
  %2192 = vmatprep.mubr.bf16.mxu0 0
  %2193 = vmatmul.mubr.bf16.gmra.mxu0 %v2158
  %v2194 = vpop.f32.mrf.mxu0
  %v2195 = vadd.f32 0.0, %v2194
  %v2196 = vpop.f32.mrf.mxu0
  %v2197 = vpop.f32.mrf.mxu0
  %v2198 = vpop.f32.mrf.mxu0
  %2199 = vdwg.mxu0
  %v2201 = vsel %vm204, %v2136, 0
  %v2204 = vsel %vm204, %v2195, 0
  %2206 = vmatprep.subr.mxu0 0.0
  %2207 = vmatpush1.xpose.msra.mxu0 0.0
  %2208 = vmatprep.subr.mxu0 0.0
  %2209 = vmatpush1.xpose.msra.mxu0 0.0
  %2210 = vmatprep.subr.mxu0 0.0
  %2211 = vmatpush1.xpose.msra.mxu0 0.0
  %2212 = vmatprep.subr.mxu0 0.0
  %2213 = vmatpush1.xpose.msra.mxu0 0.0
  %2214 = vmatprep.subr.mxu0 0.0
  %2215 = vmatpush1.xpose.msra.mxu0 0.0
  %2216 = vmatprep.subr.mxu0 0.0
  %2217 = vmatpush1.xpose.msra.mxu0 0.0
  %2218 = vmatprep.subr.mxu0 0.0
  %2219 = vmatpush1.xpose.msra.mxu0 0.0
  %2220 = vmatprep.subr.mxu0 0.0
  %2221 = vmatpush1.xpose.msra.mxu0 0.0
  %2222 = vmatprep.subr.mxu0 0.0
  %2223 = vmatpush1.xpose.msra.mxu0 0.0
  %2224 = vmatprep.subr.mxu0 0.0
  %2225 = vmatpush1.xpose.msra.mxu0 0.0
  %2226 = vmatprep.subr.mxu0 0.0
  %2227 = vmatpush1.xpose.msra.mxu0 0.0
  %2228 = vmatprep.subr.mxu0 0.0
  %2229 = vmatpush1.xpose.msra.mxu0 0.0
  %2230 = vmatprep.subr.mxu0 0.0
  %2231 = vmatpush1.xpose.msra.mxu0 0.0
  %2232 = vmatprep.subr.mxu0 0.0
  %2233 = vmatpush1.xpose.msra.mxu0 0.0
  %2234 = vmatprep.subr.mxu0 0.0
  %2235 = vmatpush1.xpose.msra.mxu0 0.0
  %2236 = vmatprep.subr.mxu0 0.0
  %2237 = vmatpush1.xpose.msra.mxu0 %v2204
  %2238 = vmatprep.subr.mxu0 0.0
  %2239 = vmatpush2.xpose.msra.mxu0 0.0
  %2240 = vmatprep.subr.mxu0 0.0
  %2241 = vmatpush2.xpose.msra.mxu0 0.0
  %2242 = vmatprep.subr.mxu0 0.0
  %2243 = vmatpush2.xpose.msra.mxu0 0.0
  %2244 = vmatprep.subr.mxu0 0.0
  %2245 = vmatpush2.xpose.msra.mxu0 0.0
  %2246 = vmatprep.subr.mxu0 0.0
  %2247 = vmatpush2.xpose.msra.mxu0 0.0
  %2248 = vmatprep.subr.mxu0 0.0
  %2249 = vmatpush2.xpose.msra.mxu0 0.0
  %2250 = vmatprep.subr.mxu0 0.0
  %2251 = vmatpush2.xpose.msra.mxu0 0.0
  %2252 = vmatprep.subr.mxu0 0.0
  %2253 = vmatpush2.xpose.msra.mxu0 0.0
  %2254 = vmatprep.subr.mxu0 0.0
  %2255 = vmatpush2.xpose.msra.mxu0 0.0
  %2256 = vmatprep.subr.mxu0 0.0
  %2257 = vmatpush2.xpose.msra.mxu0 0.0
  %2258 = vmatprep.subr.mxu0 0.0
  %2259 = vmatpush2.xpose.msra.mxu0 0.0
  %2260 = vmatprep.subr.mxu0 0.0
  %2261 = vmatpush2.xpose.msra.mxu0 0.0
  %2262 = vmatprep.subr.mxu0 0.0
  %2263 = vmatpush2.xpose.msra.mxu0 0.0
  %2264 = vmatprep.subr.mxu0 0.0
  %2265 = vmatpush2.xpose.msra.mxu0 0.0
  %2266 = vmatprep.subr.mxu0 0.0
  %2267 = vmatpush2.xpose.msra.mxu0 0.0
  %2268 = vmatprep.subr.mxu0 0.0
  %2269 = vmatpush2.xpose.msra.mxu0 0.0
  %2270 = vmatprep.mubr.f32.mxu0 0.0
  %2271 = vmatmul.mubr.f32.gmra.mxu0 %v2201
  %v2272 = vpop.f32.mrf.mxu0
  %v2273 = vadd.f32 0.0, %v2272
  %v2274 = vpop.f32.mrf.mxu0
  %2275 = vdwg.mxu0
  %v2276 = vmul.f32 %v2273, 0.17677669
  %v2277 = vsel %vm404, %v2276, -inf
  %2278 = vmax.xlane.f32.xlu0 %v2277
  %v2279 = vpop.xlane.xlu0 %2278
  %v2280 = vsub.f32 %v2276, %v2279
  %v2281 = vmul.f32 %v2280, 1.442695
  %v2282 = vpow.pop %v2281
  %v2283 = vsel %vm404, %v2282, 0.0
  %2284 = vadd.xlane.f32.xlu0 %v2283
  %v2285 = vpop.xlane.xlu0 %2284
  %v2286 = vrcp.pop %v2285
  %v2287 = vmul.f32 %v2282, %v2286
  %2288 = vrot.lane.b32.xlu0 %v2195, 64
  %v2289 = vpop.permute.xlu0 %2288
  %v2291 = vsel %vm404, %v2287, 0
  %v2293 = vsel %vm408, %v2289, 0
  %2295 = vmatprep.subr.mxu0 0.0
  %2296 = vmatpush1.msra.mxu0 0.0
  %2297 = vmatprep.subr.mxu0 0.0
  %2298 = vmatpush1.msra.mxu0 0.0
  %2299 = vmatprep.subr.mxu0 0.0
  %2300 = vmatpush1.msra.mxu0 0.0
  %2301 = vmatprep.subr.mxu0 0.0
  %2302 = vmatpush1.msra.mxu0 0.0
  %2303 = vmatprep.subr.mxu0 0.0
  %2304 = vmatpush1.msra.mxu0 0.0
  %2305 = vmatprep.subr.mxu0 0.0
  %2306 = vmatpush1.msra.mxu0 0.0
  %2307 = vmatprep.subr.mxu0 0.0
  %2308 = vmatpush1.msra.mxu0 0.0
  %2309 = vmatprep.subr.mxu0 0.0
  %2310 = vmatpush1.msra.mxu0 0.0
  %2311 = vmatprep.subr.mxu0 0.0
  %2312 = vmatpush1.msra.mxu0 0.0
  %2313 = vmatprep.subr.mxu0 0.0
  %2314 = vmatpush1.msra.mxu0 0.0
  %2315 = vmatprep.subr.mxu0 0.0
  %2316 = vmatpush1.msra.mxu0 0.0
  %2317 = vmatprep.subr.mxu0 0.0
  %2318 = vmatpush1.msra.mxu0 0.0
  %2319 = vmatprep.subr.mxu0 0.0
  %2320 = vmatpush1.msra.mxu0 0.0
  %2321 = vmatprep.subr.mxu0 0.0
  %2322 = vmatpush1.msra.mxu0 0.0
  %2323 = vmatprep.subr.mxu0 0.0
  %2324 = vmatpush1.msra.mxu0 0.0
  %2325 = vmatprep.subr.mxu0 0.0
  %2326 = vmatpush1.msra.mxu0 %v2293
  %2327 = vmatprep.subr.mxu0 0.0
  %2328 = vmatpush2.msra.mxu0 0.0
  %2329 = vmatprep.subr.mxu0 0.0
  %2330 = vmatpush2.msra.mxu0 0.0
  %2331 = vmatprep.subr.mxu0 0.0
  %2332 = vmatpush2.msra.mxu0 0.0
  %2333 = vmatprep.subr.mxu0 0.0
  %2334 = vmatpush2.msra.mxu0 0.0
  %2335 = vmatprep.subr.mxu0 0.0
  %2336 = vmatpush2.msra.mxu0 0.0
  %2337 = vmatprep.subr.mxu0 0.0
  %2338 = vmatpush2.msra.mxu0 0.0
  %2339 = vmatprep.subr.mxu0 0.0
  %2340 = vmatpush2.msra.mxu0 0.0
  %2341 = vmatprep.subr.mxu0 0.0
  %2342 = vmatpush2.msra.mxu0 0.0
  %2343 = vmatprep.subr.mxu0 0.0
  %2344 = vmatpush2.msra.mxu0 0.0
  %2345 = vmatprep.subr.mxu0 0.0
  %2346 = vmatpush2.msra.mxu0 0.0
  %2347 = vmatprep.subr.mxu0 0.0
  %2348 = vmatpush2.msra.mxu0 0.0
  %2349 = vmatprep.subr.mxu0 0.0
  %2350 = vmatpush2.msra.mxu0 0.0
  %2351 = vmatprep.subr.mxu0 0.0
  %2352 = vmatpush2.msra.mxu0 0.0
  %2353 = vmatprep.subr.mxu0 0.0
  %2354 = vmatpush2.msra.mxu0 0.0
  %2355 = vmatprep.subr.mxu0 0.0
  %2356 = vmatpush2.msra.mxu0 0.0
  %2357 = vmatprep.subr.mxu0 0.0
  %2358 = vmatpush2.msra.mxu0 0.0
  %2359 = vmatprep.mubr.f32.mxu0 0.0
  %2360 = vmatmul.mubr.f32.gmra.mxu0 %v2291
  %v2361 = vpop.f32.mrf.mxu0
  %v2362 = vadd.f32 0.0, %v2361
  %v2363 = vpop.f32.mrf.mxu0
  %2364 = vdwg.mxu0
  %2365 = vrot.lane.b32.xlu0 %v2136, 96
  %v2366 = vpop.permute.xlu0 %2365
  %2367 = vrot.lane.b32.xlu0 %v2195, 96
  %v2368 = vpop.permute.xlu0 %2367
  %v2369 = vsel %vm204, %v2366, 0
  %v2371 = vsel %vm204, %v2368, 0
  %2373 = vmatprep.subr.mxu0 0.0
  %2374 = vmatpush1.xpose.msra.mxu0 0.0
  %2375 = vmatprep.subr.mxu0 0.0
  %2376 = vmatpush1.xpose.msra.mxu0 0.0
  %2377 = vmatprep.subr.mxu0 0.0
  %2378 = vmatpush1.xpose.msra.mxu0 0.0
  %2379 = vmatprep.subr.mxu0 0.0
  %2380 = vmatpush1.xpose.msra.mxu0 0.0
  %2381 = vmatprep.subr.mxu0 0.0
  %2382 = vmatpush1.xpose.msra.mxu0 0.0
  %2383 = vmatprep.subr.mxu0 0.0
  %2384 = vmatpush1.xpose.msra.mxu0 0.0
  %2385 = vmatprep.subr.mxu0 0.0
  %2386 = vmatpush1.xpose.msra.mxu0 0.0
  %2387 = vmatprep.subr.mxu0 0.0
  %2388 = vmatpush1.xpose.msra.mxu0 0.0
  %2389 = vmatprep.subr.mxu0 0.0
  %2390 = vmatpush1.xpose.msra.mxu0 0.0
  %2391 = vmatprep.subr.mxu0 0.0
  %2392 = vmatpush1.xpose.msra.mxu0 0.0
  %2393 = vmatprep.subr.mxu0 0.0
  %2394 = vmatpush1.xpose.msra.mxu0 0.0
  %2395 = vmatprep.subr.mxu0 0.0
  %2396 = vmatpush1.xpose.msra.mxu0 0.0
  %2397 = vmatprep.subr.mxu0 0.0
  %2398 = vmatpush1.xpose.msra.mxu0 0.0
  %2399 = vmatprep.subr.mxu0 0.0
  %2400 = vmatpush1.xpose.msra.mxu0 0.0
  %2401 = vmatprep.subr.mxu0 0.0
  %2402 = vmatpush1.xpose.msra.mxu0 0.0
  %2403 = vmatprep.subr.mxu0 0.0
  %2404 = vmatpush1.xpose.msra.mxu0 %v2371
  %2405 = vmatprep.subr.mxu0 0.0
  %2406 = vmatpush2.xpose.msra.mxu0 0.0
  %2407 = vmatprep.subr.mxu0 0.0
  %2408 = vmatpush2.xpose.msra.mxu0 0.0
  %2409 = vmatprep.subr.mxu0 0.0
  %2410 = vmatpush2.xpose.msra.mxu0 0.0
  %2411 = vmatprep.subr.mxu0 0.0
  %2412 = vmatpush2.xpose.msra.mxu0 0.0
  %2413 = vmatprep.subr.mxu0 0.0
  %2414 = vmatpush2.xpose.msra.mxu0 0.0
  %2415 = vmatprep.subr.mxu0 0.0
  %2416 = vmatpush2.xpose.msra.mxu0 0.0
  %2417 = vmatprep.subr.mxu0 0.0
  %2418 = vmatpush2.xpose.msra.mxu0 0.0
  %2419 = vmatprep.subr.mxu0 0.0
  %2420 = vmatpush2.xpose.msra.mxu0 0.0
  %2421 = vmatprep.subr.mxu0 0.0
  %2422 = vmatpush2.xpose.msra.mxu0 0.0
  %2423 = vmatprep.subr.mxu0 0.0
  %2424 = vmatpush2.xpose.msra.mxu0 0.0
  %2425 = vmatprep.subr.mxu0 0.0
  %2426 = vmatpush2.xpose.msra.mxu0 0.0
  %2427 = vmatprep.subr.mxu0 0.0
  %2428 = vmatpush2.xpose.msra.mxu0 0.0
  %2429 = vmatprep.subr.mxu0 0.0
  %2430 = vmatpush2.xpose.msra.mxu0 0.0
  %2431 = vmatprep.subr.mxu0 0.0
  %2432 = vmatpush2.xpose.msra.mxu0 0.0
  %2433 = vmatprep.subr.mxu0 0.0
  %2434 = vmatpush2.xpose.msra.mxu0 0.0
  %2435 = vmatprep.subr.mxu0 0.0
  %2436 = vmatpush2.xpose.msra.mxu0 0.0
  %2437 = vmatprep.mubr.f32.mxu0 0.0
  %2438 = vmatmul.mubr.f32.gmra.mxu0 %v2369
  %v2439 = vpop.f32.mrf.mxu0
  %v2440 = vadd.f32 0.0, %v2439
  %v2441 = vpop.f32.mrf.mxu0
  %2442 = vdwg.mxu0
  %v2443 = vmul.f32 %v2440, 0.17677669
  %v2444 = vsel %vm404, %v2443, -inf
  %2445 = vmax.xlane.f32.xlu0 %v2444
  %v2446 = vpop.xlane.xlu0 %2445
  %v2447 = vsub.f32 %v2443, %v2446
  %v2448 = vmul.f32 %v2447, 1.442695
  %v2449 = vpow.pop %v2448
  %v2450 = vsel %vm404, %v2449, 0.0
  %2451 = vadd.xlane.f32.xlu0 %v2450
  %v2452 = vpop.xlane.xlu0 %2451
  %v2453 = vrcp.pop %v2452
  %v2454 = vmul.f32 %v2449, %v2453
  %2455 = vrot.lane.b32.xlu0 %v2195, 32
  %v2456 = vpop.permute.xlu0 %2455
  %v2458 = vsel %vm404, %v2454, 0
  %v2460 = vsel %vm408, %v2456, 0
  %2462 = vmatprep.subr.mxu0 0.0
  %2463 = vmatpush1.msra.mxu0 0.0
  %2464 = vmatprep.subr.mxu0 0.0
  %2465 = vmatpush1.msra.mxu0 0.0
  %2466 = vmatprep.subr.mxu0 0.0
  %2467 = vmatpush1.msra.mxu0 0.0
  %2468 = vmatprep.subr.mxu0 0.0
  %2469 = vmatpush1.msra.mxu0 0.0
  %2470 = vmatprep.subr.mxu0 0.0
  %2471 = vmatpush1.msra.mxu0 0.0
  %2472 = vmatprep.subr.mxu0 0.0
  %2473 = vmatpush1.msra.mxu0 0.0
  %2474 = vmatprep.subr.mxu0 0.0
  %2475 = vmatpush1.msra.mxu0 0.0
  %2476 = vmatprep.subr.mxu0 0.0
  %2477 = vmatpush1.msra.mxu0 0.0
  %2478 = vmatprep.subr.mxu0 0.0
  %2479 = vmatpush1.msra.mxu0 0.0
  %2480 = vmatprep.subr.mxu0 0.0
  %2481 = vmatpush1.msra.mxu0 0.0
  %2482 = vmatprep.subr.mxu0 0.0
  %2483 = vmatpush1.msra.mxu0 0.0
  %2484 = vmatprep.subr.mxu0 0.0
  %2485 = vmatpush1.msra.mxu0 0.0
  %2486 = vmatprep.subr.mxu0 0.0
  %2487 = vmatpush1.msra.mxu0 0.0
  %2488 = vmatprep.subr.mxu0 0.0
  %2489 = vmatpush1.msra.mxu0 0.0
  %2490 = vmatprep.subr.mxu0 0.0
  %2491 = vmatpush1.msra.mxu0 0.0
  %2492 = vmatprep.subr.mxu0 0.0
  %2493 = vmatpush1.msra.mxu0 %v2460
  %2494 = vmatprep.subr.mxu0 0.0
  %2495 = vmatpush2.msra.mxu0 0.0
  %2496 = vmatprep.subr.mxu0 0.0
  %2497 = vmatpush2.msra.mxu0 0.0
  %2498 = vmatprep.subr.mxu0 0.0
  %2499 = vmatpush2.msra.mxu0 0.0
  %2500 = vmatprep.subr.mxu0 0.0
  %2501 = vmatpush2.msra.mxu0 0.0
  %2502 = vmatprep.subr.mxu0 0.0
  %2503 = vmatpush2.msra.mxu0 0.0
  %2504 = vmatprep.subr.mxu0 0.0
  %2505 = vmatpush2.msra.mxu0 0.0
  %2506 = vmatprep.subr.mxu0 0.0
  %2507 = vmatpush2.msra.mxu0 0.0
  %2508 = vmatprep.subr.mxu0 0.0
  %2509 = vmatpush2.msra.mxu0 0.0
  %2510 = vmatprep.subr.mxu0 0.0
  %2511 = vmatpush2.msra.mxu0 0.0
  %2512 = vmatprep.subr.mxu0 0.0
  %2513 = vmatpush2.msra.mxu0 0.0
  %2514 = vmatprep.subr.mxu0 0.0
  %2515 = vmatpush2.msra.mxu0 0.0
  %2516 = vmatprep.subr.mxu0 0.0
  %2517 = vmatpush2.msra.mxu0 0.0
  %2518 = vmatprep.subr.mxu0 0.0
  %2519 = vmatpush2.msra.mxu0 0.0
  %2520 = vmatprep.subr.mxu0 0.0
  %2521 = vmatpush2.msra.mxu0 0.0
  %2522 = vmatprep.subr.mxu0 0.0
  %2523 = vmatpush2.msra.mxu0 0.0
  %2524 = vmatprep.subr.mxu0 0.0
  %2525 = vmatpush2.msra.mxu0 0.0
  %2526 = vmatprep.mubr.f32.mxu0 0.0
  %2527 = vmatmul.mubr.f32.gmra.mxu0 %v2458
  %v2528 = vpop.f32.mrf.mxu0
  %v2529 = vadd.f32 0.0, %v2528
  %v2530 = vpop.f32.mrf.mxu0
  %2531 = vdwg.mxu0
  %2533 = vrot.lane.b32.xlu0 %v2529, 32
  %v2534 = vpop.permute.xlu0 %2533
  %v2536 = vsel %vm204, %v2362, %v2534
  %v2537 = vpack.c.bf16 %v2536, %v2536
  %v2538 = vld [vmem:[%s59] sm:$0xf]
  %v2539 = vld [vmem:[%s59 + $0x4] sm:$0xf]
  %v2540 = vld [vmem:[%s59 + $0x8] sm:$0xf]
  %v2541 = vld [vmem:[%s59 + $0xc] sm:$0xf]
  %v2542 = vld [vmem:[%s59 + $0x10] sm:$0xf]
  %v2543 = vld [vmem:[%s59 + $0x14] sm:$0xf]
  %v2544 = vld [vmem:[%s59 + $0x18] sm:$0xf]
  %v2545 = vld [vmem:[%s59 + $0x1c] sm:$0xf]
  %v2554 = vunpack.c.l.b16 %v2538
  %v2555 = vunpack.c.l.b16 %v2539
  %v2556 = vunpack.c.l.b16 %v2540
  %v2557 = vunpack.c.l.b16 %v2541
  %v2558 = vunpack.c.l.b16 %v2542
  %v2559 = vunpack.c.l.b16 %v2543
  %v2560 = vunpack.c.l.b16 %v2544
  %v2561 = vunpack.c.l.b16 %v2545
  %v2562 = vpack.c.b16 %v2555, %v2554
  %v2563 = vpack.c.b16 %v2557, %v2556
  %v2564 = vpack.c.b16 %v2559, %v2558
  %v2565 = vpack.c.b16 %v2561, %v2560
  %v2571 = vsel %vm689, %v2537, 0
  %2573 = vmatprep.subr.bf16.mxu0 0
  %2574 = vmatpush1.bf16.msra.mxu0 0
  %2575 = vmatprep.subr.bf16.mxu0 0
  %2576 = vmatpush1.bf16.msra.mxu0 0
  %2577 = vmatprep.subr.bf16.mxu0 0
  %2578 = vmatpush1.bf16.msra.mxu0 0
  %2579 = vmatprep.subr.bf16.mxu0 0
  %2580 = vmatpush1.bf16.msra.mxu0 0
  %2581 = vmatprep.subr.bf16.mxu0 0
  %2582 = vmatpush1.bf16.msra.mxu0 %v2565
  %2583 = vmatprep.subr.bf16.mxu0 0
  %2584 = vmatpush1.bf16.msra.mxu0 %v2564
  %2585 = vmatprep.subr.bf16.mxu0 0
  %2586 = vmatpush1.bf16.msra.mxu0 %v2563
  %2587 = vmatprep.subr.bf16.mxu0 0
  %2588 = vmatpush1.bf16.msra.mxu0 %v2562
  %2589 = vmatprep.subr.bf16.mxu0 0
  %2590 = vmatpush2.bf16.msra.mxu0 0
  %2591 = vmatprep.subr.bf16.mxu0 0
  %2592 = vmatpush2.bf16.msra.mxu0 0
  %2593 = vmatprep.subr.bf16.mxu0 0
  %2594 = vmatpush2.bf16.msra.mxu0 0
  %2595 = vmatprep.subr.bf16.mxu0 0
  %2596 = vmatpush2.bf16.msra.mxu0 0
  %2597 = vmatprep.subr.bf16.mxu0 0
  %2598 = vmatpush2.bf16.msra.mxu0 0
  %2599 = vmatprep.subr.bf16.mxu0 0
  %2600 = vmatpush2.bf16.msra.mxu0 0
  %2601 = vmatprep.subr.bf16.mxu0 0
  %2602 = vmatpush2.bf16.msra.mxu0 0
  %2603 = vmatprep.subr.bf16.mxu0 0
  %2604 = vmatpush2.bf16.msra.mxu0 0
  %2605 = vmatprep.mubr.bf16.mxu0 0
  %2606 = vmatmul.mubr.bf16.gmra.mxu0 %v2571
  %v2607 = vpop.f32.mrf.mxu0
  %v2608 = vadd.f32 0.0, %v2607
  %v2609 = vpop.f32.mrf.mxu0
  %v2610 = vpop.f32.mrf.mxu0
  %v2611 = vpop.f32.mrf.mxu0
  %2612 = vdwg.mxu0
  %v2613 = vadd.f32 %v2079, %v2608
  %v2614 = vsel %vm204, %v2613, 0.0
  %2615 = vadd.xlane.f32.xlu0 %v2614
  %v2616 = vpop.xlane.xlu0 %2615
  %v2617 = vmul.f32 %v2616, %v738
  %v2618 = vsub.f32 %v2613, %v2617
  %v2619 = vmul.f32 %v2618, %v2618
  %v2620 = vsel %vm204, %v2619, 0.0
  %2621 = vadd.xlane.f32.xlu0 %v2620
  %v2622 = vpop.xlane.xlu0 %2621
  %v2623 = vmul.f32 %v2622, %v738
  %v2624 = vadd.f32 %v2623, 1e-06
  %v2625 = vrsqrt.pop %v2624
  %v2626 = vmul.f32 %v2618, %v2625
  %v2627 = vlaneseq
  %v2628 = vshrl.u32 %v2627, 7
  %v2629 = vsub.s32 2, %v2628
  %v2630 = vrot.slane %v1501, %v2629
  %v2631 = vmul.f32 %v2626, %v2630
  %v2632 = vlaneseq
  %v2633 = vshrl.u32 %v2632, 7
  %v2634 = vsub.s32 3, %v2633
  %v2635 = vrot.slane %v1501, %v2634
  %v2636 = vadd.f32 %v2631, %v2635
  %v2637 = vpack.c.bf16 %v2636, %v2636
  %v2638 = vld [vmem:[%s61] sm:$0xf]
  %v2639 = vld [vmem:[%s61 + $0x4] sm:$0xf]
  %v2640 = vld [vmem:[%s61 + $0x8] sm:$0xf]
  %v2641 = vld [vmem:[%s61 + $0xc] sm:$0xf]
  %v2643 = vlaneseq
  %v2644 = vshrl.u32 %v2643, 7
  %v2645 = vsub.s32 0, %v2644
  %v2646 = vrot.slane %v1502, %v2645
  %v2652 = vunpack.c.l.b16 %v2638
  %v2653 = vunpack.c.l.b16 %v2639
  %v2654 = vunpack.c.l.b16 %v2640
  %v2655 = vunpack.c.l.b16 %v2641
  %v2656 = vpack.c.b16 %v2653, %v2652
  %v2657 = vpack.c.b16 %v2655, %v2654
  %v2661 = vsel %vm204, %v2637, 0
  %2663 = vmatprep.subr.bf16.mxu0 0
  %2664 = vmatpush1.bf16.msra.mxu0 0
  %2665 = vmatprep.subr.bf16.mxu0 0
  %2666 = vmatpush1.bf16.msra.mxu0 0
  %2667 = vmatprep.subr.bf16.mxu0 0
  %2668 = vmatpush1.bf16.msra.mxu0 0
  %2669 = vmatprep.subr.bf16.mxu0 0
  %2670 = vmatpush1.bf16.msra.mxu0 0
  %2671 = vmatprep.subr.bf16.mxu0 0
  %2672 = vmatpush1.bf16.msra.mxu0 0
  %2673 = vmatprep.subr.bf16.mxu0 0
  %2674 = vmatpush1.bf16.msra.mxu0 0
  %2675 = vmatprep.subr.bf16.mxu0 0
  %2676 = vmatpush1.bf16.msra.mxu0 %v2657
  %2677 = vmatprep.subr.bf16.mxu0 0
  %2678 = vmatpush1.bf16.msra.mxu0 %v2656
  %2679 = vmatprep.subr.bf16.mxu0 0
  %2680 = vmatpush2.bf16.msra.mxu0 0
  %2681 = vmatprep.subr.bf16.mxu0 0
  %2682 = vmatpush2.bf16.msra.mxu0 0
  %2683 = vmatprep.subr.bf16.mxu0 0
  %2684 = vmatpush2.bf16.msra.mxu0 0
  %2685 = vmatprep.subr.bf16.mxu0 0
  %2686 = vmatpush2.bf16.msra.mxu0 0
  %2687 = vmatprep.subr.bf16.mxu0 0
  %2688 = vmatpush2.bf16.msra.mxu0 0
  %2689 = vmatprep.subr.bf16.mxu0 0
  %2690 = vmatpush2.bf16.msra.mxu0 0
  %2691 = vmatprep.subr.bf16.mxu0 0
  %2692 = vmatpush2.bf16.msra.mxu0 0
  %2693 = vmatprep.subr.bf16.mxu0 0
  %2694 = vmatpush2.bf16.msra.mxu0 0
  %2695 = vmatprep.mubr.bf16.mxu0 0
  %2696 = vmatmul.mubr.bf16.gmra.mxu0 %v2661
  %v2697 = vpop.f32.mrf.mxu0
  %v2698 = vadd.f32 %v2646, %v2697
  %v2699 = vpop.f32.mrf.mxu0
  %v2700 = vpop.f32.mrf.mxu0
  %v2701 = vpop.f32.mrf.mxu0
  %2702 = vdwg.mxu0
  %v2703 = vmax.f32 %v2698, 0.0
  %v2704 = vpack.c.bf16 %v2703, %v2703
  %v2705 = vld [vmem:[%s63] sm:$0xf]
  %v2706 = vld [vmem:[%s63 + $0x4] sm:$0xf]
  %v2707 = vld [vmem:[%s63 + $0x8] sm:$0xf]
  %v2708 = vld [vmem:[%s63 + $0xc] sm:$0xf]
  %v2709 = vld [vmem:[%s63 + $0x10] sm:$0xf]
  %v2710 = vld [vmem:[%s63 + $0x14] sm:$0xf]
  %v2711 = vld [vmem:[%s63 + $0x18] sm:$0xf]
  %v2712 = vld [vmem:[%s63 + $0x1c] sm:$0xf]
  %v2721 = vunpack.c.l.b16 %v2705
  %v2722 = vunpack.c.l.b16 %v2706
  %v2723 = vunpack.c.l.b16 %v2707
  %v2724 = vunpack.c.l.b16 %v2708
  %v2725 = vunpack.c.l.b16 %v2709
  %v2726 = vunpack.c.l.b16 %v2710
  %v2727 = vunpack.c.l.b16 %v2711
  %v2728 = vunpack.c.l.b16 %v2712
  %v2729 = vpack.c.b16 %v2722, %v2721
  %v2730 = vpack.c.b16 %v2724, %v2723
  %v2731 = vpack.c.b16 %v2726, %v2725
  %v2732 = vpack.c.b16 %v2728, %v2727
  %2737 = vrot.lane.b32.xlu0 %v2646, 64
  %v2738 = vpop.permute.xlu0 %2737
  %v2741 = vsel %vm689, %v2704, 0
  %2743 = vmatprep.subr.bf16.mxu0 0
  %2744 = vmatpush1.bf16.msra.mxu0 0
  %2745 = vmatprep.subr.bf16.mxu0 0
  %2746 = vmatpush1.bf16.msra.mxu0 0
  %2747 = vmatprep.subr.bf16.mxu0 0
  %2748 = vmatpush1.bf16.msra.mxu0 0
  %2749 = vmatprep.subr.bf16.mxu0 0
  %2750 = vmatpush1.bf16.msra.mxu0 0
  %2751 = vmatprep.subr.bf16.mxu0 0
  %2752 = vmatpush1.bf16.msra.mxu0 %v2732
  %2753 = vmatprep.subr.bf16.mxu0 0
  %2754 = vmatpush1.bf16.msra.mxu0 %v2731
  %2755 = vmatprep.subr.bf16.mxu0 0
  %2756 = vmatpush1.bf16.msra.mxu0 %v2730
  %2757 = vmatprep.subr.bf16.mxu0 0
  %2758 = vmatpush1.bf16.msra.mxu0 %v2729
  %2759 = vmatprep.subr.bf16.mxu0 0
  %2760 = vmatpush2.bf16.msra.mxu0 0
  %2761 = vmatprep.subr.bf16.mxu0 0
  %2762 = vmatpush2.bf16.msra.mxu0 0
  %2763 = vmatprep.subr.bf16.mxu0 0
  %2764 = vmatpush2.bf16.msra.mxu0 0
  %2765 = vmatprep.subr.bf16.mxu0 0
  %2766 = vmatpush2.bf16.msra.mxu0 0
  %2767 = vmatprep.subr.bf16.mxu0 0
  %2768 = vmatpush2.bf16.msra.mxu0 0
  %2769 = vmatprep.subr.bf16.mxu0 0
  %2770 = vmatpush2.bf16.msra.mxu0 0
  %2771 = vmatprep.subr.bf16.mxu0 0
  %2772 = vmatpush2.bf16.msra.mxu0 0
  %2773 = vmatprep.subr.bf16.mxu0 0
  %2774 = vmatpush2.bf16.msra.mxu0 0
  %2775 = vmatprep.mubr.bf16.mxu0 0
  %2776 = vmatmul.mubr.bf16.gmra.mxu0 %v2741
  %v2777 = vpop.f32.mrf.mxu0
  %v2778 = vadd.f32 %v2738, %v2777
  %v2779 = vpop.f32.mrf.mxu0
  %v2780 = vpop.f32.mrf.mxu0
  %v2781 = vpop.f32.mrf.mxu0
  %2782 = vdwg.mxu0
  %v2783 = vadd.f32 %v2778, %v2636
  %v2784 = vsel %vm204, %v2783, 0.0
  %2785 = vadd.xlane.f32.xlu0 %v2784
  %v2786 = vpop.xlane.xlu0 %2785
  %v2787 = vmul.f32 %v2786, %v738
  %v2788 = vsub.f32 %v2783, %v2787
  %v2789 = vmul.f32 %v2788, %v2788
  %v2790 = vsel %vm204, %v2789, 0.0
  %2791 = vadd.xlane.f32.xlu0 %v2790
  %v2792 = vpop.xlane.xlu0 %2791
  %v2793 = vmul.f32 %v2792, %v738
  %v2794 = vadd.f32 %v2793, 1e-06
  %v2795 = vrsqrt.pop %v2794
  %v2796 = vmul.f32 %v2788, %v2795
  %v2797 = vlaneseq
  %v2798 = vshrl.u32 %v2797, 7
  %v2799 = vsub.s32 4, %v2798
  %v2800 = vrot.slane %v1501, %v2799
  %v2801 = vmul.f32 %v2796, %v2800
  %v2802 = vlaneseq
  %v2803 = vshrl.u32 %v2802, 7
  %v2804 = vsub.s32 5, %v2803
  %v2805 = vrot.slane %v1501, %v2804
  %v2806 = vadd.f32 %v2801, %v2805
  %v2807 = vld [vmem:[%s27] sm:$0xff]
  %v2809 = vsel %vm404, %v2807, 0
  %v2812 = vsel %vm408, %v1488, 0
  %2814 = vmatprep.subr.mxu0 0.0
  %2815 = vmatpush1.msra.mxu0 0.0
  %2816 = vmatprep.subr.mxu0 0.0
  %2817 = vmatpush1.msra.mxu0 0.0
  %2818 = vmatprep.subr.mxu0 0.0
  %2819 = vmatpush1.msra.mxu0 0.0
  %2820 = vmatprep.subr.mxu0 0.0
  %2821 = vmatpush1.msra.mxu0 0.0
  %2822 = vmatprep.subr.mxu0 0.0
  %2823 = vmatpush1.msra.mxu0 0.0
  %2824 = vmatprep.subr.mxu0 0.0
  %2825 = vmatpush1.msra.mxu0 0.0
  %2826 = vmatprep.subr.mxu0 0.0
  %2827 = vmatpush1.msra.mxu0 0.0
  %2828 = vmatprep.subr.mxu0 0.0
  %2829 = vmatpush1.msra.mxu0 0.0
  %2830 = vmatprep.subr.mxu0 0.0
  %2831 = vmatpush1.msra.mxu0 0.0
  %2832 = vmatprep.subr.mxu0 0.0
  %2833 = vmatpush1.msra.mxu0 0.0
  %2834 = vmatprep.subr.mxu0 0.0
  %2835 = vmatpush1.msra.mxu0 0.0
  %2836 = vmatprep.subr.mxu0 0.0
  %2837 = vmatpush1.msra.mxu0 0.0
  %2838 = vmatprep.subr.mxu0 0.0
  %2839 = vmatpush1.msra.mxu0 0.0
  %2840 = vmatprep.subr.mxu0 0.0
  %2841 = vmatpush1.msra.mxu0 0.0
  %2842 = vmatprep.subr.mxu0 0.0
  %2843 = vmatpush1.msra.mxu0 0.0
  %2844 = vmatprep.subr.mxu0 0.0
  %2845 = vmatpush1.msra.mxu0 %v2812
  %2846 = vmatprep.subr.mxu0 0.0
  %2847 = vmatpush2.msra.mxu0 0.0
  %2848 = vmatprep.subr.mxu0 0.0
  %2849 = vmatpush2.msra.mxu0 0.0
  %2850 = vmatprep.subr.mxu0 0.0
  %2851 = vmatpush2.msra.mxu0 0.0
  %2852 = vmatprep.subr.mxu0 0.0
  %2853 = vmatpush2.msra.mxu0 0.0
  %2854 = vmatprep.subr.mxu0 0.0
  %2855 = vmatpush2.msra.mxu0 0.0
  %2856 = vmatprep.subr.mxu0 0.0
  %2857 = vmatpush2.msra.mxu0 0.0
  %2858 = vmatprep.subr.mxu0 0.0
  %2859 = vmatpush2.msra.mxu0 0.0
  %2860 = vmatprep.subr.mxu0 0.0
  %2861 = vmatpush2.msra.mxu0 0.0
  %2862 = vmatprep.subr.mxu0 0.0
  %2863 = vmatpush2.msra.mxu0 0.0
  %2864 = vmatprep.subr.mxu0 0.0
  %2865 = vmatpush2.msra.mxu0 0.0
  %2866 = vmatprep.subr.mxu0 0.0
  %2867 = vmatpush2.msra.mxu0 0.0
  %2868 = vmatprep.subr.mxu0 0.0
  %2869 = vmatpush2.msra.mxu0 0.0
  %2870 = vmatprep.subr.mxu0 0.0
  %2871 = vmatpush2.msra.mxu0 0.0
  %2872 = vmatprep.subr.mxu0 0.0
  %2873 = vmatpush2.msra.mxu0 0.0
  %2874 = vmatprep.subr.mxu0 0.0
  %2875 = vmatpush2.msra.mxu0 0.0
  %2876 = vmatprep.subr.mxu0 0.0
  %2877 = vmatpush2.msra.mxu0 0.0
  %2878 = vmatprep.mubr.f32.mxu0 0.0
  %2879 = vmatmul.mubr.f32.gmra.mxu0 %v2809
  %v2880 = vpop.f32.mrf.mxu0
  %v2881 = vadd.f32 0.0, %v2880
  %v2882 = vpop.f32.mrf.mxu0
  %2883 = vdwg.mxu0
  %v2884 = vld [vmem:[%s5] sm:$0xf]
  %v2885 = vld [vmem:[%s7] sm:$0xf]
  %v2886 = vld [vmem:[%s15] sm:$0x3]
  %vm2887 = vcmp.gt.f32.partialorder %v152, 0.5
  %v2888 = vsel %vm2887, 1, 0
  %v2889 = vlaneseq
  %v2890 = vshrl.u32 %v2889, 7
  %v2891 = vsub.s32 0, %v2890
  %v2892 = vrot.slane %v2888, %v2891
  %vm2893 = vcmp.eq.s32.totalorder %v2892, 1
  %vm2894 = vmand %vm161, %vm2893
  %v2895 = vsel %vm2894, 0.0, -1e+09
  %v2896 = vpack.c.bf16 %v2884, %v2884
  %v2897 = vpack.c.bf16 %v2885, %v2885
  %v2899 = vsel %vm204, %v2897, 0
  %2901 = vmatprep.subr.bf16.mxu0 0
  %2902 = vmatpush1.bf16.msra.mxu0 0
  %2903 = vmatprep.subr.bf16.mxu0 0
  %2904 = vmatpush1.bf16.msra.mxu0 0
  %2905 = vmatprep.subr.bf16.mxu0 0
  %2906 = vmatpush1.bf16.msra.mxu0 0
  %2907 = vmatprep.subr.bf16.mxu0 0
  %2908 = vmatpush1.bf16.msra.mxu0 0
  %2909 = vmatprep.subr.bf16.mxu0 0
  %2910 = vmatpush1.bf16.msra.mxu0 0
  %2911 = vmatprep.subr.bf16.mxu0 0
  %2912 = vmatpush1.bf16.msra.mxu0 0
  %2913 = vmatprep.subr.bf16.mxu0 %v199
  %2914 = vmatpush1.bf16.msra.mxu0 %v198
  %2915 = vmatprep.subr.bf16.mxu0 %v197
  %2916 = vmatpush1.bf16.msra.mxu0 %v196
  %2917 = vmatprep.subr.bf16.mxu0 0
  %2918 = vmatpush2.bf16.msra.mxu0 0
  %2919 = vmatprep.subr.bf16.mxu0 0
  %2920 = vmatpush2.bf16.msra.mxu0 0
  %2921 = vmatprep.subr.bf16.mxu0 0
  %2922 = vmatpush2.bf16.msra.mxu0 0
  %2923 = vmatprep.subr.bf16.mxu0 0
  %2924 = vmatpush2.bf16.msra.mxu0 0
  %2925 = vmatprep.subr.bf16.mxu0 0
  %2926 = vmatpush2.bf16.msra.mxu0 0
  %2927 = vmatprep.subr.bf16.mxu0 0
  %2928 = vmatpush2.bf16.msra.mxu0 0
  %2929 = vmatprep.subr.bf16.mxu0 0
  %2930 = vmatpush2.bf16.msra.mxu0 0
  %2931 = vmatprep.subr.bf16.mxu0 0
  %2932 = vmatpush2.bf16.msra.mxu0 0
  %2933 = vmatprep.mubr.bf16.mxu0 0
  %2934 = vmatmul.mubr.bf16.gmra.mxu0 %v2899
  %v2935 = vpop.f32.mrf.mxu0
  %v2936 = vadd.f32 0.0, %v2935
  %v2937 = vpop.f32.mrf.mxu0
  %v2938 = vadd.f32 0.0, %v2937
  %v2939 = vpop.f32.mrf.mxu0
  %v2940 = vpop.f32.mrf.mxu0
  %2941 = vdwg.mxu0
  %v2943 = vsel %vm204, %v2896, 0
  %2945 = vmatprep.subr.bf16.mxu0 0
  %2946 = vmatpush1.bf16.msra.mxu0 0
  %2947 = vmatprep.subr.bf16.mxu0 0
  %2948 = vmatpush1.bf16.msra.mxu0 0
  %2949 = vmatprep.subr.bf16.mxu0 0
  %2950 = vmatpush1.bf16.msra.mxu0 0
  %2951 = vmatprep.subr.bf16.mxu0 0
  %2952 = vmatpush1.bf16.msra.mxu0 0
  %2953 = vmatprep.subr.bf16.mxu0 0
  %2954 = vmatpush1.bf16.msra.mxu0 0
  %2955 = vmatprep.subr.bf16.mxu0 0
  %2956 = vmatpush1.bf16.msra.mxu0 0
  %2957 = vmatprep.subr.bf16.mxu0 %v264
  %2958 = vmatpush1.bf16.msra.mxu0 %v263
  %2959 = vmatprep.subr.bf16.mxu0 %v262
  %2960 = vmatpush1.bf16.msra.mxu0 %v261
  %2961 = vmatprep.subr.bf16.mxu0 0
  %2962 = vmatpush2.bf16.msra.mxu0 0
  %2963 = vmatprep.subr.bf16.mxu0 0
  %2964 = vmatpush2.bf16.msra.mxu0 0
  %2965 = vmatprep.subr.bf16.mxu0 0
  %2966 = vmatpush2.bf16.msra.mxu0 0
  %2967 = vmatprep.subr.bf16.mxu0 0
  %2968 = vmatpush2.bf16.msra.mxu0 0
  %2969 = vmatprep.subr.bf16.mxu0 0
  %2970 = vmatpush2.bf16.msra.mxu0 0
  %2971 = vmatprep.subr.bf16.mxu0 0
  %2972 = vmatpush2.bf16.msra.mxu0 0
  %2973 = vmatprep.subr.bf16.mxu0 0
  %2974 = vmatpush2.bf16.msra.mxu0 0
  %2975 = vmatprep.subr.bf16.mxu0 0
  %2976 = vmatpush2.bf16.msra.mxu0 0
  %2977 = vmatprep.mubr.bf16.mxu0 0
  %2978 = vmatmul.mubr.bf16.gmra.mxu0 %v2943
  %v2979 = vpop.f32.mrf.mxu0
  %v2980 = vadd.f32 %v2936, %v2979
  %v2981 = vpop.f32.mrf.mxu0
  %v2982 = vadd.f32 %v2938, %v2981
  %v2983 = vpop.f32.mrf.mxu0
  %v2984 = vpop.f32.mrf.mxu0
  %2985 = vdwg.mxu0
  %2987 = vrot.lane.b32.xlu0 %v2980, 64
  %v2988 = vpop.permute.xlu0 %2987
  %v2989 = vsel %vm204, %v2980, 0
  %v2991 = vsel %vm204, %v2988, 0
  %2993 = vmatprep.subr.mxu0 0.0
  %2994 = vmatpush1.xpose.msra.mxu0 0.0
  %2995 = vmatprep.subr.mxu0 0.0
  %2996 = vmatpush1.xpose.msra.mxu0 0.0
  %2997 = vmatprep.subr.mxu0 0.0
  %2998 = vmatpush1.xpose.msra.mxu0 0.0
  %2999 = vmatprep.subr.mxu0 0.0
  %3000 = vmatpush1.xpose.msra.mxu0 0.0
  %3001 = vmatprep.subr.mxu0 0.0
  %3002 = vmatpush1.xpose.msra.mxu0 0.0
  %3003 = vmatprep.subr.mxu0 0.0
  %3004 = vmatpush1.xpose.msra.mxu0 0.0
  %3005 = vmatprep.subr.mxu0 0.0
  %3006 = vmatpush1.xpose.msra.mxu0 0.0
  %3007 = vmatprep.subr.mxu0 0.0
  %3008 = vmatpush1.xpose.msra.mxu0 0.0
  %3009 = vmatprep.subr.mxu0 0.0
  %3010 = vmatpush1.xpose.msra.mxu0 0.0
  %3011 = vmatprep.subr.mxu0 0.0
  %3012 = vmatpush1.xpose.msra.mxu0 0.0
  %3013 = vmatprep.subr.mxu0 0.0
  %3014 = vmatpush1.xpose.msra.mxu0 0.0
  %3015 = vmatprep.subr.mxu0 0.0
  %3016 = vmatpush1.xpose.msra.mxu0 0.0
  %3017 = vmatprep.subr.mxu0 0.0
  %3018 = vmatpush1.xpose.msra.mxu0 0.0
  %3019 = vmatprep.subr.mxu0 0.0
  %3020 = vmatpush1.xpose.msra.mxu0 0.0
  %3021 = vmatprep.subr.mxu0 0.0
  %3022 = vmatpush1.xpose.msra.mxu0 0.0
  %3023 = vmatprep.subr.mxu0 0.0
  %3024 = vmatpush1.xpose.msra.mxu0 %v2991
  %3025 = vmatprep.subr.mxu0 0.0
  %3026 = vmatpush2.xpose.msra.mxu0 0.0
  %3027 = vmatprep.subr.mxu0 0.0
  %3028 = vmatpush2.xpose.msra.mxu0 0.0
  %3029 = vmatprep.subr.mxu0 0.0
  %3030 = vmatpush2.xpose.msra.mxu0 0.0
  %3031 = vmatprep.subr.mxu0 0.0
  %3032 = vmatpush2.xpose.msra.mxu0 0.0
  %3033 = vmatprep.subr.mxu0 0.0
  %3034 = vmatpush2.xpose.msra.mxu0 0.0
  %3035 = vmatprep.subr.mxu0 0.0
  %3036 = vmatpush2.xpose.msra.mxu0 0.0
  %3037 = vmatprep.subr.mxu0 0.0
  %3038 = vmatpush2.xpose.msra.mxu0 0.0
  %3039 = vmatprep.subr.mxu0 0.0
  %3040 = vmatpush2.xpose.msra.mxu0 0.0
  %3041 = vmatprep.subr.mxu0 0.0
  %3042 = vmatpush2.xpose.msra.mxu0 0.0
  %3043 = vmatprep.subr.mxu0 0.0
  %3044 = vmatpush2.xpose.msra.mxu0 0.0
  %3045 = vmatprep.subr.mxu0 0.0
  %3046 = vmatpush2.xpose.msra.mxu0 0.0
  %3047 = vmatprep.subr.mxu0 0.0
  %3048 = vmatpush2.xpose.msra.mxu0 0.0
  %3049 = vmatprep.subr.mxu0 0.0
  %3050 = vmatpush2.xpose.msra.mxu0 0.0
  %3051 = vmatprep.subr.mxu0 0.0
  %3052 = vmatpush2.xpose.msra.mxu0 0.0
  %3053 = vmatprep.subr.mxu0 0.0
  %3054 = vmatpush2.xpose.msra.mxu0 0.0
  %3055 = vmatprep.subr.mxu0 0.0
  %3056 = vmatpush2.xpose.msra.mxu0 0.0
  %3057 = vmatprep.mubr.f32.mxu0 0.0
  %3058 = vmatmul.mubr.f32.gmra.mxu0 %v2989
  %v3059 = vpop.f32.mrf.mxu0
  %v3060 = vadd.f32 0.0, %v3059
  %v3061 = vpop.f32.mrf.mxu0
  %3062 = vdwg.mxu0
  %v3063 = vmul.f32 %v3060, 0.17677669
  %v3064 = vadd.f32 %v3063, %v2895
  %v3065 = vsel %vm392, %v3064, -inf
  %3066 = vmax.xlane.f32.xlu0 %v3065
  %v3067 = vpop.xlane.xlu0 %3066
  %v3068 = vsub.f32 %v3064, %v3067
  %v3069 = vmul.f32 %v3068, 1.442695
  %v3070 = vpow.pop %v3069
  %v3071 = vsel %vm392, %v3070, 0.0
  %3072 = vadd.xlane.f32.xlu0 %v3071
  %v3073 = vpop.xlane.xlu0 %3072
  %v3074 = vrcp.pop %v3073
  %v3075 = vmul.f32 %v3070, %v3074
  %v3077 = vsel %vm404, %v3075, 0
  %v3080 = vsel %vm408, %v2982, 0
  %3082 = vmatprep.subr.mxu0 0.0
  %3083 = vmatpush1.msra.mxu0 0.0
  %3084 = vmatprep.subr.mxu0 0.0
  %3085 = vmatpush1.msra.mxu0 0.0
  %3086 = vmatprep.subr.mxu0 0.0
  %3087 = vmatpush1.msra.mxu0 0.0
  %3088 = vmatprep.subr.mxu0 0.0
  %3089 = vmatpush1.msra.mxu0 0.0
  %3090 = vmatprep.subr.mxu0 0.0
  %3091 = vmatpush1.msra.mxu0 0.0
  %3092 = vmatprep.subr.mxu0 0.0
  %3093 = vmatpush1.msra.mxu0 0.0
  %3094 = vmatprep.subr.mxu0 0.0
  %3095 = vmatpush1.msra.mxu0 0.0
  %3096 = vmatprep.subr.mxu0 0.0
  %3097 = vmatpush1.msra.mxu0 0.0
  %3098 = vmatprep.subr.mxu0 0.0
  %3099 = vmatpush1.msra.mxu0 0.0
  %3100 = vmatprep.subr.mxu0 0.0
  %3101 = vmatpush1.msra.mxu0 0.0
  %3102 = vmatprep.subr.mxu0 0.0
  %3103 = vmatpush1.msra.mxu0 0.0
  %3104 = vmatprep.subr.mxu0 0.0
  %3105 = vmatpush1.msra.mxu0 0.0
  %3106 = vmatprep.subr.mxu0 0.0
  %3107 = vmatpush1.msra.mxu0 0.0
  %3108 = vmatprep.subr.mxu0 0.0
  %3109 = vmatpush1.msra.mxu0 0.0
  %3110 = vmatprep.subr.mxu0 0.0
  %3111 = vmatpush1.msra.mxu0 0.0
  %3112 = vmatprep.subr.mxu0 0.0
  %3113 = vmatpush1.msra.mxu0 %v3080
  %3114 = vmatprep.subr.mxu0 0.0
  %3115 = vmatpush2.msra.mxu0 0.0
  %3116 = vmatprep.subr.mxu0 0.0
  %3117 = vmatpush2.msra.mxu0 0.0
  %3118 = vmatprep.subr.mxu0 0.0
  %3119 = vmatpush2.msra.mxu0 0.0
  %3120 = vmatprep.subr.mxu0 0.0
  %3121 = vmatpush2.msra.mxu0 0.0
  %3122 = vmatprep.subr.mxu0 0.0
  %3123 = vmatpush2.msra.mxu0 0.0
  %3124 = vmatprep.subr.mxu0 0.0
  %3125 = vmatpush2.msra.mxu0 0.0
  %3126 = vmatprep.subr.mxu0 0.0
  %3127 = vmatpush2.msra.mxu0 0.0
  %3128 = vmatprep.subr.mxu0 0.0
  %3129 = vmatpush2.msra.mxu0 0.0
  %3130 = vmatprep.subr.mxu0 0.0
  %3131 = vmatpush2.msra.mxu0 0.0
  %3132 = vmatprep.subr.mxu0 0.0
  %3133 = vmatpush2.msra.mxu0 0.0
  %3134 = vmatprep.subr.mxu0 0.0
  %3135 = vmatpush2.msra.mxu0 0.0
  %3136 = vmatprep.subr.mxu0 0.0
  %3137 = vmatpush2.msra.mxu0 0.0
  %3138 = vmatprep.subr.mxu0 0.0
  %3139 = vmatpush2.msra.mxu0 0.0
  %3140 = vmatprep.subr.mxu0 0.0
  %3141 = vmatpush2.msra.mxu0 0.0
  %3142 = vmatprep.subr.mxu0 0.0
  %3143 = vmatpush2.msra.mxu0 0.0
  %3144 = vmatprep.subr.mxu0 0.0
  %3145 = vmatpush2.msra.mxu0 0.0
  %3146 = vmatprep.mubr.f32.mxu0 0.0
  %3147 = vmatmul.mubr.f32.gmra.mxu0 %v3077
  %v3148 = vpop.f32.mrf.mxu0
  %v3149 = vadd.f32 0.0, %v3148
  %v3150 = vpop.f32.mrf.mxu0
  %3151 = vdwg.mxu0
  %3152 = vrot.lane.b32.xlu0 %v2980, 96
  %v3153 = vpop.permute.xlu0 %3152
  %3154 = vrot.lane.b32.xlu0 %v2980, 32
  %v3155 = vpop.permute.xlu0 %3154
  %v3156 = vsel %vm204, %v3153, 0
  %v3158 = vsel %vm204, %v3155, 0
  %3160 = vmatprep.subr.mxu0 0.0
  %3161 = vmatpush1.xpose.msra.mxu0 0.0
  %3162 = vmatprep.subr.mxu0 0.0
  %3163 = vmatpush1.xpose.msra.mxu0 0.0
  %3164 = vmatprep.subr.mxu0 0.0
  %3165 = vmatpush1.xpose.msra.mxu0 0.0
  %3166 = vmatprep.subr.mxu0 0.0
  %3167 = vmatpush1.xpose.msra.mxu0 0.0
  %3168 = vmatprep.subr.mxu0 0.0
  %3169 = vmatpush1.xpose.msra.mxu0 0.0
  %3170 = vmatprep.subr.mxu0 0.0
  %3171 = vmatpush1.xpose.msra.mxu0 0.0
  %3172 = vmatprep.subr.mxu0 0.0
  %3173 = vmatpush1.xpose.msra.mxu0 0.0
  %3174 = vmatprep.subr.mxu0 0.0
  %3175 = vmatpush1.xpose.msra.mxu0 0.0
  %3176 = vmatprep.subr.mxu0 0.0
  %3177 = vmatpush1.xpose.msra.mxu0 0.0
  %3178 = vmatprep.subr.mxu0 0.0
  %3179 = vmatpush1.xpose.msra.mxu0 0.0
  %3180 = vmatprep.subr.mxu0 0.0
  %3181 = vmatpush1.xpose.msra.mxu0 0.0
  %3182 = vmatprep.subr.mxu0 0.0
  %3183 = vmatpush1.xpose.msra.mxu0 0.0
  %3184 = vmatprep.subr.mxu0 0.0
  %3185 = vmatpush1.xpose.msra.mxu0 0.0
  %3186 = vmatprep.subr.mxu0 0.0
  %3187 = vmatpush1.xpose.msra.mxu0 0.0
  %3188 = vmatprep.subr.mxu0 0.0
  %3189 = vmatpush1.xpose.msra.mxu0 0.0
  %3190 = vmatprep.subr.mxu0 0.0
  %3191 = vmatpush1.xpose.msra.mxu0 %v3158
  %3192 = vmatprep.subr.mxu0 0.0
  %3193 = vmatpush2.xpose.msra.mxu0 0.0
  %3194 = vmatprep.subr.mxu0 0.0
  %3195 = vmatpush2.xpose.msra.mxu0 0.0
  %3196 = vmatprep.subr.mxu0 0.0
  %3197 = vmatpush2.xpose.msra.mxu0 0.0
  %3198 = vmatprep.subr.mxu0 0.0
  %3199 = vmatpush2.xpose.msra.mxu0 0.0
  %3200 = vmatprep.subr.mxu0 0.0
  %3201 = vmatpush2.xpose.msra.mxu0 0.0
  %3202 = vmatprep.subr.mxu0 0.0
  %3203 = vmatpush2.xpose.msra.mxu0 0.0
  %3204 = vmatprep.subr.mxu0 0.0
  %3205 = vmatpush2.xpose.msra.mxu0 0.0
  %3206 = vmatprep.subr.mxu0 0.0
  %3207 = vmatpush2.xpose.msra.mxu0 0.0
  %3208 = vmatprep.subr.mxu0 0.0
  %3209 = vmatpush2.xpose.msra.mxu0 0.0
  %3210 = vmatprep.subr.mxu0 0.0
  %3211 = vmatpush2.xpose.msra.mxu0 0.0
  %3212 = vmatprep.subr.mxu0 0.0
  %3213 = vmatpush2.xpose.msra.mxu0 0.0
  %3214 = vmatprep.subr.mxu0 0.0
  %3215 = vmatpush2.xpose.msra.mxu0 0.0
  %3216 = vmatprep.subr.mxu0 0.0
  %3217 = vmatpush2.xpose.msra.mxu0 0.0
  %3218 = vmatprep.subr.mxu0 0.0
  %3219 = vmatpush2.xpose.msra.mxu0 0.0
  %3220 = vmatprep.subr.mxu0 0.0
  %3221 = vmatpush2.xpose.msra.mxu0 0.0
  %3222 = vmatprep.subr.mxu0 0.0
  %3223 = vmatpush2.xpose.msra.mxu0 0.0
  %3224 = vmatprep.mubr.f32.mxu0 0.0
  %3225 = vmatmul.mubr.f32.gmra.mxu0 %v3156
  %v3226 = vpop.f32.mrf.mxu0
  %v3227 = vadd.f32 0.0, %v3226
  %v3228 = vpop.f32.mrf.mxu0
  %3229 = vdwg.mxu0
  %v3230 = vmul.f32 %v3227, 0.17677669
  %v3231 = vadd.f32 %v3230, %v2895
  %v3232 = vsel %vm392, %v3231, -inf
  %3233 = vmax.xlane.f32.xlu0 %v3232
  %v3234 = vpop.xlane.xlu0 %3233
  %v3235 = vsub.f32 %v3231, %v3234
  %v3236 = vmul.f32 %v3235, 1.442695
  %v3237 = vpow.pop %v3236
  %v3238 = vsel %vm392, %v3237, 0.0
  %3239 = vadd.xlane.f32.xlu0 %v3238
  %v3240 = vpop.xlane.xlu0 %3239
  %v3241 = vrcp.pop %v3240
  %v3242 = vmul.f32 %v3237, %v3241
  %3243 = vrot.lane.b32.xlu0 %v2982, 96
  %v3244 = vpop.permute.xlu0 %3243
  %v3246 = vsel %vm404, %v3242, 0
  %v3248 = vsel %vm408, %v3244, 0
  %3250 = vmatprep.subr.mxu0 0.0
  %3251 = vmatpush1.msra.mxu0 0.0
  %3252 = vmatprep.subr.mxu0 0.0
  %3253 = vmatpush1.msra.mxu0 0.0
  %3254 = vmatprep.subr.mxu0 0.0
  %3255 = vmatpush1.msra.mxu0 0.0
  %3256 = vmatprep.subr.mxu0 0.0
  %3257 = vmatpush1.msra.mxu0 0.0
  %3258 = vmatprep.subr.mxu0 0.0
  %3259 = vmatpush1.msra.mxu0 0.0
  %3260 = vmatprep.subr.mxu0 0.0
  %3261 = vmatpush1.msra.mxu0 0.0
  %3262 = vmatprep.subr.mxu0 0.0
  %3263 = vmatpush1.msra.mxu0 0.0
  %3264 = vmatprep.subr.mxu0 0.0
  %3265 = vmatpush1.msra.mxu0 0.0
  %3266 = vmatprep.subr.mxu0 0.0
  %3267 = vmatpush1.msra.mxu0 0.0
  %3268 = vmatprep.subr.mxu0 0.0
  %3269 = vmatpush1.msra.mxu0 0.0
  %3270 = vmatprep.subr.mxu0 0.0
  %3271 = vmatpush1.msra.mxu0 0.0
  %3272 = vmatprep.subr.mxu0 0.0
  %3273 = vmatpush1.msra.mxu0 0.0
  %3274 = vmatprep.subr.mxu0 0.0
  %3275 = vmatpush1.msra.mxu0 0.0
  %3276 = vmatprep.subr.mxu0 0.0
  %3277 = vmatpush1.msra.mxu0 0.0
  %3278 = vmatprep.subr.mxu0 0.0
  %3279 = vmatpush1.msra.mxu0 0.0
  %3280 = vmatprep.subr.mxu0 0.0
  %3281 = vmatpush1.msra.mxu0 %v3248
  %3282 = vmatprep.subr.mxu0 0.0
  %3283 = vmatpush2.msra.mxu0 0.0
  %3284 = vmatprep.subr.mxu0 0.0
  %3285 = vmatpush2.msra.mxu0 0.0
  %3286 = vmatprep.subr.mxu0 0.0
  %3287 = vmatpush2.msra.mxu0 0.0
  %3288 = vmatprep.subr.mxu0 0.0
  %3289 = vmatpush2.msra.mxu0 0.0
  %3290 = vmatprep.subr.mxu0 0.0
  %3291 = vmatpush2.msra.mxu0 0.0
  %3292 = vmatprep.subr.mxu0 0.0
  %3293 = vmatpush2.msra.mxu0 0.0
  %3294 = vmatprep.subr.mxu0 0.0
  %3295 = vmatpush2.msra.mxu0 0.0
  %3296 = vmatprep.subr.mxu0 0.0
  %3297 = vmatpush2.msra.mxu0 0.0
  %3298 = vmatprep.subr.mxu0 0.0
  %3299 = vmatpush2.msra.mxu0 0.0
  %3300 = vmatprep.subr.mxu0 0.0
  %3301 = vmatpush2.msra.mxu0 0.0
  %3302 = vmatprep.subr.mxu0 0.0
  %3303 = vmatpush2.msra.mxu0 0.0
  %3304 = vmatprep.subr.mxu0 0.0
  %3305 = vmatpush2.msra.mxu0 0.0
  %3306 = vmatprep.subr.mxu0 0.0
  %3307 = vmatpush2.msra.mxu0 0.0
  %3308 = vmatprep.subr.mxu0 0.0
  %3309 = vmatpush2.msra.mxu0 0.0
  %3310 = vmatprep.subr.mxu0 0.0
  %3311 = vmatpush2.msra.mxu0 0.0
  %3312 = vmatprep.subr.mxu0 0.0
  %3313 = vmatpush2.msra.mxu0 0.0
  %3314 = vmatprep.mubr.f32.mxu0 0.0
  %3315 = vmatmul.mubr.f32.gmra.mxu0 %v3246
  %v3316 = vpop.f32.mrf.mxu0
  %v3317 = vadd.f32 0.0, %v3316
  %v3318 = vpop.f32.mrf.mxu0
  %3319 = vdwg.mxu0
  %3321 = vrot.lane.b32.xlu0 %v3317, 32
  %v3322 = vpop.permute.xlu0 %3321
  %v3324 = vsel %vm204, %v3149, %v3322
  %v3325 = vadd.f32 %v2884, %v2885
  %v3326 = vpack.c.bf16 %v3324, %v3324
  %v3328 = vsel %vm689, %v3326, 0
  %3330 = vmatprep.subr.bf16.mxu0 0
  %3331 = vmatpush1.bf16.msra.mxu0 0
  %3332 = vmatprep.subr.bf16.mxu0 0
  %3333 = vmatpush1.bf16.msra.mxu0 0
  %3334 = vmatprep.subr.bf16.mxu0 0
  %3335 = vmatpush1.bf16.msra.mxu0 0
  %3336 = vmatprep.subr.bf16.mxu0 0
  %3337 = vmatpush1.bf16.msra.mxu0 0
  %3338 = vmatprep.subr.bf16.mxu0 0
  %3339 = vmatpush1.bf16.msra.mxu0 %v684
  %3340 = vmatprep.subr.bf16.mxu0 0
  %3341 = vmatpush1.bf16.msra.mxu0 %v683
  %3342 = vmatprep.subr.bf16.mxu0 0
  %3343 = vmatpush1.bf16.msra.mxu0 %v682
  %3344 = vmatprep.subr.bf16.mxu0 0
  %3345 = vmatpush1.bf16.msra.mxu0 %v681
  %3346 = vmatprep.subr.bf16.mxu0 0
  %3347 = vmatpush2.bf16.msra.mxu0 0
  %3348 = vmatprep.subr.bf16.mxu0 0
  %3349 = vmatpush2.bf16.msra.mxu0 0
  %3350 = vmatprep.subr.bf16.mxu0 0
  %3351 = vmatpush2.bf16.msra.mxu0 0
  %3352 = vmatprep.subr.bf16.mxu0 0
  %3353 = vmatpush2.bf16.msra.mxu0 0
  %3354 = vmatprep.subr.bf16.mxu0 0
  %3355 = vmatpush2.bf16.msra.mxu0 0
  %3356 = vmatprep.subr.bf16.mxu0 0
  %3357 = vmatpush2.bf16.msra.mxu0 0
  %3358 = vmatprep.subr.bf16.mxu0 0
  %3359 = vmatpush2.bf16.msra.mxu0 0
  %3360 = vmatprep.subr.bf16.mxu0 0
  %3361 = vmatpush2.bf16.msra.mxu0 0
  %3362 = vmatprep.mubr.bf16.mxu0 0
  %3363 = vmatmul.mubr.bf16.gmra.mxu0 %v3328
  %v3364 = vpop.f32.mrf.mxu0
  %v3365 = vadd.f32 0.0, %v3364
  %v3366 = vpop.f32.mrf.mxu0
  %v3367 = vpop.f32.mrf.mxu0
  %v3368 = vpop.f32.mrf.mxu0
  %3369 = vdwg.mxu0
  %v3370 = vadd.f32 %v3325, %v3365
  %v3371 = vsel %vm734, %v3370, 0.0
  %3372 = vadd.xlane.f32.xlu0 %v3371
  %v3373 = vpop.xlane.xlu0 %3372
  %v3374 = vmul.f32 %v3373, %v738
  %v3375 = vsub.f32 %v3370, %v3374
  %v3376 = vmul.f32 %v3375, %v3375
  %v3377 = vsel %vm734, %v3376, 0.0
  %3378 = vadd.xlane.f32.xlu0 %v3377
  %v3379 = vpop.xlane.xlu0 %3378
  %v3380 = vmul.f32 %v3379, %v738
  %v3381 = vadd.f32 %v3380, 1e-06
  %v3382 = vrsqrt.pop %v3381
  %v3383 = vmul.f32 %v3375, %v3382
  %v3384 = vmul.f32 %v3383, %v752
  %v3385 = vadd.f32 %v3384, %v757
  %v3386 = vpack.c.bf16 %v3385, %v3385
  %v3387 = vpack.c.bf16 %v2886, %v2886
  %v3389 = vsel %vm204, %v3386, 0
  %3391 = vmatprep.subr.bf16.mxu0 0
  %3392 = vmatpush1.bf16.msra.mxu0 0
  %3393 = vmatprep.subr.bf16.mxu0 0
  %3394 = vmatpush1.bf16.msra.mxu0 0
  %3395 = vmatprep.subr.bf16.mxu0 0
  %3396 = vmatpush1.bf16.msra.mxu0 0
  %3397 = vmatprep.subr.bf16.mxu0 0
  %3398 = vmatpush1.bf16.msra.mxu0 0
  %3399 = vmatprep.subr.bf16.mxu0 0
  %3400 = vmatpush1.bf16.msra.mxu0 0
  %3401 = vmatprep.subr.bf16.mxu0 0
  %3402 = vmatpush1.bf16.msra.mxu0 0
  %3403 = vmatprep.subr.bf16.mxu0 0
  %3404 = vmatpush1.bf16.msra.mxu0 %v774
  %3405 = vmatprep.subr.bf16.mxu0 0
  %3406 = vmatpush1.bf16.msra.mxu0 %v773
  %3407 = vmatprep.subr.bf16.mxu0 0
  %3408 = vmatpush2.bf16.msra.mxu0 0
  %3409 = vmatprep.subr.bf16.mxu0 0
  %3410 = vmatpush2.bf16.msra.mxu0 0
  %3411 = vmatprep.subr.bf16.mxu0 0
  %3412 = vmatpush2.bf16.msra.mxu0 0
  %3413 = vmatprep.subr.bf16.mxu0 0
  %3414 = vmatpush2.bf16.msra.mxu0 0
  %3415 = vmatprep.subr.bf16.mxu0 0
  %3416 = vmatpush2.bf16.msra.mxu0 0
  %3417 = vmatprep.subr.bf16.mxu0 0
  %3418 = vmatpush2.bf16.msra.mxu0 0
  %3419 = vmatprep.subr.bf16.mxu0 0
  %3420 = vmatpush2.bf16.msra.mxu0 0
  %3421 = vmatprep.subr.bf16.mxu0 0
  %3422 = vmatpush2.bf16.msra.mxu0 0
  %3423 = vmatprep.mubr.bf16.mxu0 0
  %3424 = vmatmul.mubr.bf16.gmra.mxu0 %v3389
  %v3425 = vpop.f32.mrf.mxu0
  %v3426 = vadd.f32 0.0, %v3425
  %v3427 = vpop.f32.mrf.mxu0
  %v3428 = vpop.f32.mrf.mxu0
  %v3429 = vpop.f32.mrf.mxu0
  %3430 = vdwg.mxu0
  %v3432 = vsel %vm204, %v3387, 0
  %3434 = vmatprep.subr.bf16.mxu0 0
  %3435 = vmatpush1.bf16.msra.mxu0 0
  %3436 = vmatprep.subr.bf16.mxu0 0
  %3437 = vmatpush1.bf16.msra.mxu0 0
  %3438 = vmatprep.subr.bf16.mxu0 0
  %3439 = vmatpush1.bf16.msra.mxu0 0
  %3440 = vmatprep.subr.bf16.mxu0 0
  %3441 = vmatpush1.bf16.msra.mxu0 0
  %3442 = vmatprep.subr.bf16.mxu0 0
  %3443 = vmatpush1.bf16.msra.mxu0 0
  %3444 = vmatprep.subr.bf16.mxu0 0
  %3445 = vmatpush1.bf16.msra.mxu0 0
  %3446 = vmatprep.subr.bf16.mxu0 0
  %3447 = vmatpush1.bf16.msra.mxu0 %v833
  %3448 = vmatprep.subr.bf16.mxu0 0
  %3449 = vmatpush1.bf16.msra.mxu0 %v832
  %3450 = vmatprep.subr.bf16.mxu0 0
  %3451 = vmatpush2.bf16.msra.mxu0 0
  %3452 = vmatprep.subr.bf16.mxu0 0
  %3453 = vmatpush2.bf16.msra.mxu0 0
  %3454 = vmatprep.subr.bf16.mxu0 0
  %3455 = vmatpush2.bf16.msra.mxu0 0
  %3456 = vmatprep.subr.bf16.mxu0 0
  %3457 = vmatpush2.bf16.msra.mxu0 0
  %3458 = vmatprep.subr.bf16.mxu0 0
  %3459 = vmatpush2.bf16.msra.mxu0 0
  %3460 = vmatprep.subr.bf16.mxu0 0
  %3461 = vmatpush2.bf16.msra.mxu0 0
  %3462 = vmatprep.subr.bf16.mxu0 0
  %3463 = vmatpush2.bf16.msra.mxu0 0
  %3464 = vmatprep.subr.bf16.mxu0 0
  %3465 = vmatpush2.bf16.msra.mxu0 0
  %3466 = vmatprep.mubr.bf16.mxu0 0
  %3467 = vmatmul.mubr.bf16.gmra.mxu0 %v3432
  %v3468 = vpop.f32.mrf.mxu0
  %v3469 = vadd.f32 0.0, %v3468
  %v3470 = vpop.f32.mrf.mxu0
  %v3471 = vpop.f32.mrf.mxu0
  %v3472 = vpop.f32.mrf.mxu0
  %3473 = vdwg.mxu0
  %v3475 = vsel %vm204, %v3426, 0
  %v3478 = vsel %vm204, %v3469, 0
  %3480 = vmatprep.subr.mxu0 0.0
  %3481 = vmatpush1.xpose.msra.mxu0 0.0
  %3482 = vmatprep.subr.mxu0 0.0
  %3483 = vmatpush1.xpose.msra.mxu0 0.0
  %3484 = vmatprep.subr.mxu0 0.0
  %3485 = vmatpush1.xpose.msra.mxu0 0.0
  %3486 = vmatprep.subr.mxu0 0.0
  %3487 = vmatpush1.xpose.msra.mxu0 0.0
  %3488 = vmatprep.subr.mxu0 0.0
  %3489 = vmatpush1.xpose.msra.mxu0 0.0
  %3490 = vmatprep.subr.mxu0 0.0
  %3491 = vmatpush1.xpose.msra.mxu0 0.0
  %3492 = vmatprep.subr.mxu0 0.0
  %3493 = vmatpush1.xpose.msra.mxu0 0.0
  %3494 = vmatprep.subr.mxu0 0.0
  %3495 = vmatpush1.xpose.msra.mxu0 0.0
  %3496 = vmatprep.subr.mxu0 0.0
  %3497 = vmatpush1.xpose.msra.mxu0 0.0
  %3498 = vmatprep.subr.mxu0 0.0
  %3499 = vmatpush1.xpose.msra.mxu0 0.0
  %3500 = vmatprep.subr.mxu0 0.0
  %3501 = vmatpush1.xpose.msra.mxu0 0.0
  %3502 = vmatprep.subr.mxu0 0.0
  %3503 = vmatpush1.xpose.msra.mxu0 0.0
  %3504 = vmatprep.subr.mxu0 0.0
  %3505 = vmatpush1.xpose.msra.mxu0 0.0
  %3506 = vmatprep.subr.mxu0 0.0
  %3507 = vmatpush1.xpose.msra.mxu0 0.0
  %3508 = vmatprep.subr.mxu0 0.0
  %3509 = vmatpush1.xpose.msra.mxu0 0.0
  %3510 = vmatprep.subr.mxu0 0.0
  %3511 = vmatpush1.xpose.msra.mxu0 %v3478
  %3512 = vmatprep.subr.mxu0 0.0
  %3513 = vmatpush2.xpose.msra.mxu0 0.0
  %3514 = vmatprep.subr.mxu0 0.0
  %3515 = vmatpush2.xpose.msra.mxu0 0.0
  %3516 = vmatprep.subr.mxu0 0.0
  %3517 = vmatpush2.xpose.msra.mxu0 0.0
  %3518 = vmatprep.subr.mxu0 0.0
  %3519 = vmatpush2.xpose.msra.mxu0 0.0
  %3520 = vmatprep.subr.mxu0 0.0
  %3521 = vmatpush2.xpose.msra.mxu0 0.0
  %3522 = vmatprep.subr.mxu0 0.0
  %3523 = vmatpush2.xpose.msra.mxu0 0.0
  %3524 = vmatprep.subr.mxu0 0.0
  %3525 = vmatpush2.xpose.msra.mxu0 0.0
  %3526 = vmatprep.subr.mxu0 0.0
  %3527 = vmatpush2.xpose.msra.mxu0 0.0
  %3528 = vmatprep.subr.mxu0 0.0
  %3529 = vmatpush2.xpose.msra.mxu0 0.0
  %3530 = vmatprep.subr.mxu0 0.0
  %3531 = vmatpush2.xpose.msra.mxu0 0.0
  %3532 = vmatprep.subr.mxu0 0.0
  %3533 = vmatpush2.xpose.msra.mxu0 0.0
  %3534 = vmatprep.subr.mxu0 0.0
  %3535 = vmatpush2.xpose.msra.mxu0 0.0
  %3536 = vmatprep.subr.mxu0 0.0
  %3537 = vmatpush2.xpose.msra.mxu0 0.0
  %3538 = vmatprep.subr.mxu0 0.0
  %3539 = vmatpush2.xpose.msra.mxu0 0.0
  %3540 = vmatprep.subr.mxu0 0.0
  %3541 = vmatpush2.xpose.msra.mxu0 0.0
  %3542 = vmatprep.subr.mxu0 0.0
  %3543 = vmatpush2.xpose.msra.mxu0 0.0
  %3544 = vmatprep.mubr.f32.mxu0 0.0
  %3545 = vmatmul.mubr.f32.gmra.mxu0 %v3475
  %v3546 = vpop.f32.mrf.mxu0
  %v3547 = vadd.f32 0.0, %v3546
  %v3548 = vpop.f32.mrf.mxu0
  %3549 = vdwg.mxu0
  %v3550 = vmul.f32 %v3547, 0.17677669
  %v3551 = vsel %vm956, %v3550, -inf
  %3552 = vmax.xlane.f32.xlu0 %v3551
  %v3553 = vpop.xlane.xlu0 %3552
  %v3554 = vsub.f32 %v3550, %v3553
  %v3555 = vmul.f32 %v3554, 1.442695
  %v3556 = vpow.pop %v3555
  %v3557 = vsel %vm956, %v3556, 0.0
  %3558 = vadd.xlane.f32.xlu0 %v3557
  %v3559 = vpop.xlane.xlu0 %3558
  %v3560 = vrcp.pop %v3559
  %v3561 = vmul.f32 %v3556, %v3560
  %3562 = vrot.lane.b32.xlu0 %v3469, 64
  %v3563 = vpop.permute.xlu0 %3562
  %v3565 = vsel %vm970, %v3561, 0
  %v3567 = vsel %vm974, %v3563, 0
  %3569 = vmatprep.subr.mxu0 0.0
  %3570 = vmatpush1.msra.mxu0 0.0
  %3571 = vmatprep.subr.mxu0 0.0
  %3572 = vmatpush1.msra.mxu0 0.0
  %3573 = vmatprep.subr.mxu0 0.0
  %3574 = vmatpush1.msra.mxu0 0.0
  %3575 = vmatprep.subr.mxu0 0.0
  %3576 = vmatpush1.msra.mxu0 0.0
  %3577 = vmatprep.subr.mxu0 0.0
  %3578 = vmatpush1.msra.mxu0 0.0
  %3579 = vmatprep.subr.mxu0 0.0
  %3580 = vmatpush1.msra.mxu0 0.0
  %3581 = vmatprep.subr.mxu0 0.0
  %3582 = vmatpush1.msra.mxu0 0.0
  %3583 = vmatprep.subr.mxu0 0.0
  %3584 = vmatpush1.msra.mxu0 0.0
  %3585 = vmatprep.subr.mxu0 0.0
  %3586 = vmatpush1.msra.mxu0 0.0
  %3587 = vmatprep.subr.mxu0 0.0
  %3588 = vmatpush1.msra.mxu0 0.0
  %3589 = vmatprep.subr.mxu0 0.0
  %3590 = vmatpush1.msra.mxu0 0.0
  %3591 = vmatprep.subr.mxu0 0.0
  %3592 = vmatpush1.msra.mxu0 0.0
  %3593 = vmatprep.subr.mxu0 0.0
  %3594 = vmatpush1.msra.mxu0 0.0
  %3595 = vmatprep.subr.mxu0 0.0
  %3596 = vmatpush1.msra.mxu0 0.0
  %3597 = vmatprep.subr.mxu0 0.0
  %3598 = vmatpush1.msra.mxu0 0.0
  %3599 = vmatprep.subr.mxu0 0.0
  %3600 = vmatpush1.msra.mxu0 %v3567
  %3601 = vmatprep.subr.mxu0 0.0
  %3602 = vmatpush2.msra.mxu0 0.0
  %3603 = vmatprep.subr.mxu0 0.0
  %3604 = vmatpush2.msra.mxu0 0.0
  %3605 = vmatprep.subr.mxu0 0.0
  %3606 = vmatpush2.msra.mxu0 0.0
  %3607 = vmatprep.subr.mxu0 0.0
  %3608 = vmatpush2.msra.mxu0 0.0
  %3609 = vmatprep.subr.mxu0 0.0
  %3610 = vmatpush2.msra.mxu0 0.0
  %3611 = vmatprep.subr.mxu0 0.0
  %3612 = vmatpush2.msra.mxu0 0.0
  %3613 = vmatprep.subr.mxu0 0.0
  %3614 = vmatpush2.msra.mxu0 0.0
  %3615 = vmatprep.subr.mxu0 0.0
  %3616 = vmatpush2.msra.mxu0 0.0
  %3617 = vmatprep.subr.mxu0 0.0
  %3618 = vmatpush2.msra.mxu0 0.0
  %3619 = vmatprep.subr.mxu0 0.0
  %3620 = vmatpush2.msra.mxu0 0.0
  %3621 = vmatprep.subr.mxu0 0.0
  %3622 = vmatpush2.msra.mxu0 0.0
  %3623 = vmatprep.subr.mxu0 0.0
  %3624 = vmatpush2.msra.mxu0 0.0
  %3625 = vmatprep.subr.mxu0 0.0
  %3626 = vmatpush2.msra.mxu0 0.0
  %3627 = vmatprep.subr.mxu0 0.0
  %3628 = vmatpush2.msra.mxu0 0.0
  %3629 = vmatprep.subr.mxu0 0.0
  %3630 = vmatpush2.msra.mxu0 0.0
  %3631 = vmatprep.subr.mxu0 0.0
  %3632 = vmatpush2.msra.mxu0 0.0
  %3633 = vmatprep.mubr.f32.mxu0 0.0
  %3634 = vmatmul.mubr.f32.gmra.mxu0 %v3565
  %v3635 = vpop.f32.mrf.mxu0
  %v3636 = vadd.f32 0.0, %v3635
  %v3637 = vpop.f32.mrf.mxu0
  %3638 = vdwg.mxu0
  %3639 = vrot.lane.b32.xlu0 %v3426, 96
  %v3640 = vpop.permute.xlu0 %3639
  %3641 = vrot.lane.b32.xlu0 %v3469, 96
  %v3642 = vpop.permute.xlu0 %3641
  %v3643 = vsel %vm204, %v3640, 0
  %v3645 = vsel %vm204, %v3642, 0
  %3647 = vmatprep.subr.mxu0 0.0
  %3648 = vmatpush1.xpose.msra.mxu0 0.0
  %3649 = vmatprep.subr.mxu0 0.0
  %3650 = vmatpush1.xpose.msra.mxu0 0.0
  %3651 = vmatprep.subr.mxu0 0.0
  %3652 = vmatpush1.xpose.msra.mxu0 0.0
  %3653 = vmatprep.subr.mxu0 0.0
  %3654 = vmatpush1.xpose.msra.mxu0 0.0
  %3655 = vmatprep.subr.mxu0 0.0
  %3656 = vmatpush1.xpose.msra.mxu0 0.0
  %3657 = vmatprep.subr.mxu0 0.0
  %3658 = vmatpush1.xpose.msra.mxu0 0.0
  %3659 = vmatprep.subr.mxu0 0.0
  %3660 = vmatpush1.xpose.msra.mxu0 0.0
  %3661 = vmatprep.subr.mxu0 0.0
  %3662 = vmatpush1.xpose.msra.mxu0 0.0
  %3663 = vmatprep.subr.mxu0 0.0
  %3664 = vmatpush1.xpose.msra.mxu0 0.0
  %3665 = vmatprep.subr.mxu0 0.0
  %3666 = vmatpush1.xpose.msra.mxu0 0.0
  %3667 = vmatprep.subr.mxu0 0.0
  %3668 = vmatpush1.xpose.msra.mxu0 0.0
  %3669 = vmatprep.subr.mxu0 0.0
  %3670 = vmatpush1.xpose.msra.mxu0 0.0
  %3671 = vmatprep.subr.mxu0 0.0
  %3672 = vmatpush1.xpose.msra.mxu0 0.0
  %3673 = vmatprep.subr.mxu0 0.0
  %3674 = vmatpush1.xpose.msra.mxu0 0.0
  %3675 = vmatprep.subr.mxu0 0.0
  %3676 = vmatpush1.xpose.msra.mxu0 0.0
  %3677 = vmatprep.subr.mxu0 0.0
  %3678 = vmatpush1.xpose.msra.mxu0 %v3645
  %3679 = vmatprep.subr.mxu0 0.0
  %3680 = vmatpush2.xpose.msra.mxu0 0.0
  %3681 = vmatprep.subr.mxu0 0.0
  %3682 = vmatpush2.xpose.msra.mxu0 0.0
  %3683 = vmatprep.subr.mxu0 0.0
  %3684 = vmatpush2.xpose.msra.mxu0 0.0
  %3685 = vmatprep.subr.mxu0 0.0
  %3686 = vmatpush2.xpose.msra.mxu0 0.0
  %3687 = vmatprep.subr.mxu0 0.0
  %3688 = vmatpush2.xpose.msra.mxu0 0.0
  %3689 = vmatprep.subr.mxu0 0.0
  %3690 = vmatpush2.xpose.msra.mxu0 0.0
  %3691 = vmatprep.subr.mxu0 0.0
  %3692 = vmatpush2.xpose.msra.mxu0 0.0
  %3693 = vmatprep.subr.mxu0 0.0
  %3694 = vmatpush2.xpose.msra.mxu0 0.0
  %3695 = vmatprep.subr.mxu0 0.0
  %3696 = vmatpush2.xpose.msra.mxu0 0.0
  %3697 = vmatprep.subr.mxu0 0.0
  %3698 = vmatpush2.xpose.msra.mxu0 0.0
  %3699 = vmatprep.subr.mxu0 0.0
  %3700 = vmatpush2.xpose.msra.mxu0 0.0
  %3701 = vmatprep.subr.mxu0 0.0
  %3702 = vmatpush2.xpose.msra.mxu0 0.0
  %3703 = vmatprep.subr.mxu0 0.0
  %3704 = vmatpush2.xpose.msra.mxu0 0.0
  %3705 = vmatprep.subr.mxu0 0.0
  %3706 = vmatpush2.xpose.msra.mxu0 0.0
  %3707 = vmatprep.subr.mxu0 0.0
  %3708 = vmatpush2.xpose.msra.mxu0 0.0
  %3709 = vmatprep.subr.mxu0 0.0
  %3710 = vmatpush2.xpose.msra.mxu0 0.0
  %3711 = vmatprep.mubr.f32.mxu0 0.0
  %3712 = vmatmul.mubr.f32.gmra.mxu0 %v3643
  %v3713 = vpop.f32.mrf.mxu0
  %v3714 = vadd.f32 0.0, %v3713
  %v3715 = vpop.f32.mrf.mxu0
  %3716 = vdwg.mxu0
  %v3717 = vmul.f32 %v3714, 0.17677669
  %v3718 = vsel %vm956, %v3717, -inf
  %3719 = vmax.xlane.f32.xlu0 %v3718
  %v3720 = vpop.xlane.xlu0 %3719
  %v3721 = vsub.f32 %v3717, %v3720
  %v3722 = vmul.f32 %v3721, 1.442695
  %v3723 = vpow.pop %v3722
  %v3724 = vsel %vm956, %v3723, 0.0
  %3725 = vadd.xlane.f32.xlu0 %v3724
  %v3726 = vpop.xlane.xlu0 %3725
  %v3727 = vrcp.pop %v3726
  %v3728 = vmul.f32 %v3723, %v3727
  %3729 = vrot.lane.b32.xlu0 %v3469, 32
  %v3730 = vpop.permute.xlu0 %3729
  %v3732 = vsel %vm970, %v3728, 0
  %v3734 = vsel %vm974, %v3730, 0
  %3736 = vmatprep.subr.mxu0 0.0
  %3737 = vmatpush1.msra.mxu0 0.0
  %3738 = vmatprep.subr.mxu0 0.0
  %3739 = vmatpush1.msra.mxu0 0.0
  %3740 = vmatprep.subr.mxu0 0.0
  %3741 = vmatpush1.msra.mxu0 0.0
  %3742 = vmatprep.subr.mxu0 0.0
  %3743 = vmatpush1.msra.mxu0 0.0
  %3744 = vmatprep.subr.mxu0 0.0
  %3745 = vmatpush1.msra.mxu0 0.0
  %3746 = vmatprep.subr.mxu0 0.0
  %3747 = vmatpush1.msra.mxu0 0.0
  %3748 = vmatprep.subr.mxu0 0.0
  %3749 = vmatpush1.msra.mxu0 0.0
  %3750 = vmatprep.subr.mxu0 0.0
  %3751 = vmatpush1.msra.mxu0 0.0
  %3752 = vmatprep.subr.mxu0 0.0
  %3753 = vmatpush1.msra.mxu0 0.0
  %3754 = vmatprep.subr.mxu0 0.0
  %3755 = vmatpush1.msra.mxu0 0.0
  %3756 = vmatprep.subr.mxu0 0.0
  %3757 = vmatpush1.msra.mxu0 0.0
  %3758 = vmatprep.subr.mxu0 0.0
  %3759 = vmatpush1.msra.mxu0 0.0
  %3760 = vmatprep.subr.mxu0 0.0
  %3761 = vmatpush1.msra.mxu0 0.0
  %3762 = vmatprep.subr.mxu0 0.0
  %3763 = vmatpush1.msra.mxu0 0.0
  %3764 = vmatprep.subr.mxu0 0.0
  %3765 = vmatpush1.msra.mxu0 0.0
  %3766 = vmatprep.subr.mxu0 0.0
  %3767 = vmatpush1.msra.mxu0 %v3734
  %3768 = vmatprep.subr.mxu0 0.0
  %3769 = vmatpush2.msra.mxu0 0.0
  %3770 = vmatprep.subr.mxu0 0.0
  %3771 = vmatpush2.msra.mxu0 0.0
  %3772 = vmatprep.subr.mxu0 0.0
  %3773 = vmatpush2.msra.mxu0 0.0
  %3774 = vmatprep.subr.mxu0 0.0
  %3775 = vmatpush2.msra.mxu0 0.0
  %3776 = vmatprep.subr.mxu0 0.0
  %3777 = vmatpush2.msra.mxu0 0.0
  %3778 = vmatprep.subr.mxu0 0.0
  %3779 = vmatpush2.msra.mxu0 0.0
  %3780 = vmatprep.subr.mxu0 0.0
  %3781 = vmatpush2.msra.mxu0 0.0
  %3782 = vmatprep.subr.mxu0 0.0
  %3783 = vmatpush2.msra.mxu0 0.0
  %3784 = vmatprep.subr.mxu0 0.0
  %3785 = vmatpush2.msra.mxu0 0.0
  %3786 = vmatprep.subr.mxu0 0.0
  %3787 = vmatpush2.msra.mxu0 0.0
  %3788 = vmatprep.subr.mxu0 0.0
  %3789 = vmatpush2.msra.mxu0 0.0
  %3790 = vmatprep.subr.mxu0 0.0
  %3791 = vmatpush2.msra.mxu0 0.0
  %3792 = vmatprep.subr.mxu0 0.0
  %3793 = vmatpush2.msra.mxu0 0.0
  %3794 = vmatprep.subr.mxu0 0.0
  %3795 = vmatpush2.msra.mxu0 0.0
  %3796 = vmatprep.subr.mxu0 0.0
  %3797 = vmatpush2.msra.mxu0 0.0
  %3798 = vmatprep.subr.mxu0 0.0
  %3799 = vmatpush2.msra.mxu0 0.0
  %3800 = vmatprep.mubr.f32.mxu0 0.0
  %3801 = vmatmul.mubr.f32.gmra.mxu0 %v3732
  %v3802 = vpop.f32.mrf.mxu0
  %v3803 = vadd.f32 0.0, %v3802
  %v3804 = vpop.f32.mrf.mxu0
  %3805 = vdwg.mxu0
  %3807 = vrot.lane.b32.xlu0 %v3803, 32
  %v3808 = vpop.permute.xlu0 %3807
  %v3810 = vsel %vm204, %v3636, %v3808
  %v3811 = vpack.c.bf16 %v3810, %v3810
  %v3813 = vsel %vm689, %v3811, 0
  %3815 = vmatprep.subr.bf16.mxu0 0
  %3816 = vmatpush1.bf16.msra.mxu0 0
  %3817 = vmatprep.subr.bf16.mxu0 0
  %3818 = vmatpush1.bf16.msra.mxu0 0
  %3819 = vmatprep.subr.bf16.mxu0 0
  %3820 = vmatpush1.bf16.msra.mxu0 0
  %3821 = vmatprep.subr.bf16.mxu0 0
  %3822 = vmatpush1.bf16.msra.mxu0 0
  %3823 = vmatprep.subr.bf16.mxu0 0
  %3824 = vmatpush1.bf16.msra.mxu0 %v1247
  %3825 = vmatprep.subr.bf16.mxu0 0
  %3826 = vmatpush1.bf16.msra.mxu0 %v1246
  %3827 = vmatprep.subr.bf16.mxu0 0
  %3828 = vmatpush1.bf16.msra.mxu0 %v1245
  %3829 = vmatprep.subr.bf16.mxu0 0
  %3830 = vmatpush1.bf16.msra.mxu0 %v1244
  %3831 = vmatprep.subr.bf16.mxu0 0
  %3832 = vmatpush2.bf16.msra.mxu0 0
  %3833 = vmatprep.subr.bf16.mxu0 0
  %3834 = vmatpush2.bf16.msra.mxu0 0
  %3835 = vmatprep.subr.bf16.mxu0 0
  %3836 = vmatpush2.bf16.msra.mxu0 0
  %3837 = vmatprep.subr.bf16.mxu0 0
  %3838 = vmatpush2.bf16.msra.mxu0 0
  %3839 = vmatprep.subr.bf16.mxu0 0
  %3840 = vmatpush2.bf16.msra.mxu0 0
  %3841 = vmatprep.subr.bf16.mxu0 0
  %3842 = vmatpush2.bf16.msra.mxu0 0
  %3843 = vmatprep.subr.bf16.mxu0 0
  %3844 = vmatpush2.bf16.msra.mxu0 0
  %3845 = vmatprep.subr.bf16.mxu0 0
  %3846 = vmatpush2.bf16.msra.mxu0 0
  %3847 = vmatprep.mubr.bf16.mxu0 0
  %3848 = vmatmul.mubr.bf16.gmra.mxu0 %v3813
  %v3849 = vpop.f32.mrf.mxu0
  %v3850 = vadd.f32 0.0, %v3849
  %v3851 = vpop.f32.mrf.mxu0
  %v3852 = vpop.f32.mrf.mxu0
  %v3853 = vpop.f32.mrf.mxu0
  %3854 = vdwg.mxu0
  %v3855 = vadd.f32 %v3385, %v3850
  %v3856 = vsel %vm734, %v3855, 0.0
  %3857 = vadd.xlane.f32.xlu0 %v3856
  %v3858 = vpop.xlane.xlu0 %3857
  %v3859 = vmul.f32 %v3858, %v738
  %v3860 = vsub.f32 %v3855, %v3859
  %v3861 = vmul.f32 %v3860, %v3860
  %v3862 = vsel %vm734, %v3861, 0.0
  %3863 = vadd.xlane.f32.xlu0 %v3862
  %v3864 = vpop.xlane.xlu0 %3863
  %v3865 = vmul.f32 %v3864, %v738
  %v3866 = vadd.f32 %v3865, 1e-06
  %v3867 = vrsqrt.pop %v3866
  %v3868 = vmul.f32 %v3860, %v3867
  %v3869 = vmul.f32 %v3868, %v1312
  %v3870 = vadd.f32 %v3869, %v1317
  %v3871 = vpack.c.bf16 %v3870, %v3870
  %v3873 = vsel %vm204, %v3871, 0
  %3875 = vmatprep.subr.bf16.mxu0 0
  %3876 = vmatpush1.bf16.msra.mxu0 0
  %3877 = vmatprep.subr.bf16.mxu0 0
  %3878 = vmatpush1.bf16.msra.mxu0 0
  %3879 = vmatprep.subr.bf16.mxu0 0
  %3880 = vmatpush1.bf16.msra.mxu0 0
  %3881 = vmatprep.subr.bf16.mxu0 0
  %3882 = vmatpush1.bf16.msra.mxu0 0
  %3883 = vmatprep.subr.bf16.mxu0 0
  %3884 = vmatpush1.bf16.msra.mxu0 0
  %3885 = vmatprep.subr.bf16.mxu0 0
  %3886 = vmatpush1.bf16.msra.mxu0 0
  %3887 = vmatprep.subr.bf16.mxu0 0
  %3888 = vmatpush1.bf16.msra.mxu0 %v1339
  %3889 = vmatprep.subr.bf16.mxu0 0
  %3890 = vmatpush1.bf16.msra.mxu0 %v1338
  %3891 = vmatprep.subr.bf16.mxu0 0
  %3892 = vmatpush2.bf16.msra.mxu0 0
  %3893 = vmatprep.subr.bf16.mxu0 0
  %3894 = vmatpush2.bf16.msra.mxu0 0
  %3895 = vmatprep.subr.bf16.mxu0 0
  %3896 = vmatpush2.bf16.msra.mxu0 0
  %3897 = vmatprep.subr.bf16.mxu0 0
  %3898 = vmatpush2.bf16.msra.mxu0 0
  %3899 = vmatprep.subr.bf16.mxu0 0
  %3900 = vmatpush2.bf16.msra.mxu0 0
  %3901 = vmatprep.subr.bf16.mxu0 0
  %3902 = vmatpush2.bf16.msra.mxu0 0
  %3903 = vmatprep.subr.bf16.mxu0 0
  %3904 = vmatpush2.bf16.msra.mxu0 0
  %3905 = vmatprep.subr.bf16.mxu0 0
  %3906 = vmatpush2.bf16.msra.mxu0 0
  %3907 = vmatprep.mubr.bf16.mxu0 0
  %3908 = vmatmul.mubr.bf16.gmra.mxu0 %v3873
  %v3909 = vpop.f32.mrf.mxu0
  %v3910 = vadd.f32 %v1328, %v3909
  %v3911 = vpop.f32.mrf.mxu0
  %v3912 = vpop.f32.mrf.mxu0
  %v3913 = vpop.f32.mrf.mxu0
  %3914 = vdwg.mxu0
  %v3915 = vmax.f32 %v3910, 0.0
  %v3916 = vpack.c.bf16 %v3915, %v3915
  %v3918 = vsel %vm689, %v3916, 0
  %3920 = vmatprep.subr.bf16.mxu0 0
  %3921 = vmatpush1.bf16.msra.mxu0 0
  %3922 = vmatprep.subr.bf16.mxu0 0
  %3923 = vmatpush1.bf16.msra.mxu0 0
  %3924 = vmatprep.subr.bf16.mxu0 0
  %3925 = vmatpush1.bf16.msra.mxu0 0
  %3926 = vmatprep.subr.bf16.mxu0 0
  %3927 = vmatpush1.bf16.msra.mxu0 0
  %3928 = vmatprep.subr.bf16.mxu0 0
  %3929 = vmatpush1.bf16.msra.mxu0 %v1414
  %3930 = vmatprep.subr.bf16.mxu0 0
  %3931 = vmatpush1.bf16.msra.mxu0 %v1413
  %3932 = vmatprep.subr.bf16.mxu0 0
  %3933 = vmatpush1.bf16.msra.mxu0 %v1412
  %3934 = vmatprep.subr.bf16.mxu0 0
  %3935 = vmatpush1.bf16.msra.mxu0 %v1411
  %3936 = vmatprep.subr.bf16.mxu0 0
  %3937 = vmatpush2.bf16.msra.mxu0 0
  %3938 = vmatprep.subr.bf16.mxu0 0
  %3939 = vmatpush2.bf16.msra.mxu0 0
  %3940 = vmatprep.subr.bf16.mxu0 0
  %3941 = vmatpush2.bf16.msra.mxu0 0
  %3942 = vmatprep.subr.bf16.mxu0 0
  %3943 = vmatpush2.bf16.msra.mxu0 0
  %3944 = vmatprep.subr.bf16.mxu0 0
  %3945 = vmatpush2.bf16.msra.mxu0 0
  %3946 = vmatprep.subr.bf16.mxu0 0
  %3947 = vmatpush2.bf16.msra.mxu0 0
  %3948 = vmatprep.subr.bf16.mxu0 0
  %3949 = vmatpush2.bf16.msra.mxu0 0
  %3950 = vmatprep.subr.bf16.mxu0 0
  %3951 = vmatpush2.bf16.msra.mxu0 0
  %3952 = vmatprep.mubr.bf16.mxu0 0
  %3953 = vmatmul.mubr.bf16.gmra.mxu0 %v3918
  %v3954 = vpop.f32.mrf.mxu0
  %v3955 = vadd.f32 %v1420, %v3954
  %v3956 = vpop.f32.mrf.mxu0
  %v3957 = vpop.f32.mrf.mxu0
  %v3958 = vpop.f32.mrf.mxu0
  %3959 = vdwg.mxu0
  %v3960 = vadd.f32 %v3955, %v3870
  %v3961 = vsel %vm734, %v3960, 0.0
  %3962 = vadd.xlane.f32.xlu0 %v3961
  %v3963 = vpop.xlane.xlu0 %3962
  %v3964 = vmul.f32 %v3963, %v738
  %v3965 = vsub.f32 %v3960, %v3964
  %v3966 = vmul.f32 %v3965, %v3965
  %v3967 = vsel %vm734, %v3966, 0.0
  %3968 = vadd.xlane.f32.xlu0 %v3967
  %v3969 = vpop.xlane.xlu0 %3968
  %v3970 = vmul.f32 %v3969, %v738
  %v3971 = vadd.f32 %v3970, 1e-06
  %v3972 = vrsqrt.pop %v3971
  %v3973 = vmul.f32 %v3965, %v3972
  %v3974 = vmul.f32 %v3973, %v1482
  %v3975 = vadd.f32 %v3974, %v1487
  %v3976 = vld [vmem:[%s29] sm:$0xff]
  %v3978 = vsel %vm404, %v3976, 0
  %v3981 = vsel %vm408, %v3975, 0
  %3983 = vmatprep.subr.mxu0 0.0
  %3984 = vmatpush1.msra.mxu0 0.0
  %3985 = vmatprep.subr.mxu0 0.0
  %3986 = vmatpush1.msra.mxu0 0.0
  %3987 = vmatprep.subr.mxu0 0.0
  %3988 = vmatpush1.msra.mxu0 0.0
  %3989 = vmatprep.subr.mxu0 0.0
  %3990 = vmatpush1.msra.mxu0 0.0
  %3991 = vmatprep.subr.mxu0 0.0
  %3992 = vmatpush1.msra.mxu0 0.0
  %3993 = vmatprep.subr.mxu0 0.0
  %3994 = vmatpush1.msra.mxu0 0.0
  %3995 = vmatprep.subr.mxu0 0.0
  %3996 = vmatpush1.msra.mxu0 0.0
  %3997 = vmatprep.subr.mxu0 0.0
  %3998 = vmatpush1.msra.mxu0 0.0
  %3999 = vmatprep.subr.mxu0 0.0
  %4000 = vmatpush1.msra.mxu0 0.0
  %4001 = vmatprep.subr.mxu0 0.0
  %4002 = vmatpush1.msra.mxu0 0.0
  %4003 = vmatprep.subr.mxu0 0.0
  %4004 = vmatpush1.msra.mxu0 0.0
  %4005 = vmatprep.subr.mxu0 0.0
  %4006 = vmatpush1.msra.mxu0 0.0
  %4007 = vmatprep.subr.mxu0 0.0
  %4008 = vmatpush1.msra.mxu0 0.0
  %4009 = vmatprep.subr.mxu0 0.0
  %4010 = vmatpush1.msra.mxu0 0.0
  %4011 = vmatprep.subr.mxu0 0.0
  %4012 = vmatpush1.msra.mxu0 0.0
  %4013 = vmatprep.subr.mxu0 0.0
  %4014 = vmatpush1.msra.mxu0 %v3981
  %4015 = vmatprep.subr.mxu0 0.0
  %4016 = vmatpush2.msra.mxu0 0.0
  %4017 = vmatprep.subr.mxu0 0.0
  %4018 = vmatpush2.msra.mxu0 0.0
  %4019 = vmatprep.subr.mxu0 0.0
  %4020 = vmatpush2.msra.mxu0 0.0
  %4021 = vmatprep.subr.mxu0 0.0
  %4022 = vmatpush2.msra.mxu0 0.0
  %4023 = vmatprep.subr.mxu0 0.0
  %4024 = vmatpush2.msra.mxu0 0.0
  %4025 = vmatprep.subr.mxu0 0.0
  %4026 = vmatpush2.msra.mxu0 0.0
  %4027 = vmatprep.subr.mxu0 0.0
  %4028 = vmatpush2.msra.mxu0 0.0
  %4029 = vmatprep.subr.mxu0 0.0
  %4030 = vmatpush2.msra.mxu0 0.0
  %4031 = vmatprep.subr.mxu0 0.0
  %4032 = vmatpush2.msra.mxu0 0.0
  %4033 = vmatprep.subr.mxu0 0.0
  %4034 = vmatpush2.msra.mxu0 0.0
  %4035 = vmatprep.subr.mxu0 0.0
  %4036 = vmatpush2.msra.mxu0 0.0
  %4037 = vmatprep.subr.mxu0 0.0
  %4038 = vmatpush2.msra.mxu0 0.0
  %4039 = vmatprep.subr.mxu0 0.0
  %4040 = vmatpush2.msra.mxu0 0.0
  %4041 = vmatprep.subr.mxu0 0.0
  %4042 = vmatpush2.msra.mxu0 0.0
  %4043 = vmatprep.subr.mxu0 0.0
  %4044 = vmatpush2.msra.mxu0 0.0
  %4045 = vmatprep.subr.mxu0 0.0
  %4046 = vmatpush2.msra.mxu0 0.0
  %4047 = vmatprep.mubr.f32.mxu0 0.0
  %4048 = vmatmul.mubr.f32.gmra.mxu0 %v3978
  %v4049 = vpop.f32.mrf.mxu0
  %v4050 = vadd.f32 0.0, %v4049
  %v4051 = vpop.f32.mrf.mxu0
  %4052 = vdwg.mxu0
  %4054 = vrot.lane.b32.xlu0 %v4050, 32
  %v4055 = vpop.permute.xlu0 %4054
  %4058 = vrot.lane.b32.xlu0 %v2806, 64
  %v4059 = vpop.permute.xlu0 %4058
  %v4061 = vsel %vm204, %v2881, %v4055
  %v4062 = vsel %vm689, %v4061, %v4059
  %v4063 = vpack.c.bf16 %v4062, %v4062
  %v4064 = vld [vmem:[%s69] sm:$0xff]
  %v4065 = vld [vmem:[%s69 + $0x8] sm:$0xff]
  %v4066 = vld [vmem:[%s69 + $0x10] sm:$0xff]
  %v4067 = vld [vmem:[%s69 + $0x18] sm:$0xff]
  %v4068 = vld [vmem:[%s69 + $0x20] sm:$0xff]
  %v4069 = vld [vmem:[%s69 + $0x28] sm:$0xff]
  %v4070 = vld [vmem:[%s69 + $0x30] sm:$0xff]
  %v4071 = vld [vmem:[%s69 + $0x38] sm:$0xff]
  %v4072 = vld [vmem:[%s69 + $0x40] sm:$0xff]
  %v4073 = vld [vmem:[%s69 + $0x48] sm:$0xff]
  %v4074 = vld [vmem:[%s69 + $0x50] sm:$0xff]
  %v4075 = vld [vmem:[%s69 + $0x58] sm:$0xff]
  %v4088 = vunpack.c.l.b16 %v4064
  %v4089 = vunpack.c.h.b16 %v4064
  %v4090 = vunpack.c.l.b16 %v4065
  %v4091 = vunpack.c.h.b16 %v4065
  %v4092 = vunpack.c.l.b16 %v4066
  %v4093 = vunpack.c.h.b16 %v4066
  %v4094 = vunpack.c.l.b16 %v4067
  %v4095 = vunpack.c.h.b16 %v4067
  %v4096 = vunpack.c.l.b16 %v4068
  %v4097 = vunpack.c.h.b16 %v4068
  %v4098 = vunpack.c.l.b16 %v4069
  %v4099 = vunpack.c.h.b16 %v4069
  %v4100 = vunpack.c.l.b16 %v4070
  %v4101 = vunpack.c.h.b16 %v4070
  %v4102 = vunpack.c.l.b16 %v4071
  %v4103 = vunpack.c.h.b16 %v4071
  %v4104 = vunpack.c.l.b16 %v4072
  %v4105 = vunpack.c.h.b16 %v4072
  %v4106 = vunpack.c.l.b16 %v4073
  %v4107 = vunpack.c.h.b16 %v4073
  %v4108 = vunpack.c.l.b16 %v4074
  %v4109 = vunpack.c.h.b16 %v4074
  %v4110 = vunpack.c.l.b16 %v4075
  %v4111 = vunpack.c.h.b16 %v4075
  %v4112 = vpack.c.b16 %v4090, %v4088
  %v4113 = vpack.c.b16 %v4091, %v4089
  %v4114 = vpack.c.b16 %v4094, %v4092
  %v4115 = vpack.c.b16 %v4095, %v4093
  %v4116 = vpack.c.b16 %v4098, %v4096
  %v4117 = vpack.c.b16 %v4099, %v4097
  %v4118 = vpack.c.b16 %v4102, %v4100
  %v4119 = vpack.c.b16 %v4103, %v4101
  %v4120 = vpack.c.b16 %v4106, %v4104
  %v4121 = vpack.c.b16 %v4107, %v4105
  %v4122 = vpack.c.b16 %v4110, %v4108
  %v4123 = vpack.c.b16 %v4111, %v4109
  %vm4136 = vcmask 785408
  %v4138 = vsel %vm4136, %v4063, 0
  %4140 = vmatprep.subr.bf16.mxu0 0
  %4141 = vmatpush1.bf16.msra.mxu0 0
  %4142 = vmatprep.subr.bf16.mxu0 0
  %4143 = vmatpush1.bf16.msra.mxu0 0
  %4144 = vmatprep.subr.bf16.mxu0 %v4123
  %4145 = vmatpush1.bf16.msra.mxu0 %v4122
  %4146 = vmatprep.subr.bf16.mxu0 %v4121
  %4147 = vmatpush1.bf16.msra.mxu0 %v4120
  %4148 = vmatprep.subr.bf16.mxu0 %v4119
  %4149 = vmatpush1.bf16.msra.mxu0 %v4118
  %4150 = vmatprep.subr.bf16.mxu0 %v4117
  %4151 = vmatpush1.bf16.msra.mxu0 %v4116
  %4152 = vmatprep.subr.bf16.mxu0 %v4115
  %4153 = vmatpush1.bf16.msra.mxu0 %v4114
  %4154 = vmatprep.subr.bf16.mxu0 %v4113
  %4155 = vmatpush1.bf16.msra.mxu0 %v4112
  %4156 = vmatprep.subr.bf16.mxu0 0
  %4157 = vmatpush2.bf16.msra.mxu0 0
  %4158 = vmatprep.subr.bf16.mxu0 0
  %4159 = vmatpush2.bf16.msra.mxu0 0
  %4160 = vmatprep.subr.bf16.mxu0 0
  %4161 = vmatpush2.bf16.msra.mxu0 0
  %4162 = vmatprep.subr.bf16.mxu0 0
  %4163 = vmatpush2.bf16.msra.mxu0 0
  %4164 = vmatprep.subr.bf16.mxu0 0
  %4165 = vmatpush2.bf16.msra.mxu0 0
  %4166 = vmatprep.subr.bf16.mxu0 0
  %4167 = vmatpush2.bf16.msra.mxu0 0
  %4168 = vmatprep.subr.bf16.mxu0 0
  %4169 = vmatpush2.bf16.msra.mxu0 0
  %4170 = vmatprep.subr.bf16.mxu0 0
  %4171 = vmatpush2.bf16.msra.mxu0 0
  %4172 = vmatprep.mubr.bf16.mxu0 0
  %4173 = vmatmul.mubr.bf16.gmra.mxu0 %v4138
  %v4174 = vpop.f32.mrf.mxu0
  %v4175 = vadd.f32 0.0, %v4174
  %v4176 = vpop.f32.mrf.mxu0
  %v4177 = vadd.f32 0.0, %v4176
  %v4178 = vpop.f32.mrf.mxu0
  %v4179 = vpop.f32.mrf.mxu0
  %4180 = vdwg.mxu0
  %v4181 = vtanh.pop %v4175
  %v4182 = vxor.u32 %v4175, 2147483648
  %v4183 = vxor.u32 %v4177, 2147483648
  %v4184 = vmul.f32 %v4182, 1.442695
  %v4185 = vpow.pop %v4184
  %v4186 = vmul.f32 %v4183, 1.442695
  %v4187 = vpow.pop %v4186
  %v4188 = vadd.f32 %v4185, 1.0
  %v4189 = vadd.f32 %v4187, 1.0
  %v4190 = vrcp.pop %v4188
  %v4191 = vmul.f32 1.0, %v4190
  %v4192 = vrcp.pop %v4189
  %v4193 = vmul.f32 1.0, %v4192
  %v4194 = vld [vmem:[%s31] sm:$0xff]
  %4197 = vrot.lane.b32.xlu0 %v4191, 32
  %v4198 = vpop.permute.xlu0 %4197
  %4199 = vrot.lane.b32.xlu0 %v4193, 32
  %v4200 = vpop.permute.xlu0 %4199
  %v4201 = vsel %vm204, %v4198, %v4200
  %v4203 = vmul.f32 %v4194, %v4201
  %v4204 = vmul.f32 %v4203, %v4181
  %4206 = vrot.lane.b32.xlu0 %v4204, 96
  %v4207 = vpop.permute.xlu0 %4206
  %v4209 = vadd.f32 %v4204, %v4207
  %4210 = vrot.lane.b32.xlu0 %v4204, 64
  %v4211 = vpop.permute.xlu0 %4210
  %v4213 = vadd.f32 %v4209, %v4211
  %v4214 = vxor.u32 %v4213, 2147483648
  %v4215 = vmul.f32 %v4214, 1.442695
  %v4216 = vpow.pop %v4215
  %v4217 = vadd.f32 %v4216, 1.0
  %v4218 = vrcp.pop %v4217
  %v4219 = vmul.f32 1.0, %v4218
  %v4220 = vld [vmem:[%s25] sm:$0xff]
  %v4221 = vadd.f32 %v4219, %v4220
  %v4222 = vpack.c.bf16 %v4221, %v4221
  %v4223 = vld [vmem:[%s71] sm:$0xf]
  %v4224 = vld [vmem:[%s71 + $0x4] sm:$0xf]
  %v4225 = vld [vmem:[%s71 + $0x8] sm:$0xf]
  %v4226 = vld [vmem:[%s71 + $0xc] sm:$0xf]
  %v4231 = vunpack.c.l.b16 %v4223
  %v4232 = vunpack.c.l.b16 %v4224
  %v4233 = vunpack.c.l.b16 %v4225
  %v4234 = vunpack.c.l.b16 %v4226
  %v4235 = vpack.c.b16 %v4232, %v4231
  %v4236 = vpack.c.b16 %v4234, %v4233
  %v4240 = vsel %vm204, %v4222, 0
  %4242 = vmatprep.subr.bf16.mxu0 0
  %4243 = vmatpush1.bf16.msra.mxu0 0
  %4244 = vmatprep.subr.bf16.mxu0 0
  %4245 = vmatpush1.bf16.msra.mxu0 0
  %4246 = vmatprep.subr.bf16.mxu0 0
  %4247 = vmatpush1.bf16.msra.mxu0 0
  %4248 = vmatprep.subr.bf16.mxu0 0
  %4249 = vmatpush1.bf16.msra.mxu0 0
  %4250 = vmatprep.subr.bf16.mxu0 0
  %4251 = vmatpush1.bf16.msra.mxu0 0
  %4252 = vmatprep.subr.bf16.mxu0 0
  %4253 = vmatpush1.bf16.msra.mxu0 0
  %4254 = vmatprep.subr.bf16.mxu0 0
  %4255 = vmatpush1.bf16.msra.mxu0 %v4236
  %4256 = vmatprep.subr.bf16.mxu0 0
  %4257 = vmatpush1.bf16.msra.mxu0 %v4235
  %4258 = vmatprep.subr.bf16.mxu0 0
  %4259 = vmatpush2.bf16.msra.mxu0 0
  %4260 = vmatprep.subr.bf16.mxu0 0
  %4261 = vmatpush2.bf16.msra.mxu0 0
  %4262 = vmatprep.subr.bf16.mxu0 0
  %4263 = vmatpush2.bf16.msra.mxu0 0
  %4264 = vmatprep.subr.bf16.mxu0 0
  %4265 = vmatpush2.bf16.msra.mxu0 0
  %4266 = vmatprep.subr.bf16.mxu0 0
  %4267 = vmatpush2.bf16.msra.mxu0 0
  %4268 = vmatprep.subr.bf16.mxu0 0
  %4269 = vmatpush2.bf16.msra.mxu0 0
  %4270 = vmatprep.subr.bf16.mxu0 0
  %4271 = vmatpush2.bf16.msra.mxu0 0
  %4272 = vmatprep.subr.bf16.mxu0 0
  %4273 = vmatpush2.bf16.msra.mxu0 0
  %4274 = vmatprep.mubr.bf16.mxu0 0
  %4275 = vmatmul.mubr.bf16.gmra.mxu0 %v4240
  %v4276 = vpop.f32.mrf.mxu0
  %v4277 = vadd.f32 0.0, %v4276
  %v4278 = vpop.f32.mrf.mxu0
  %v4279 = vpop.f32.mrf.mxu0
  %v4280 = vpop.f32.mrf.mxu0
  %4281 = vdwg.mxu0
  %4282 = vst [vmem:[%s73] sm:$0xff] %v4277
  %s4283 = scalar_lea.vmem %s1, 4
  %v4284 = vld [vmem:[%s4283] sm:$0xf]
  %s4285 = scalar_lea.vmem %s3, 4
  %v4286 = vld [vmem:[%s4285] sm:$0xf]
  %s4287 = scalar_lea.vmem %s13, 2
  %v4288 = vld [vmem:[%s4287] sm:$0x3]
  %v4289 = vlaneseq
  %v4290 = vshrl.u32 %v4289, 7
  %v4291 = vsub.s32 1, %v4290
  %v4292 = vrot.slane %v163, %v4291
  %vm4293 = vcmp.eq.s32.totalorder %v4292, 1
  %vm4294 = vmand %vm161, %vm4293
  %v4295 = vsel %vm4294, 0.0, -1e+09
  %v4296 = vld [vmem:[%s49] sm:$0x3f]
  %v4297 = vld [vmem:[%s47] sm:$0x1]
  %v4298 = vpack.c.bf16 %v4284, %v4284
  %v4299 = vpack.c.bf16 %v4286, %v4286
  %v4300 = vld [vmem:[%s33] sm:$0xff]
  %v4301 = vld [vmem:[%s33 + $0x8] sm:$0xff]
  %v4302 = vld [vmem:[%s33 + $0x10] sm:$0xff]
  %v4303 = vld [vmem:[%s33 + $0x18] sm:$0xff]
  %v4304 = vld [vmem:[%s179] sm:$0xff]
  %v4305 = vld [vmem:[%s179 + $0x8] sm:$0xff]
  %v4306 = vld [vmem:[%s179 + $0x10] sm:$0xff]
  %v4307 = vld [vmem:[%s179 + $0x18] sm:$0xff]
  %v4312 = vunpack.c.l.b16 %v4304
  %v4313 = vunpack.c.h.b16 %v4304
  %v4314 = vunpack.c.l.b16 %v4305
  %v4315 = vunpack.c.h.b16 %v4305
  %v4316 = vunpack.c.l.b16 %v4306
  %v4317 = vunpack.c.h.b16 %v4306
  %v4318 = vunpack.c.l.b16 %v4307
  %v4319 = vunpack.c.h.b16 %v4307
  %v4320 = vpack.c.b16 %v4314, %v4312
  %v4321 = vpack.c.b16 %v4315, %v4313
  %v4322 = vpack.c.b16 %v4318, %v4316
  %v4323 = vpack.c.b16 %v4319, %v4317
  %v4329 = vsel %vm204, %v4299, 0
  %4331 = vmatprep.subr.bf16.mxu0 0
  %4332 = vmatpush1.bf16.msra.mxu0 0
  %4333 = vmatprep.subr.bf16.mxu0 0
  %4334 = vmatpush1.bf16.msra.mxu0 0
  %4335 = vmatprep.subr.bf16.mxu0 0
  %4336 = vmatpush1.bf16.msra.mxu0 0
  %4337 = vmatprep.subr.bf16.mxu0 0
  %4338 = vmatpush1.bf16.msra.mxu0 0
  %4339 = vmatprep.subr.bf16.mxu0 0
  %4340 = vmatpush1.bf16.msra.mxu0 0
  %4341 = vmatprep.subr.bf16.mxu0 0
  %4342 = vmatpush1.bf16.msra.mxu0 0
  %4343 = vmatprep.subr.bf16.mxu0 %v4323
  %4344 = vmatpush1.bf16.msra.mxu0 %v4322
  %4345 = vmatprep.subr.bf16.mxu0 %v4321
  %4346 = vmatpush1.bf16.msra.mxu0 %v4320
  %4347 = vmatprep.subr.bf16.mxu0 0
  %4348 = vmatpush2.bf16.msra.mxu0 0
  %4349 = vmatprep.subr.bf16.mxu0 0
  %4350 = vmatpush2.bf16.msra.mxu0 0
  %4351 = vmatprep.subr.bf16.mxu0 0
  %4352 = vmatpush2.bf16.msra.mxu0 0
  %4353 = vmatprep.subr.bf16.mxu0 0
  %4354 = vmatpush2.bf16.msra.mxu0 0
  %4355 = vmatprep.subr.bf16.mxu0 0
  %4356 = vmatpush2.bf16.msra.mxu0 0
  %4357 = vmatprep.subr.bf16.mxu0 0
  %4358 = vmatpush2.bf16.msra.mxu0 0
  %4359 = vmatprep.subr.bf16.mxu0 0
  %4360 = vmatpush2.bf16.msra.mxu0 0
  %4361 = vmatprep.subr.bf16.mxu0 0
  %4362 = vmatpush2.bf16.msra.mxu0 0
  %4363 = vmatprep.mubr.bf16.mxu0 0
  %4364 = vmatmul.mubr.bf16.gmra.mxu0 %v4329
  %v4365 = vpop.f32.mrf.mxu0
  %v4366 = vadd.f32 0.0, %v4365
  %v4367 = vpop.f32.mrf.mxu0
  %v4368 = vadd.f32 0.0, %v4367
  %v4369 = vpop.f32.mrf.mxu0
  %v4370 = vpop.f32.mrf.mxu0
  %4371 = vdwg.mxu0
  %v4376 = vunpack.c.l.b16 %v4300
  %v4377 = vunpack.c.h.b16 %v4300
  %v4378 = vunpack.c.l.b16 %v4301
  %v4379 = vunpack.c.h.b16 %v4301
  %v4380 = vunpack.c.l.b16 %v4302
  %v4381 = vunpack.c.h.b16 %v4302
  %v4382 = vunpack.c.l.b16 %v4303
  %v4383 = vunpack.c.h.b16 %v4303
  %v4384 = vpack.c.b16 %v4378, %v4376
  %v4385 = vpack.c.b16 %v4379, %v4377
  %v4386 = vpack.c.b16 %v4382, %v4380
  %v4387 = vpack.c.b16 %v4383, %v4381
  %v4393 = vsel %vm204, %v4298, 0
  %4395 = vmatprep.subr.bf16.mxu0 0
  %4396 = vmatpush1.bf16.msra.mxu0 0
  %4397 = vmatprep.subr.bf16.mxu0 0
  %4398 = vmatpush1.bf16.msra.mxu0 0
  %4399 = vmatprep.subr.bf16.mxu0 0
  %4400 = vmatpush1.bf16.msra.mxu0 0
  %4401 = vmatprep.subr.bf16.mxu0 0
  %4402 = vmatpush1.bf16.msra.mxu0 0
  %4403 = vmatprep.subr.bf16.mxu0 0
  %4404 = vmatpush1.bf16.msra.mxu0 0
  %4405 = vmatprep.subr.bf16.mxu0 0
  %4406 = vmatpush1.bf16.msra.mxu0 0
  %4407 = vmatprep.subr.bf16.mxu0 %v4387
  %4408 = vmatpush1.bf16.msra.mxu0 %v4386
  %4409 = vmatprep.subr.bf16.mxu0 %v4385
  %4410 = vmatpush1.bf16.msra.mxu0 %v4384
  %4411 = vmatprep.subr.bf16.mxu0 0
  %4412 = vmatpush2.bf16.msra.mxu0 0
  %4413 = vmatprep.subr.bf16.mxu0 0
  %4414 = vmatpush2.bf16.msra.mxu0 0
  %4415 = vmatprep.subr.bf16.mxu0 0
  %4416 = vmatpush2.bf16.msra.mxu0 0
  %4417 = vmatprep.subr.bf16.mxu0 0
  %4418 = vmatpush2.bf16.msra.mxu0 0
  %4419 = vmatprep.subr.bf16.mxu0 0
  %4420 = vmatpush2.bf16.msra.mxu0 0
  %4421 = vmatprep.subr.bf16.mxu0 0
  %4422 = vmatpush2.bf16.msra.mxu0 0
  %4423 = vmatprep.subr.bf16.mxu0 0
  %4424 = vmatpush2.bf16.msra.mxu0 0
  %4425 = vmatprep.subr.bf16.mxu0 0
  %4426 = vmatpush2.bf16.msra.mxu0 0
  %4427 = vmatprep.mubr.bf16.mxu0 0
  %4428 = vmatmul.mubr.bf16.gmra.mxu0 %v4393
  %v4429 = vpop.f32.mrf.mxu0
  %v4430 = vadd.f32 %v4366, %v4429
  %v4431 = vpop.f32.mrf.mxu0
  %v4432 = vadd.f32 %v4368, %v4431
  %v4433 = vpop.f32.mrf.mxu0
  %v4434 = vpop.f32.mrf.mxu0
  %4435 = vdwg.mxu0
  %4437 = vrot.lane.b32.xlu0 %v4430, 64
  %v4438 = vpop.permute.xlu0 %4437
  %v4439 = vsel %vm204, %v4430, 0
  %v4441 = vsel %vm204, %v4438, 0
  %4443 = vmatprep.subr.mxu0 0.0
  %4444 = vmatpush1.xpose.msra.mxu0 0.0
  %4445 = vmatprep.subr.mxu0 0.0
  %4446 = vmatpush1.xpose.msra.mxu0 0.0
  %4447 = vmatprep.subr.mxu0 0.0
  %4448 = vmatpush1.xpose.msra.mxu0 0.0
  %4449 = vmatprep.subr.mxu0 0.0
  %4450 = vmatpush1.xpose.msra.mxu0 0.0
  %4451 = vmatprep.subr.mxu0 0.0
  %4452 = vmatpush1.xpose.msra.mxu0 0.0
  %4453 = vmatprep.subr.mxu0 0.0
  %4454 = vmatpush1.xpose.msra.mxu0 0.0
  %4455 = vmatprep.subr.mxu0 0.0
  %4456 = vmatpush1.xpose.msra.mxu0 0.0
  %4457 = vmatprep.subr.mxu0 0.0
  %4458 = vmatpush1.xpose.msra.mxu0 0.0
  %4459 = vmatprep.subr.mxu0 0.0
  %4460 = vmatpush1.xpose.msra.mxu0 0.0
  %4461 = vmatprep.subr.mxu0 0.0
  %4462 = vmatpush1.xpose.msra.mxu0 0.0
  %4463 = vmatprep.subr.mxu0 0.0
  %4464 = vmatpush1.xpose.msra.mxu0 0.0
  %4465 = vmatprep.subr.mxu0 0.0
  %4466 = vmatpush1.xpose.msra.mxu0 0.0
  %4467 = vmatprep.subr.mxu0 0.0
  %4468 = vmatpush1.xpose.msra.mxu0 0.0
  %4469 = vmatprep.subr.mxu0 0.0
  %4470 = vmatpush1.xpose.msra.mxu0 0.0
  %4471 = vmatprep.subr.mxu0 0.0
  %4472 = vmatpush1.xpose.msra.mxu0 0.0
  %4473 = vmatprep.subr.mxu0 0.0
  %4474 = vmatpush1.xpose.msra.mxu0 %v4441
  %4475 = vmatprep.subr.mxu0 0.0
  %4476 = vmatpush2.xpose.msra.mxu0 0.0
  %4477 = vmatprep.subr.mxu0 0.0
  %4478 = vmatpush2.xpose.msra.mxu0 0.0
  %4479 = vmatprep.subr.mxu0 0.0
  %4480 = vmatpush2.xpose.msra.mxu0 0.0
  %4481 = vmatprep.subr.mxu0 0.0
  %4482 = vmatpush2.xpose.msra.mxu0 0.0
  %4483 = vmatprep.subr.mxu0 0.0
  %4484 = vmatpush2.xpose.msra.mxu0 0.0
  %4485 = vmatprep.subr.mxu0 0.0
  %4486 = vmatpush2.xpose.msra.mxu0 0.0
  %4487 = vmatprep.subr.mxu0 0.0
  %4488 = vmatpush2.xpose.msra.mxu0 0.0
  %4489 = vmatprep.subr.mxu0 0.0
  %4490 = vmatpush2.xpose.msra.mxu0 0.0
  %4491 = vmatprep.subr.mxu0 0.0
  %4492 = vmatpush2.xpose.msra.mxu0 0.0
  %4493 = vmatprep.subr.mxu0 0.0
  %4494 = vmatpush2.xpose.msra.mxu0 0.0
  %4495 = vmatprep.subr.mxu0 0.0
  %4496 = vmatpush2.xpose.msra.mxu0 0.0
  %4497 = vmatprep.subr.mxu0 0.0
  %4498 = vmatpush2.xpose.msra.mxu0 0.0
  %4499 = vmatprep.subr.mxu0 0.0
  %4500 = vmatpush2.xpose.msra.mxu0 0.0
  %4501 = vmatprep.subr.mxu0 0.0
  %4502 = vmatpush2.xpose.msra.mxu0 0.0
  %4503 = vmatprep.subr.mxu0 0.0
  %4504 = vmatpush2.xpose.msra.mxu0 0.0
  %4505 = vmatprep.subr.mxu0 0.0
  %4506 = vmatpush2.xpose.msra.mxu0 0.0
  %4507 = vmatprep.mubr.f32.mxu0 0.0
  %4508 = vmatmul.mubr.f32.gmra.mxu0 %v4439
  %v4509 = vpop.f32.mrf.mxu0
  %v4510 = vadd.f32 0.0, %v4509
  %v4511 = vpop.f32.mrf.mxu0
  %4512 = vdwg.mxu0
  %v4513 = vmul.f32 %v4510, 0.17677669
  %v4514 = vadd.f32 %v4513, %v4295
  %v4515 = vsel %vm392, %v4514, -inf
  %4516 = vmax.xlane.f32.xlu0 %v4515
  %v4517 = vpop.xlane.xlu0 %4516
  %v4518 = vsub.f32 %v4514, %v4517
  %v4519 = vmul.f32 %v4518, 1.442695
  %v4520 = vpow.pop %v4519
  %v4521 = vsel %vm392, %v4520, 0.0
  %4522 = vadd.xlane.f32.xlu0 %v4521
  %v4523 = vpop.xlane.xlu0 %4522
  %v4524 = vrcp.pop %v4523
  %v4525 = vmul.f32 %v4520, %v4524
  %v4527 = vsel %vm404, %v4525, 0
  %v4530 = vsel %vm408, %v4432, 0
  %4532 = vmatprep.subr.mxu0 0.0
  %4533 = vmatpush1.msra.mxu0 0.0
  %4534 = vmatprep.subr.mxu0 0.0
  %4535 = vmatpush1.msra.mxu0 0.0
  %4536 = vmatprep.subr.mxu0 0.0
  %4537 = vmatpush1.msra.mxu0 0.0
  %4538 = vmatprep.subr.mxu0 0.0
  %4539 = vmatpush1.msra.mxu0 0.0
  %4540 = vmatprep.subr.mxu0 0.0
  %4541 = vmatpush1.msra.mxu0 0.0
  %4542 = vmatprep.subr.mxu0 0.0
  %4543 = vmatpush1.msra.mxu0 0.0
  %4544 = vmatprep.subr.mxu0 0.0
  %4545 = vmatpush1.msra.mxu0 0.0
  %4546 = vmatprep.subr.mxu0 0.0
  %4547 = vmatpush1.msra.mxu0 0.0
  %4548 = vmatprep.subr.mxu0 0.0
  %4549 = vmatpush1.msra.mxu0 0.0
  %4550 = vmatprep.subr.mxu0 0.0
  %4551 = vmatpush1.msra.mxu0 0.0
  %4552 = vmatprep.subr.mxu0 0.0
  %4553 = vmatpush1.msra.mxu0 0.0
  %4554 = vmatprep.subr.mxu0 0.0
  %4555 = vmatpush1.msra.mxu0 0.0
  %4556 = vmatprep.subr.mxu0 0.0
  %4557 = vmatpush1.msra.mxu0 0.0
  %4558 = vmatprep.subr.mxu0 0.0
  %4559 = vmatpush1.msra.mxu0 0.0
  %4560 = vmatprep.subr.mxu0 0.0
  %4561 = vmatpush1.msra.mxu0 0.0
  %4562 = vmatprep.subr.mxu0 0.0
  %4563 = vmatpush1.msra.mxu0 %v4530
  %4564 = vmatprep.subr.mxu0 0.0
  %4565 = vmatpush2.msra.mxu0 0.0
  %4566 = vmatprep.subr.mxu0 0.0
  %4567 = vmatpush2.msra.mxu0 0.0
  %4568 = vmatprep.subr.mxu0 0.0
  %4569 = vmatpush2.msra.mxu0 0.0
  %4570 = vmatprep.subr.mxu0 0.0
  %4571 = vmatpush2.msra.mxu0 0.0
  %4572 = vmatprep.subr.mxu0 0.0
  %4573 = vmatpush2.msra.mxu0 0.0
  %4574 = vmatprep.subr.mxu0 0.0
  %4575 = vmatpush2.msra.mxu0 0.0
  %4576 = vmatprep.subr.mxu0 0.0
  %4577 = vmatpush2.msra.mxu0 0.0
  %4578 = vmatprep.subr.mxu0 0.0
  %4579 = vmatpush2.msra.mxu0 0.0
  %4580 = vmatprep.subr.mxu0 0.0
  %4581 = vmatpush2.msra.mxu0 0.0
  %4582 = vmatprep.subr.mxu0 0.0
  %4583 = vmatpush2.msra.mxu0 0.0
  %4584 = vmatprep.subr.mxu0 0.0
  %4585 = vmatpush2.msra.mxu0 0.0
  %4586 = vmatprep.subr.mxu0 0.0
  %4587 = vmatpush2.msra.mxu0 0.0
  %4588 = vmatprep.subr.mxu0 0.0
  %4589 = vmatpush2.msra.mxu0 0.0
  %4590 = vmatprep.subr.mxu0 0.0
  %4591 = vmatpush2.msra.mxu0 0.0
  %4592 = vmatprep.subr.mxu0 0.0
  %4593 = vmatpush2.msra.mxu0 0.0
  %4594 = vmatprep.subr.mxu0 0.0
  %4595 = vmatpush2.msra.mxu0 0.0
  %4596 = vmatprep.mubr.f32.mxu0 0.0
  %4597 = vmatmul.mubr.f32.gmra.mxu0 %v4527
  %v4598 = vpop.f32.mrf.mxu0
  %v4599 = vadd.f32 0.0, %v4598
  %v4600 = vpop.f32.mrf.mxu0
  %4601 = vdwg.mxu0
  %4602 = vrot.lane.b32.xlu0 %v4430, 96
  %v4603 = vpop.permute.xlu0 %4602
  %4604 = vrot.lane.b32.xlu0 %v4430, 32
  %v4605 = vpop.permute.xlu0 %4604
  %v4606 = vsel %vm204, %v4603, 0
  %v4608 = vsel %vm204, %v4605, 0
  %4610 = vmatprep.subr.mxu0 0.0
  %4611 = vmatpush1.xpose.msra.mxu0 0.0
  %4612 = vmatprep.subr.mxu0 0.0
  %4613 = vmatpush1.xpose.msra.mxu0 0.0
  %4614 = vmatprep.subr.mxu0 0.0
  %4615 = vmatpush1.xpose.msra.mxu0 0.0
  %4616 = vmatprep.subr.mxu0 0.0
  %4617 = vmatpush1.xpose.msra.mxu0 0.0
  %4618 = vmatprep.subr.mxu0 0.0
  %4619 = vmatpush1.xpose.msra.mxu0 0.0
  %4620 = vmatprep.subr.mxu0 0.0
  %4621 = vmatpush1.xpose.msra.mxu0 0.0
  %4622 = vmatprep.subr.mxu0 0.0
  %4623 = vmatpush1.xpose.msra.mxu0 0.0
  %4624 = vmatprep.subr.mxu0 0.0
  %4625 = vmatpush1.xpose.msra.mxu0 0.0
  %4626 = vmatprep.subr.mxu0 0.0
  %4627 = vmatpush1.xpose.msra.mxu0 0.0
  %4628 = vmatprep.subr.mxu0 0.0
  %4629 = vmatpush1.xpose.msra.mxu0 0.0
  %4630 = vmatprep.subr.mxu0 0.0
  %4631 = vmatpush1.xpose.msra.mxu0 0.0
  %4632 = vmatprep.subr.mxu0 0.0
  %4633 = vmatpush1.xpose.msra.mxu0 0.0
  %4634 = vmatprep.subr.mxu0 0.0
  %4635 = vmatpush1.xpose.msra.mxu0 0.0
  %4636 = vmatprep.subr.mxu0 0.0
  %4637 = vmatpush1.xpose.msra.mxu0 0.0
  %4638 = vmatprep.subr.mxu0 0.0
  %4639 = vmatpush1.xpose.msra.mxu0 0.0
  %4640 = vmatprep.subr.mxu0 0.0
  %4641 = vmatpush1.xpose.msra.mxu0 %v4608
  %4642 = vmatprep.subr.mxu0 0.0
  %4643 = vmatpush2.xpose.msra.mxu0 0.0
  %4644 = vmatprep.subr.mxu0 0.0
  %4645 = vmatpush2.xpose.msra.mxu0 0.0
  %4646 = vmatprep.subr.mxu0 0.0
  %4647 = vmatpush2.xpose.msra.mxu0 0.0
  %4648 = vmatprep.subr.mxu0 0.0
  %4649 = vmatpush2.xpose.msra.mxu0 0.0
  %4650 = vmatprep.subr.mxu0 0.0
  %4651 = vmatpush2.xpose.msra.mxu0 0.0
  %4652 = vmatprep.subr.mxu0 0.0
  %4653 = vmatpush2.xpose.msra.mxu0 0.0
  %4654 = vmatprep.subr.mxu0 0.0
  %4655 = vmatpush2.xpose.msra.mxu0 0.0
  %4656 = vmatprep.subr.mxu0 0.0
  %4657 = vmatpush2.xpose.msra.mxu0 0.0
  %4658 = vmatprep.subr.mxu0 0.0
  %4659 = vmatpush2.xpose.msra.mxu0 0.0
  %4660 = vmatprep.subr.mxu0 0.0
  %4661 = vmatpush2.xpose.msra.mxu0 0.0
  %4662 = vmatprep.subr.mxu0 0.0
  %4663 = vmatpush2.xpose.msra.mxu0 0.0
  %4664 = vmatprep.subr.mxu0 0.0
  %4665 = vmatpush2.xpose.msra.mxu0 0.0
  %4666 = vmatprep.subr.mxu0 0.0
  %4667 = vmatpush2.xpose.msra.mxu0 0.0
  %4668 = vmatprep.subr.mxu0 0.0
  %4669 = vmatpush2.xpose.msra.mxu0 0.0
  %4670 = vmatprep.subr.mxu0 0.0
  %4671 = vmatpush2.xpose.msra.mxu0 0.0
  %4672 = vmatprep.subr.mxu0 0.0
  %4673 = vmatpush2.xpose.msra.mxu0 0.0
  %4674 = vmatprep.mubr.f32.mxu0 0.0
  %4675 = vmatmul.mubr.f32.gmra.mxu0 %v4606
  %v4676 = vpop.f32.mrf.mxu0
  %v4677 = vadd.f32 0.0, %v4676
  %v4678 = vpop.f32.mrf.mxu0
  %4679 = vdwg.mxu0
  %v4680 = vmul.f32 %v4677, 0.17677669
  %v4681 = vadd.f32 %v4680, %v4295
  %v4682 = vsel %vm392, %v4681, -inf
  %4683 = vmax.xlane.f32.xlu0 %v4682
  %v4684 = vpop.xlane.xlu0 %4683
  %v4685 = vsub.f32 %v4681, %v4684
  %v4686 = vmul.f32 %v4685, 1.442695
  %v4687 = vpow.pop %v4686
  %v4688 = vsel %vm392, %v4687, 0.0
  %4689 = vadd.xlane.f32.xlu0 %v4688
  %v4690 = vpop.xlane.xlu0 %4689
  %v4691 = vrcp.pop %v4690
  %v4692 = vmul.f32 %v4687, %v4691
  %4693 = vrot.lane.b32.xlu0 %v4432, 96
  %v4694 = vpop.permute.xlu0 %4693
  %v4696 = vsel %vm404, %v4692, 0
  %v4698 = vsel %vm408, %v4694, 0
  %4700 = vmatprep.subr.mxu0 0.0
  %4701 = vmatpush1.msra.mxu0 0.0
  %4702 = vmatprep.subr.mxu0 0.0
  %4703 = vmatpush1.msra.mxu0 0.0
  %4704 = vmatprep.subr.mxu0 0.0
  %4705 = vmatpush1.msra.mxu0 0.0
  %4706 = vmatprep.subr.mxu0 0.0
  %4707 = vmatpush1.msra.mxu0 0.0
  %4708 = vmatprep.subr.mxu0 0.0
  %4709 = vmatpush1.msra.mxu0 0.0
  %4710 = vmatprep.subr.mxu0 0.0
  %4711 = vmatpush1.msra.mxu0 0.0
  %4712 = vmatprep.subr.mxu0 0.0
  %4713 = vmatpush1.msra.mxu0 0.0
  %4714 = vmatprep.subr.mxu0 0.0
  %4715 = vmatpush1.msra.mxu0 0.0
  %4716 = vmatprep.subr.mxu0 0.0
  %4717 = vmatpush1.msra.mxu0 0.0
  %4718 = vmatprep.subr.mxu0 0.0
  %4719 = vmatpush1.msra.mxu0 0.0
  %4720 = vmatprep.subr.mxu0 0.0
  %4721 = vmatpush1.msra.mxu0 0.0
  %4722 = vmatprep.subr.mxu0 0.0
  %4723 = vmatpush1.msra.mxu0 0.0
  %4724 = vmatprep.subr.mxu0 0.0
  %4725 = vmatpush1.msra.mxu0 0.0
  %4726 = vmatprep.subr.mxu0 0.0
  %4727 = vmatpush1.msra.mxu0 0.0
  %4728 = vmatprep.subr.mxu0 0.0
  %4729 = vmatpush1.msra.mxu0 0.0
  %4730 = vmatprep.subr.mxu0 0.0
  %4731 = vmatpush1.msra.mxu0 %v4698
  %4732 = vmatprep.subr.mxu0 0.0
  %4733 = vmatpush2.msra.mxu0 0.0
  %4734 = vmatprep.subr.mxu0 0.0
  %4735 = vmatpush2.msra.mxu0 0.0
  %4736 = vmatprep.subr.mxu0 0.0
  %4737 = vmatpush2.msra.mxu0 0.0
  %4738 = vmatprep.subr.mxu0 0.0
  %4739 = vmatpush2.msra.mxu0 0.0
  %4740 = vmatprep.subr.mxu0 0.0
  %4741 = vmatpush2.msra.mxu0 0.0
  %4742 = vmatprep.subr.mxu0 0.0
  %4743 = vmatpush2.msra.mxu0 0.0
  %4744 = vmatprep.subr.mxu0 0.0
  %4745 = vmatpush2.msra.mxu0 0.0
  %4746 = vmatprep.subr.mxu0 0.0
  %4747 = vmatpush2.msra.mxu0 0.0
  %4748 = vmatprep.subr.mxu0 0.0
  %4749 = vmatpush2.msra.mxu0 0.0
  %4750 = vmatprep.subr.mxu0 0.0
  %4751 = vmatpush2.msra.mxu0 0.0
  %4752 = vmatprep.subr.mxu0 0.0
  %4753 = vmatpush2.msra.mxu0 0.0
  %4754 = vmatprep.subr.mxu0 0.0
  %4755 = vmatpush2.msra.mxu0 0.0
  %4756 = vmatprep.subr.mxu0 0.0
  %4757 = vmatpush2.msra.mxu0 0.0
  %4758 = vmatprep.subr.mxu0 0.0
  %4759 = vmatpush2.msra.mxu0 0.0
  %4760 = vmatprep.subr.mxu0 0.0
  %4761 = vmatpush2.msra.mxu0 0.0
  %4762 = vmatprep.subr.mxu0 0.0
  %4763 = vmatpush2.msra.mxu0 0.0
  %4764 = vmatprep.mubr.f32.mxu0 0.0
  %4765 = vmatmul.mubr.f32.gmra.mxu0 %v4696
  %v4766 = vpop.f32.mrf.mxu0
  %v4767 = vadd.f32 0.0, %v4766
  %v4768 = vpop.f32.mrf.mxu0
  %4769 = vdwg.mxu0
  %4771 = vrot.lane.b32.xlu0 %v4767, 32
  %v4772 = vpop.permute.xlu0 %4771
  %v4774 = vsel %vm204, %v4599, %v4772
  %v4775 = vadd.f32 %v4284, %v4286
  %v4776 = vpack.c.bf16 %v4774, %v4774
  %v4777 = vld [vmem:[%s35] sm:$0xf]
  %v4778 = vld [vmem:[%s35 + $0x4] sm:$0xf]
  %v4779 = vld [vmem:[%s35 + $0x8] sm:$0xf]
  %v4780 = vld [vmem:[%s35 + $0xc] sm:$0xf]
  %v4781 = vld [vmem:[%s35 + $0x10] sm:$0xf]
  %v4782 = vld [vmem:[%s35 + $0x14] sm:$0xf]
  %v4783 = vld [vmem:[%s35 + $0x18] sm:$0xf]
  %v4784 = vld [vmem:[%s35 + $0x1c] sm:$0xf]
  %v4793 = vunpack.c.l.b16 %v4777
  %v4794 = vunpack.c.l.b16 %v4778
  %v4795 = vunpack.c.l.b16 %v4779
  %v4796 = vunpack.c.l.b16 %v4780
  %v4797 = vunpack.c.l.b16 %v4781
  %v4798 = vunpack.c.l.b16 %v4782
  %v4799 = vunpack.c.l.b16 %v4783
  %v4800 = vunpack.c.l.b16 %v4784
  %v4801 = vpack.c.b16 %v4794, %v4793
  %v4802 = vpack.c.b16 %v4796, %v4795
  %v4803 = vpack.c.b16 %v4798, %v4797
  %v4804 = vpack.c.b16 %v4800, %v4799
  %v4810 = vsel %vm689, %v4776, 0
  %4812 = vmatprep.subr.bf16.mxu0 0
  %4813 = vmatpush1.bf16.msra.mxu0 0
  %4814 = vmatprep.subr.bf16.mxu0 0
  %4815 = vmatpush1.bf16.msra.mxu0 0
  %4816 = vmatprep.subr.bf16.mxu0 0
  %4817 = vmatpush1.bf16.msra.mxu0 0
  %4818 = vmatprep.subr.bf16.mxu0 0
  %4819 = vmatpush1.bf16.msra.mxu0 0
  %4820 = vmatprep.subr.bf16.mxu0 0
  %4821 = vmatpush1.bf16.msra.mxu0 %v4804
  %4822 = vmatprep.subr.bf16.mxu0 0
  %4823 = vmatpush1.bf16.msra.mxu0 %v4803
  %4824 = vmatprep.subr.bf16.mxu0 0
  %4825 = vmatpush1.bf16.msra.mxu0 %v4802
  %4826 = vmatprep.subr.bf16.mxu0 0
  %4827 = vmatpush1.bf16.msra.mxu0 %v4801
  %4828 = vmatprep.subr.bf16.mxu0 0
  %4829 = vmatpush2.bf16.msra.mxu0 0
  %4830 = vmatprep.subr.bf16.mxu0 0
  %4831 = vmatpush2.bf16.msra.mxu0 0
  %4832 = vmatprep.subr.bf16.mxu0 0
  %4833 = vmatpush2.bf16.msra.mxu0 0
  %4834 = vmatprep.subr.bf16.mxu0 0
  %4835 = vmatpush2.bf16.msra.mxu0 0
  %4836 = vmatprep.subr.bf16.mxu0 0
  %4837 = vmatpush2.bf16.msra.mxu0 0
  %4838 = vmatprep.subr.bf16.mxu0 0
  %4839 = vmatpush2.bf16.msra.mxu0 0
  %4840 = vmatprep.subr.bf16.mxu0 0
  %4841 = vmatpush2.bf16.msra.mxu0 0
  %4842 = vmatprep.subr.bf16.mxu0 0
  %4843 = vmatpush2.bf16.msra.mxu0 0
  %4844 = vmatprep.mubr.bf16.mxu0 0
  %4845 = vmatmul.mubr.bf16.gmra.mxu0 %v4810
  %v4846 = vpop.f32.mrf.mxu0
  %v4847 = vadd.f32 0.0, %v4846
  %v4848 = vpop.f32.mrf.mxu0
  %v4849 = vpop.f32.mrf.mxu0
  %v4850 = vpop.f32.mrf.mxu0
  %4851 = vdwg.mxu0
  %v4852 = vadd.f32 %v4775, %v4847
  %v4853 = vsel %vm734, %v4852, 0.0
  %4854 = vadd.xlane.f32.xlu0 %v4853
  %v4855 = vpop.xlane.xlu0 %4854
  %v4856 = vmul.f32 %v4855, %v738
  %v4857 = vsub.f32 %v4852, %v4856
  %v4858 = vmul.f32 %v4857, %v4857
  %v4859 = vsel %vm734, %v4858, 0.0
  %4860 = vadd.xlane.f32.xlu0 %v4859
  %v4861 = vpop.xlane.xlu0 %4860
  %v4862 = vmul.f32 %v4861, %v738
  %v4863 = vadd.f32 %v4862, 1e-06
  %v4864 = vrsqrt.pop %v4863
  %v4865 = vmul.f32 %v4857, %v4864
  %v4866 = vlaneseq
  %v4867 = vshrl.u32 %v4866, 7
  %v4868 = vsub.s32 0, %v4867
  %v4869 = vrot.slane %v4296, %v4868
  %v4870 = vmul.f32 %v4865, %v4869
  %v4871 = vlaneseq
  %v4872 = vshrl.u32 %v4871, 7
  %v4873 = vsub.s32 1, %v4872
  %v4874 = vrot.slane %v4296, %v4873
  %v4875 = vadd.f32 %v4870, %v4874
  %v4876 = vpack.c.bf16 %v4875, %v4875
  %v4877 = vpack.c.bf16 %v4288, %v4288
  %v4878 = vld [vmem:[%s37] sm:$0xf]
  %v4879 = vld [vmem:[%s37 + $0x4] sm:$0xf]
  %v4880 = vld [vmem:[%s37 + $0x8] sm:$0xf]
  %v4881 = vld [vmem:[%s37 + $0xc] sm:$0xf]
  %v4886 = vunpack.c.l.b16 %v4878
  %v4887 = vunpack.c.l.b16 %v4879
  %v4888 = vunpack.c.l.b16 %v4880
  %v4889 = vunpack.c.l.b16 %v4881
  %v4890 = vpack.c.b16 %v4887, %v4886
  %v4891 = vpack.c.b16 %v4889, %v4888
  %v4895 = vsel %vm204, %v4876, 0
  %4897 = vmatprep.subr.bf16.mxu0 0
  %4898 = vmatpush1.bf16.msra.mxu0 0
  %4899 = vmatprep.subr.bf16.mxu0 0
  %4900 = vmatpush1.bf16.msra.mxu0 0
  %4901 = vmatprep.subr.bf16.mxu0 0
  %4902 = vmatpush1.bf16.msra.mxu0 0
  %4903 = vmatprep.subr.bf16.mxu0 0
  %4904 = vmatpush1.bf16.msra.mxu0 0
  %4905 = vmatprep.subr.bf16.mxu0 0
  %4906 = vmatpush1.bf16.msra.mxu0 0
  %4907 = vmatprep.subr.bf16.mxu0 0
  %4908 = vmatpush1.bf16.msra.mxu0 0
  %4909 = vmatprep.subr.bf16.mxu0 0
  %4910 = vmatpush1.bf16.msra.mxu0 %v4891
  %4911 = vmatprep.subr.bf16.mxu0 0
  %4912 = vmatpush1.bf16.msra.mxu0 %v4890
  %4913 = vmatprep.subr.bf16.mxu0 0
  %4914 = vmatpush2.bf16.msra.mxu0 0
  %4915 = vmatprep.subr.bf16.mxu0 0
  %4916 = vmatpush2.bf16.msra.mxu0 0
  %4917 = vmatprep.subr.bf16.mxu0 0
  %4918 = vmatpush2.bf16.msra.mxu0 0
  %4919 = vmatprep.subr.bf16.mxu0 0
  %4920 = vmatpush2.bf16.msra.mxu0 0
  %4921 = vmatprep.subr.bf16.mxu0 0
  %4922 = vmatpush2.bf16.msra.mxu0 0
  %4923 = vmatprep.subr.bf16.mxu0 0
  %4924 = vmatpush2.bf16.msra.mxu0 0
  %4925 = vmatprep.subr.bf16.mxu0 0
  %4926 = vmatpush2.bf16.msra.mxu0 0
  %4927 = vmatprep.subr.bf16.mxu0 0
  %4928 = vmatpush2.bf16.msra.mxu0 0
  %4929 = vmatprep.mubr.bf16.mxu0 0
  %4930 = vmatmul.mubr.bf16.gmra.mxu0 %v4895
  %v4931 = vpop.f32.mrf.mxu0
  %v4932 = vadd.f32 0.0, %v4931
  %v4933 = vpop.f32.mrf.mxu0
  %v4934 = vpop.f32.mrf.mxu0
  %v4935 = vpop.f32.mrf.mxu0
  %4936 = vdwg.mxu0
  %v4937 = vld [vmem:[%s39] sm:$0xf]
  %v4938 = vld [vmem:[%s39 + $0x4] sm:$0xf]
  %v4939 = vld [vmem:[%s39 + $0x8] sm:$0xf]
  %v4940 = vld [vmem:[%s39 + $0xc] sm:$0xf]
  %v4945 = vunpack.c.l.b16 %v4937
  %v4946 = vunpack.c.l.b16 %v4938
  %v4947 = vunpack.c.l.b16 %v4939
  %v4948 = vunpack.c.l.b16 %v4940
  %v4949 = vpack.c.b16 %v4946, %v4945
  %v4950 = vpack.c.b16 %v4948, %v4947
  %v4954 = vsel %vm204, %v4877, 0
  %4956 = vmatprep.subr.bf16.mxu0 0
  %4957 = vmatpush1.bf16.msra.mxu0 0
  %4958 = vmatprep.subr.bf16.mxu0 0
  %4959 = vmatpush1.bf16.msra.mxu0 0
  %4960 = vmatprep.subr.bf16.mxu0 0
  %4961 = vmatpush1.bf16.msra.mxu0 0
  %4962 = vmatprep.subr.bf16.mxu0 0
  %4963 = vmatpush1.bf16.msra.mxu0 0
  %4964 = vmatprep.subr.bf16.mxu0 0
  %4965 = vmatpush1.bf16.msra.mxu0 0
  %4966 = vmatprep.subr.bf16.mxu0 0
  %4967 = vmatpush1.bf16.msra.mxu0 0
  %4968 = vmatprep.subr.bf16.mxu0 0
  %4969 = vmatpush1.bf16.msra.mxu0 %v4950
  %4970 = vmatprep.subr.bf16.mxu0 0
  %4971 = vmatpush1.bf16.msra.mxu0 %v4949
  %4972 = vmatprep.subr.bf16.mxu0 0
  %4973 = vmatpush2.bf16.msra.mxu0 0
  %4974 = vmatprep.subr.bf16.mxu0 0
  %4975 = vmatpush2.bf16.msra.mxu0 0
  %4976 = vmatprep.subr.bf16.mxu0 0
  %4977 = vmatpush2.bf16.msra.mxu0 0
  %4978 = vmatprep.subr.bf16.mxu0 0
  %4979 = vmatpush2.bf16.msra.mxu0 0
  %4980 = vmatprep.subr.bf16.mxu0 0
  %4981 = vmatpush2.bf16.msra.mxu0 0
  %4982 = vmatprep.subr.bf16.mxu0 0
  %4983 = vmatpush2.bf16.msra.mxu0 0
  %4984 = vmatprep.subr.bf16.mxu0 0
  %4985 = vmatpush2.bf16.msra.mxu0 0
  %4986 = vmatprep.subr.bf16.mxu0 0
  %4987 = vmatpush2.bf16.msra.mxu0 0
  %4988 = vmatprep.mubr.bf16.mxu0 0
  %4989 = vmatmul.mubr.bf16.gmra.mxu0 %v4954
  %v4990 = vpop.f32.mrf.mxu0
  %v4991 = vadd.f32 0.0, %v4990
  %v4992 = vpop.f32.mrf.mxu0
  %v4993 = vpop.f32.mrf.mxu0
  %v4994 = vpop.f32.mrf.mxu0
  %4995 = vdwg.mxu0
  %v4997 = vsel %vm204, %v4932, 0
  %v5000 = vsel %vm204, %v4991, 0
  %5002 = vmatprep.subr.mxu0 0.0
  %5003 = vmatpush1.xpose.msra.mxu0 0.0
  %5004 = vmatprep.subr.mxu0 0.0
  %5005 = vmatpush1.xpose.msra.mxu0 0.0
  %5006 = vmatprep.subr.mxu0 0.0
  %5007 = vmatpush1.xpose.msra.mxu0 0.0
  %5008 = vmatprep.subr.mxu0 0.0
  %5009 = vmatpush1.xpose.msra.mxu0 0.0
  %5010 = vmatprep.subr.mxu0 0.0
  %5011 = vmatpush1.xpose.msra.mxu0 0.0
  %5012 = vmatprep.subr.mxu0 0.0
  %5013 = vmatpush1.xpose.msra.mxu0 0.0
  %5014 = vmatprep.subr.mxu0 0.0
  %5015 = vmatpush1.xpose.msra.mxu0 0.0
  %5016 = vmatprep.subr.mxu0 0.0
  %5017 = vmatpush1.xpose.msra.mxu0 0.0
  %5018 = vmatprep.subr.mxu0 0.0
  %5019 = vmatpush1.xpose.msra.mxu0 0.0
  %5020 = vmatprep.subr.mxu0 0.0
  %5021 = vmatpush1.xpose.msra.mxu0 0.0
  %5022 = vmatprep.subr.mxu0 0.0
  %5023 = vmatpush1.xpose.msra.mxu0 0.0
  %5024 = vmatprep.subr.mxu0 0.0
  %5025 = vmatpush1.xpose.msra.mxu0 0.0
  %5026 = vmatprep.subr.mxu0 0.0
  %5027 = vmatpush1.xpose.msra.mxu0 0.0
  %5028 = vmatprep.subr.mxu0 0.0
  %5029 = vmatpush1.xpose.msra.mxu0 0.0
  %5030 = vmatprep.subr.mxu0 0.0
  %5031 = vmatpush1.xpose.msra.mxu0 0.0
  %5032 = vmatprep.subr.mxu0 0.0
  %5033 = vmatpush1.xpose.msra.mxu0 %v5000
  %5034 = vmatprep.subr.mxu0 0.0
  %5035 = vmatpush2.xpose.msra.mxu0 0.0
  %5036 = vmatprep.subr.mxu0 0.0
  %5037 = vmatpush2.xpose.msra.mxu0 0.0
  %5038 = vmatprep.subr.mxu0 0.0
  %5039 = vmatpush2.xpose.msra.mxu0 0.0
  %5040 = vmatprep.subr.mxu0 0.0
  %5041 = vmatpush2.xpose.msra.mxu0 0.0
  %5042 = vmatprep.subr.mxu0 0.0
  %5043 = vmatpush2.xpose.msra.mxu0 0.0
  %5044 = vmatprep.subr.mxu0 0.0
  %5045 = vmatpush2.xpose.msra.mxu0 0.0
  %5046 = vmatprep.subr.mxu0 0.0
  %5047 = vmatpush2.xpose.msra.mxu0 0.0
  %5048 = vmatprep.subr.mxu0 0.0
  %5049 = vmatpush2.xpose.msra.mxu0 0.0
  %5050 = vmatprep.subr.mxu0 0.0
  %5051 = vmatpush2.xpose.msra.mxu0 0.0
  %5052 = vmatprep.subr.mxu0 0.0
  %5053 = vmatpush2.xpose.msra.mxu0 0.0
  %5054 = vmatprep.subr.mxu0 0.0
  %5055 = vmatpush2.xpose.msra.mxu0 0.0
  %5056 = vmatprep.subr.mxu0 0.0
  %5057 = vmatpush2.xpose.msra.mxu0 0.0
  %5058 = vmatprep.subr.mxu0 0.0
  %5059 = vmatpush2.xpose.msra.mxu0 0.0
  %5060 = vmatprep.subr.mxu0 0.0
  %5061 = vmatpush2.xpose.msra.mxu0 0.0
  %5062 = vmatprep.subr.mxu0 0.0
  %5063 = vmatpush2.xpose.msra.mxu0 0.0
  %5064 = vmatprep.subr.mxu0 0.0
  %5065 = vmatpush2.xpose.msra.mxu0 0.0
  %5066 = vmatprep.mubr.f32.mxu0 0.0
  %5067 = vmatmul.mubr.f32.gmra.mxu0 %v4997
  %v5068 = vpop.f32.mrf.mxu0
  %v5069 = vadd.f32 0.0, %v5068
  %v5070 = vpop.f32.mrf.mxu0
  %5071 = vdwg.mxu0
  %v5072 = vmul.f32 %v5069, 0.17677669
  %v5073 = vsel %vm956, %v5072, -inf
  %5074 = vmax.xlane.f32.xlu0 %v5073
  %v5075 = vpop.xlane.xlu0 %5074
  %v5076 = vsub.f32 %v5072, %v5075
  %v5077 = vmul.f32 %v5076, 1.442695
  %v5078 = vpow.pop %v5077
  %v5079 = vsel %vm956, %v5078, 0.0
  %5080 = vadd.xlane.f32.xlu0 %v5079
  %v5081 = vpop.xlane.xlu0 %5080
  %v5082 = vrcp.pop %v5081
  %v5083 = vmul.f32 %v5078, %v5082
  %5084 = vrot.lane.b32.xlu0 %v4991, 64
  %v5085 = vpop.permute.xlu0 %5084
  %v5087 = vsel %vm970, %v5083, 0
  %v5089 = vsel %vm974, %v5085, 0
  %5091 = vmatprep.subr.mxu0 0.0
  %5092 = vmatpush1.msra.mxu0 0.0
  %5093 = vmatprep.subr.mxu0 0.0
  %5094 = vmatpush1.msra.mxu0 0.0
  %5095 = vmatprep.subr.mxu0 0.0
  %5096 = vmatpush1.msra.mxu0 0.0
  %5097 = vmatprep.subr.mxu0 0.0
  %5098 = vmatpush1.msra.mxu0 0.0
  %5099 = vmatprep.subr.mxu0 0.0
  %5100 = vmatpush1.msra.mxu0 0.0
  %5101 = vmatprep.subr.mxu0 0.0
  %5102 = vmatpush1.msra.mxu0 0.0
  %5103 = vmatprep.subr.mxu0 0.0
  %5104 = vmatpush1.msra.mxu0 0.0
  %5105 = vmatprep.subr.mxu0 0.0
  %5106 = vmatpush1.msra.mxu0 0.0
  %5107 = vmatprep.subr.mxu0 0.0
  %5108 = vmatpush1.msra.mxu0 0.0
  %5109 = vmatprep.subr.mxu0 0.0
  %5110 = vmatpush1.msra.mxu0 0.0
  %5111 = vmatprep.subr.mxu0 0.0
  %5112 = vmatpush1.msra.mxu0 0.0
  %5113 = vmatprep.subr.mxu0 0.0
  %5114 = vmatpush1.msra.mxu0 0.0
  %5115 = vmatprep.subr.mxu0 0.0
  %5116 = vmatpush1.msra.mxu0 0.0
  %5117 = vmatprep.subr.mxu0 0.0
  %5118 = vmatpush1.msra.mxu0 0.0
  %5119 = vmatprep.subr.mxu0 0.0
  %5120 = vmatpush1.msra.mxu0 0.0
  %5121 = vmatprep.subr.mxu0 0.0
  %5122 = vmatpush1.msra.mxu0 %v5089
  %5123 = vmatprep.subr.mxu0 0.0
  %5124 = vmatpush2.msra.mxu0 0.0
  %5125 = vmatprep.subr.mxu0 0.0
  %5126 = vmatpush2.msra.mxu0 0.0
  %5127 = vmatprep.subr.mxu0 0.0
  %5128 = vmatpush2.msra.mxu0 0.0
  %5129 = vmatprep.subr.mxu0 0.0
  %5130 = vmatpush2.msra.mxu0 0.0
  %5131 = vmatprep.subr.mxu0 0.0
  %5132 = vmatpush2.msra.mxu0 0.0
  %5133 = vmatprep.subr.mxu0 0.0
  %5134 = vmatpush2.msra.mxu0 0.0
  %5135 = vmatprep.subr.mxu0 0.0
  %5136 = vmatpush2.msra.mxu0 0.0
  %5137 = vmatprep.subr.mxu0 0.0
  %5138 = vmatpush2.msra.mxu0 0.0
  %5139 = vmatprep.subr.mxu0 0.0
  %5140 = vmatpush2.msra.mxu0 0.0
  %5141 = vmatprep.subr.mxu0 0.0
  %5142 = vmatpush2.msra.mxu0 0.0
  %5143 = vmatprep.subr.mxu0 0.0
  %5144 = vmatpush2.msra.mxu0 0.0
  %5145 = vmatprep.subr.mxu0 0.0
  %5146 = vmatpush2.msra.mxu0 0.0
  %5147 = vmatprep.subr.mxu0 0.0
  %5148 = vmatpush2.msra.mxu0 0.0
  %5149 = vmatprep.subr.mxu0 0.0
  %5150 = vmatpush2.msra.mxu0 0.0
  %5151 = vmatprep.subr.mxu0 0.0
  %5152 = vmatpush2.msra.mxu0 0.0
  %5153 = vmatprep.subr.mxu0 0.0
  %5154 = vmatpush2.msra.mxu0 0.0
  %5155 = vmatprep.mubr.f32.mxu0 0.0
  %5156 = vmatmul.mubr.f32.gmra.mxu0 %v5087
  %v5157 = vpop.f32.mrf.mxu0
  %v5158 = vadd.f32 0.0, %v5157
  %v5159 = vpop.f32.mrf.mxu0
  %5160 = vdwg.mxu0
  %5161 = vrot.lane.b32.xlu0 %v4932, 96
  %v5162 = vpop.permute.xlu0 %5161
  %5163 = vrot.lane.b32.xlu0 %v4991, 96
  %v5164 = vpop.permute.xlu0 %5163
  %v5165 = vsel %vm204, %v5162, 0
  %v5167 = vsel %vm204, %v5164, 0
  %5169 = vmatprep.subr.mxu0 0.0
  %5170 = vmatpush1.xpose.msra.mxu0 0.0
  %5171 = vmatprep.subr.mxu0 0.0
  %5172 = vmatpush1.xpose.msra.mxu0 0.0
  %5173 = vmatprep.subr.mxu0 0.0
  %5174 = vmatpush1.xpose.msra.mxu0 0.0
  %5175 = vmatprep.subr.mxu0 0.0
  %5176 = vmatpush1.xpose.msra.mxu0 0.0
  %5177 = vmatprep.subr.mxu0 0.0
  %5178 = vmatpush1.xpose.msra.mxu0 0.0
  %5179 = vmatprep.subr.mxu0 0.0
  %5180 = vmatpush1.xpose.msra.mxu0 0.0
  %5181 = vmatprep.subr.mxu0 0.0
  %5182 = vmatpush1.xpose.msra.mxu0 0.0
  %5183 = vmatprep.subr.mxu0 0.0
  %5184 = vmatpush1.xpose.msra.mxu0 0.0
  %5185 = vmatprep.subr.mxu0 0.0
  %5186 = vmatpush1.xpose.msra.mxu0 0.0
  %5187 = vmatprep.subr.mxu0 0.0
  %5188 = vmatpush1.xpose.msra.mxu0 0.0
  %5189 = vmatprep.subr.mxu0 0.0
  %5190 = vmatpush1.xpose.msra.mxu0 0.0
  %5191 = vmatprep.subr.mxu0 0.0
  %5192 = vmatpush1.xpose.msra.mxu0 0.0
  %5193 = vmatprep.subr.mxu0 0.0
  %5194 = vmatpush1.xpose.msra.mxu0 0.0
  %5195 = vmatprep.subr.mxu0 0.0
  %5196 = vmatpush1.xpose.msra.mxu0 0.0
  %5197 = vmatprep.subr.mxu0 0.0
  %5198 = vmatpush1.xpose.msra.mxu0 0.0
  %5199 = vmatprep.subr.mxu0 0.0
  %5200 = vmatpush1.xpose.msra.mxu0 %v5167
  %5201 = vmatprep.subr.mxu0 0.0
  %5202 = vmatpush2.xpose.msra.mxu0 0.0
  %5203 = vmatprep.subr.mxu0 0.0
  %5204 = vmatpush2.xpose.msra.mxu0 0.0
  %5205 = vmatprep.subr.mxu0 0.0
  %5206 = vmatpush2.xpose.msra.mxu0 0.0
  %5207 = vmatprep.subr.mxu0 0.0
  %5208 = vmatpush2.xpose.msra.mxu0 0.0
  %5209 = vmatprep.subr.mxu0 0.0
  %5210 = vmatpush2.xpose.msra.mxu0 0.0
  %5211 = vmatprep.subr.mxu0 0.0
  %5212 = vmatpush2.xpose.msra.mxu0 0.0
  %5213 = vmatprep.subr.mxu0 0.0
  %5214 = vmatpush2.xpose.msra.mxu0 0.0
  %5215 = vmatprep.subr.mxu0 0.0
  %5216 = vmatpush2.xpose.msra.mxu0 0.0
  %5217 = vmatprep.subr.mxu0 0.0
  %5218 = vmatpush2.xpose.msra.mxu0 0.0
  %5219 = vmatprep.subr.mxu0 0.0
  %5220 = vmatpush2.xpose.msra.mxu0 0.0
  %5221 = vmatprep.subr.mxu0 0.0
  %5222 = vmatpush2.xpose.msra.mxu0 0.0
  %5223 = vmatprep.subr.mxu0 0.0
  %5224 = vmatpush2.xpose.msra.mxu0 0.0
  %5225 = vmatprep.subr.mxu0 0.0
  %5226 = vmatpush2.xpose.msra.mxu0 0.0
  %5227 = vmatprep.subr.mxu0 0.0
  %5228 = vmatpush2.xpose.msra.mxu0 0.0
  %5229 = vmatprep.subr.mxu0 0.0
  %5230 = vmatpush2.xpose.msra.mxu0 0.0
  %5231 = vmatprep.subr.mxu0 0.0
  %5232 = vmatpush2.xpose.msra.mxu0 0.0
  %5233 = vmatprep.mubr.f32.mxu0 0.0
  %5234 = vmatmul.mubr.f32.gmra.mxu0 %v5165
  %v5235 = vpop.f32.mrf.mxu0
  %v5236 = vadd.f32 0.0, %v5235
  %v5237 = vpop.f32.mrf.mxu0
  %5238 = vdwg.mxu0
  %v5239 = vmul.f32 %v5236, 0.17677669
  %v5240 = vsel %vm956, %v5239, -inf
  %5241 = vmax.xlane.f32.xlu0 %v5240
  %v5242 = vpop.xlane.xlu0 %5241
  %v5243 = vsub.f32 %v5239, %v5242
  %v5244 = vmul.f32 %v5243, 1.442695
  %v5245 = vpow.pop %v5244
  %v5246 = vsel %vm956, %v5245, 0.0
  %5247 = vadd.xlane.f32.xlu0 %v5246
  %v5248 = vpop.xlane.xlu0 %5247
  %v5249 = vrcp.pop %v5248
  %v5250 = vmul.f32 %v5245, %v5249
  %5251 = vrot.lane.b32.xlu0 %v4991, 32
  %v5252 = vpop.permute.xlu0 %5251
  %v5254 = vsel %vm970, %v5250, 0
  %v5256 = vsel %vm974, %v5252, 0
  %5258 = vmatprep.subr.mxu0 0.0
  %5259 = vmatpush1.msra.mxu0 0.0
  %5260 = vmatprep.subr.mxu0 0.0
  %5261 = vmatpush1.msra.mxu0 0.0
  %5262 = vmatprep.subr.mxu0 0.0
  %5263 = vmatpush1.msra.mxu0 0.0
  %5264 = vmatprep.subr.mxu0 0.0
  %5265 = vmatpush1.msra.mxu0 0.0
  %5266 = vmatprep.subr.mxu0 0.0
  %5267 = vmatpush1.msra.mxu0 0.0
  %5268 = vmatprep.subr.mxu0 0.0
  %5269 = vmatpush1.msra.mxu0 0.0
  %5270 = vmatprep.subr.mxu0 0.0
  %5271 = vmatpush1.msra.mxu0 0.0
  %5272 = vmatprep.subr.mxu0 0.0
  %5273 = vmatpush1.msra.mxu0 0.0
  %5274 = vmatprep.subr.mxu0 0.0
  %5275 = vmatpush1.msra.mxu0 0.0
  %5276 = vmatprep.subr.mxu0 0.0
  %5277 = vmatpush1.msra.mxu0 0.0
  %5278 = vmatprep.subr.mxu0 0.0
  %5279 = vmatpush1.msra.mxu0 0.0
  %5280 = vmatprep.subr.mxu0 0.0
  %5281 = vmatpush1.msra.mxu0 0.0
  %5282 = vmatprep.subr.mxu0 0.0
  %5283 = vmatpush1.msra.mxu0 0.0
  %5284 = vmatprep.subr.mxu0 0.0
  %5285 = vmatpush1.msra.mxu0 0.0
  %5286 = vmatprep.subr.mxu0 0.0
  %5287 = vmatpush1.msra.mxu0 0.0
  %5288 = vmatprep.subr.mxu0 0.0
  %5289 = vmatpush1.msra.mxu0 %v5256
  %5290 = vmatprep.subr.mxu0 0.0
  %5291 = vmatpush2.msra.mxu0 0.0
  %5292 = vmatprep.subr.mxu0 0.0
  %5293 = vmatpush2.msra.mxu0 0.0
  %5294 = vmatprep.subr.mxu0 0.0
  %5295 = vmatpush2.msra.mxu0 0.0
  %5296 = vmatprep.subr.mxu0 0.0
  %5297 = vmatpush2.msra.mxu0 0.0
  %5298 = vmatprep.subr.mxu0 0.0
  %5299 = vmatpush2.msra.mxu0 0.0
  %5300 = vmatprep.subr.mxu0 0.0
  %5301 = vmatpush2.msra.mxu0 0.0
  %5302 = vmatprep.subr.mxu0 0.0
  %5303 = vmatpush2.msra.mxu0 0.0
  %5304 = vmatprep.subr.mxu0 0.0
  %5305 = vmatpush2.msra.mxu0 0.0
  %5306 = vmatprep.subr.mxu0 0.0
  %5307 = vmatpush2.msra.mxu0 0.0
  %5308 = vmatprep.subr.mxu0 0.0
  %5309 = vmatpush2.msra.mxu0 0.0
  %5310 = vmatprep.subr.mxu0 0.0
  %5311 = vmatpush2.msra.mxu0 0.0
  %5312 = vmatprep.subr.mxu0 0.0
  %5313 = vmatpush2.msra.mxu0 0.0
  %5314 = vmatprep.subr.mxu0 0.0
  %5315 = vmatpush2.msra.mxu0 0.0
  %5316 = vmatprep.subr.mxu0 0.0
  %5317 = vmatpush2.msra.mxu0 0.0
  %5318 = vmatprep.subr.mxu0 0.0
  %5319 = vmatpush2.msra.mxu0 0.0
  %5320 = vmatprep.subr.mxu0 0.0
  %5321 = vmatpush2.msra.mxu0 0.0
  %5322 = vmatprep.mubr.f32.mxu0 0.0
  %5323 = vmatmul.mubr.f32.gmra.mxu0 %v5254
  %v5324 = vpop.f32.mrf.mxu0
  %v5325 = vadd.f32 0.0, %v5324
  %v5326 = vpop.f32.mrf.mxu0
  %5327 = vdwg.mxu0
  %5329 = vrot.lane.b32.xlu0 %v5325, 32
  %v5330 = vpop.permute.xlu0 %5329
  %v5332 = vsel %vm204, %v5158, %v5330
  %v5333 = vpack.c.bf16 %v5332, %v5332
  %v5334 = vld [vmem:[%s41] sm:$0xf]
  %v5335 = vld [vmem:[%s41 + $0x4] sm:$0xf]
  %v5336 = vld [vmem:[%s41 + $0x8] sm:$0xf]
  %v5337 = vld [vmem:[%s41 + $0xc] sm:$0xf]
  %v5338 = vld [vmem:[%s41 + $0x10] sm:$0xf]
  %v5339 = vld [vmem:[%s41 + $0x14] sm:$0xf]
  %v5340 = vld [vmem:[%s41 + $0x18] sm:$0xf]
  %v5341 = vld [vmem:[%s41 + $0x1c] sm:$0xf]
  %v5350 = vunpack.c.l.b16 %v5334
  %v5351 = vunpack.c.l.b16 %v5335
  %v5352 = vunpack.c.l.b16 %v5336
  %v5353 = vunpack.c.l.b16 %v5337
  %v5354 = vunpack.c.l.b16 %v5338
  %v5355 = vunpack.c.l.b16 %v5339
  %v5356 = vunpack.c.l.b16 %v5340
  %v5357 = vunpack.c.l.b16 %v5341
  %v5358 = vpack.c.b16 %v5351, %v5350
  %v5359 = vpack.c.b16 %v5353, %v5352
  %v5360 = vpack.c.b16 %v5355, %v5354
  %v5361 = vpack.c.b16 %v5357, %v5356
  %v5367 = vsel %vm689, %v5333, 0
  %5369 = vmatprep.subr.bf16.mxu0 0
  %5370 = vmatpush1.bf16.msra.mxu0 0
  %5371 = vmatprep.subr.bf16.mxu0 0
  %5372 = vmatpush1.bf16.msra.mxu0 0
  %5373 = vmatprep.subr.bf16.mxu0 0
  %5374 = vmatpush1.bf16.msra.mxu0 0
  %5375 = vmatprep.subr.bf16.mxu0 0
  %5376 = vmatpush1.bf16.msra.mxu0 0
  %5377 = vmatprep.subr.bf16.mxu0 0
  %5378 = vmatpush1.bf16.msra.mxu0 %v5361
  %5379 = vmatprep.subr.bf16.mxu0 0
  %5380 = vmatpush1.bf16.msra.mxu0 %v5360
  %5381 = vmatprep.subr.bf16.mxu0 0
  %5382 = vmatpush1.bf16.msra.mxu0 %v5359
  %5383 = vmatprep.subr.bf16.mxu0 0
  %5384 = vmatpush1.bf16.msra.mxu0 %v5358
  %5385 = vmatprep.subr.bf16.mxu0 0
  %5386 = vmatpush2.bf16.msra.mxu0 0
  %5387 = vmatprep.subr.bf16.mxu0 0
  %5388 = vmatpush2.bf16.msra.mxu0 0
  %5389 = vmatprep.subr.bf16.mxu0 0
  %5390 = vmatpush2.bf16.msra.mxu0 0
  %5391 = vmatprep.subr.bf16.mxu0 0
  %5392 = vmatpush2.bf16.msra.mxu0 0
  %5393 = vmatprep.subr.bf16.mxu0 0
  %5394 = vmatpush2.bf16.msra.mxu0 0
  %5395 = vmatprep.subr.bf16.mxu0 0
  %5396 = vmatpush2.bf16.msra.mxu0 0
  %5397 = vmatprep.subr.bf16.mxu0 0
  %5398 = vmatpush2.bf16.msra.mxu0 0
  %5399 = vmatprep.subr.bf16.mxu0 0
  %5400 = vmatpush2.bf16.msra.mxu0 0
  %5401 = vmatprep.mubr.bf16.mxu0 0
  %5402 = vmatmul.mubr.bf16.gmra.mxu0 %v5367
  %v5403 = vpop.f32.mrf.mxu0
  %v5404 = vadd.f32 0.0, %v5403
  %v5405 = vpop.f32.mrf.mxu0
  %v5406 = vpop.f32.mrf.mxu0
  %v5407 = vpop.f32.mrf.mxu0
  %5408 = vdwg.mxu0
  %v5409 = vadd.f32 %v4875, %v5404
  %v5410 = vsel %vm734, %v5409, 0.0
  %5411 = vadd.xlane.f32.xlu0 %v5410
  %v5412 = vpop.xlane.xlu0 %5411
  %v5413 = vmul.f32 %v5412, %v738
  %v5414 = vsub.f32 %v5409, %v5413
  %v5415 = vmul.f32 %v5414, %v5414
  %v5416 = vsel %vm734, %v5415, 0.0
  %5417 = vadd.xlane.f32.xlu0 %v5416
  %v5418 = vpop.xlane.xlu0 %5417
  %v5419 = vmul.f32 %v5418, %v738
  %v5420 = vadd.f32 %v5419, 1e-06
  %v5421 = vrsqrt.pop %v5420
  %v5422 = vmul.f32 %v5414, %v5421
  %v5423 = vlaneseq
  %v5424 = vshrl.u32 %v5423, 7
  %v5425 = vsub.s32 2, %v5424
  %v5426 = vrot.slane %v4296, %v5425
  %v5427 = vmul.f32 %v5422, %v5426
  %v5428 = vlaneseq
  %v5429 = vshrl.u32 %v5428, 7
  %v5430 = vsub.s32 3, %v5429
  %v5431 = vrot.slane %v4296, %v5430
  %v5432 = vadd.f32 %v5427, %v5431
  %v5433 = vpack.c.bf16 %v5432, %v5432
  %v5434 = vld [vmem:[%s43] sm:$0xf]
  %v5435 = vld [vmem:[%s43 + $0x4] sm:$0xf]
  %v5436 = vld [vmem:[%s43 + $0x8] sm:$0xf]
  %v5437 = vld [vmem:[%s43 + $0xc] sm:$0xf]
  %v5439 = vlaneseq
  %v5440 = vshrl.u32 %v5439, 7
  %v5441 = vsub.s32 0, %v5440
  %v5442 = vrot.slane %v4297, %v5441
  %v5448 = vunpack.c.l.b16 %v5434
  %v5449 = vunpack.c.l.b16 %v5435
  %v5450 = vunpack.c.l.b16 %v5436
  %v5451 = vunpack.c.l.b16 %v5437
  %v5452 = vpack.c.b16 %v5449, %v5448
  %v5453 = vpack.c.b16 %v5451, %v5450
  %v5457 = vsel %vm204, %v5433, 0
  %5459 = vmatprep.subr.bf16.mxu0 0
  %5460 = vmatpush1.bf16.msra.mxu0 0
  %5461 = vmatprep.subr.bf16.mxu0 0
  %5462 = vmatpush1.bf16.msra.mxu0 0
  %5463 = vmatprep.subr.bf16.mxu0 0
  %5464 = vmatpush1.bf16.msra.mxu0 0
  %5465 = vmatprep.subr.bf16.mxu0 0
  %5466 = vmatpush1.bf16.msra.mxu0 0
  %5467 = vmatprep.subr.bf16.mxu0 0
  %5468 = vmatpush1.bf16.msra.mxu0 0
  %5469 = vmatprep.subr.bf16.mxu0 0
  %5470 = vmatpush1.bf16.msra.mxu0 0
  %5471 = vmatprep.subr.bf16.mxu0 0
  %5472 = vmatpush1.bf16.msra.mxu0 %v5453
  %5473 = vmatprep.subr.bf16.mxu0 0
  %5474 = vmatpush1.bf16.msra.mxu0 %v5452
  %5475 = vmatprep.subr.bf16.mxu0 0
  %5476 = vmatpush2.bf16.msra.mxu0 0
  %5477 = vmatprep.subr.bf16.mxu0 0
  %5478 = vmatpush2.bf16.msra.mxu0 0
  %5479 = vmatprep.subr.bf16.mxu0 0
  %5480 = vmatpush2.bf16.msra.mxu0 0
  %5481 = vmatprep.subr.bf16.mxu0 0
  %5482 = vmatpush2.bf16.msra.mxu0 0
  %5483 = vmatprep.subr.bf16.mxu0 0
  %5484 = vmatpush2.bf16.msra.mxu0 0
  %5485 = vmatprep.subr.bf16.mxu0 0
  %5486 = vmatpush2.bf16.msra.mxu0 0
  %5487 = vmatprep.subr.bf16.mxu0 0
  %5488 = vmatpush2.bf16.msra.mxu0 0
  %5489 = vmatprep.subr.bf16.mxu0 0
  %5490 = vmatpush2.bf16.msra.mxu0 0
  %5491 = vmatprep.mubr.bf16.mxu0 0
  %5492 = vmatmul.mubr.bf16.gmra.mxu0 %v5457
  %v5493 = vpop.f32.mrf.mxu0
  %v5494 = vadd.f32 %v5442, %v5493
  %v5495 = vpop.f32.mrf.mxu0
  %v5496 = vpop.f32.mrf.mxu0
  %v5497 = vpop.f32.mrf.mxu0
  %5498 = vdwg.mxu0
  %v5499 = vmax.f32 %v5494, 0.0
  %v5500 = vpack.c.bf16 %v5499, %v5499
  %v5501 = vld [vmem:[%s45] sm:$0xf]
  %v5502 = vld [vmem:[%s45 + $0x4] sm:$0xf]
  %v5503 = vld [vmem:[%s45 + $0x8] sm:$0xf]
  %v5504 = vld [vmem:[%s45 + $0xc] sm:$0xf]
  %v5505 = vld [vmem:[%s45 + $0x10] sm:$0xf]
  %v5506 = vld [vmem:[%s45 + $0x14] sm:$0xf]
  %v5507 = vld [vmem:[%s45 + $0x18] sm:$0xf]
  %v5508 = vld [vmem:[%s45 + $0x1c] sm:$0xf]
  %v5517 = vunpack.c.l.b16 %v5501
  %v5518 = vunpack.c.l.b16 %v5502
  %v5519 = vunpack.c.l.b16 %v5503
  %v5520 = vunpack.c.l.b16 %v5504
  %v5521 = vunpack.c.l.b16 %v5505
  %v5522 = vunpack.c.l.b16 %v5506
  %v5523 = vunpack.c.l.b16 %v5507
  %v5524 = vunpack.c.l.b16 %v5508
  %v5525 = vpack.c.b16 %v5518, %v5517
  %v5526 = vpack.c.b16 %v5520, %v5519
  %v5527 = vpack.c.b16 %v5522, %v5521
  %v5528 = vpack.c.b16 %v5524, %v5523
  %5533 = vrot.lane.b32.xlu0 %v5442, 64
  %v5534 = vpop.permute.xlu0 %5533
  %v5537 = vsel %vm689, %v5500, 0
  %5539 = vmatprep.subr.bf16.mxu0 0
  %5540 = vmatpush1.bf16.msra.mxu0 0
  %5541 = vmatprep.subr.bf16.mxu0 0
  %5542 = vmatpush1.bf16.msra.mxu0 0
  %5543 = vmatprep.subr.bf16.mxu0 0
  %5544 = vmatpush1.bf16.msra.mxu0 0
  %5545 = vmatprep.subr.bf16.mxu0 0
  %5546 = vmatpush1.bf16.msra.mxu0 0
  %5547 = vmatprep.subr.bf16.mxu0 0
  %5548 = vmatpush1.bf16.msra.mxu0 %v5528
  %5549 = vmatprep.subr.bf16.mxu0 0
  %5550 = vmatpush1.bf16.msra.mxu0 %v5527
  %5551 = vmatprep.subr.bf16.mxu0 0
  %5552 = vmatpush1.bf16.msra.mxu0 %v5526
  %5553 = vmatprep.subr.bf16.mxu0 0
  %5554 = vmatpush1.bf16.msra.mxu0 %v5525
  %5555 = vmatprep.subr.bf16.mxu0 0
  %5556 = vmatpush2.bf16.msra.mxu0 0
  %5557 = vmatprep.subr.bf16.mxu0 0
  %5558 = vmatpush2.bf16.msra.mxu0 0
  %5559 = vmatprep.subr.bf16.mxu0 0
  %5560 = vmatpush2.bf16.msra.mxu0 0
  %5561 = vmatprep.subr.bf16.mxu0 0
  %5562 = vmatpush2.bf16.msra.mxu0 0
  %5563 = vmatprep.subr.bf16.mxu0 0
  %5564 = vmatpush2.bf16.msra.mxu0 0
  %5565 = vmatprep.subr.bf16.mxu0 0
  %5566 = vmatpush2.bf16.msra.mxu0 0
  %5567 = vmatprep.subr.bf16.mxu0 0
  %5568 = vmatpush2.bf16.msra.mxu0 0
  %5569 = vmatprep.subr.bf16.mxu0 0
  %5570 = vmatpush2.bf16.msra.mxu0 0
  %5571 = vmatprep.mubr.bf16.mxu0 0
  %5572 = vmatmul.mubr.bf16.gmra.mxu0 %v5537
  %v5573 = vpop.f32.mrf.mxu0
  %v5574 = vadd.f32 %v5534, %v5573
  %v5575 = vpop.f32.mrf.mxu0
  %v5576 = vpop.f32.mrf.mxu0
  %v5577 = vpop.f32.mrf.mxu0
  %5578 = vdwg.mxu0
  %v5579 = vadd.f32 %v5574, %v5432
  %v5580 = vsel %vm734, %v5579, 0.0
  %5581 = vadd.xlane.f32.xlu0 %v5580
  %v5582 = vpop.xlane.xlu0 %5581
  %v5583 = vmul.f32 %v5582, %v738
  %v5584 = vsub.f32 %v5579, %v5583
  %v5585 = vmul.f32 %v5584, %v5584
  %v5586 = vsel %vm734, %v5585, 0.0
  %5587 = vadd.xlane.f32.xlu0 %v5586
  %v5588 = vpop.xlane.xlu0 %5587
  %v5589 = vmul.f32 %v5588, %v738
  %v5590 = vadd.f32 %v5589, 1e-06
  %v5591 = vrsqrt.pop %v5590
  %v5592 = vmul.f32 %v5584, %v5591
  %v5593 = vlaneseq
  %v5594 = vshrl.u32 %v5593, 7
  %v5595 = vsub.s32 4, %v5594
  %v5596 = vrot.slane %v4296, %v5595
  %v5597 = vmul.f32 %v5592, %v5596
  %v5598 = vlaneseq
  %v5599 = vshrl.u32 %v5598, 7
  %v5600 = vsub.s32 5, %v5599
  %v5601 = vrot.slane %v4296, %v5600
  %v5602 = vadd.f32 %v5597, %v5601
  %s5603 = scalar_lea.vmem %s9, 8
  %v5604 = vld [vmem:[%s5603] sm:$0xff]
  %s5605 = scalar_lea.vmem %s11, 8
  %v5606 = vld [vmem:[%s5605] sm:$0xff]
  %s5607 = scalar_lea.vmem %s17, 4
  %v5608 = vld [vmem:[%s5607] sm:$0xf]
  %v5609 = vlaneseq
  %v5610 = vshrl.u32 %v5609, 7
  %v5611 = vsub.s32 1, %v5610
  %v5612 = vrot.slane %v1493, %v5611
  %vm5613 = vcmp.eq.s32.totalorder %v5612, 1
  %vm5614 = vmand %vm161, %vm5613
  %v5615 = vsel %vm5614, 0.0, -1e+09
  %v5616 = vld [vmem:[%s67] sm:$0x3f]
  %v5617 = vld [vmem:[%s65] sm:$0x1]
  %v5618 = vpack.c.bf16 %v5604, %v5604
  %v5619 = vpack.c.bf16 %v5606, %v5606
  %v5620 = vld [vmem:[%s51] sm:$0xff]
  %v5621 = vld [vmem:[%s51 + $0x8] sm:$0xff]
  %v5622 = vld [vmem:[%s51 + $0x10] sm:$0xff]
  %v5623 = vld [vmem:[%s51 + $0x18] sm:$0xff]
  %v5624 = vld [vmem:[%s1509] sm:$0xff]
  %v5625 = vld [vmem:[%s1509 + $0x8] sm:$0xff]
  %v5626 = vld [vmem:[%s1509 + $0x10] sm:$0xff]
  %v5627 = vld [vmem:[%s1509 + $0x18] sm:$0xff]
  %v5632 = vunpack.c.l.b16 %v5624
  %v5633 = vunpack.c.h.b16 %v5624
  %v5634 = vunpack.c.l.b16 %v5625
  %v5635 = vunpack.c.h.b16 %v5625
  %v5636 = vunpack.c.l.b16 %v5626
  %v5637 = vunpack.c.h.b16 %v5626
  %v5638 = vunpack.c.l.b16 %v5627
  %v5639 = vunpack.c.h.b16 %v5627
  %v5640 = vpack.c.b16 %v5634, %v5632
  %v5641 = vpack.c.b16 %v5635, %v5633
  %v5642 = vpack.c.b16 %v5638, %v5636
  %v5643 = vpack.c.b16 %v5639, %v5637
  %v5649 = vsel %vm204, %v5619, 0
  %5651 = vmatprep.subr.bf16.mxu0 0
  %5652 = vmatpush1.bf16.msra.mxu0 0
  %5653 = vmatprep.subr.bf16.mxu0 0
  %5654 = vmatpush1.bf16.msra.mxu0 0
  %5655 = vmatprep.subr.bf16.mxu0 0
  %5656 = vmatpush1.bf16.msra.mxu0 0
  %5657 = vmatprep.subr.bf16.mxu0 0
  %5658 = vmatpush1.bf16.msra.mxu0 0
  %5659 = vmatprep.subr.bf16.mxu0 0
  %5660 = vmatpush1.bf16.msra.mxu0 0
  %5661 = vmatprep.subr.bf16.mxu0 0
  %5662 = vmatpush1.bf16.msra.mxu0 0
  %5663 = vmatprep.subr.bf16.mxu0 %v5643
  %5664 = vmatpush1.bf16.msra.mxu0 %v5642
  %5665 = vmatprep.subr.bf16.mxu0 %v5641
  %5666 = vmatpush1.bf16.msra.mxu0 %v5640
  %5667 = vmatprep.subr.bf16.mxu0 0
  %5668 = vmatpush2.bf16.msra.mxu0 0
  %5669 = vmatprep.subr.bf16.mxu0 0
  %5670 = vmatpush2.bf16.msra.mxu0 0
  %5671 = vmatprep.subr.bf16.mxu0 0
  %5672 = vmatpush2.bf16.msra.mxu0 0
  %5673 = vmatprep.subr.bf16.mxu0 0
  %5674 = vmatpush2.bf16.msra.mxu0 0
  %5675 = vmatprep.subr.bf16.mxu0 0
  %5676 = vmatpush2.bf16.msra.mxu0 0
  %5677 = vmatprep.subr.bf16.mxu0 0
  %5678 = vmatpush2.bf16.msra.mxu0 0
  %5679 = vmatprep.subr.bf16.mxu0 0
  %5680 = vmatpush2.bf16.msra.mxu0 0
  %5681 = vmatprep.subr.bf16.mxu0 0
  %5682 = vmatpush2.bf16.msra.mxu0 0
  %5683 = vmatprep.mubr.bf16.mxu0 0
  %5684 = vmatmul.mubr.bf16.gmra.mxu0 %v5649
  %v5685 = vpop.f32.mrf.mxu0
  %v5686 = vadd.f32 0.0, %v5685
  %v5687 = vpop.f32.mrf.mxu0
  %v5688 = vadd.f32 0.0, %v5687
  %v5689 = vpop.f32.mrf.mxu0
  %v5690 = vpop.f32.mrf.mxu0
  %5691 = vdwg.mxu0
  %v5696 = vunpack.c.l.b16 %v5620
  %v5697 = vunpack.c.h.b16 %v5620
  %v5698 = vunpack.c.l.b16 %v5621
  %v5699 = vunpack.c.h.b16 %v5621
  %v5700 = vunpack.c.l.b16 %v5622
  %v5701 = vunpack.c.h.b16 %v5622
  %v5702 = vunpack.c.l.b16 %v5623
  %v5703 = vunpack.c.h.b16 %v5623
  %v5704 = vpack.c.b16 %v5698, %v5696
  %v5705 = vpack.c.b16 %v5699, %v5697
  %v5706 = vpack.c.b16 %v5702, %v5700
  %v5707 = vpack.c.b16 %v5703, %v5701
  %v5713 = vsel %vm204, %v5618, 0
  %5715 = vmatprep.subr.bf16.mxu0 0
  %5716 = vmatpush1.bf16.msra.mxu0 0
  %5717 = vmatprep.subr.bf16.mxu0 0
  %5718 = vmatpush1.bf16.msra.mxu0 0
  %5719 = vmatprep.subr.bf16.mxu0 0
  %5720 = vmatpush1.bf16.msra.mxu0 0
  %5721 = vmatprep.subr.bf16.mxu0 0
  %5722 = vmatpush1.bf16.msra.mxu0 0
  %5723 = vmatprep.subr.bf16.mxu0 0
  %5724 = vmatpush1.bf16.msra.mxu0 0
  %5725 = vmatprep.subr.bf16.mxu0 0
  %5726 = vmatpush1.bf16.msra.mxu0 0
  %5727 = vmatprep.subr.bf16.mxu0 %v5707
  %5728 = vmatpush1.bf16.msra.mxu0 %v5706
  %5729 = vmatprep.subr.bf16.mxu0 %v5705
  %5730 = vmatpush1.bf16.msra.mxu0 %v5704
  %5731 = vmatprep.subr.bf16.mxu0 0
  %5732 = vmatpush2.bf16.msra.mxu0 0
  %5733 = vmatprep.subr.bf16.mxu0 0
  %5734 = vmatpush2.bf16.msra.mxu0 0
  %5735 = vmatprep.subr.bf16.mxu0 0
  %5736 = vmatpush2.bf16.msra.mxu0 0
  %5737 = vmatprep.subr.bf16.mxu0 0
  %5738 = vmatpush2.bf16.msra.mxu0 0
  %5739 = vmatprep.subr.bf16.mxu0 0
  %5740 = vmatpush2.bf16.msra.mxu0 0
  %5741 = vmatprep.subr.bf16.mxu0 0
  %5742 = vmatpush2.bf16.msra.mxu0 0
  %5743 = vmatprep.subr.bf16.mxu0 0
  %5744 = vmatpush2.bf16.msra.mxu0 0
  %5745 = vmatprep.subr.bf16.mxu0 0
  %5746 = vmatpush2.bf16.msra.mxu0 0
  %5747 = vmatprep.mubr.bf16.mxu0 0
  %5748 = vmatmul.mubr.bf16.gmra.mxu0 %v5713
  %v5749 = vpop.f32.mrf.mxu0
  %v5750 = vadd.f32 %v5686, %v5749
  %v5751 = vpop.f32.mrf.mxu0
  %v5752 = vadd.f32 %v5688, %v5751
  %v5753 = vpop.f32.mrf.mxu0
  %v5754 = vpop.f32.mrf.mxu0
  %5755 = vdwg.mxu0
  %5757 = vrot.lane.b32.xlu0 %v5750, 64
  %v5758 = vpop.permute.xlu0 %5757
  %v5759 = vsel %vm204, %v5750, 0
  %v5761 = vsel %vm204, %v5758, 0
  %5763 = vmatprep.subr.mxu0 0.0
  %5764 = vmatpush1.xpose.msra.mxu0 0.0
  %5765 = vmatprep.subr.mxu0 0.0
  %5766 = vmatpush1.xpose.msra.mxu0 0.0
  %5767 = vmatprep.subr.mxu0 0.0
  %5768 = vmatpush1.xpose.msra.mxu0 0.0
  %5769 = vmatprep.subr.mxu0 0.0
  %5770 = vmatpush1.xpose.msra.mxu0 0.0
  %5771 = vmatprep.subr.mxu0 0.0
  %5772 = vmatpush1.xpose.msra.mxu0 0.0
  %5773 = vmatprep.subr.mxu0 0.0
  %5774 = vmatpush1.xpose.msra.mxu0 0.0
  %5775 = vmatprep.subr.mxu0 0.0
  %5776 = vmatpush1.xpose.msra.mxu0 0.0
  %5777 = vmatprep.subr.mxu0 0.0
  %5778 = vmatpush1.xpose.msra.mxu0 0.0
  %5779 = vmatprep.subr.mxu0 0.0
  %5780 = vmatpush1.xpose.msra.mxu0 0.0
  %5781 = vmatprep.subr.mxu0 0.0
  %5782 = vmatpush1.xpose.msra.mxu0 0.0
  %5783 = vmatprep.subr.mxu0 0.0
  %5784 = vmatpush1.xpose.msra.mxu0 0.0
  %5785 = vmatprep.subr.mxu0 0.0
  %5786 = vmatpush1.xpose.msra.mxu0 0.0
  %5787 = vmatprep.subr.mxu0 0.0
  %5788 = vmatpush1.xpose.msra.mxu0 0.0
  %5789 = vmatprep.subr.mxu0 0.0
  %5790 = vmatpush1.xpose.msra.mxu0 0.0
  %5791 = vmatprep.subr.mxu0 0.0
  %5792 = vmatpush1.xpose.msra.mxu0 0.0
  %5793 = vmatprep.subr.mxu0 0.0
  %5794 = vmatpush1.xpose.msra.mxu0 %v5761
  %5795 = vmatprep.subr.mxu0 0.0
  %5796 = vmatpush2.xpose.msra.mxu0 0.0
  %5797 = vmatprep.subr.mxu0 0.0
  %5798 = vmatpush2.xpose.msra.mxu0 0.0
  %5799 = vmatprep.subr.mxu0 0.0
  %5800 = vmatpush2.xpose.msra.mxu0 0.0
  %5801 = vmatprep.subr.mxu0 0.0
  %5802 = vmatpush2.xpose.msra.mxu0 0.0
  %5803 = vmatprep.subr.mxu0 0.0
  %5804 = vmatpush2.xpose.msra.mxu0 0.0
  %5805 = vmatprep.subr.mxu0 0.0
  %5806 = vmatpush2.xpose.msra.mxu0 0.0
  %5807 = vmatprep.subr.mxu0 0.0
  %5808 = vmatpush2.xpose.msra.mxu0 0.0
  %5809 = vmatprep.subr.mxu0 0.0
  %5810 = vmatpush2.xpose.msra.mxu0 0.0
  %5811 = vmatprep.subr.mxu0 0.0
  %5812 = vmatpush2.xpose.msra.mxu0 0.0
  %5813 = vmatprep.subr.mxu0 0.0
  %5814 = vmatpush2.xpose.msra.mxu0 0.0
  %5815 = vmatprep.subr.mxu0 0.0
  %5816 = vmatpush2.xpose.msra.mxu0 0.0
  %5817 = vmatprep.subr.mxu0 0.0
  %5818 = vmatpush2.xpose.msra.mxu0 0.0
  %5819 = vmatprep.subr.mxu0 0.0
  %5820 = vmatpush2.xpose.msra.mxu0 0.0
  %5821 = vmatprep.subr.mxu0 0.0
  %5822 = vmatpush2.xpose.msra.mxu0 0.0
  %5823 = vmatprep.subr.mxu0 0.0
  %5824 = vmatpush2.xpose.msra.mxu0 0.0
  %5825 = vmatprep.subr.mxu0 0.0
  %5826 = vmatpush2.xpose.msra.mxu0 0.0
  %5827 = vmatprep.mubr.f32.mxu0 0.0
  %5828 = vmatmul.mubr.f32.gmra.mxu0 %v5759
  %v5829 = vpop.f32.mrf.mxu0
  %v5830 = vadd.f32 0.0, %v5829
  %v5831 = vpop.f32.mrf.mxu0
  %5832 = vdwg.mxu0
  %v5833 = vmul.f32 %v5830, 0.17677669
  %v5834 = vadd.f32 %v5833, %v5615
  %v5835 = vsel %vm1721, %v5834, -inf
  %5836 = vmax.xlane.f32.xlu0 %v5835
  %v5837 = vpop.xlane.xlu0 %5836
  %v5838 = vsub.f32 %v5834, %v5837
  %v5839 = vmul.f32 %v5838, 1.442695
  %v5840 = vpow.pop %v5839
  %v5841 = vsel %vm1721, %v5840, 0.0
  %5842 = vadd.xlane.f32.xlu0 %v5841
  %v5843 = vpop.xlane.xlu0 %5842
  %v5844 = vrcp.pop %v5843
  %v5845 = vmul.f32 %v5840, %v5844
  %v5847 = vsel %vm1721, %v5845, 0
  %5849 = vmatprep.subr.mxu0 0.0
  %5850 = vmatpush1.msra.mxu0 0.0
  %5851 = vmatprep.subr.mxu0 0.0
  %5852 = vmatpush1.msra.mxu0 0.0
  %5853 = vmatprep.subr.mxu0 0.0
  %5854 = vmatpush1.msra.mxu0 0.0
  %5855 = vmatprep.subr.mxu0 0.0
  %5856 = vmatpush1.msra.mxu0 0.0
  %5857 = vmatprep.subr.mxu0 0.0
  %5858 = vmatpush1.msra.mxu0 0.0
  %5859 = vmatprep.subr.mxu0 0.0
  %5860 = vmatpush1.msra.mxu0 0.0
  %5861 = vmatprep.subr.mxu0 0.0
  %5862 = vmatpush1.msra.mxu0 0.0
  %5863 = vmatprep.subr.mxu0 0.0
  %5864 = vmatpush1.msra.mxu0 0.0
  %5865 = vmatprep.subr.mxu0 0.0
  %5866 = vmatpush1.msra.mxu0 0.0
  %5867 = vmatprep.subr.mxu0 0.0
  %5868 = vmatpush1.msra.mxu0 0.0
  %5869 = vmatprep.subr.mxu0 0.0
  %5870 = vmatpush1.msra.mxu0 0.0
  %5871 = vmatprep.subr.mxu0 0.0
  %5872 = vmatpush1.msra.mxu0 0.0
  %5873 = vmatprep.subr.mxu0 0.0
  %5874 = vmatpush1.msra.mxu0 0.0
  %5875 = vmatprep.subr.mxu0 0.0
  %5876 = vmatpush1.msra.mxu0 0.0
  %5877 = vmatprep.subr.mxu0 0.0
  %5878 = vmatpush1.msra.mxu0 0.0
  %5879 = vmatprep.subr.mxu0 0.0
  %5880 = vmatpush1.msra.mxu0 %v5752
  %5881 = vmatprep.subr.mxu0 0.0
  %5882 = vmatpush2.msra.mxu0 0.0
  %5883 = vmatprep.subr.mxu0 0.0
  %5884 = vmatpush2.msra.mxu0 0.0
  %5885 = vmatprep.subr.mxu0 0.0
  %5886 = vmatpush2.msra.mxu0 0.0
  %5887 = vmatprep.subr.mxu0 0.0
  %5888 = vmatpush2.msra.mxu0 0.0
  %5889 = vmatprep.subr.mxu0 0.0
  %5890 = vmatpush2.msra.mxu0 0.0
  %5891 = vmatprep.subr.mxu0 0.0
  %5892 = vmatpush2.msra.mxu0 0.0
  %5893 = vmatprep.subr.mxu0 0.0
  %5894 = vmatpush2.msra.mxu0 0.0
  %5895 = vmatprep.subr.mxu0 0.0
  %5896 = vmatpush2.msra.mxu0 0.0
  %5897 = vmatprep.subr.mxu0 0.0
  %5898 = vmatpush2.msra.mxu0 0.0
  %5899 = vmatprep.subr.mxu0 0.0
  %5900 = vmatpush2.msra.mxu0 0.0
  %5901 = vmatprep.subr.mxu0 0.0
  %5902 = vmatpush2.msra.mxu0 0.0
  %5903 = vmatprep.subr.mxu0 0.0
  %5904 = vmatpush2.msra.mxu0 0.0
  %5905 = vmatprep.subr.mxu0 0.0
  %5906 = vmatpush2.msra.mxu0 0.0
  %5907 = vmatprep.subr.mxu0 0.0
  %5908 = vmatpush2.msra.mxu0 0.0
  %5909 = vmatprep.subr.mxu0 0.0
  %5910 = vmatpush2.msra.mxu0 0.0
  %5911 = vmatprep.subr.mxu0 0.0
  %5912 = vmatpush2.msra.mxu0 0.0
  %5913 = vmatprep.mubr.f32.mxu0 0.0
  %5914 = vmatmul.mubr.f32.gmra.mxu0 %v5847
  %v5915 = vpop.f32.mrf.mxu0
  %v5916 = vadd.f32 0.0, %v5915
  %v5917 = vpop.f32.mrf.mxu0
  %5918 = vdwg.mxu0
  %5919 = vrot.lane.b32.xlu0 %v5750, 96
  %v5920 = vpop.permute.xlu0 %5919
  %5921 = vrot.lane.b32.xlu0 %v5750, 32
  %v5922 = vpop.permute.xlu0 %5921
  %v5923 = vsel %vm204, %v5920, 0
  %v5925 = vsel %vm204, %v5922, 0
  %5927 = vmatprep.subr.mxu0 0.0
  %5928 = vmatpush1.xpose.msra.mxu0 0.0
  %5929 = vmatprep.subr.mxu0 0.0
  %5930 = vmatpush1.xpose.msra.mxu0 0.0
  %5931 = vmatprep.subr.mxu0 0.0
  %5932 = vmatpush1.xpose.msra.mxu0 0.0
  %5933 = vmatprep.subr.mxu0 0.0
  %5934 = vmatpush1.xpose.msra.mxu0 0.0
  %5935 = vmatprep.subr.mxu0 0.0
  %5936 = vmatpush1.xpose.msra.mxu0 0.0
  %5937 = vmatprep.subr.mxu0 0.0
  %5938 = vmatpush1.xpose.msra.mxu0 0.0
  %5939 = vmatprep.subr.mxu0 0.0
  %5940 = vmatpush1.xpose.msra.mxu0 0.0
  %5941 = vmatprep.subr.mxu0 0.0
  %5942 = vmatpush1.xpose.msra.mxu0 0.0
  %5943 = vmatprep.subr.mxu0 0.0
  %5944 = vmatpush1.xpose.msra.mxu0 0.0
  %5945 = vmatprep.subr.mxu0 0.0
  %5946 = vmatpush1.xpose.msra.mxu0 0.0
  %5947 = vmatprep.subr.mxu0 0.0
  %5948 = vmatpush1.xpose.msra.mxu0 0.0
  %5949 = vmatprep.subr.mxu0 0.0
  %5950 = vmatpush1.xpose.msra.mxu0 0.0
  %5951 = vmatprep.subr.mxu0 0.0
  %5952 = vmatpush1.xpose.msra.mxu0 0.0
  %5953 = vmatprep.subr.mxu0 0.0
  %5954 = vmatpush1.xpose.msra.mxu0 0.0
  %5955 = vmatprep.subr.mxu0 0.0
  %5956 = vmatpush1.xpose.msra.mxu0 0.0
  %5957 = vmatprep.subr.mxu0 0.0
  %5958 = vmatpush1.xpose.msra.mxu0 %v5925
  %5959 = vmatprep.subr.mxu0 0.0
  %5960 = vmatpush2.xpose.msra.mxu0 0.0
  %5961 = vmatprep.subr.mxu0 0.0
  %5962 = vmatpush2.xpose.msra.mxu0 0.0
  %5963 = vmatprep.subr.mxu0 0.0
  %5964 = vmatpush2.xpose.msra.mxu0 0.0
  %5965 = vmatprep.subr.mxu0 0.0
  %5966 = vmatpush2.xpose.msra.mxu0 0.0
  %5967 = vmatprep.subr.mxu0 0.0
  %5968 = vmatpush2.xpose.msra.mxu0 0.0
  %5969 = vmatprep.subr.mxu0 0.0
  %5970 = vmatpush2.xpose.msra.mxu0 0.0
  %5971 = vmatprep.subr.mxu0 0.0
  %5972 = vmatpush2.xpose.msra.mxu0 0.0
  %5973 = vmatprep.subr.mxu0 0.0
  %5974 = vmatpush2.xpose.msra.mxu0 0.0
  %5975 = vmatprep.subr.mxu0 0.0
  %5976 = vmatpush2.xpose.msra.mxu0 0.0
  %5977 = vmatprep.subr.mxu0 0.0
  %5978 = vmatpush2.xpose.msra.mxu0 0.0
  %5979 = vmatprep.subr.mxu0 0.0
  %5980 = vmatpush2.xpose.msra.mxu0 0.0
  %5981 = vmatprep.subr.mxu0 0.0
  %5982 = vmatpush2.xpose.msra.mxu0 0.0
  %5983 = vmatprep.subr.mxu0 0.0
  %5984 = vmatpush2.xpose.msra.mxu0 0.0
  %5985 = vmatprep.subr.mxu0 0.0
  %5986 = vmatpush2.xpose.msra.mxu0 0.0
  %5987 = vmatprep.subr.mxu0 0.0
  %5988 = vmatpush2.xpose.msra.mxu0 0.0
  %5989 = vmatprep.subr.mxu0 0.0
  %5990 = vmatpush2.xpose.msra.mxu0 0.0
  %5991 = vmatprep.mubr.f32.mxu0 0.0
  %5992 = vmatmul.mubr.f32.gmra.mxu0 %v5923
  %v5993 = vpop.f32.mrf.mxu0
  %v5994 = vadd.f32 0.0, %v5993
  %v5995 = vpop.f32.mrf.mxu0
  %5996 = vdwg.mxu0
  %v5997 = vmul.f32 %v5994, 0.17677669
  %v5998 = vadd.f32 %v5997, %v5615
  %v5999 = vsel %vm1721, %v5998, -inf
  %6000 = vmax.xlane.f32.xlu0 %v5999
  %v6001 = vpop.xlane.xlu0 %6000
  %v6002 = vsub.f32 %v5998, %v6001
  %v6003 = vmul.f32 %v6002, 1.442695
  %v6004 = vpow.pop %v6003
  %v6005 = vsel %vm1721, %v6004, 0.0
  %6006 = vadd.xlane.f32.xlu0 %v6005
  %v6007 = vpop.xlane.xlu0 %6006
  %v6008 = vrcp.pop %v6007
  %v6009 = vmul.f32 %v6004, %v6008
  %6011 = vrot.lane.b32.xlu0 %v5752, 96
  %v6012 = vpop.permute.xlu0 %6011
  %v6015 = vsel %vm1721, %v6009, 0
  %6017 = vmatprep.subr.mxu0 0.0
  %6018 = vmatpush1.msra.mxu0 0.0
  %6019 = vmatprep.subr.mxu0 0.0
  %6020 = vmatpush1.msra.mxu0 0.0
  %6021 = vmatprep.subr.mxu0 0.0
  %6022 = vmatpush1.msra.mxu0 0.0
  %6023 = vmatprep.subr.mxu0 0.0
  %6024 = vmatpush1.msra.mxu0 0.0
  %6025 = vmatprep.subr.mxu0 0.0
  %6026 = vmatpush1.msra.mxu0 0.0
  %6027 = vmatprep.subr.mxu0 0.0
  %6028 = vmatpush1.msra.mxu0 0.0
  %6029 = vmatprep.subr.mxu0 0.0
  %6030 = vmatpush1.msra.mxu0 0.0
  %6031 = vmatprep.subr.mxu0 0.0
  %6032 = vmatpush1.msra.mxu0 0.0
  %6033 = vmatprep.subr.mxu0 0.0
  %6034 = vmatpush1.msra.mxu0 0.0
  %6035 = vmatprep.subr.mxu0 0.0
  %6036 = vmatpush1.msra.mxu0 0.0
  %6037 = vmatprep.subr.mxu0 0.0
  %6038 = vmatpush1.msra.mxu0 0.0
  %6039 = vmatprep.subr.mxu0 0.0
  %6040 = vmatpush1.msra.mxu0 0.0
  %6041 = vmatprep.subr.mxu0 0.0
  %6042 = vmatpush1.msra.mxu0 0.0
  %6043 = vmatprep.subr.mxu0 0.0
  %6044 = vmatpush1.msra.mxu0 0.0
  %6045 = vmatprep.subr.mxu0 0.0
  %6046 = vmatpush1.msra.mxu0 0.0
  %6047 = vmatprep.subr.mxu0 0.0
  %6048 = vmatpush1.msra.mxu0 %v6012
  %6049 = vmatprep.subr.mxu0 0.0
  %6050 = vmatpush2.msra.mxu0 0.0
  %6051 = vmatprep.subr.mxu0 0.0
  %6052 = vmatpush2.msra.mxu0 0.0
  %6053 = vmatprep.subr.mxu0 0.0
  %6054 = vmatpush2.msra.mxu0 0.0
  %6055 = vmatprep.subr.mxu0 0.0
  %6056 = vmatpush2.msra.mxu0 0.0
  %6057 = vmatprep.subr.mxu0 0.0
  %6058 = vmatpush2.msra.mxu0 0.0
  %6059 = vmatprep.subr.mxu0 0.0
  %6060 = vmatpush2.msra.mxu0 0.0
  %6061 = vmatprep.subr.mxu0 0.0
  %6062 = vmatpush2.msra.mxu0 0.0
  %6063 = vmatprep.subr.mxu0 0.0
  %6064 = vmatpush2.msra.mxu0 0.0
  %6065 = vmatprep.subr.mxu0 0.0
  %6066 = vmatpush2.msra.mxu0 0.0
  %6067 = vmatprep.subr.mxu0 0.0
  %6068 = vmatpush2.msra.mxu0 0.0
  %6069 = vmatprep.subr.mxu0 0.0
  %6070 = vmatpush2.msra.mxu0 0.0
  %6071 = vmatprep.subr.mxu0 0.0
  %6072 = vmatpush2.msra.mxu0 0.0
  %6073 = vmatprep.subr.mxu0 0.0
  %6074 = vmatpush2.msra.mxu0 0.0
  %6075 = vmatprep.subr.mxu0 0.0
  %6076 = vmatpush2.msra.mxu0 0.0
  %6077 = vmatprep.subr.mxu0 0.0
  %6078 = vmatpush2.msra.mxu0 0.0
  %6079 = vmatprep.subr.mxu0 0.0
  %6080 = vmatpush2.msra.mxu0 0.0
  %6081 = vmatprep.mubr.f32.mxu0 0.0
  %6082 = vmatmul.mubr.f32.gmra.mxu0 %v6015
  %v6083 = vpop.f32.mrf.mxu0
  %v6084 = vadd.f32 0.0, %v6083
  %v6085 = vpop.f32.mrf.mxu0
  %6086 = vdwg.mxu0
  %6088 = vrot.lane.b32.xlu0 %v6084, 32
  %v6089 = vpop.permute.xlu0 %6088
  %v6091 = vsel %vm204, %v5916, %v6089
  %v6092 = vadd.f32 %v5604, %v5606
  %v6093 = vpack.c.bf16 %v6091, %v6091
  %v6094 = vld [vmem:[%s53] sm:$0xf]
  %v6095 = vld [vmem:[%s53 + $0x4] sm:$0xf]
  %v6096 = vld [vmem:[%s53 + $0x8] sm:$0xf]
  %v6097 = vld [vmem:[%s53 + $0xc] sm:$0xf]
  %v6098 = vld [vmem:[%s53 + $0x10] sm:$0xf]
  %v6099 = vld [vmem:[%s53 + $0x14] sm:$0xf]
  %v6100 = vld [vmem:[%s53 + $0x18] sm:$0xf]
  %v6101 = vld [vmem:[%s53 + $0x1c] sm:$0xf]
  %v6110 = vunpack.c.l.b16 %v6094
  %v6111 = vunpack.c.l.b16 %v6095
  %v6112 = vunpack.c.l.b16 %v6096
  %v6113 = vunpack.c.l.b16 %v6097
  %v6114 = vunpack.c.l.b16 %v6098
  %v6115 = vunpack.c.l.b16 %v6099
  %v6116 = vunpack.c.l.b16 %v6100
  %v6117 = vunpack.c.l.b16 %v6101
  %v6118 = vpack.c.b16 %v6111, %v6110
  %v6119 = vpack.c.b16 %v6113, %v6112
  %v6120 = vpack.c.b16 %v6115, %v6114
  %v6121 = vpack.c.b16 %v6117, %v6116
  %v6127 = vsel %vm689, %v6093, 0
  %6129 = vmatprep.subr.bf16.mxu0 0
  %6130 = vmatpush1.bf16.msra.mxu0 0
  %6131 = vmatprep.subr.bf16.mxu0 0
  %6132 = vmatpush1.bf16.msra.mxu0 0
  %6133 = vmatprep.subr.bf16.mxu0 0
  %6134 = vmatpush1.bf16.msra.mxu0 0
  %6135 = vmatprep.subr.bf16.mxu0 0
  %6136 = vmatpush1.bf16.msra.mxu0 0
  %6137 = vmatprep.subr.bf16.mxu0 0
  %6138 = vmatpush1.bf16.msra.mxu0 %v6121
  %6139 = vmatprep.subr.bf16.mxu0 0
  %6140 = vmatpush1.bf16.msra.mxu0 %v6120
  %6141 = vmatprep.subr.bf16.mxu0 0
  %6142 = vmatpush1.bf16.msra.mxu0 %v6119
  %6143 = vmatprep.subr.bf16.mxu0 0
  %6144 = vmatpush1.bf16.msra.mxu0 %v6118
  %6145 = vmatprep.subr.bf16.mxu0 0
  %6146 = vmatpush2.bf16.msra.mxu0 0
  %6147 = vmatprep.subr.bf16.mxu0 0
  %6148 = vmatpush2.bf16.msra.mxu0 0
  %6149 = vmatprep.subr.bf16.mxu0 0
  %6150 = vmatpush2.bf16.msra.mxu0 0
  %6151 = vmatprep.subr.bf16.mxu0 0
  %6152 = vmatpush2.bf16.msra.mxu0 0
  %6153 = vmatprep.subr.bf16.mxu0 0
  %6154 = vmatpush2.bf16.msra.mxu0 0
  %6155 = vmatprep.subr.bf16.mxu0 0
  %6156 = vmatpush2.bf16.msra.mxu0 0
  %6157 = vmatprep.subr.bf16.mxu0 0
  %6158 = vmatpush2.bf16.msra.mxu0 0
  %6159 = vmatprep.subr.bf16.mxu0 0
  %6160 = vmatpush2.bf16.msra.mxu0 0
  %6161 = vmatprep.mubr.bf16.mxu0 0
  %6162 = vmatmul.mubr.bf16.gmra.mxu0 %v6127
  %v6163 = vpop.f32.mrf.mxu0
  %v6164 = vadd.f32 0.0, %v6163
  %v6165 = vpop.f32.mrf.mxu0
  %v6166 = vpop.f32.mrf.mxu0
  %v6167 = vpop.f32.mrf.mxu0
  %6168 = vdwg.mxu0
  %v6169 = vadd.f32 %v6092, %v6164
  %v6170 = vsel %vm204, %v6169, 0.0
  %6171 = vadd.xlane.f32.xlu0 %v6170
  %v6172 = vpop.xlane.xlu0 %6171
  %v6173 = vmul.f32 %v6172, %v738
  %v6174 = vsub.f32 %v6169, %v6173
  %v6175 = vmul.f32 %v6174, %v6174
  %v6176 = vsel %vm204, %v6175, 0.0
  %6177 = vadd.xlane.f32.xlu0 %v6176
  %v6178 = vpop.xlane.xlu0 %6177
  %v6179 = vmul.f32 %v6178, %v738
  %v6180 = vadd.f32 %v6179, 1e-06
  %v6181 = vrsqrt.pop %v6180
  %v6182 = vmul.f32 %v6174, %v6181
  %v6183 = vlaneseq
  %v6184 = vshrl.u32 %v6183, 7
  %v6185 = vsub.s32 0, %v6184
  %v6186 = vrot.slane %v5616, %v6185
  %v6187 = vmul.f32 %v6182, %v6186
  %v6188 = vlaneseq
  %v6189 = vshrl.u32 %v6188, 7
  %v6190 = vsub.s32 1, %v6189
  %v6191 = vrot.slane %v5616, %v6190
  %v6192 = vadd.f32 %v6187, %v6191
  %v6193 = vpack.c.bf16 %v6192, %v6192
  %v6194 = vpack.c.bf16 %v5608, %v5608
  %v6195 = vld [vmem:[%s55] sm:$0xf]
  %v6196 = vld [vmem:[%s55 + $0x4] sm:$0xf]
  %v6197 = vld [vmem:[%s55 + $0x8] sm:$0xf]
  %v6198 = vld [vmem:[%s55 + $0xc] sm:$0xf]
  %v6203 = vunpack.c.l.b16 %v6195
  %v6204 = vunpack.c.l.b16 %v6196
  %v6205 = vunpack.c.l.b16 %v6197
  %v6206 = vunpack.c.l.b16 %v6198
  %v6207 = vpack.c.b16 %v6204, %v6203
  %v6208 = vpack.c.b16 %v6206, %v6205
  %v6212 = vsel %vm204, %v6193, 0
  %6214 = vmatprep.subr.bf16.mxu0 0
  %6215 = vmatpush1.bf16.msra.mxu0 0
  %6216 = vmatprep.subr.bf16.mxu0 0
  %6217 = vmatpush1.bf16.msra.mxu0 0
  %6218 = vmatprep.subr.bf16.mxu0 0
  %6219 = vmatpush1.bf16.msra.mxu0 0
  %6220 = vmatprep.subr.bf16.mxu0 0
  %6221 = vmatpush1.bf16.msra.mxu0 0
  %6222 = vmatprep.subr.bf16.mxu0 0
  %6223 = vmatpush1.bf16.msra.mxu0 0
  %6224 = vmatprep.subr.bf16.mxu0 0
  %6225 = vmatpush1.bf16.msra.mxu0 0
  %6226 = vmatprep.subr.bf16.mxu0 0
  %6227 = vmatpush1.bf16.msra.mxu0 %v6208
  %6228 = vmatprep.subr.bf16.mxu0 0
  %6229 = vmatpush1.bf16.msra.mxu0 %v6207
  %6230 = vmatprep.subr.bf16.mxu0 0
  %6231 = vmatpush2.bf16.msra.mxu0 0
  %6232 = vmatprep.subr.bf16.mxu0 0
  %6233 = vmatpush2.bf16.msra.mxu0 0
  %6234 = vmatprep.subr.bf16.mxu0 0
  %6235 = vmatpush2.bf16.msra.mxu0 0
  %6236 = vmatprep.subr.bf16.mxu0 0
  %6237 = vmatpush2.bf16.msra.mxu0 0
  %6238 = vmatprep.subr.bf16.mxu0 0
  %6239 = vmatpush2.bf16.msra.mxu0 0
  %6240 = vmatprep.subr.bf16.mxu0 0
  %6241 = vmatpush2.bf16.msra.mxu0 0
  %6242 = vmatprep.subr.bf16.mxu0 0
  %6243 = vmatpush2.bf16.msra.mxu0 0
  %6244 = vmatprep.subr.bf16.mxu0 0
  %6245 = vmatpush2.bf16.msra.mxu0 0
  %6246 = vmatprep.mubr.bf16.mxu0 0
  %6247 = vmatmul.mubr.bf16.gmra.mxu0 %v6212
  %v6248 = vpop.f32.mrf.mxu0
  %v6249 = vadd.f32 0.0, %v6248
  %v6250 = vpop.f32.mrf.mxu0
  %v6251 = vpop.f32.mrf.mxu0
  %v6252 = vpop.f32.mrf.mxu0
  %6253 = vdwg.mxu0
  %v6254 = vld [vmem:[%s57] sm:$0xf]
  %v6255 = vld [vmem:[%s57 + $0x4] sm:$0xf]
  %v6256 = vld [vmem:[%s57 + $0x8] sm:$0xf]
  %v6257 = vld [vmem:[%s57 + $0xc] sm:$0xf]
  %v6262 = vunpack.c.l.b16 %v6254
  %v6263 = vunpack.c.l.b16 %v6255
  %v6264 = vunpack.c.l.b16 %v6256
  %v6265 = vunpack.c.l.b16 %v6257
  %v6266 = vpack.c.b16 %v6263, %v6262
  %v6267 = vpack.c.b16 %v6265, %v6264
  %v6271 = vsel %vm204, %v6194, 0
  %6273 = vmatprep.subr.bf16.mxu0 0
  %6274 = vmatpush1.bf16.msra.mxu0 0
  %6275 = vmatprep.subr.bf16.mxu0 0
  %6276 = vmatpush1.bf16.msra.mxu0 0
  %6277 = vmatprep.subr.bf16.mxu0 0
  %6278 = vmatpush1.bf16.msra.mxu0 0
  %6279 = vmatprep.subr.bf16.mxu0 0
  %6280 = vmatpush1.bf16.msra.mxu0 0
  %6281 = vmatprep.subr.bf16.mxu0 0
  %6282 = vmatpush1.bf16.msra.mxu0 0
  %6283 = vmatprep.subr.bf16.mxu0 0
  %6284 = vmatpush1.bf16.msra.mxu0 0
  %6285 = vmatprep.subr.bf16.mxu0 0
  %6286 = vmatpush1.bf16.msra.mxu0 %v6267
  %6287 = vmatprep.subr.bf16.mxu0 0
  %6288 = vmatpush1.bf16.msra.mxu0 %v6266
  %6289 = vmatprep.subr.bf16.mxu0 0
  %6290 = vmatpush2.bf16.msra.mxu0 0
  %6291 = vmatprep.subr.bf16.mxu0 0
  %6292 = vmatpush2.bf16.msra.mxu0 0
  %6293 = vmatprep.subr.bf16.mxu0 0
  %6294 = vmatpush2.bf16.msra.mxu0 0
  %6295 = vmatprep.subr.bf16.mxu0 0
  %6296 = vmatpush2.bf16.msra.mxu0 0
  %6297 = vmatprep.subr.bf16.mxu0 0
  %6298 = vmatpush2.bf16.msra.mxu0 0
  %6299 = vmatprep.subr.bf16.mxu0 0
  %6300 = vmatpush2.bf16.msra.mxu0 0
  %6301 = vmatprep.subr.bf16.mxu0 0
  %6302 = vmatpush2.bf16.msra.mxu0 0
  %6303 = vmatprep.subr.bf16.mxu0 0
  %6304 = vmatpush2.bf16.msra.mxu0 0
  %6305 = vmatprep.mubr.bf16.mxu0 0
  %6306 = vmatmul.mubr.bf16.gmra.mxu0 %v6271
  %v6307 = vpop.f32.mrf.mxu0
  %v6308 = vadd.f32 0.0, %v6307
  %v6309 = vpop.f32.mrf.mxu0
  %v6310 = vpop.f32.mrf.mxu0
  %v6311 = vpop.f32.mrf.mxu0
  %6312 = vdwg.mxu0
  %v6314 = vsel %vm204, %v6249, 0
  %v6317 = vsel %vm204, %v6308, 0
  %6319 = vmatprep.subr.mxu0 0.0
  %6320 = vmatpush1.xpose.msra.mxu0 0.0
  %6321 = vmatprep.subr.mxu0 0.0
  %6322 = vmatpush1.xpose.msra.mxu0 0.0
  %6323 = vmatprep.subr.mxu0 0.0
  %6324 = vmatpush1.xpose.msra.mxu0 0.0
  %6325 = vmatprep.subr.mxu0 0.0
  %6326 = vmatpush1.xpose.msra.mxu0 0.0
  %6327 = vmatprep.subr.mxu0 0.0
  %6328 = vmatpush1.xpose.msra.mxu0 0.0
  %6329 = vmatprep.subr.mxu0 0.0
  %6330 = vmatpush1.xpose.msra.mxu0 0.0
  %6331 = vmatprep.subr.mxu0 0.0
  %6332 = vmatpush1.xpose.msra.mxu0 0.0
  %6333 = vmatprep.subr.mxu0 0.0
  %6334 = vmatpush1.xpose.msra.mxu0 0.0
  %6335 = vmatprep.subr.mxu0 0.0
  %6336 = vmatpush1.xpose.msra.mxu0 0.0
  %6337 = vmatprep.subr.mxu0 0.0
  %6338 = vmatpush1.xpose.msra.mxu0 0.0
  %6339 = vmatprep.subr.mxu0 0.0
  %6340 = vmatpush1.xpose.msra.mxu0 0.0
  %6341 = vmatprep.subr.mxu0 0.0
  %6342 = vmatpush1.xpose.msra.mxu0 0.0
  %6343 = vmatprep.subr.mxu0 0.0
  %6344 = vmatpush1.xpose.msra.mxu0 0.0
  %6345 = vmatprep.subr.mxu0 0.0
  %6346 = vmatpush1.xpose.msra.mxu0 0.0
  %6347 = vmatprep.subr.mxu0 0.0
  %6348 = vmatpush1.xpose.msra.mxu0 0.0
  %6349 = vmatprep.subr.mxu0 0.0
  %6350 = vmatpush1.xpose.msra.mxu0 %v6317
  %6351 = vmatprep.subr.mxu0 0.0
  %6352 = vmatpush2.xpose.msra.mxu0 0.0
  %6353 = vmatprep.subr.mxu0 0.0
  %6354 = vmatpush2.xpose.msra.mxu0 0.0
  %6355 = vmatprep.subr.mxu0 0.0
  %6356 = vmatpush2.xpose.msra.mxu0 0.0
  %6357 = vmatprep.subr.mxu0 0.0
  %6358 = vmatpush2.xpose.msra.mxu0 0.0
  %6359 = vmatprep.subr.mxu0 0.0
  %6360 = vmatpush2.xpose.msra.mxu0 0.0
  %6361 = vmatprep.subr.mxu0 0.0
  %6362 = vmatpush2.xpose.msra.mxu0 0.0
  %6363 = vmatprep.subr.mxu0 0.0
  %6364 = vmatpush2.xpose.msra.mxu0 0.0
  %6365 = vmatprep.subr.mxu0 0.0
  %6366 = vmatpush2.xpose.msra.mxu0 0.0
  %6367 = vmatprep.subr.mxu0 0.0
  %6368 = vmatpush2.xpose.msra.mxu0 0.0
  %6369 = vmatprep.subr.mxu0 0.0
  %6370 = vmatpush2.xpose.msra.mxu0 0.0
  %6371 = vmatprep.subr.mxu0 0.0
  %6372 = vmatpush2.xpose.msra.mxu0 0.0
  %6373 = vmatprep.subr.mxu0 0.0
  %6374 = vmatpush2.xpose.msra.mxu0 0.0
  %6375 = vmatprep.subr.mxu0 0.0
  %6376 = vmatpush2.xpose.msra.mxu0 0.0
  %6377 = vmatprep.subr.mxu0 0.0
  %6378 = vmatpush2.xpose.msra.mxu0 0.0
  %6379 = vmatprep.subr.mxu0 0.0
  %6380 = vmatpush2.xpose.msra.mxu0 0.0
  %6381 = vmatprep.subr.mxu0 0.0
  %6382 = vmatpush2.xpose.msra.mxu0 0.0
  %6383 = vmatprep.mubr.f32.mxu0 0.0
  %6384 = vmatmul.mubr.f32.gmra.mxu0 %v6314
  %v6385 = vpop.f32.mrf.mxu0
  %v6386 = vadd.f32 0.0, %v6385
  %v6387 = vpop.f32.mrf.mxu0
  %6388 = vdwg.mxu0
  %v6389 = vmul.f32 %v6386, 0.17677669
  %v6390 = vsel %vm404, %v6389, -inf
  %6391 = vmax.xlane.f32.xlu0 %v6390
  %v6392 = vpop.xlane.xlu0 %6391
  %v6393 = vsub.f32 %v6389, %v6392
  %v6394 = vmul.f32 %v6393, 1.442695
  %v6395 = vpow.pop %v6394
  %v6396 = vsel %vm404, %v6395, 0.0
  %6397 = vadd.xlane.f32.xlu0 %v6396
  %v6398 = vpop.xlane.xlu0 %6397
  %v6399 = vrcp.pop %v6398
  %v6400 = vmul.f32 %v6395, %v6399
  %6401 = vrot.lane.b32.xlu0 %v6308, 64
  %v6402 = vpop.permute.xlu0 %6401
  %v6404 = vsel %vm404, %v6400, 0
  %v6406 = vsel %vm408, %v6402, 0
  %6408 = vmatprep.subr.mxu0 0.0
  %6409 = vmatpush1.msra.mxu0 0.0
  %6410 = vmatprep.subr.mxu0 0.0
  %6411 = vmatpush1.msra.mxu0 0.0
  %6412 = vmatprep.subr.mxu0 0.0
  %6413 = vmatpush1.msra.mxu0 0.0
  %6414 = vmatprep.subr.mxu0 0.0
  %6415 = vmatpush1.msra.mxu0 0.0
  %6416 = vmatprep.subr.mxu0 0.0
  %6417 = vmatpush1.msra.mxu0 0.0
  %6418 = vmatprep.subr.mxu0 0.0
  %6419 = vmatpush1.msra.mxu0 0.0
  %6420 = vmatprep.subr.mxu0 0.0
  %6421 = vmatpush1.msra.mxu0 0.0
  %6422 = vmatprep.subr.mxu0 0.0
  %6423 = vmatpush1.msra.mxu0 0.0
  %6424 = vmatprep.subr.mxu0 0.0
  %6425 = vmatpush1.msra.mxu0 0.0
  %6426 = vmatprep.subr.mxu0 0.0
  %6427 = vmatpush1.msra.mxu0 0.0
  %6428 = vmatprep.subr.mxu0 0.0
  %6429 = vmatpush1.msra.mxu0 0.0
  %6430 = vmatprep.subr.mxu0 0.0
  %6431 = vmatpush1.msra.mxu0 0.0
  %6432 = vmatprep.subr.mxu0 0.0
  %6433 = vmatpush1.msra.mxu0 0.0
  %6434 = vmatprep.subr.mxu0 0.0
  %6435 = vmatpush1.msra.mxu0 0.0
  %6436 = vmatprep.subr.mxu0 0.0
  %6437 = vmatpush1.msra.mxu0 0.0
  %6438 = vmatprep.subr.mxu0 0.0
  %6439 = vmatpush1.msra.mxu0 %v6406
  %6440 = vmatprep.subr.mxu0 0.0
  %6441 = vmatpush2.msra.mxu0 0.0
  %6442 = vmatprep.subr.mxu0 0.0
  %6443 = vmatpush2.msra.mxu0 0.0
  %6444 = vmatprep.subr.mxu0 0.0
  %6445 = vmatpush2.msra.mxu0 0.0
  %6446 = vmatprep.subr.mxu0 0.0
  %6447 = vmatpush2.msra.mxu0 0.0
  %6448 = vmatprep.subr.mxu0 0.0
  %6449 = vmatpush2.msra.mxu0 0.0
  %6450 = vmatprep.subr.mxu0 0.0
  %6451 = vmatpush2.msra.mxu0 0.0
  %6452 = vmatprep.subr.mxu0 0.0
  %6453 = vmatpush2.msra.mxu0 0.0
  %6454 = vmatprep.subr.mxu0 0.0
  %6455 = vmatpush2.msra.mxu0 0.0
  %6456 = vmatprep.subr.mxu0 0.0
  %6457 = vmatpush2.msra.mxu0 0.0
  %6458 = vmatprep.subr.mxu0 0.0
  %6459 = vmatpush2.msra.mxu0 0.0
  %6460 = vmatprep.subr.mxu0 0.0
  %6461 = vmatpush2.msra.mxu0 0.0
  %6462 = vmatprep.subr.mxu0 0.0
  %6463 = vmatpush2.msra.mxu0 0.0
  %6464 = vmatprep.subr.mxu0 0.0
  %6465 = vmatpush2.msra.mxu0 0.0
  %6466 = vmatprep.subr.mxu0 0.0
  %6467 = vmatpush2.msra.mxu0 0.0
  %6468 = vmatprep.subr.mxu0 0.0
  %6469 = vmatpush2.msra.mxu0 0.0
  %6470 = vmatprep.subr.mxu0 0.0
  %6471 = vmatpush2.msra.mxu0 0.0
  %6472 = vmatprep.mubr.f32.mxu0 0.0
  %6473 = vmatmul.mubr.f32.gmra.mxu0 %v6404
  %v6474 = vpop.f32.mrf.mxu0
  %v6475 = vadd.f32 0.0, %v6474
  %v6476 = vpop.f32.mrf.mxu0
  %6477 = vdwg.mxu0
  %6478 = vrot.lane.b32.xlu0 %v6249, 96
  %v6479 = vpop.permute.xlu0 %6478
  %6480 = vrot.lane.b32.xlu0 %v6308, 96
  %v6481 = vpop.permute.xlu0 %6480
  %v6482 = vsel %vm204, %v6479, 0
  %v6484 = vsel %vm204, %v6481, 0
  %6486 = vmatprep.subr.mxu0 0.0
  %6487 = vmatpush1.xpose.msra.mxu0 0.0
  %6488 = vmatprep.subr.mxu0 0.0
  %6489 = vmatpush1.xpose.msra.mxu0 0.0
  %6490 = vmatprep.subr.mxu0 0.0
  %6491 = vmatpush1.xpose.msra.mxu0 0.0
  %6492 = vmatprep.subr.mxu0 0.0
  %6493 = vmatpush1.xpose.msra.mxu0 0.0
  %6494 = vmatprep.subr.mxu0 0.0
  %6495 = vmatpush1.xpose.msra.mxu0 0.0
  %6496 = vmatprep.subr.mxu0 0.0
  %6497 = vmatpush1.xpose.msra.mxu0 0.0
  %6498 = vmatprep.subr.mxu0 0.0
  %6499 = vmatpush1.xpose.msra.mxu0 0.0
  %6500 = vmatprep.subr.mxu0 0.0
  %6501 = vmatpush1.xpose.msra.mxu0 0.0
  %6502 = vmatprep.subr.mxu0 0.0
  %6503 = vmatpush1.xpose.msra.mxu0 0.0
  %6504 = vmatprep.subr.mxu0 0.0
  %6505 = vmatpush1.xpose.msra.mxu0 0.0
  %6506 = vmatprep.subr.mxu0 0.0
  %6507 = vmatpush1.xpose.msra.mxu0 0.0
  %6508 = vmatprep.subr.mxu0 0.0
  %6509 = vmatpush1.xpose.msra.mxu0 0.0
  %6510 = vmatprep.subr.mxu0 0.0
  %6511 = vmatpush1.xpose.msra.mxu0 0.0
  %6512 = vmatprep.subr.mxu0 0.0
  %6513 = vmatpush1.xpose.msra.mxu0 0.0
  %6514 = vmatprep.subr.mxu0 0.0
  %6515 = vmatpush1.xpose.msra.mxu0 0.0
  %6516 = vmatprep.subr.mxu0 0.0
  %6517 = vmatpush1.xpose.msra.mxu0 %v6484
  %6518 = vmatprep.subr.mxu0 0.0
  %6519 = vmatpush2.xpose.msra.mxu0 0.0
  %6520 = vmatprep.subr.mxu0 0.0
  %6521 = vmatpush2.xpose.msra.mxu0 0.0
  %6522 = vmatprep.subr.mxu0 0.0
  %6523 = vmatpush2.xpose.msra.mxu0 0.0
  %6524 = vmatprep.subr.mxu0 0.0
  %6525 = vmatpush2.xpose.msra.mxu0 0.0
  %6526 = vmatprep.subr.mxu0 0.0
  %6527 = vmatpush2.xpose.msra.mxu0 0.0
  %6528 = vmatprep.subr.mxu0 0.0
  %6529 = vmatpush2.xpose.msra.mxu0 0.0
  %6530 = vmatprep.subr.mxu0 0.0
  %6531 = vmatpush2.xpose.msra.mxu0 0.0
  %6532 = vmatprep.subr.mxu0 0.0
  %6533 = vmatpush2.xpose.msra.mxu0 0.0
  %6534 = vmatprep.subr.mxu0 0.0
  %6535 = vmatpush2.xpose.msra.mxu0 0.0
  %6536 = vmatprep.subr.mxu0 0.0
  %6537 = vmatpush2.xpose.msra.mxu0 0.0
  %6538 = vmatprep.subr.mxu0 0.0
  %6539 = vmatpush2.xpose.msra.mxu0 0.0
  %6540 = vmatprep.subr.mxu0 0.0
  %6541 = vmatpush2.xpose.msra.mxu0 0.0
  %6542 = vmatprep.subr.mxu0 0.0
  %6543 = vmatpush2.xpose.msra.mxu0 0.0
  %6544 = vmatprep.subr.mxu0 0.0
  %6545 = vmatpush2.xpose.msra.mxu0 0.0
  %6546 = vmatprep.subr.mxu0 0.0
  %6547 = vmatpush2.xpose.msra.mxu0 0.0
  %6548 = vmatprep.subr.mxu0 0.0
  %6549 = vmatpush2.xpose.msra.mxu0 0.0
  %6550 = vmatprep.mubr.f32.mxu0 0.0
  %6551 = vmatmul.mubr.f32.gmra.mxu0 %v6482
  %v6552 = vpop.f32.mrf.mxu0
  %v6553 = vadd.f32 0.0, %v6552
  %v6554 = vpop.f32.mrf.mxu0
  %6555 = vdwg.mxu0
  %v6556 = vmul.f32 %v6553, 0.17677669
  %v6557 = vsel %vm404, %v6556, -inf
  %6558 = vmax.xlane.f32.xlu0 %v6557
  %v6559 = vpop.xlane.xlu0 %6558
  %v6560 = vsub.f32 %v6556, %v6559
  %v6561 = vmul.f32 %v6560, 1.442695
  %v6562 = vpow.pop %v6561
  %v6563 = vsel %vm404, %v6562, 0.0
  %6564 = vadd.xlane.f32.xlu0 %v6563
  %v6565 = vpop.xlane.xlu0 %6564
  %v6566 = vrcp.pop %v6565
  %v6567 = vmul.f32 %v6562, %v6566
  %6568 = vrot.lane.b32.xlu0 %v6308, 32
  %v6569 = vpop.permute.xlu0 %6568
  %v6571 = vsel %vm404, %v6567, 0
  %v6573 = vsel %vm408, %v6569, 0
  %6575 = vmatprep.subr.mxu0 0.0
  %6576 = vmatpush1.msra.mxu0 0.0
  %6577 = vmatprep.subr.mxu0 0.0
  %6578 = vmatpush1.msra.mxu0 0.0
  %6579 = vmatprep.subr.mxu0 0.0
  %6580 = vmatpush1.msra.mxu0 0.0
  %6581 = vmatprep.subr.mxu0 0.0
  %6582 = vmatpush1.msra.mxu0 0.0
  %6583 = vmatprep.subr.mxu0 0.0
  %6584 = vmatpush1.msra.mxu0 0.0
  %6585 = vmatprep.subr.mxu0 0.0
  %6586 = vmatpush1.msra.mxu0 0.0
  %6587 = vmatprep.subr.mxu0 0.0
  %6588 = vmatpush1.msra.mxu0 0.0
  %6589 = vmatprep.subr.mxu0 0.0
  %6590 = vmatpush1.msra.mxu0 0.0
  %6591 = vmatprep.subr.mxu0 0.0
  %6592 = vmatpush1.msra.mxu0 0.0
  %6593 = vmatprep.subr.mxu0 0.0
  %6594 = vmatpush1.msra.mxu0 0.0
  %6595 = vmatprep.subr.mxu0 0.0
  %6596 = vmatpush1.msra.mxu0 0.0
  %6597 = vmatprep.subr.mxu0 0.0
  %6598 = vmatpush1.msra.mxu0 0.0
  %6599 = vmatprep.subr.mxu0 0.0
  %6600 = vmatpush1.msra.mxu0 0.0
  %6601 = vmatprep.subr.mxu0 0.0
  %6602 = vmatpush1.msra.mxu0 0.0
  %6603 = vmatprep.subr.mxu0 0.0
  %6604 = vmatpush1.msra.mxu0 0.0
  %6605 = vmatprep.subr.mxu0 0.0
  %6606 = vmatpush1.msra.mxu0 %v6573
  %6607 = vmatprep.subr.mxu0 0.0
  %6608 = vmatpush2.msra.mxu0 0.0
  %6609 = vmatprep.subr.mxu0 0.0
  %6610 = vmatpush2.msra.mxu0 0.0
  %6611 = vmatprep.subr.mxu0 0.0
  %6612 = vmatpush2.msra.mxu0 0.0
  %6613 = vmatprep.subr.mxu0 0.0
  %6614 = vmatpush2.msra.mxu0 0.0
  %6615 = vmatprep.subr.mxu0 0.0
  %6616 = vmatpush2.msra.mxu0 0.0
  %6617 = vmatprep.subr.mxu0 0.0
  %6618 = vmatpush2.msra.mxu0 0.0
  %6619 = vmatprep.subr.mxu0 0.0
  %6620 = vmatpush2.msra.mxu0 0.0
  %6621 = vmatprep.subr.mxu0 0.0
  %6622 = vmatpush2.msra.mxu0 0.0
  %6623 = vmatprep.subr.mxu0 0.0
  %6624 = vmatpush2.msra.mxu0 0.0
  %6625 = vmatprep.subr.mxu0 0.0
  %6626 = vmatpush2.msra.mxu0 0.0
  %6627 = vmatprep.subr.mxu0 0.0
  %6628 = vmatpush2.msra.mxu0 0.0
  %6629 = vmatprep.subr.mxu0 0.0
  %6630 = vmatpush2.msra.mxu0 0.0
  %6631 = vmatprep.subr.mxu0 0.0
  %6632 = vmatpush2.msra.mxu0 0.0
  %6633 = vmatprep.subr.mxu0 0.0
  %6634 = vmatpush2.msra.mxu0 0.0
  %6635 = vmatprep.subr.mxu0 0.0
  %6636 = vmatpush2.msra.mxu0 0.0
  %6637 = vmatprep.subr.mxu0 0.0
  %6638 = vmatpush2.msra.mxu0 0.0
  %6639 = vmatprep.mubr.f32.mxu0 0.0
  %6640 = vmatmul.mubr.f32.gmra.mxu0 %v6571
  %v6641 = vpop.f32.mrf.mxu0
  %v6642 = vadd.f32 0.0, %v6641
  %v6643 = vpop.f32.mrf.mxu0
  %6644 = vdwg.mxu0
  %6646 = vrot.lane.b32.xlu0 %v6642, 32
  %v6647 = vpop.permute.xlu0 %6646
  %v6649 = vsel %vm204, %v6475, %v6647
  %v6650 = vpack.c.bf16 %v6649, %v6649
  %v6651 = vld [vmem:[%s59] sm:$0xf]
  %v6652 = vld [vmem:[%s59 + $0x4] sm:$0xf]
  %v6653 = vld [vmem:[%s59 + $0x8] sm:$0xf]
  %v6654 = vld [vmem:[%s59 + $0xc] sm:$0xf]
  %v6655 = vld [vmem:[%s59 + $0x10] sm:$0xf]
  %v6656 = vld [vmem:[%s59 + $0x14] sm:$0xf]
  %v6657 = vld [vmem:[%s59 + $0x18] sm:$0xf]
  %v6658 = vld [vmem:[%s59 + $0x1c] sm:$0xf]
  %v6667 = vunpack.c.l.b16 %v6651
  %v6668 = vunpack.c.l.b16 %v6652
  %v6669 = vunpack.c.l.b16 %v6653
  %v6670 = vunpack.c.l.b16 %v6654
  %v6671 = vunpack.c.l.b16 %v6655
  %v6672 = vunpack.c.l.b16 %v6656
  %v6673 = vunpack.c.l.b16 %v6657
  %v6674 = vunpack.c.l.b16 %v6658
  %v6675 = vpack.c.b16 %v6668, %v6667
  %v6676 = vpack.c.b16 %v6670, %v6669
  %v6677 = vpack.c.b16 %v6672, %v6671
  %v6678 = vpack.c.b16 %v6674, %v6673
  %v6684 = vsel %vm689, %v6650, 0
  %6686 = vmatprep.subr.bf16.mxu0 0
  %6687 = vmatpush1.bf16.msra.mxu0 0
  %6688 = vmatprep.subr.bf16.mxu0 0
  %6689 = vmatpush1.bf16.msra.mxu0 0
  %6690 = vmatprep.subr.bf16.mxu0 0
  %6691 = vmatpush1.bf16.msra.mxu0 0
  %6692 = vmatprep.subr.bf16.mxu0 0
  %6693 = vmatpush1.bf16.msra.mxu0 0
  %6694 = vmatprep.subr.bf16.mxu0 0
  %6695 = vmatpush1.bf16.msra.mxu0 %v6678
  %6696 = vmatprep.subr.bf16.mxu0 0
  %6697 = vmatpush1.bf16.msra.mxu0 %v6677
  %6698 = vmatprep.subr.bf16.mxu0 0
  %6699 = vmatpush1.bf16.msra.mxu0 %v6676
  %6700 = vmatprep.subr.bf16.mxu0 0
  %6701 = vmatpush1.bf16.msra.mxu0 %v6675
  %6702 = vmatprep.subr.bf16.mxu0 0
  %6703 = vmatpush2.bf16.msra.mxu0 0
  %6704 = vmatprep.subr.bf16.mxu0 0
  %6705 = vmatpush2.bf16.msra.mxu0 0
  %6706 = vmatprep.subr.bf16.mxu0 0
  %6707 = vmatpush2.bf16.msra.mxu0 0
  %6708 = vmatprep.subr.bf16.mxu0 0
  %6709 = vmatpush2.bf16.msra.mxu0 0
  %6710 = vmatprep.subr.bf16.mxu0 0
  %6711 = vmatpush2.bf16.msra.mxu0 0
  %6712 = vmatprep.subr.bf16.mxu0 0
  %6713 = vmatpush2.bf16.msra.mxu0 0
  %6714 = vmatprep.subr.bf16.mxu0 0
  %6715 = vmatpush2.bf16.msra.mxu0 0
  %6716 = vmatprep.subr.bf16.mxu0 0
  %6717 = vmatpush2.bf16.msra.mxu0 0
  %6718 = vmatprep.mubr.bf16.mxu0 0
  %6719 = vmatmul.mubr.bf16.gmra.mxu0 %v6684
  %v6720 = vpop.f32.mrf.mxu0
  %v6721 = vadd.f32 0.0, %v6720
  %v6722 = vpop.f32.mrf.mxu0
  %v6723 = vpop.f32.mrf.mxu0
  %v6724 = vpop.f32.mrf.mxu0
  %6725 = vdwg.mxu0
  %v6726 = vadd.f32 %v6192, %v6721
  %v6727 = vsel %vm204, %v6726, 0.0
  %6728 = vadd.xlane.f32.xlu0 %v6727
  %v6729 = vpop.xlane.xlu0 %6728
  %v6730 = vmul.f32 %v6729, %v738
  %v6731 = vsub.f32 %v6726, %v6730
  %v6732 = vmul.f32 %v6731, %v6731
  %v6733 = vsel %vm204, %v6732, 0.0
  %6734 = vadd.xlane.f32.xlu0 %v6733
  %v6735 = vpop.xlane.xlu0 %6734
  %v6736 = vmul.f32 %v6735, %v738
  %v6737 = vadd.f32 %v6736, 1e-06
  %v6738 = vrsqrt.pop %v6737
  %v6739 = vmul.f32 %v6731, %v6738
  %v6740 = vlaneseq
  %v6741 = vshrl.u32 %v6740, 7
  %v6742 = vsub.s32 2, %v6741
  %v6743 = vrot.slane %v5616, %v6742
  %v6744 = vmul.f32 %v6739, %v6743
  %v6745 = vlaneseq
  %v6746 = vshrl.u32 %v6745, 7
  %v6747 = vsub.s32 3, %v6746
  %v6748 = vrot.slane %v5616, %v6747
  %v6749 = vadd.f32 %v6744, %v6748
  %v6750 = vpack.c.bf16 %v6749, %v6749
  %v6751 = vld [vmem:[%s61] sm:$0xf]
  %v6752 = vld [vmem:[%s61 + $0x4] sm:$0xf]
  %v6753 = vld [vmem:[%s61 + $0x8] sm:$0xf]
  %v6754 = vld [vmem:[%s61 + $0xc] sm:$0xf]
  %v6756 = vlaneseq
  %v6757 = vshrl.u32 %v6756, 7
  %v6758 = vsub.s32 0, %v6757
  %v6759 = vrot.slane %v5617, %v6758
  %v6765 = vunpack.c.l.b16 %v6751
  %v6766 = vunpack.c.l.b16 %v6752
  %v6767 = vunpack.c.l.b16 %v6753
  %v6768 = vunpack.c.l.b16 %v6754
  %v6769 = vpack.c.b16 %v6766, %v6765
  %v6770 = vpack.c.b16 %v6768, %v6767
  %v6774 = vsel %vm204, %v6750, 0
  %6776 = vmatprep.subr.bf16.mxu0 0
  %6777 = vmatpush1.bf16.msra.mxu0 0
  %6778 = vmatprep.subr.bf16.mxu0 0
  %6779 = vmatpush1.bf16.msra.mxu0 0
  %6780 = vmatprep.subr.bf16.mxu0 0
  %6781 = vmatpush1.bf16.msra.mxu0 0
  %6782 = vmatprep.subr.bf16.mxu0 0
  %6783 = vmatpush1.bf16.msra.mxu0 0
  %6784 = vmatprep.subr.bf16.mxu0 0
  %6785 = vmatpush1.bf16.msra.mxu0 0
  %6786 = vmatprep.subr.bf16.mxu0 0
  %6787 = vmatpush1.bf16.msra.mxu0 0
  %6788 = vmatprep.subr.bf16.mxu0 0
  %6789 = vmatpush1.bf16.msra.mxu0 %v6770
  %6790 = vmatprep.subr.bf16.mxu0 0
  %6791 = vmatpush1.bf16.msra.mxu0 %v6769
  %6792 = vmatprep.subr.bf16.mxu0 0
  %6793 = vmatpush2.bf16.msra.mxu0 0
  %6794 = vmatprep.subr.bf16.mxu0 0
  %6795 = vmatpush2.bf16.msra.mxu0 0
  %6796 = vmatprep.subr.bf16.mxu0 0
  %6797 = vmatpush2.bf16.msra.mxu0 0
  %6798 = vmatprep.subr.bf16.mxu0 0
  %6799 = vmatpush2.bf16.msra.mxu0 0
  %6800 = vmatprep.subr.bf16.mxu0 0
  %6801 = vmatpush2.bf16.msra.mxu0 0
  %6802 = vmatprep.subr.bf16.mxu0 0
  %6803 = vmatpush2.bf16.msra.mxu0 0
  %6804 = vmatprep.subr.bf16.mxu0 0
  %6805 = vmatpush2.bf16.msra.mxu0 0
  %6806 = vmatprep.subr.bf16.mxu0 0
  %6807 = vmatpush2.bf16.msra.mxu0 0
  %6808 = vmatprep.mubr.bf16.mxu0 0
  %6809 = vmatmul.mubr.bf16.gmra.mxu0 %v6774
  %v6810 = vpop.f32.mrf.mxu0
  %v6811 = vadd.f32 %v6759, %v6810
  %v6812 = vpop.f32.mrf.mxu0
  %v6813 = vpop.f32.mrf.mxu0
  %v6814 = vpop.f32.mrf.mxu0
  %6815 = vdwg.mxu0
  %v6816 = vmax.f32 %v6811, 0.0
  %v6817 = vpack.c.bf16 %v6816, %v6816
  %v6818 = vld [vmem:[%s63] sm:$0xf]
  %v6819 = vld [vmem:[%s63 + $0x4] sm:$0xf]
  %v6820 = vld [vmem:[%s63 + $0x8] sm:$0xf]
  %v6821 = vld [vmem:[%s63 + $0xc] sm:$0xf]
  %v6822 = vld [vmem:[%s63 + $0x10] sm:$0xf]
  %v6823 = vld [vmem:[%s63 + $0x14] sm:$0xf]
  %v6824 = vld [vmem:[%s63 + $0x18] sm:$0xf]
  %v6825 = vld [vmem:[%s63 + $0x1c] sm:$0xf]
  %v6834 = vunpack.c.l.b16 %v6818
  %v6835 = vunpack.c.l.b16 %v6819
  %v6836 = vunpack.c.l.b16 %v6820
  %v6837 = vunpack.c.l.b16 %v6821
  %v6838 = vunpack.c.l.b16 %v6822
  %v6839 = vunpack.c.l.b16 %v6823
  %v6840 = vunpack.c.l.b16 %v6824
  %v6841 = vunpack.c.l.b16 %v6825
  %v6842 = vpack.c.b16 %v6835, %v6834
  %v6843 = vpack.c.b16 %v6837, %v6836
  %v6844 = vpack.c.b16 %v6839, %v6838
  %v6845 = vpack.c.b16 %v6841, %v6840
  %6850 = vrot.lane.b32.xlu0 %v6759, 64
  %v6851 = vpop.permute.xlu0 %6850
  %v6854 = vsel %vm689, %v6817, 0
  %6856 = vmatprep.subr.bf16.mxu0 0
  %6857 = vmatpush1.bf16.msra.mxu0 0
  %6858 = vmatprep.subr.bf16.mxu0 0
  %6859 = vmatpush1.bf16.msra.mxu0 0
  %6860 = vmatprep.subr.bf16.mxu0 0
  %6861 = vmatpush1.bf16.msra.mxu0 0
  %6862 = vmatprep.subr.bf16.mxu0 0
  %6863 = vmatpush1.bf16.msra.mxu0 0
  %6864 = vmatprep.subr.bf16.mxu0 0
  %6865 = vmatpush1.bf16.msra.mxu0 %v6845
  %6866 = vmatprep.subr.bf16.mxu0 0
  %6867 = vmatpush1.bf16.msra.mxu0 %v6844
  %6868 = vmatprep.subr.bf16.mxu0 0
  %6869 = vmatpush1.bf16.msra.mxu0 %v6843
  %6870 = vmatprep.subr.bf16.mxu0 0
  %6871 = vmatpush1.bf16.msra.mxu0 %v6842
  %6872 = vmatprep.subr.bf16.mxu0 0
  %6873 = vmatpush2.bf16.msra.mxu0 0
  %6874 = vmatprep.subr.bf16.mxu0 0
  %6875 = vmatpush2.bf16.msra.mxu0 0
  %6876 = vmatprep.subr.bf16.mxu0 0
  %6877 = vmatpush2.bf16.msra.mxu0 0
  %6878 = vmatprep.subr.bf16.mxu0 0
  %6879 = vmatpush2.bf16.msra.mxu0 0
  %6880 = vmatprep.subr.bf16.mxu0 0
  %6881 = vmatpush2.bf16.msra.mxu0 0
  %6882 = vmatprep.subr.bf16.mxu0 0
  %6883 = vmatpush2.bf16.msra.mxu0 0
  %6884 = vmatprep.subr.bf16.mxu0 0
  %6885 = vmatpush2.bf16.msra.mxu0 0
  %6886 = vmatprep.subr.bf16.mxu0 0
  %6887 = vmatpush2.bf16.msra.mxu0 0
  %6888 = vmatprep.mubr.bf16.mxu0 0
  %6889 = vmatmul.mubr.bf16.gmra.mxu0 %v6854
  %v6890 = vpop.f32.mrf.mxu0
  %v6891 = vadd.f32 %v6851, %v6890
  %v6892 = vpop.f32.mrf.mxu0
  %v6893 = vpop.f32.mrf.mxu0
  %v6894 = vpop.f32.mrf.mxu0
  %6895 = vdwg.mxu0
  %v6896 = vadd.f32 %v6891, %v6749
  %v6897 = vsel %vm204, %v6896, 0.0
  %6898 = vadd.xlane.f32.xlu0 %v6897
  %v6899 = vpop.xlane.xlu0 %6898
  %v6900 = vmul.f32 %v6899, %v738
  %v6901 = vsub.f32 %v6896, %v6900
  %v6902 = vmul.f32 %v6901, %v6901
  %v6903 = vsel %vm204, %v6902, 0.0
  %6904 = vadd.xlane.f32.xlu0 %v6903
  %v6905 = vpop.xlane.xlu0 %6904
  %v6906 = vmul.f32 %v6905, %v738
  %v6907 = vadd.f32 %v6906, 1e-06
  %v6908 = vrsqrt.pop %v6907
  %v6909 = vmul.f32 %v6901, %v6908
  %v6910 = vlaneseq
  %v6911 = vshrl.u32 %v6910, 7
  %v6912 = vsub.s32 4, %v6911
  %v6913 = vrot.slane %v5616, %v6912
  %v6914 = vmul.f32 %v6909, %v6913
  %v6915 = vlaneseq
  %v6916 = vshrl.u32 %v6915, 7
  %v6917 = vsub.s32 5, %v6916
  %v6918 = vrot.slane %v5616, %v6917
  %v6919 = vadd.f32 %v6914, %v6918
  %v6920 = vld [vmem:[%s27] sm:$0xff]
  %v6922 = vsel %vm404, %v6920, 0
  %v6925 = vsel %vm408, %v5602, 0
  %6927 = vmatprep.subr.mxu0 0.0
  %6928 = vmatpush1.msra.mxu0 0.0
  %6929 = vmatprep.subr.mxu0 0.0
  %6930 = vmatpush1.msra.mxu0 0.0
  %6931 = vmatprep.subr.mxu0 0.0
  %6932 = vmatpush1.msra.mxu0 0.0
  %6933 = vmatprep.subr.mxu0 0.0
  %6934 = vmatpush1.msra.mxu0 0.0
  %6935 = vmatprep.subr.mxu0 0.0
  %6936 = vmatpush1.msra.mxu0 0.0
  %6937 = vmatprep.subr.mxu0 0.0
  %6938 = vmatpush1.msra.mxu0 0.0
  %6939 = vmatprep.subr.mxu0 0.0
  %6940 = vmatpush1.msra.mxu0 0.0
  %6941 = vmatprep.subr.mxu0 0.0
  %6942 = vmatpush1.msra.mxu0 0.0
  %6943 = vmatprep.subr.mxu0 0.0
  %6944 = vmatpush1.msra.mxu0 0.0
  %6945 = vmatprep.subr.mxu0 0.0
  %6946 = vmatpush1.msra.mxu0 0.0
  %6947 = vmatprep.subr.mxu0 0.0
  %6948 = vmatpush1.msra.mxu0 0.0
  %6949 = vmatprep.subr.mxu0 0.0
  %6950 = vmatpush1.msra.mxu0 0.0
  %6951 = vmatprep.subr.mxu0 0.0
  %6952 = vmatpush1.msra.mxu0 0.0
  %6953 = vmatprep.subr.mxu0 0.0
  %6954 = vmatpush1.msra.mxu0 0.0
  %6955 = vmatprep.subr.mxu0 0.0
  %6956 = vmatpush1.msra.mxu0 0.0
  %6957 = vmatprep.subr.mxu0 0.0
  %6958 = vmatpush1.msra.mxu0 %v6925
  %6959 = vmatprep.subr.mxu0 0.0
  %6960 = vmatpush2.msra.mxu0 0.0
  %6961 = vmatprep.subr.mxu0 0.0
  %6962 = vmatpush2.msra.mxu0 0.0
  %6963 = vmatprep.subr.mxu0 0.0
  %6964 = vmatpush2.msra.mxu0 0.0
  %6965 = vmatprep.subr.mxu0 0.0
  %6966 = vmatpush2.msra.mxu0 0.0
  %6967 = vmatprep.subr.mxu0 0.0
  %6968 = vmatpush2.msra.mxu0 0.0
  %6969 = vmatprep.subr.mxu0 0.0
  %6970 = vmatpush2.msra.mxu0 0.0
  %6971 = vmatprep.subr.mxu0 0.0
  %6972 = vmatpush2.msra.mxu0 0.0
  %6973 = vmatprep.subr.mxu0 0.0
  %6974 = vmatpush2.msra.mxu0 0.0
  %6975 = vmatprep.subr.mxu0 0.0
  %6976 = vmatpush2.msra.mxu0 0.0
  %6977 = vmatprep.subr.mxu0 0.0
  %6978 = vmatpush2.msra.mxu0 0.0
  %6979 = vmatprep.subr.mxu0 0.0
  %6980 = vmatpush2.msra.mxu0 0.0
  %6981 = vmatprep.subr.mxu0 0.0
  %6982 = vmatpush2.msra.mxu0 0.0
  %6983 = vmatprep.subr.mxu0 0.0
  %6984 = vmatpush2.msra.mxu0 0.0
  %6985 = vmatprep.subr.mxu0 0.0
  %6986 = vmatpush2.msra.mxu0 0.0
  %6987 = vmatprep.subr.mxu0 0.0
  %6988 = vmatpush2.msra.mxu0 0.0
  %6989 = vmatprep.subr.mxu0 0.0
  %6990 = vmatpush2.msra.mxu0 0.0
  %6991 = vmatprep.mubr.f32.mxu0 0.0
  %6992 = vmatmul.mubr.f32.gmra.mxu0 %v6922
  %v6993 = vpop.f32.mrf.mxu0
  %v6994 = vadd.f32 0.0, %v6993
  %v6995 = vpop.f32.mrf.mxu0
  %6996 = vdwg.mxu0
  %s6997 = scalar_lea.vmem %s5, 4
  %v6998 = vld [vmem:[%s6997] sm:$0xf]
  %s6999 = scalar_lea.vmem %s7, 4
  %v7000 = vld [vmem:[%s6999] sm:$0xf]
  %s7001 = scalar_lea.vmem %s15, 2
  %v7002 = vld [vmem:[%s7001] sm:$0x3]
  %v7003 = vlaneseq
  %v7004 = vshrl.u32 %v7003, 7
  %v7005 = vsub.s32 1, %v7004
  %v7006 = vrot.slane %v2888, %v7005
  %vm7007 = vcmp.eq.s32.totalorder %v7006, 1
  %vm7008 = vmand %vm161, %vm7007
  %v7009 = vsel %vm7008, 0.0, -1e+09
  %v7010 = vpack.c.bf16 %v6998, %v6998
  %v7011 = vpack.c.bf16 %v7000, %v7000
  %v7013 = vsel %vm204, %v7011, 0
  %7015 = vmatprep.subr.bf16.mxu0 0
  %7016 = vmatpush1.bf16.msra.mxu0 0
  %7017 = vmatprep.subr.bf16.mxu0 0
  %7018 = vmatpush1.bf16.msra.mxu0 0
  %7019 = vmatprep.subr.bf16.mxu0 0
  %7020 = vmatpush1.bf16.msra.mxu0 0
  %7021 = vmatprep.subr.bf16.mxu0 0
  %7022 = vmatpush1.bf16.msra.mxu0 0
  %7023 = vmatprep.subr.bf16.mxu0 0
  %7024 = vmatpush1.bf16.msra.mxu0 0
  %7025 = vmatprep.subr.bf16.mxu0 0
  %7026 = vmatpush1.bf16.msra.mxu0 0
  %7027 = vmatprep.subr.bf16.mxu0 %v4323
  %7028 = vmatpush1.bf16.msra.mxu0 %v4322
  %7029 = vmatprep.subr.bf16.mxu0 %v4321
  %7030 = vmatpush1.bf16.msra.mxu0 %v4320
  %7031 = vmatprep.subr.bf16.mxu0 0
  %7032 = vmatpush2.bf16.msra.mxu0 0
  %7033 = vmatprep.subr.bf16.mxu0 0
  %7034 = vmatpush2.bf16.msra.mxu0 0
  %7035 = vmatprep.subr.bf16.mxu0 0
  %7036 = vmatpush2.bf16.msra.mxu0 0
  %7037 = vmatprep.subr.bf16.mxu0 0
  %7038 = vmatpush2.bf16.msra.mxu0 0
  %7039 = vmatprep.subr.bf16.mxu0 0
  %7040 = vmatpush2.bf16.msra.mxu0 0
  %7041 = vmatprep.subr.bf16.mxu0 0
  %7042 = vmatpush2.bf16.msra.mxu0 0
  %7043 = vmatprep.subr.bf16.mxu0 0
  %7044 = vmatpush2.bf16.msra.mxu0 0
  %7045 = vmatprep.subr.bf16.mxu0 0
  %7046 = vmatpush2.bf16.msra.mxu0 0
  %7047 = vmatprep.mubr.bf16.mxu0 0
  %7048 = vmatmul.mubr.bf16.gmra.mxu0 %v7013
  %v7049 = vpop.f32.mrf.mxu0
  %v7050 = vadd.f32 0.0, %v7049
  %v7051 = vpop.f32.mrf.mxu0
  %v7052 = vadd.f32 0.0, %v7051
  %v7053 = vpop.f32.mrf.mxu0
  %v7054 = vpop.f32.mrf.mxu0
  %7055 = vdwg.mxu0
  %v7057 = vsel %vm204, %v7010, 0
  %7059 = vmatprep.subr.bf16.mxu0 0
  %7060 = vmatpush1.bf16.msra.mxu0 0
  %7061 = vmatprep.subr.bf16.mxu0 0
  %7062 = vmatpush1.bf16.msra.mxu0 0
  %7063 = vmatprep.subr.bf16.mxu0 0
  %7064 = vmatpush1.bf16.msra.mxu0 0
  %7065 = vmatprep.subr.bf16.mxu0 0
  %7066 = vmatpush1.bf16.msra.mxu0 0
  %7067 = vmatprep.subr.bf16.mxu0 0
  %7068 = vmatpush1.bf16.msra.mxu0 0
  %7069 = vmatprep.subr.bf16.mxu0 0
  %7070 = vmatpush1.bf16.msra.mxu0 0
  %7071 = vmatprep.subr.bf16.mxu0 %v4387
  %7072 = vmatpush1.bf16.msra.mxu0 %v4386
  %7073 = vmatprep.subr.bf16.mxu0 %v4385
  %7074 = vmatpush1.bf16.msra.mxu0 %v4384
  %7075 = vmatprep.subr.bf16.mxu0 0
  %7076 = vmatpush2.bf16.msra.mxu0 0
  %7077 = vmatprep.subr.bf16.mxu0 0
  %7078 = vmatpush2.bf16.msra.mxu0 0
  %7079 = vmatprep.subr.bf16.mxu0 0
  %7080 = vmatpush2.bf16.msra.mxu0 0
  %7081 = vmatprep.subr.bf16.mxu0 0
  %7082 = vmatpush2.bf16.msra.mxu0 0
  %7083 = vmatprep.subr.bf16.mxu0 0
  %7084 = vmatpush2.bf16.msra.mxu0 0
  %7085 = vmatprep.subr.bf16.mxu0 0
  %7086 = vmatpush2.bf16.msra.mxu0 0
  %7087 = vmatprep.subr.bf16.mxu0 0
  %7088 = vmatpush2.bf16.msra.mxu0 0
  %7089 = vmatprep.subr.bf16.mxu0 0
  %7090 = vmatpush2.bf16.msra.mxu0 0
  %7091 = vmatprep.mubr.bf16.mxu0 0
  %7092 = vmatmul.mubr.bf16.gmra.mxu0 %v7057
  %v7093 = vpop.f32.mrf.mxu0
  %v7094 = vadd.f32 %v7050, %v7093
  %v7095 = vpop.f32.mrf.mxu0
  %v7096 = vadd.f32 %v7052, %v7095
  %v7097 = vpop.f32.mrf.mxu0
  %v7098 = vpop.f32.mrf.mxu0
  %7099 = vdwg.mxu0
  %7101 = vrot.lane.b32.xlu0 %v7094, 64
  %v7102 = vpop.permute.xlu0 %7101
  %v7103 = vsel %vm204, %v7094, 0
  %v7105 = vsel %vm204, %v7102, 0
  %7107 = vmatprep.subr.mxu0 0.0
  %7108 = vmatpush1.xpose.msra.mxu0 0.0
  %7109 = vmatprep.subr.mxu0 0.0
  %7110 = vmatpush1.xpose.msra.mxu0 0.0
  %7111 = vmatprep.subr.mxu0 0.0
  %7112 = vmatpush1.xpose.msra.mxu0 0.0
  %7113 = vmatprep.subr.mxu0 0.0
  %7114 = vmatpush1.xpose.msra.mxu0 0.0
  %7115 = vmatprep.subr.mxu0 0.0
  %7116 = vmatpush1.xpose.msra.mxu0 0.0
  %7117 = vmatprep.subr.mxu0 0.0
  %7118 = vmatpush1.xpose.msra.mxu0 0.0
  %7119 = vmatprep.subr.mxu0 0.0
  %7120 = vmatpush1.xpose.msra.mxu0 0.0
  %7121 = vmatprep.subr.mxu0 0.0
  %7122 = vmatpush1.xpose.msra.mxu0 0.0
  %7123 = vmatprep.subr.mxu0 0.0
  %7124 = vmatpush1.xpose.msra.mxu0 0.0
  %7125 = vmatprep.subr.mxu0 0.0
  %7126 = vmatpush1.xpose.msra.mxu0 0.0
  %7127 = vmatprep.subr.mxu0 0.0
  %7128 = vmatpush1.xpose.msra.mxu0 0.0
  %7129 = vmatprep.subr.mxu0 0.0
  %7130 = vmatpush1.xpose.msra.mxu0 0.0
  %7131 = vmatprep.subr.mxu0 0.0
  %7132 = vmatpush1.xpose.msra.mxu0 0.0
  %7133 = vmatprep.subr.mxu0 0.0
  %7134 = vmatpush1.xpose.msra.mxu0 0.0
  %7135 = vmatprep.subr.mxu0 0.0
  %7136 = vmatpush1.xpose.msra.mxu0 0.0
  %7137 = vmatprep.subr.mxu0 0.0
  %7138 = vmatpush1.xpose.msra.mxu0 %v7105
  %7139 = vmatprep.subr.mxu0 0.0
  %7140 = vmatpush2.xpose.msra.mxu0 0.0
  %7141 = vmatprep.subr.mxu0 0.0
  %7142 = vmatpush2.xpose.msra.mxu0 0.0
  %7143 = vmatprep.subr.mxu0 0.0
  %7144 = vmatpush2.xpose.msra.mxu0 0.0
  %7145 = vmatprep.subr.mxu0 0.0
  %7146 = vmatpush2.xpose.msra.mxu0 0.0
  %7147 = vmatprep.subr.mxu0 0.0
  %7148 = vmatpush2.xpose.msra.mxu0 0.0
  %7149 = vmatprep.subr.mxu0 0.0
  %7150 = vmatpush2.xpose.msra.mxu0 0.0
  %7151 = vmatprep.subr.mxu0 0.0
  %7152 = vmatpush2.xpose.msra.mxu0 0.0
  %7153 = vmatprep.subr.mxu0 0.0
  %7154 = vmatpush2.xpose.msra.mxu0 0.0
  %7155 = vmatprep.subr.mxu0 0.0
  %7156 = vmatpush2.xpose.msra.mxu0 0.0
  %7157 = vmatprep.subr.mxu0 0.0
  %7158 = vmatpush2.xpose.msra.mxu0 0.0
  %7159 = vmatprep.subr.mxu0 0.0
  %7160 = vmatpush2.xpose.msra.mxu0 0.0
  %7161 = vmatprep.subr.mxu0 0.0
  %7162 = vmatpush2.xpose.msra.mxu0 0.0
  %7163 = vmatprep.subr.mxu0 0.0
  %7164 = vmatpush2.xpose.msra.mxu0 0.0
  %7165 = vmatprep.subr.mxu0 0.0
  %7166 = vmatpush2.xpose.msra.mxu0 0.0
  %7167 = vmatprep.subr.mxu0 0.0
  %7168 = vmatpush2.xpose.msra.mxu0 0.0
  %7169 = vmatprep.subr.mxu0 0.0
  %7170 = vmatpush2.xpose.msra.mxu0 0.0
  %7171 = vmatprep.mubr.f32.mxu0 0.0
  %7172 = vmatmul.mubr.f32.gmra.mxu0 %v7103
  %v7173 = vpop.f32.mrf.mxu0
  %v7174 = vadd.f32 0.0, %v7173
  %v7175 = vpop.f32.mrf.mxu0
  %7176 = vdwg.mxu0
  %v7177 = vmul.f32 %v7174, 0.17677669
  %v7178 = vadd.f32 %v7177, %v7009
  %v7179 = vsel %vm392, %v7178, -inf
  %7180 = vmax.xlane.f32.xlu0 %v7179
  %v7181 = vpop.xlane.xlu0 %7180
  %v7182 = vsub.f32 %v7178, %v7181
  %v7183 = vmul.f32 %v7182, 1.442695
  %v7184 = vpow.pop %v7183
  %v7185 = vsel %vm392, %v7184, 0.0
  %7186 = vadd.xlane.f32.xlu0 %v7185
  %v7187 = vpop.xlane.xlu0 %7186
  %v7188 = vrcp.pop %v7187
  %v7189 = vmul.f32 %v7184, %v7188
  %v7191 = vsel %vm404, %v7189, 0
  %v7194 = vsel %vm408, %v7096, 0
  %7196 = vmatprep.subr.mxu0 0.0
  %7197 = vmatpush1.msra.mxu0 0.0
  %7198 = vmatprep.subr.mxu0 0.0
  %7199 = vmatpush1.msra.mxu0 0.0
  %7200 = vmatprep.subr.mxu0 0.0
  %7201 = vmatpush1.msra.mxu0 0.0
  %7202 = vmatprep.subr.mxu0 0.0
  %7203 = vmatpush1.msra.mxu0 0.0
  %7204 = vmatprep.subr.mxu0 0.0
  %7205 = vmatpush1.msra.mxu0 0.0
  %7206 = vmatprep.subr.mxu0 0.0
  %7207 = vmatpush1.msra.mxu0 0.0
  %7208 = vmatprep.subr.mxu0 0.0
  %7209 = vmatpush1.msra.mxu0 0.0
  %7210 = vmatprep.subr.mxu0 0.0
  %7211 = vmatpush1.msra.mxu0 0.0
  %7212 = vmatprep.subr.mxu0 0.0
  %7213 = vmatpush1.msra.mxu0 0.0
  %7214 = vmatprep.subr.mxu0 0.0
  %7215 = vmatpush1.msra.mxu0 0.0
  %7216 = vmatprep.subr.mxu0 0.0
  %7217 = vmatpush1.msra.mxu0 0.0
  %7218 = vmatprep.subr.mxu0 0.0
  %7219 = vmatpush1.msra.mxu0 0.0
  %7220 = vmatprep.subr.mxu0 0.0
  %7221 = vmatpush1.msra.mxu0 0.0
  %7222 = vmatprep.subr.mxu0 0.0
  %7223 = vmatpush1.msra.mxu0 0.0
  %7224 = vmatprep.subr.mxu0 0.0
  %7225 = vmatpush1.msra.mxu0 0.0
  %7226 = vmatprep.subr.mxu0 0.0
  %7227 = vmatpush1.msra.mxu0 %v7194
  %7228 = vmatprep.subr.mxu0 0.0
  %7229 = vmatpush2.msra.mxu0 0.0
  %7230 = vmatprep.subr.mxu0 0.0
  %7231 = vmatpush2.msra.mxu0 0.0
  %7232 = vmatprep.subr.mxu0 0.0
  %7233 = vmatpush2.msra.mxu0 0.0
  %7234 = vmatprep.subr.mxu0 0.0
  %7235 = vmatpush2.msra.mxu0 0.0
  %7236 = vmatprep.subr.mxu0 0.0
  %7237 = vmatpush2.msra.mxu0 0.0
  %7238 = vmatprep.subr.mxu0 0.0
  %7239 = vmatpush2.msra.mxu0 0.0
  %7240 = vmatprep.subr.mxu0 0.0
  %7241 = vmatpush2.msra.mxu0 0.0
  %7242 = vmatprep.subr.mxu0 0.0
  %7243 = vmatpush2.msra.mxu0 0.0
  %7244 = vmatprep.subr.mxu0 0.0
  %7245 = vmatpush2.msra.mxu0 0.0
  %7246 = vmatprep.subr.mxu0 0.0
  %7247 = vmatpush2.msra.mxu0 0.0
  %7248 = vmatprep.subr.mxu0 0.0
  %7249 = vmatpush2.msra.mxu0 0.0
  %7250 = vmatprep.subr.mxu0 0.0
  %7251 = vmatpush2.msra.mxu0 0.0
  %7252 = vmatprep.subr.mxu0 0.0
  %7253 = vmatpush2.msra.mxu0 0.0
  %7254 = vmatprep.subr.mxu0 0.0
  %7255 = vmatpush2.msra.mxu0 0.0
  %7256 = vmatprep.subr.mxu0 0.0
  %7257 = vmatpush2.msra.mxu0 0.0
  %7258 = vmatprep.subr.mxu0 0.0
  %7259 = vmatpush2.msra.mxu0 0.0
  %7260 = vmatprep.mubr.f32.mxu0 0.0
  %7261 = vmatmul.mubr.f32.gmra.mxu0 %v7191
  %v7262 = vpop.f32.mrf.mxu0
  %v7263 = vadd.f32 0.0, %v7262
  %v7264 = vpop.f32.mrf.mxu0
  %7265 = vdwg.mxu0
  %7266 = vrot.lane.b32.xlu0 %v7094, 96
  %v7267 = vpop.permute.xlu0 %7266
  %7268 = vrot.lane.b32.xlu0 %v7094, 32
  %v7269 = vpop.permute.xlu0 %7268
  %v7270 = vsel %vm204, %v7267, 0
  %v7272 = vsel %vm204, %v7269, 0
  %7274 = vmatprep.subr.mxu0 0.0
  %7275 = vmatpush1.xpose.msra.mxu0 0.0
  %7276 = vmatprep.subr.mxu0 0.0
  %7277 = vmatpush1.xpose.msra.mxu0 0.0
  %7278 = vmatprep.subr.mxu0 0.0
  %7279 = vmatpush1.xpose.msra.mxu0 0.0
  %7280 = vmatprep.subr.mxu0 0.0
  %7281 = vmatpush1.xpose.msra.mxu0 0.0
  %7282 = vmatprep.subr.mxu0 0.0
  %7283 = vmatpush1.xpose.msra.mxu0 0.0
  %7284 = vmatprep.subr.mxu0 0.0
  %7285 = vmatpush1.xpose.msra.mxu0 0.0
  %7286 = vmatprep.subr.mxu0 0.0
  %7287 = vmatpush1.xpose.msra.mxu0 0.0
  %7288 = vmatprep.subr.mxu0 0.0
  %7289 = vmatpush1.xpose.msra.mxu0 0.0
  %7290 = vmatprep.subr.mxu0 0.0
  %7291 = vmatpush1.xpose.msra.mxu0 0.0
  %7292 = vmatprep.subr.mxu0 0.0
  %7293 = vmatpush1.xpose.msra.mxu0 0.0
  %7294 = vmatprep.subr.mxu0 0.0
  %7295 = vmatpush1.xpose.msra.mxu0 0.0
  %7296 = vmatprep.subr.mxu0 0.0
  %7297 = vmatpush1.xpose.msra.mxu0 0.0
  %7298 = vmatprep.subr.mxu0 0.0
  %7299 = vmatpush1.xpose.msra.mxu0 0.0
  %7300 = vmatprep.subr.mxu0 0.0
  %7301 = vmatpush1.xpose.msra.mxu0 0.0
  %7302 = vmatprep.subr.mxu0 0.0
  %7303 = vmatpush1.xpose.msra.mxu0 0.0
  %7304 = vmatprep.subr.mxu0 0.0
  %7305 = vmatpush1.xpose.msra.mxu0 %v7272
  %7306 = vmatprep.subr.mxu0 0.0
  %7307 = vmatpush2.xpose.msra.mxu0 0.0
  %7308 = vmatprep.subr.mxu0 0.0
  %7309 = vmatpush2.xpose.msra.mxu0 0.0
  %7310 = vmatprep.subr.mxu0 0.0
  %7311 = vmatpush2.xpose.msra.mxu0 0.0
  %7312 = vmatprep.subr.mxu0 0.0
  %7313 = vmatpush2.xpose.msra.mxu0 0.0
  %7314 = vmatprep.subr.mxu0 0.0
  %7315 = vmatpush2.xpose.msra.mxu0 0.0
  %7316 = vmatprep.subr.mxu0 0.0
  %7317 = vmatpush2.xpose.msra.mxu0 0.0
  %7318 = vmatprep.subr.mxu0 0.0
  %7319 = vmatpush2.xpose.msra.mxu0 0.0
  %7320 = vmatprep.subr.mxu0 0.0
  %7321 = vmatpush2.xpose.msra.mxu0 0.0
  %7322 = vmatprep.subr.mxu0 0.0
  %7323 = vmatpush2.xpose.msra.mxu0 0.0
  %7324 = vmatprep.subr.mxu0 0.0
  %7325 = vmatpush2.xpose.msra.mxu0 0.0
  %7326 = vmatprep.subr.mxu0 0.0
  %7327 = vmatpush2.xpose.msra.mxu0 0.0
  %7328 = vmatprep.subr.mxu0 0.0
  %7329 = vmatpush2.xpose.msra.mxu0 0.0
  %7330 = vmatprep.subr.mxu0 0.0
  %7331 = vmatpush2.xpose.msra.mxu0 0.0
  %7332 = vmatprep.subr.mxu0 0.0
  %7333 = vmatpush2.xpose.msra.mxu0 0.0
  %7334 = vmatprep.subr.mxu0 0.0
  %7335 = vmatpush2.xpose.msra.mxu0 0.0
  %7336 = vmatprep.subr.mxu0 0.0
  %7337 = vmatpush2.xpose.msra.mxu0 0.0
  %7338 = vmatprep.mubr.f32.mxu0 0.0
  %7339 = vmatmul.mubr.f32.gmra.mxu0 %v7270
  %v7340 = vpop.f32.mrf.mxu0
  %v7341 = vadd.f32 0.0, %v7340
  %v7342 = vpop.f32.mrf.mxu0
  %7343 = vdwg.mxu0
  %v7344 = vmul.f32 %v7341, 0.17677669
  %v7345 = vadd.f32 %v7344, %v7009
  %v7346 = vsel %vm392, %v7345, -inf
  %7347 = vmax.xlane.f32.xlu0 %v7346
  %v7348 = vpop.xlane.xlu0 %7347
  %v7349 = vsub.f32 %v7345, %v7348
  %v7350 = vmul.f32 %v7349, 1.442695
  %v7351 = vpow.pop %v7350
  %v7352 = vsel %vm392, %v7351, 0.0
  %7353 = vadd.xlane.f32.xlu0 %v7352
  %v7354 = vpop.xlane.xlu0 %7353
  %v7355 = vrcp.pop %v7354
  %v7356 = vmul.f32 %v7351, %v7355
  %7357 = vrot.lane.b32.xlu0 %v7096, 96
  %v7358 = vpop.permute.xlu0 %7357
  %v7360 = vsel %vm404, %v7356, 0
  %v7362 = vsel %vm408, %v7358, 0
  %7364 = vmatprep.subr.mxu0 0.0
  %7365 = vmatpush1.msra.mxu0 0.0
  %7366 = vmatprep.subr.mxu0 0.0
  %7367 = vmatpush1.msra.mxu0 0.0
  %7368 = vmatprep.subr.mxu0 0.0
  %7369 = vmatpush1.msra.mxu0 0.0
  %7370 = vmatprep.subr.mxu0 0.0
  %7371 = vmatpush1.msra.mxu0 0.0
  %7372 = vmatprep.subr.mxu0 0.0
  %7373 = vmatpush1.msra.mxu0 0.0
  %7374 = vmatprep.subr.mxu0 0.0
  %7375 = vmatpush1.msra.mxu0 0.0
  %7376 = vmatprep.subr.mxu0 0.0
  %7377 = vmatpush1.msra.mxu0 0.0
  %7378 = vmatprep.subr.mxu0 0.0
  %7379 = vmatpush1.msra.mxu0 0.0
  %7380 = vmatprep.subr.mxu0 0.0
  %7381 = vmatpush1.msra.mxu0 0.0
  %7382 = vmatprep.subr.mxu0 0.0
  %7383 = vmatpush1.msra.mxu0 0.0
  %7384 = vmatprep.subr.mxu0 0.0
  %7385 = vmatpush1.msra.mxu0 0.0
  %7386 = vmatprep.subr.mxu0 0.0
  %7387 = vmatpush1.msra.mxu0 0.0
  %7388 = vmatprep.subr.mxu0 0.0
  %7389 = vmatpush1.msra.mxu0 0.0
  %7390 = vmatprep.subr.mxu0 0.0
  %7391 = vmatpush1.msra.mxu0 0.0
  %7392 = vmatprep.subr.mxu0 0.0
  %7393 = vmatpush1.msra.mxu0 0.0
  %7394 = vmatprep.subr.mxu0 0.0
  %7395 = vmatpush1.msra.mxu0 %v7362
  %7396 = vmatprep.subr.mxu0 0.0
  %7397 = vmatpush2.msra.mxu0 0.0
  %7398 = vmatprep.subr.mxu0 0.0
  %7399 = vmatpush2.msra.mxu0 0.0
  %7400 = vmatprep.subr.mxu0 0.0
  %7401 = vmatpush2.msra.mxu0 0.0
  %7402 = vmatprep.subr.mxu0 0.0
  %7403 = vmatpush2.msra.mxu0 0.0
  %7404 = vmatprep.subr.mxu0 0.0
  %7405 = vmatpush2.msra.mxu0 0.0
  %7406 = vmatprep.subr.mxu0 0.0
  %7407 = vmatpush2.msra.mxu0 0.0
  %7408 = vmatprep.subr.mxu0 0.0
  %7409 = vmatpush2.msra.mxu0 0.0
  %7410 = vmatprep.subr.mxu0 0.0
  %7411 = vmatpush2.msra.mxu0 0.0
  %7412 = vmatprep.subr.mxu0 0.0
  %7413 = vmatpush2.msra.mxu0 0.0
  %7414 = vmatprep.subr.mxu0 0.0
  %7415 = vmatpush2.msra.mxu0 0.0
  %7416 = vmatprep.subr.mxu0 0.0
  %7417 = vmatpush2.msra.mxu0 0.0
  %7418 = vmatprep.subr.mxu0 0.0
  %7419 = vmatpush2.msra.mxu0 0.0
  %7420 = vmatprep.subr.mxu0 0.0
  %7421 = vmatpush2.msra.mxu0 0.0
  %7422 = vmatprep.subr.mxu0 0.0
  %7423 = vmatpush2.msra.mxu0 0.0
  %7424 = vmatprep.subr.mxu0 0.0
  %7425 = vmatpush2.msra.mxu0 0.0
  %7426 = vmatprep.subr.mxu0 0.0
  %7427 = vmatpush2.msra.mxu0 0.0
  %7428 = vmatprep.mubr.f32.mxu0 0.0
  %7429 = vmatmul.mubr.f32.gmra.mxu0 %v7360
  %v7430 = vpop.f32.mrf.mxu0
  %v7431 = vadd.f32 0.0, %v7430
  %v7432 = vpop.f32.mrf.mxu0
  %7433 = vdwg.mxu0
  %7435 = vrot.lane.b32.xlu0 %v7431, 32
  %v7436 = vpop.permute.xlu0 %7435
  %v7438 = vsel %vm204, %v7263, %v7436
  %v7439 = vadd.f32 %v6998, %v7000
  %v7440 = vpack.c.bf16 %v7438, %v7438
  %v7442 = vsel %vm689, %v7440, 0
  %7444 = vmatprep.subr.bf16.mxu0 0
  %7445 = vmatpush1.bf16.msra.mxu0 0
  %7446 = vmatprep.subr.bf16.mxu0 0
  %7447 = vmatpush1.bf16.msra.mxu0 0
  %7448 = vmatprep.subr.bf16.mxu0 0
  %7449 = vmatpush1.bf16.msra.mxu0 0
  %7450 = vmatprep.subr.bf16.mxu0 0
  %7451 = vmatpush1.bf16.msra.mxu0 0
  %7452 = vmatprep.subr.bf16.mxu0 0
  %7453 = vmatpush1.bf16.msra.mxu0 %v4804
  %7454 = vmatprep.subr.bf16.mxu0 0
  %7455 = vmatpush1.bf16.msra.mxu0 %v4803
  %7456 = vmatprep.subr.bf16.mxu0 0
  %7457 = vmatpush1.bf16.msra.mxu0 %v4802
  %7458 = vmatprep.subr.bf16.mxu0 0
  %7459 = vmatpush1.bf16.msra.mxu0 %v4801
  %7460 = vmatprep.subr.bf16.mxu0 0
  %7461 = vmatpush2.bf16.msra.mxu0 0
  %7462 = vmatprep.subr.bf16.mxu0 0
  %7463 = vmatpush2.bf16.msra.mxu0 0
  %7464 = vmatprep.subr.bf16.mxu0 0
  %7465 = vmatpush2.bf16.msra.mxu0 0
  %7466 = vmatprep.subr.bf16.mxu0 0
  %7467 = vmatpush2.bf16.msra.mxu0 0
  %7468 = vmatprep.subr.bf16.mxu0 0
  %7469 = vmatpush2.bf16.msra.mxu0 0
  %7470 = vmatprep.subr.bf16.mxu0 0
  %7471 = vmatpush2.bf16.msra.mxu0 0
  %7472 = vmatprep.subr.bf16.mxu0 0
  %7473 = vmatpush2.bf16.msra.mxu0 0
  %7474 = vmatprep.subr.bf16.mxu0 0
  %7475 = vmatpush2.bf16.msra.mxu0 0
  %7476 = vmatprep.mubr.bf16.mxu0 0
  %7477 = vmatmul.mubr.bf16.gmra.mxu0 %v7442
  %v7478 = vpop.f32.mrf.mxu0
  %v7479 = vadd.f32 0.0, %v7478
  %v7480 = vpop.f32.mrf.mxu0
  %v7481 = vpop.f32.mrf.mxu0
  %v7482 = vpop.f32.mrf.mxu0
  %7483 = vdwg.mxu0
  %v7484 = vadd.f32 %v7439, %v7479
  %v7485 = vsel %vm734, %v7484, 0.0
  %7486 = vadd.xlane.f32.xlu0 %v7485
  %v7487 = vpop.xlane.xlu0 %7486
  %v7488 = vmul.f32 %v7487, %v738
  %v7489 = vsub.f32 %v7484, %v7488
  %v7490 = vmul.f32 %v7489, %v7489
  %v7491 = vsel %vm734, %v7490, 0.0
  %7492 = vadd.xlane.f32.xlu0 %v7491
  %v7493 = vpop.xlane.xlu0 %7492
  %v7494 = vmul.f32 %v7493, %v738
  %v7495 = vadd.f32 %v7494, 1e-06
  %v7496 = vrsqrt.pop %v7495
  %v7497 = vmul.f32 %v7489, %v7496
  %v7498 = vmul.f32 %v7497, %v4869
  %v7499 = vadd.f32 %v7498, %v4874
  %v7500 = vpack.c.bf16 %v7499, %v7499
  %v7501 = vpack.c.bf16 %v7002, %v7002
  %v7503 = vsel %vm204, %v7500, 0
  %7505 = vmatprep.subr.bf16.mxu0 0
  %7506 = vmatpush1.bf16.msra.mxu0 0
  %7507 = vmatprep.subr.bf16.mxu0 0
  %7508 = vmatpush1.bf16.msra.mxu0 0
  %7509 = vmatprep.subr.bf16.mxu0 0
  %7510 = vmatpush1.bf16.msra.mxu0 0
  %7511 = vmatprep.subr.bf16.mxu0 0
  %7512 = vmatpush1.bf16.msra.mxu0 0
  %7513 = vmatprep.subr.bf16.mxu0 0
  %7514 = vmatpush1.bf16.msra.mxu0 0
  %7515 = vmatprep.subr.bf16.mxu0 0
  %7516 = vmatpush1.bf16.msra.mxu0 0
  %7517 = vmatprep.subr.bf16.mxu0 0
  %7518 = vmatpush1.bf16.msra.mxu0 %v4891
  %7519 = vmatprep.subr.bf16.mxu0 0
  %7520 = vmatpush1.bf16.msra.mxu0 %v4890
  %7521 = vmatprep.subr.bf16.mxu0 0
  %7522 = vmatpush2.bf16.msra.mxu0 0
  %7523 = vmatprep.subr.bf16.mxu0 0
  %7524 = vmatpush2.bf16.msra.mxu0 0
  %7525 = vmatprep.subr.bf16.mxu0 0
  %7526 = vmatpush2.bf16.msra.mxu0 0
  %7527 = vmatprep.subr.bf16.mxu0 0
  %7528 = vmatpush2.bf16.msra.mxu0 0
  %7529 = vmatprep.subr.bf16.mxu0 0
  %7530 = vmatpush2.bf16.msra.mxu0 0
  %7531 = vmatprep.subr.bf16.mxu0 0
  %7532 = vmatpush2.bf16.msra.mxu0 0
  %7533 = vmatprep.subr.bf16.mxu0 0
  %7534 = vmatpush2.bf16.msra.mxu0 0
  %7535 = vmatprep.subr.bf16.mxu0 0
  %7536 = vmatpush2.bf16.msra.mxu0 0
  %7537 = vmatprep.mubr.bf16.mxu0 0
  %7538 = vmatmul.mubr.bf16.gmra.mxu0 %v7503
  %v7539 = vpop.f32.mrf.mxu0
  %v7540 = vadd.f32 0.0, %v7539
  %v7541 = vpop.f32.mrf.mxu0
  %v7542 = vpop.f32.mrf.mxu0
  %v7543 = vpop.f32.mrf.mxu0
  %7544 = vdwg.mxu0
  %v7546 = vsel %vm204, %v7501, 0
  %7548 = vmatprep.subr.bf16.mxu0 0
  %7549 = vmatpush1.bf16.msra.mxu0 0
  %7550 = vmatprep.subr.bf16.mxu0 0
  %7551 = vmatpush1.bf16.msra.mxu0 0
  %7552 = vmatprep.subr.bf16.mxu0 0
  %7553 = vmatpush1.bf16.msra.mxu0 0
  %7554 = vmatprep.subr.bf16.mxu0 0
  %7555 = vmatpush1.bf16.msra.mxu0 0
  %7556 = vmatprep.subr.bf16.mxu0 0
  %7557 = vmatpush1.bf16.msra.mxu0 0
  %7558 = vmatprep.subr.bf16.mxu0 0
  %7559 = vmatpush1.bf16.msra.mxu0 0
  %7560 = vmatprep.subr.bf16.mxu0 0
  %7561 = vmatpush1.bf16.msra.mxu0 %v4950
  %7562 = vmatprep.subr.bf16.mxu0 0
  %7563 = vmatpush1.bf16.msra.mxu0 %v4949
  %7564 = vmatprep.subr.bf16.mxu0 0
  %7565 = vmatpush2.bf16.msra.mxu0 0
  %7566 = vmatprep.subr.bf16.mxu0 0
  %7567 = vmatpush2.bf16.msra.mxu0 0
  %7568 = vmatprep.subr.bf16.mxu0 0
  %7569 = vmatpush2.bf16.msra.mxu0 0
  %7570 = vmatprep.subr.bf16.mxu0 0
  %7571 = vmatpush2.bf16.msra.mxu0 0
  %7572 = vmatprep.subr.bf16.mxu0 0
  %7573 = vmatpush2.bf16.msra.mxu0 0
  %7574 = vmatprep.subr.bf16.mxu0 0
  %7575 = vmatpush2.bf16.msra.mxu0 0
  %7576 = vmatprep.subr.bf16.mxu0 0
  %7577 = vmatpush2.bf16.msra.mxu0 0
  %7578 = vmatprep.subr.bf16.mxu0 0
  %7579 = vmatpush2.bf16.msra.mxu0 0
  %7580 = vmatprep.mubr.bf16.mxu0 0
  %7581 = vmatmul.mubr.bf16.gmra.mxu0 %v7546
  %v7582 = vpop.f32.mrf.mxu0
  %v7583 = vadd.f32 0.0, %v7582
  %v7584 = vpop.f32.mrf.mxu0
  %v7585 = vpop.f32.mrf.mxu0
  %v7586 = vpop.f32.mrf.mxu0
  %7587 = vdwg.mxu0
  %v7589 = vsel %vm204, %v7540, 0
  %v7592 = vsel %vm204, %v7583, 0
  %7594 = vmatprep.subr.mxu0 0.0
  %7595 = vmatpush1.xpose.msra.mxu0 0.0
  %7596 = vmatprep.subr.mxu0 0.0
  %7597 = vmatpush1.xpose.msra.mxu0 0.0
  %7598 = vmatprep.subr.mxu0 0.0
  %7599 = vmatpush1.xpose.msra.mxu0 0.0
  %7600 = vmatprep.subr.mxu0 0.0
  %7601 = vmatpush1.xpose.msra.mxu0 0.0
  %7602 = vmatprep.subr.mxu0 0.0
  %7603 = vmatpush1.xpose.msra.mxu0 0.0
  %7604 = vmatprep.subr.mxu0 0.0
  %7605 = vmatpush1.xpose.msra.mxu0 0.0
  %7606 = vmatprep.subr.mxu0 0.0
  %7607 = vmatpush1.xpose.msra.mxu0 0.0
  %7608 = vmatprep.subr.mxu0 0.0
  %7609 = vmatpush1.xpose.msra.mxu0 0.0
  %7610 = vmatprep.subr.mxu0 0.0
  %7611 = vmatpush1.xpose.msra.mxu0 0.0
  %7612 = vmatprep.subr.mxu0 0.0
  %7613 = vmatpush1.xpose.msra.mxu0 0.0
  %7614 = vmatprep.subr.mxu0 0.0
  %7615 = vmatpush1.xpose.msra.mxu0 0.0
  %7616 = vmatprep.subr.mxu0 0.0
  %7617 = vmatpush1.xpose.msra.mxu0 0.0
  %7618 = vmatprep.subr.mxu0 0.0
  %7619 = vmatpush1.xpose.msra.mxu0 0.0
  %7620 = vmatprep.subr.mxu0 0.0
  %7621 = vmatpush1.xpose.msra.mxu0 0.0
  %7622 = vmatprep.subr.mxu0 0.0
  %7623 = vmatpush1.xpose.msra.mxu0 0.0
  %7624 = vmatprep.subr.mxu0 0.0
  %7625 = vmatpush1.xpose.msra.mxu0 %v7592
  %7626 = vmatprep.subr.mxu0 0.0
  %7627 = vmatpush2.xpose.msra.mxu0 0.0
  %7628 = vmatprep.subr.mxu0 0.0
  %7629 = vmatpush2.xpose.msra.mxu0 0.0
  %7630 = vmatprep.subr.mxu0 0.0
  %7631 = vmatpush2.xpose.msra.mxu0 0.0
  %7632 = vmatprep.subr.mxu0 0.0
  %7633 = vmatpush2.xpose.msra.mxu0 0.0
  %7634 = vmatprep.subr.mxu0 0.0
  %7635 = vmatpush2.xpose.msra.mxu0 0.0
  %7636 = vmatprep.subr.mxu0 0.0
  %7637 = vmatpush2.xpose.msra.mxu0 0.0
  %7638 = vmatprep.subr.mxu0 0.0
  %7639 = vmatpush2.xpose.msra.mxu0 0.0
  %7640 = vmatprep.subr.mxu0 0.0
  %7641 = vmatpush2.xpose.msra.mxu0 0.0
  %7642 = vmatprep.subr.mxu0 0.0
  %7643 = vmatpush2.xpose.msra.mxu0 0.0
  %7644 = vmatprep.subr.mxu0 0.0
  %7645 = vmatpush2.xpose.msra.mxu0 0.0
  %7646 = vmatprep.subr.mxu0 0.0
  %7647 = vmatpush2.xpose.msra.mxu0 0.0
  %7648 = vmatprep.subr.mxu0 0.0
  %7649 = vmatpush2.xpose.msra.mxu0 0.0
  %7650 = vmatprep.subr.mxu0 0.0
  %7651 = vmatpush2.xpose.msra.mxu0 0.0
  %7652 = vmatprep.subr.mxu0 0.0
  %7653 = vmatpush2.xpose.msra.mxu0 0.0
  %7654 = vmatprep.subr.mxu0 0.0
  %7655 = vmatpush2.xpose.msra.mxu0 0.0
  %7656 = vmatprep.subr.mxu0 0.0
  %7657 = vmatpush2.xpose.msra.mxu0 0.0
  %7658 = vmatprep.mubr.f32.mxu0 0.0
  %7659 = vmatmul.mubr.f32.gmra.mxu0 %v7589
  %v7660 = vpop.f32.mrf.mxu0
  %v7661 = vadd.f32 0.0, %v7660
  %v7662 = vpop.f32.mrf.mxu0
  %7663 = vdwg.mxu0
  %v7664 = vmul.f32 %v7661, 0.17677669
  %v7665 = vsel %vm956, %v7664, -inf
  %7666 = vmax.xlane.f32.xlu0 %v7665
  %v7667 = vpop.xlane.xlu0 %7666
  %v7668 = vsub.f32 %v7664, %v7667
  %v7669 = vmul.f32 %v7668, 1.442695
  %v7670 = vpow.pop %v7669
  %v7671 = vsel %vm956, %v7670, 0.0
  %7672 = vadd.xlane.f32.xlu0 %v7671
  %v7673 = vpop.xlane.xlu0 %7672
  %v7674 = vrcp.pop %v7673
  %v7675 = vmul.f32 %v7670, %v7674
  %7676 = vrot.lane.b32.xlu0 %v7583, 64
  %v7677 = vpop.permute.xlu0 %7676
  %v7679 = vsel %vm970, %v7675, 0
  %v7681 = vsel %vm974, %v7677, 0
  %7683 = vmatprep.subr.mxu0 0.0
  %7684 = vmatpush1.msra.mxu0 0.0
  %7685 = vmatprep.subr.mxu0 0.0
  %7686 = vmatpush1.msra.mxu0 0.0
  %7687 = vmatprep.subr.mxu0 0.0
  %7688 = vmatpush1.msra.mxu0 0.0
  %7689 = vmatprep.subr.mxu0 0.0
  %7690 = vmatpush1.msra.mxu0 0.0
  %7691 = vmatprep.subr.mxu0 0.0
  %7692 = vmatpush1.msra.mxu0 0.0
  %7693 = vmatprep.subr.mxu0 0.0
  %7694 = vmatpush1.msra.mxu0 0.0
  %7695 = vmatprep.subr.mxu0 0.0
  %7696 = vmatpush1.msra.mxu0 0.0
  %7697 = vmatprep.subr.mxu0 0.0
  %7698 = vmatpush1.msra.mxu0 0.0
  %7699 = vmatprep.subr.mxu0 0.0
  %7700 = vmatpush1.msra.mxu0 0.0
  %7701 = vmatprep.subr.mxu0 0.0
  %7702 = vmatpush1.msra.mxu0 0.0
  %7703 = vmatprep.subr.mxu0 0.0
  %7704 = vmatpush1.msra.mxu0 0.0
  %7705 = vmatprep.subr.mxu0 0.0
  %7706 = vmatpush1.msra.mxu0 0.0
  %7707 = vmatprep.subr.mxu0 0.0
  %7708 = vmatpush1.msra.mxu0 0.0
  %7709 = vmatprep.subr.mxu0 0.0
  %7710 = vmatpush1.msra.mxu0 0.0
  %7711 = vmatprep.subr.mxu0 0.0
  %7712 = vmatpush1.msra.mxu0 0.0
  %7713 = vmatprep.subr.mxu0 0.0
  %7714 = vmatpush1.msra.mxu0 %v7681
  %7715 = vmatprep.subr.mxu0 0.0
  %7716 = vmatpush2.msra.mxu0 0.0
  %7717 = vmatprep.subr.mxu0 0.0
  %7718 = vmatpush2.msra.mxu0 0.0
  %7719 = vmatprep.subr.mxu0 0.0
  %7720 = vmatpush2.msra.mxu0 0.0
  %7721 = vmatprep.subr.mxu0 0.0
  %7722 = vmatpush2.msra.mxu0 0.0
  %7723 = vmatprep.subr.mxu0 0.0
  %7724 = vmatpush2.msra.mxu0 0.0
  %7725 = vmatprep.subr.mxu0 0.0
  %7726 = vmatpush2.msra.mxu0 0.0
  %7727 = vmatprep.subr.mxu0 0.0
  %7728 = vmatpush2.msra.mxu0 0.0
  %7729 = vmatprep.subr.mxu0 0.0
  %7730 = vmatpush2.msra.mxu0 0.0
  %7731 = vmatprep.subr.mxu0 0.0
  %7732 = vmatpush2.msra.mxu0 0.0
  %7733 = vmatprep.subr.mxu0 0.0
  %7734 = vmatpush2.msra.mxu0 0.0
  %7735 = vmatprep.subr.mxu0 0.0
  %7736 = vmatpush2.msra.mxu0 0.0
  %7737 = vmatprep.subr.mxu0 0.0
  %7738 = vmatpush2.msra.mxu0 0.0
  %7739 = vmatprep.subr.mxu0 0.0
  %7740 = vmatpush2.msra.mxu0 0.0
  %7741 = vmatprep.subr.mxu0 0.0
  %7742 = vmatpush2.msra.mxu0 0.0
  %7743 = vmatprep.subr.mxu0 0.0
  %7744 = vmatpush2.msra.mxu0 0.0
  %7745 = vmatprep.subr.mxu0 0.0
  %7746 = vmatpush2.msra.mxu0 0.0
  %7747 = vmatprep.mubr.f32.mxu0 0.0
  %7748 = vmatmul.mubr.f32.gmra.mxu0 %v7679
  %v7749 = vpop.f32.mrf.mxu0
  %v7750 = vadd.f32 0.0, %v7749
  %v7751 = vpop.f32.mrf.mxu0
  %7752 = vdwg.mxu0
  %7753 = vrot.lane.b32.xlu0 %v7540, 96
  %v7754 = vpop.permute.xlu0 %7753
  %7755 = vrot.lane.b32.xlu0 %v7583, 96
  %v7756 = vpop.permute.xlu0 %7755
  %v7757 = vsel %vm204, %v7754, 0
  %v7759 = vsel %vm204, %v7756, 0
  %7761 = vmatprep.subr.mxu0 0.0
  %7762 = vmatpush1.xpose.msra.mxu0 0.0
  %7763 = vmatprep.subr.mxu0 0.0
  %7764 = vmatpush1.xpose.msra.mxu0 0.0
  %7765 = vmatprep.subr.mxu0 0.0
  %7766 = vmatpush1.xpose.msra.mxu0 0.0
  %7767 = vmatprep.subr.mxu0 0.0
  %7768 = vmatpush1.xpose.msra.mxu0 0.0
  %7769 = vmatprep.subr.mxu0 0.0
  %7770 = vmatpush1.xpose.msra.mxu0 0.0
  %7771 = vmatprep.subr.mxu0 0.0
  %7772 = vmatpush1.xpose.msra.mxu0 0.0
  %7773 = vmatprep.subr.mxu0 0.0
  %7774 = vmatpush1.xpose.msra.mxu0 0.0
  %7775 = vmatprep.subr.mxu0 0.0
  %7776 = vmatpush1.xpose.msra.mxu0 0.0
  %7777 = vmatprep.subr.mxu0 0.0
  %7778 = vmatpush1.xpose.msra.mxu0 0.0
  %7779 = vmatprep.subr.mxu0 0.0
  %7780 = vmatpush1.xpose.msra.mxu0 0.0
  %7781 = vmatprep.subr.mxu0 0.0
  %7782 = vmatpush1.xpose.msra.mxu0 0.0
  %7783 = vmatprep.subr.mxu0 0.0
  %7784 = vmatpush1.xpose.msra.mxu0 0.0
  %7785 = vmatprep.subr.mxu0 0.0
  %7786 = vmatpush1.xpose.msra.mxu0 0.0
  %7787 = vmatprep.subr.mxu0 0.0
  %7788 = vmatpush1.xpose.msra.mxu0 0.0
  %7789 = vmatprep.subr.mxu0 0.0
  %7790 = vmatpush1.xpose.msra.mxu0 0.0
  %7791 = vmatprep.subr.mxu0 0.0
  %7792 = vmatpush1.xpose.msra.mxu0 %v7759
  %7793 = vmatprep.subr.mxu0 0.0
  %7794 = vmatpush2.xpose.msra.mxu0 0.0
  %7795 = vmatprep.subr.mxu0 0.0
  %7796 = vmatpush2.xpose.msra.mxu0 0.0
  %7797 = vmatprep.subr.mxu0 0.0
  %7798 = vmatpush2.xpose.msra.mxu0 0.0
  %7799 = vmatprep.subr.mxu0 0.0
  %7800 = vmatpush2.xpose.msra.mxu0 0.0
  %7801 = vmatprep.subr.mxu0 0.0
  %7802 = vmatpush2.xpose.msra.mxu0 0.0
  %7803 = vmatprep.subr.mxu0 0.0
  %7804 = vmatpush2.xpose.msra.mxu0 0.0
  %7805 = vmatprep.subr.mxu0 0.0
  %7806 = vmatpush2.xpose.msra.mxu0 0.0
  %7807 = vmatprep.subr.mxu0 0.0
  %7808 = vmatpush2.xpose.msra.mxu0 0.0
  %7809 = vmatprep.subr.mxu0 0.0
  %7810 = vmatpush2.xpose.msra.mxu0 0.0
  %7811 = vmatprep.subr.mxu0 0.0
  %7812 = vmatpush2.xpose.msra.mxu0 0.0
  %7813 = vmatprep.subr.mxu0 0.0
  %7814 = vmatpush2.xpose.msra.mxu0 0.0
  %7815 = vmatprep.subr.mxu0 0.0
  %7816 = vmatpush2.xpose.msra.mxu0 0.0
  %7817 = vmatprep.subr.mxu0 0.0
  %7818 = vmatpush2.xpose.msra.mxu0 0.0
  %7819 = vmatprep.subr.mxu0 0.0
  %7820 = vmatpush2.xpose.msra.mxu0 0.0
  %7821 = vmatprep.subr.mxu0 0.0
  %7822 = vmatpush2.xpose.msra.mxu0 0.0
  %7823 = vmatprep.subr.mxu0 0.0
  %7824 = vmatpush2.xpose.msra.mxu0 0.0
  %7825 = vmatprep.mubr.f32.mxu0 0.0
  %7826 = vmatmul.mubr.f32.gmra.mxu0 %v7757
  %v7827 = vpop.f32.mrf.mxu0
  %v7828 = vadd.f32 0.0, %v7827
  %v7829 = vpop.f32.mrf.mxu0
  %7830 = vdwg.mxu0
  %v7831 = vmul.f32 %v7828, 0.17677669
  %v7832 = vsel %vm956, %v7831, -inf
  %7833 = vmax.xlane.f32.xlu0 %v7832
  %v7834 = vpop.xlane.xlu0 %7833
  %v7835 = vsub.f32 %v7831, %v7834
  %v7836 = vmul.f32 %v7835, 1.442695
  %v7837 = vpow.pop %v7836
  %v7838 = vsel %vm956, %v7837, 0.0
  %7839 = vadd.xlane.f32.xlu0 %v7838
  %v7840 = vpop.xlane.xlu0 %7839
  %v7841 = vrcp.pop %v7840
  %v7842 = vmul.f32 %v7837, %v7841
  %7843 = vrot.lane.b32.xlu0 %v7583, 32
  %v7844 = vpop.permute.xlu0 %7843
  %v7846 = vsel %vm970, %v7842, 0
  %v7848 = vsel %vm974, %v7844, 0
  %7850 = vmatprep.subr.mxu0 0.0
  %7851 = vmatpush1.msra.mxu0 0.0
  %7852 = vmatprep.subr.mxu0 0.0
  %7853 = vmatpush1.msra.mxu0 0.0
  %7854 = vmatprep.subr.mxu0 0.0
  %7855 = vmatpush1.msra.mxu0 0.0
  %7856 = vmatprep.subr.mxu0 0.0
  %7857 = vmatpush1.msra.mxu0 0.0
  %7858 = vmatprep.subr.mxu0 0.0
  %7859 = vmatpush1.msra.mxu0 0.0
  %7860 = vmatprep.subr.mxu0 0.0
  %7861 = vmatpush1.msra.mxu0 0.0
  %7862 = vmatprep.subr.mxu0 0.0
  %7863 = vmatpush1.msra.mxu0 0.0
  %7864 = vmatprep.subr.mxu0 0.0
  %7865 = vmatpush1.msra.mxu0 0.0
  %7866 = vmatprep.subr.mxu0 0.0
  %7867 = vmatpush1.msra.mxu0 0.0
  %7868 = vmatprep.subr.mxu0 0.0
  %7869 = vmatpush1.msra.mxu0 0.0
  %7870 = vmatprep.subr.mxu0 0.0
  %7871 = vmatpush1.msra.mxu0 0.0
  %7872 = vmatprep.subr.mxu0 0.0
  %7873 = vmatpush1.msra.mxu0 0.0
  %7874 = vmatprep.subr.mxu0 0.0
  %7875 = vmatpush1.msra.mxu0 0.0
  %7876 = vmatprep.subr.mxu0 0.0
  %7877 = vmatpush1.msra.mxu0 0.0
  %7878 = vmatprep.subr.mxu0 0.0
  %7879 = vmatpush1.msra.mxu0 0.0
  %7880 = vmatprep.subr.mxu0 0.0
  %7881 = vmatpush1.msra.mxu0 %v7848
  %7882 = vmatprep.subr.mxu0 0.0
  %7883 = vmatpush2.msra.mxu0 0.0
  %7884 = vmatprep.subr.mxu0 0.0
  %7885 = vmatpush2.msra.mxu0 0.0
  %7886 = vmatprep.subr.mxu0 0.0
  %7887 = vmatpush2.msra.mxu0 0.0
  %7888 = vmatprep.subr.mxu0 0.0
  %7889 = vmatpush2.msra.mxu0 0.0
  %7890 = vmatprep.subr.mxu0 0.0
  %7891 = vmatpush2.msra.mxu0 0.0
  %7892 = vmatprep.subr.mxu0 0.0
  %7893 = vmatpush2.msra.mxu0 0.0
  %7894 = vmatprep.subr.mxu0 0.0
  %7895 = vmatpush2.msra.mxu0 0.0
  %7896 = vmatprep.subr.mxu0 0.0
  %7897 = vmatpush2.msra.mxu0 0.0
  %7898 = vmatprep.subr.mxu0 0.0
  %7899 = vmatpush2.msra.mxu0 0.0
  %7900 = vmatprep.subr.mxu0 0.0
  %7901 = vmatpush2.msra.mxu0 0.0
  %7902 = vmatprep.subr.mxu0 0.0
  %7903 = vmatpush2.msra.mxu0 0.0
  %7904 = vmatprep.subr.mxu0 0.0
  %7905 = vmatpush2.msra.mxu0 0.0
  %7906 = vmatprep.subr.mxu0 0.0
  %7907 = vmatpush2.msra.mxu0 0.0
  %7908 = vmatprep.subr.mxu0 0.0
  %7909 = vmatpush2.msra.mxu0 0.0
  %7910 = vmatprep.subr.mxu0 0.0
  %7911 = vmatpush2.msra.mxu0 0.0
  %7912 = vmatprep.subr.mxu0 0.0
  %7913 = vmatpush2.msra.mxu0 0.0
  %7914 = vmatprep.mubr.f32.mxu0 0.0
  %7915 = vmatmul.mubr.f32.gmra.mxu0 %v7846
  %v7916 = vpop.f32.mrf.mxu0
  %v7917 = vadd.f32 0.0, %v7916
  %v7918 = vpop.f32.mrf.mxu0
  %7919 = vdwg.mxu0
  %7921 = vrot.lane.b32.xlu0 %v7917, 32
  %v7922 = vpop.permute.xlu0 %7921
  %v7924 = vsel %vm204, %v7750, %v7922
  %v7925 = vpack.c.bf16 %v7924, %v7924
  %v7927 = vsel %vm689, %v7925, 0
  %7929 = vmatprep.subr.bf16.mxu0 0
  %7930 = vmatpush1.bf16.msra.mxu0 0
  %7931 = vmatprep.subr.bf16.mxu0 0
  %7932 = vmatpush1.bf16.msra.mxu0 0
  %7933 = vmatprep.subr.bf16.mxu0 0
  %7934 = vmatpush1.bf16.msra.mxu0 0
  %7935 = vmatprep.subr.bf16.mxu0 0
  %7936 = vmatpush1.bf16.msra.mxu0 0
  %7937 = vmatprep.subr.bf16.mxu0 0
  %7938 = vmatpush1.bf16.msra.mxu0 %v5361
  %7939 = vmatprep.subr.bf16.mxu0 0
  %7940 = vmatpush1.bf16.msra.mxu0 %v5360
  %7941 = vmatprep.subr.bf16.mxu0 0
  %7942 = vmatpush1.bf16.msra.mxu0 %v5359
  %7943 = vmatprep.subr.bf16.mxu0 0
  %7944 = vmatpush1.bf16.msra.mxu0 %v5358
  %7945 = vmatprep.subr.bf16.mxu0 0
  %7946 = vmatpush2.bf16.msra.mxu0 0
  %7947 = vmatprep.subr.bf16.mxu0 0
  %7948 = vmatpush2.bf16.msra.mxu0 0
  %7949 = vmatprep.subr.bf16.mxu0 0
  %7950 = vmatpush2.bf16.msra.mxu0 0
  %7951 = vmatprep.subr.bf16.mxu0 0
  %7952 = vmatpush2.bf16.msra.mxu0 0
  %7953 = vmatprep.subr.bf16.mxu0 0
  %7954 = vmatpush2.bf16.msra.mxu0 0
  %7955 = vmatprep.subr.bf16.mxu0 0
  %7956 = vmatpush2.bf16.msra.mxu0 0
  %7957 = vmatprep.subr.bf16.mxu0 0
  %7958 = vmatpush2.bf16.msra.mxu0 0
  %7959 = vmatprep.subr.bf16.mxu0 0
  %7960 = vmatpush2.bf16.msra.mxu0 0
  %7961 = vmatprep.mubr.bf16.mxu0 0
  %7962 = vmatmul.mubr.bf16.gmra.mxu0 %v7927
  %v7963 = vpop.f32.mrf.mxu0
  %v7964 = vadd.f32 0.0, %v7963
  %v7965 = vpop.f32.mrf.mxu0
  %v7966 = vpop.f32.mrf.mxu0
  %v7967 = vpop.f32.mrf.mxu0
  %7968 = vdwg.mxu0
  %v7969 = vadd.f32 %v7499, %v7964
  %v7970 = vsel %vm734, %v7969, 0.0
  %7971 = vadd.xlane.f32.xlu0 %v7970
  %v7972 = vpop.xlane.xlu0 %7971
  %v7973 = vmul.f32 %v7972, %v738
  %v7974 = vsub.f32 %v7969, %v7973
  %v7975 = vmul.f32 %v7974, %v7974
  %v7976 = vsel %vm734, %v7975, 0.0
  %7977 = vadd.xlane.f32.xlu0 %v7976
  %v7978 = vpop.xlane.xlu0 %7977
  %v7979 = vmul.f32 %v7978, %v738
  %v7980 = vadd.f32 %v7979, 1e-06
  %v7981 = vrsqrt.pop %v7980
  %v7982 = vmul.f32 %v7974, %v7981
  %v7983 = vmul.f32 %v7982, %v5426
  %v7984 = vadd.f32 %v7983, %v5431
  %v7985 = vpack.c.bf16 %v7984, %v7984
  %v7987 = vsel %vm204, %v7985, 0
  %7989 = vmatprep.subr.bf16.mxu0 0
  %7990 = vmatpush1.bf16.msra.mxu0 0
  %7991 = vmatprep.subr.bf16.mxu0 0
  %7992 = vmatpush1.bf16.msra.mxu0 0
  %7993 = vmatprep.subr.bf16.mxu0 0
  %7994 = vmatpush1.bf16.msra.mxu0 0
  %7995 = vmatprep.subr.bf16.mxu0 0
  %7996 = vmatpush1.bf16.msra.mxu0 0
  %7997 = vmatprep.subr.bf16.mxu0 0
  %7998 = vmatpush1.bf16.msra.mxu0 0
  %7999 = vmatprep.subr.bf16.mxu0 0
  %8000 = vmatpush1.bf16.msra.mxu0 0
  %8001 = vmatprep.subr.bf16.mxu0 0
  %8002 = vmatpush1.bf16.msra.mxu0 %v5453
  %8003 = vmatprep.subr.bf16.mxu0 0
  %8004 = vmatpush1.bf16.msra.mxu0 %v5452
  %8005 = vmatprep.subr.bf16.mxu0 0
  %8006 = vmatpush2.bf16.msra.mxu0 0
  %8007 = vmatprep.subr.bf16.mxu0 0
  %8008 = vmatpush2.bf16.msra.mxu0 0
  %8009 = vmatprep.subr.bf16.mxu0 0
  %8010 = vmatpush2.bf16.msra.mxu0 0
  %8011 = vmatprep.subr.bf16.mxu0 0
  %8012 = vmatpush2.bf16.msra.mxu0 0
  %8013 = vmatprep.subr.bf16.mxu0 0
  %8014 = vmatpush2.bf16.msra.mxu0 0
  %8015 = vmatprep.subr.bf16.mxu0 0
  %8016 = vmatpush2.bf16.msra.mxu0 0
  %8017 = vmatprep.subr.bf16.mxu0 0
  %8018 = vmatpush2.bf16.msra.mxu0 0
  %8019 = vmatprep.subr.bf16.mxu0 0
  %8020 = vmatpush2.bf16.msra.mxu0 0
  %8021 = vmatprep.mubr.bf16.mxu0 0
  %8022 = vmatmul.mubr.bf16.gmra.mxu0 %v7987
  %v8023 = vpop.f32.mrf.mxu0
  %v8024 = vadd.f32 %v5442, %v8023
  %v8025 = vpop.f32.mrf.mxu0
  %v8026 = vpop.f32.mrf.mxu0
  %v8027 = vpop.f32.mrf.mxu0
  %8028 = vdwg.mxu0
  %v8029 = vmax.f32 %v8024, 0.0
  %v8030 = vpack.c.bf16 %v8029, %v8029
  %v8032 = vsel %vm689, %v8030, 0
  %8034 = vmatprep.subr.bf16.mxu0 0
  %8035 = vmatpush1.bf16.msra.mxu0 0
  %8036 = vmatprep.subr.bf16.mxu0 0
  %8037 = vmatpush1.bf16.msra.mxu0 0
  %8038 = vmatprep.subr.bf16.mxu0 0
  %8039 = vmatpush1.bf16.msra.mxu0 0
  %8040 = vmatprep.subr.bf16.mxu0 0
  %8041 = vmatpush1.bf16.msra.mxu0 0
  %8042 = vmatprep.subr.bf16.mxu0 0
  %8043 = vmatpush1.bf16.msra.mxu0 %v5528
  %8044 = vmatprep.subr.bf16.mxu0 0
  %8045 = vmatpush1.bf16.msra.mxu0 %v5527
  %8046 = vmatprep.subr.bf16.mxu0 0
  %8047 = vmatpush1.bf16.msra.mxu0 %v5526
  %8048 = vmatprep.subr.bf16.mxu0 0
  %8049 = vmatpush1.bf16.msra.mxu0 %v5525
  %8050 = vmatprep.subr.bf16.mxu0 0
  %8051 = vmatpush2.bf16.msra.mxu0 0
  %8052 = vmatprep.subr.bf16.mxu0 0
  %8053 = vmatpush2.bf16.msra.mxu0 0
  %8054 = vmatprep.subr.bf16.mxu0 0
  %8055 = vmatpush2.bf16.msra.mxu0 0
  %8056 = vmatprep.subr.bf16.mxu0 0
  %8057 = vmatpush2.bf16.msra.mxu0 0
  %8058 = vmatprep.subr.bf16.mxu0 0
  %8059 = vmatpush2.bf16.msra.mxu0 0
  %8060 = vmatprep.subr.bf16.mxu0 0
  %8061 = vmatpush2.bf16.msra.mxu0 0
  %8062 = vmatprep.subr.bf16.mxu0 0
  %8063 = vmatpush2.bf16.msra.mxu0 0
  %8064 = vmatprep.subr.bf16.mxu0 0
  %8065 = vmatpush2.bf16.msra.mxu0 0
  %8066 = vmatprep.mubr.bf16.mxu0 0
  %8067 = vmatmul.mubr.bf16.gmra.mxu0 %v8032
  %v8068 = vpop.f32.mrf.mxu0
  %v8069 = vadd.f32 %v5534, %v8068
  %v8070 = vpop.f32.mrf.mxu0
  %v8071 = vpop.f32.mrf.mxu0
  %v8072 = vpop.f32.mrf.mxu0
  %8073 = vdwg.mxu0
  %v8074 = vadd.f32 %v8069, %v7984
  %v8075 = vsel %vm734, %v8074, 0.0
  %8076 = vadd.xlane.f32.xlu0 %v8075
  %v8077 = vpop.xlane.xlu0 %8076
  %v8078 = vmul.f32 %v8077, %v738
  %v8079 = vsub.f32 %v8074, %v8078
  %v8080 = vmul.f32 %v8079, %v8079
  %v8081 = vsel %vm734, %v8080, 0.0
  %8082 = vadd.xlane.f32.xlu0 %v8081
  %v8083 = vpop.xlane.xlu0 %8082
  %v8084 = vmul.f32 %v8083, %v738
  %v8085 = vadd.f32 %v8084, 1e-06
  %v8086 = vrsqrt.pop %v8085
  %v8087 = vmul.f32 %v8079, %v8086
  %v8088 = vmul.f32 %v8087, %v5596
  %v8089 = vadd.f32 %v8088, %v5601
  %v8090 = vld [vmem:[%s29] sm:$0xff]
  %v8092 = vsel %vm404, %v8090, 0
  %v8095 = vsel %vm408, %v8089, 0
  %8097 = vmatprep.subr.mxu0 0.0
  %8098 = vmatpush1.msra.mxu0 0.0
  %8099 = vmatprep.subr.mxu0 0.0
  %8100 = vmatpush1.msra.mxu0 0.0
  %8101 = vmatprep.subr.mxu0 0.0
  %8102 = vmatpush1.msra.mxu0 0.0
  %8103 = vmatprep.subr.mxu0 0.0
  %8104 = vmatpush1.msra.mxu0 0.0
  %8105 = vmatprep.subr.mxu0 0.0
  %8106 = vmatpush1.msra.mxu0 0.0
  %8107 = vmatprep.subr.mxu0 0.0
  %8108 = vmatpush1.msra.mxu0 0.0
  %8109 = vmatprep.subr.mxu0 0.0
  %8110 = vmatpush1.msra.mxu0 0.0
  %8111 = vmatprep.subr.mxu0 0.0
  %8112 = vmatpush1.msra.mxu0 0.0
  %8113 = vmatprep.subr.mxu0 0.0
  %8114 = vmatpush1.msra.mxu0 0.0
  %8115 = vmatprep.subr.mxu0 0.0
  %8116 = vmatpush1.msra.mxu0 0.0
  %8117 = vmatprep.subr.mxu0 0.0
  %8118 = vmatpush1.msra.mxu0 0.0
  %8119 = vmatprep.subr.mxu0 0.0
  %8120 = vmatpush1.msra.mxu0 0.0
  %8121 = vmatprep.subr.mxu0 0.0
  %8122 = vmatpush1.msra.mxu0 0.0
  %8123 = vmatprep.subr.mxu0 0.0
  %8124 = vmatpush1.msra.mxu0 0.0
  %8125 = vmatprep.subr.mxu0 0.0
  %8126 = vmatpush1.msra.mxu0 0.0
  %8127 = vmatprep.subr.mxu0 0.0
  %8128 = vmatpush1.msra.mxu0 %v8095
  %8129 = vmatprep.subr.mxu0 0.0
  %8130 = vmatpush2.msra.mxu0 0.0
  %8131 = vmatprep.subr.mxu0 0.0
  %8132 = vmatpush2.msra.mxu0 0.0
  %8133 = vmatprep.subr.mxu0 0.0
  %8134 = vmatpush2.msra.mxu0 0.0
  %8135 = vmatprep.subr.mxu0 0.0
  %8136 = vmatpush2.msra.mxu0 0.0
  %8137 = vmatprep.subr.mxu0 0.0
  %8138 = vmatpush2.msra.mxu0 0.0
  %8139 = vmatprep.subr.mxu0 0.0
  %8140 = vmatpush2.msra.mxu0 0.0
  %8141 = vmatprep.subr.mxu0 0.0
  %8142 = vmatpush2.msra.mxu0 0.0
  %8143 = vmatprep.subr.mxu0 0.0
  %8144 = vmatpush2.msra.mxu0 0.0
  %8145 = vmatprep.subr.mxu0 0.0
  %8146 = vmatpush2.msra.mxu0 0.0
  %8147 = vmatprep.subr.mxu0 0.0
  %8148 = vmatpush2.msra.mxu0 0.0
  %8149 = vmatprep.subr.mxu0 0.0
  %8150 = vmatpush2.msra.mxu0 0.0
  %8151 = vmatprep.subr.mxu0 0.0
  %8152 = vmatpush2.msra.mxu0 0.0
  %8153 = vmatprep.subr.mxu0 0.0
  %8154 = vmatpush2.msra.mxu0 0.0
  %8155 = vmatprep.subr.mxu0 0.0
  %8156 = vmatpush2.msra.mxu0 0.0
  %8157 = vmatprep.subr.mxu0 0.0
  %8158 = vmatpush2.msra.mxu0 0.0
  %8159 = vmatprep.subr.mxu0 0.0
  %8160 = vmatpush2.msra.mxu0 0.0
  %8161 = vmatprep.mubr.f32.mxu0 0.0
  %8162 = vmatmul.mubr.f32.gmra.mxu0 %v8092
  %v8163 = vpop.f32.mrf.mxu0
  %v8164 = vadd.f32 0.0, %v8163
  %v8165 = vpop.f32.mrf.mxu0
  %8166 = vdwg.mxu0
  %8168 = vrot.lane.b32.xlu0 %v8164, 32
  %v8169 = vpop.permute.xlu0 %8168
  %8172 = vrot.lane.b32.xlu0 %v6919, 64
  %v8173 = vpop.permute.xlu0 %8172
  %v8175 = vsel %vm204, %v6994, %v8169
  %v8176 = vsel %vm689, %v8175, %v8173
  %v8177 = vpack.c.bf16 %v8176, %v8176
  %v8178 = vld [vmem:[%s69] sm:$0xff]
  %v8179 = vld [vmem:[%s69 + $0x8] sm:$0xff]
  %v8180 = vld [vmem:[%s69 + $0x10] sm:$0xff]
  %v8181 = vld [vmem:[%s69 + $0x18] sm:$0xff]
  %v8182 = vld [vmem:[%s69 + $0x20] sm:$0xff]
  %v8183 = vld [vmem:[%s69 + $0x28] sm:$0xff]
  %v8184 = vld [vmem:[%s69 + $0x30] sm:$0xff]
  %v8185 = vld [vmem:[%s69 + $0x38] sm:$0xff]
  %v8186 = vld [vmem:[%s69 + $0x40] sm:$0xff]
  %v8187 = vld [vmem:[%s69 + $0x48] sm:$0xff]
  %v8188 = vld [vmem:[%s69 + $0x50] sm:$0xff]
  %v8189 = vld [vmem:[%s69 + $0x58] sm:$0xff]
  %v8202 = vunpack.c.l.b16 %v8178
  %v8203 = vunpack.c.h.b16 %v8178
  %v8204 = vunpack.c.l.b16 %v8179
  %v8205 = vunpack.c.h.b16 %v8179
  %v8206 = vunpack.c.l.b16 %v8180
  %v8207 = vunpack.c.h.b16 %v8180
  %v8208 = vunpack.c.l.b16 %v8181
  %v8209 = vunpack.c.h.b16 %v8181
  %v8210 = vunpack.c.l.b16 %v8182
  %v8211 = vunpack.c.h.b16 %v8182
  %v8212 = vunpack.c.l.b16 %v8183
  %v8213 = vunpack.c.h.b16 %v8183
  %v8214 = vunpack.c.l.b16 %v8184
  %v8215 = vunpack.c.h.b16 %v8184
  %v8216 = vunpack.c.l.b16 %v8185
  %v8217 = vunpack.c.h.b16 %v8185
  %v8218 = vunpack.c.l.b16 %v8186
  %v8219 = vunpack.c.h.b16 %v8186
  %v8220 = vunpack.c.l.b16 %v8187
  %v8221 = vunpack.c.h.b16 %v8187
  %v8222 = vunpack.c.l.b16 %v8188
  %v8223 = vunpack.c.h.b16 %v8188
  %v8224 = vunpack.c.l.b16 %v8189
  %v8225 = vunpack.c.h.b16 %v8189
  %v8226 = vpack.c.b16 %v8204, %v8202
  %v8227 = vpack.c.b16 %v8205, %v8203
  %v8228 = vpack.c.b16 %v8208, %v8206
  %v8229 = vpack.c.b16 %v8209, %v8207
  %v8230 = vpack.c.b16 %v8212, %v8210
  %v8231 = vpack.c.b16 %v8213, %v8211
  %v8232 = vpack.c.b16 %v8216, %v8214
  %v8233 = vpack.c.b16 %v8217, %v8215
  %v8234 = vpack.c.b16 %v8220, %v8218
  %v8235 = vpack.c.b16 %v8221, %v8219
  %v8236 = vpack.c.b16 %v8224, %v8222
  %v8237 = vpack.c.b16 %v8225, %v8223
  %v8251 = vsel %vm4136, %v8177, 0
  %8253 = vmatprep.subr.bf16.mxu0 0
  %8254 = vmatpush1.bf16.msra.mxu0 0
  %8255 = vmatprep.subr.bf16.mxu0 0
  %8256 = vmatpush1.bf16.msra.mxu0 0
  %8257 = vmatprep.subr.bf16.mxu0 %v8237
  %8258 = vmatpush1.bf16.msra.mxu0 %v8236
  %8259 = vmatprep.subr.bf16.mxu0 %v8235
  %8260 = vmatpush1.bf16.msra.mxu0 %v8234
  %8261 = vmatprep.subr.bf16.mxu0 %v8233
  %8262 = vmatpush1.bf16.msra.mxu0 %v8232
  %8263 = vmatprep.subr.bf16.mxu0 %v8231
  %8264 = vmatpush1.bf16.msra.mxu0 %v8230
  %8265 = vmatprep.subr.bf16.mxu0 %v8229
  %8266 = vmatpush1.bf16.msra.mxu0 %v8228
  %8267 = vmatprep.subr.bf16.mxu0 %v8227
  %8268 = vmatpush1.bf16.msra.mxu0 %v8226
  %8269 = vmatprep.subr.bf16.mxu0 0
  %8270 = vmatpush2.bf16.msra.mxu0 0
  %8271 = vmatprep.subr.bf16.mxu0 0
  %8272 = vmatpush2.bf16.msra.mxu0 0
  %8273 = vmatprep.subr.bf16.mxu0 0
  %8274 = vmatpush2.bf16.msra.mxu0 0
  %8275 = vmatprep.subr.bf16.mxu0 0
  %8276 = vmatpush2.bf16.msra.mxu0 0
  %8277 = vmatprep.subr.bf16.mxu0 0
  %8278 = vmatpush2.bf16.msra.mxu0 0
  %8279 = vmatprep.subr.bf16.mxu0 0
  %8280 = vmatpush2.bf16.msra.mxu0 0
  %8281 = vmatprep.subr.bf16.mxu0 0
  %8282 = vmatpush2.bf16.msra.mxu0 0
  %8283 = vmatprep.subr.bf16.mxu0 0
  %8284 = vmatpush2.bf16.msra.mxu0 0
  %8285 = vmatprep.mubr.bf16.mxu0 0
  %8286 = vmatmul.mubr.bf16.gmra.mxu0 %v8251
  %v8287 = vpop.f32.mrf.mxu0
  %v8288 = vadd.f32 0.0, %v8287
  %v8289 = vpop.f32.mrf.mxu0
  %v8290 = vadd.f32 0.0, %v8289
  %v8291 = vpop.f32.mrf.mxu0
  %v8292 = vpop.f32.mrf.mxu0
  %8293 = vdwg.mxu0
  %v8294 = vtanh.pop %v8288
  %v8295 = vxor.u32 %v8288, 2147483648
  %v8296 = vxor.u32 %v8290, 2147483648
  %v8297 = vmul.f32 %v8295, 1.442695
  %v8298 = vpow.pop %v8297
  %v8299 = vmul.f32 %v8296, 1.442695
  %v8300 = vpow.pop %v8299
  %v8301 = vadd.f32 %v8298, 1.0
  %v8302 = vadd.f32 %v8300, 1.0
  %v8303 = vrcp.pop %v8301
  %v8304 = vmul.f32 1.0, %v8303
  %v8305 = vrcp.pop %v8302
  %v8306 = vmul.f32 1.0, %v8305
  %v8307 = vld [vmem:[%s31] sm:$0xff]
  %8310 = vrot.lane.b32.xlu0 %v8304, 32
  %v8311 = vpop.permute.xlu0 %8310
  %8312 = vrot.lane.b32.xlu0 %v8306, 32
  %v8313 = vpop.permute.xlu0 %8312
  %v8314 = vsel %vm204, %v8311, %v8313
  %v8316 = vmul.f32 %v8307, %v8314
  %v8317 = vmul.f32 %v8316, %v8294
  %8319 = vrot.lane.b32.xlu0 %v8317, 96
  %v8320 = vpop.permute.xlu0 %8319
  %v8322 = vadd.f32 %v8317, %v8320
  %8323 = vrot.lane.b32.xlu0 %v8317, 64
  %v8324 = vpop.permute.xlu0 %8323
  %v8326 = vadd.f32 %v8322, %v8324
  %v8327 = vxor.u32 %v8326, 2147483648
  %v8328 = vmul.f32 %v8327, 1.442695
  %v8329 = vpow.pop %v8328
  %v8330 = vadd.f32 %v8329, 1.0
  %v8331 = vrcp.pop %v8330
  %v8332 = vmul.f32 1.0, %v8331
  %s8333 = scalar_lea.vmem %s25, 8
  %v8334 = vld [vmem:[%s8333] sm:$0xff]
  %v8335 = vadd.f32 %v8332, %v8334
  %v8336 = vpack.c.bf16 %v8335, %v8335
  %v8337 = vld [vmem:[%s71] sm:$0xf]
  %v8338 = vld [vmem:[%s71 + $0x4] sm:$0xf]
  %v8339 = vld [vmem:[%s71 + $0x8] sm:$0xf]
  %v8340 = vld [vmem:[%s71 + $0xc] sm:$0xf]
  %v8345 = vunpack.c.l.b16 %v8337
  %v8346 = vunpack.c.l.b16 %v8338
  %v8347 = vunpack.c.l.b16 %v8339
  %v8348 = vunpack.c.l.b16 %v8340
  %v8349 = vpack.c.b16 %v8346, %v8345
  %v8350 = vpack.c.b16 %v8348, %v8347
  %v8354 = vsel %vm204, %v8336, 0
  %8356 = vmatprep.subr.bf16.mxu0 0
  %8357 = vmatpush1.bf16.msra.mxu0 0
  %8358 = vmatprep.subr.bf16.mxu0 0
  %8359 = vmatpush1.bf16.msra.mxu0 0
  %8360 = vmatprep.subr.bf16.mxu0 0
  %8361 = vmatpush1.bf16.msra.mxu0 0
  %8362 = vmatprep.subr.bf16.mxu0 0
  %8363 = vmatpush1.bf16.msra.mxu0 0
  %8364 = vmatprep.subr.bf16.mxu0 0
  %8365 = vmatpush1.bf16.msra.mxu0 0
  %8366 = vmatprep.subr.bf16.mxu0 0
  %8367 = vmatpush1.bf16.msra.mxu0 0
  %8368 = vmatprep.subr.bf16.mxu0 0
  %8369 = vmatpush1.bf16.msra.mxu0 %v8350
  %8370 = vmatprep.subr.bf16.mxu0 0
  %8371 = vmatpush1.bf16.msra.mxu0 %v8349
  %8372 = vmatprep.subr.bf16.mxu0 0
  %8373 = vmatpush2.bf16.msra.mxu0 0
  %8374 = vmatprep.subr.bf16.mxu0 0
  %8375 = vmatpush2.bf16.msra.mxu0 0
  %8376 = vmatprep.subr.bf16.mxu0 0
  %8377 = vmatpush2.bf16.msra.mxu0 0
  %8378 = vmatprep.subr.bf16.mxu0 0
  %8379 = vmatpush2.bf16.msra.mxu0 0
  %8380 = vmatprep.subr.bf16.mxu0 0
  %8381 = vmatpush2.bf16.msra.mxu0 0
  %8382 = vmatprep.subr.bf16.mxu0 0
  %8383 = vmatpush2.bf16.msra.mxu0 0
  %8384 = vmatprep.subr.bf16.mxu0 0
  %8385 = vmatpush2.bf16.msra.mxu0 0
  %8386 = vmatprep.subr.bf16.mxu0 0
  %8387 = vmatpush2.bf16.msra.mxu0 0
  %8388 = vmatprep.mubr.bf16.mxu0 0
  %8389 = vmatmul.mubr.bf16.gmra.mxu0 %v8354
  %v8390 = vpop.f32.mrf.mxu0
  %v8391 = vadd.f32 0.0, %v8390
  %v8392 = vpop.f32.mrf.mxu0
  %v8393 = vpop.f32.mrf.mxu0
  %v8394 = vpop.f32.mrf.mxu0
  %8395 = vdwg.mxu0
  %s8396 = scalar_lea.vmem %s73, 8
  %8397 = vst [vmem:[%s8396] sm:$0xff] %v8391
  // Predicated region
  $region146: #{_lambda_.1} parent=0 // pred_check
    _
  $region147: #{_lambda_.1} parent=0 // pred_check_branch
    %8399 = sbr.rel (0) target = $region149
  $region148: #{_lambda_.1} parent=0 // pred_region
    _
  $region149: #{_lambda_.1} parent=0 // pred_fallthru
    _
  // Predicated region
  $region150: #{_lambda_.1} parent=0 // pred_check
    _
  $region151: #{_lambda_.1} parent=0 // pred_check_branch
    %8401 = sbr.rel (0) target = $region153
  $region152: #{_lambda_.1} parent=0 // pred_region
    _
  $region153: #{_lambda_.1} parent=0 // pred_fallthru
    _

</llo_original>
